<compile_context>
chip_gen: v7x
topology: tpu7x:2x2x1
jax: 0.10.0
libtpu: 0.0.40
codegen_flags: <defaults>
</compile_context>

<pallas_src>
import functools

import jax
import jax.numpy as jnp
import numpy as np
from jax.experimental import pallas as pl
from jax.experimental.pallas import tpu as pltpu

# ---------------------------------------------------------------------------
# Geometry of the fused conv kernel's flat "position" axes (per image).
#   Coarse (pool-pair) grid index (A, B) is flattened as A*_S + B.
# ---------------------------------------------------------------------------
_S = 19                  # flat stride of the coarse position axis
_XQW = _S * _S           # 361  : quad-grid positions in the prepped input
_NPOS1 = 17 * _S + 1     # 324  : conv1 / pooled-map position axis (+junk cols)
_NPOS2 = 16 * _S         # 304  : conv2 position axis (+junk cols)


# ---------------------------------------------------------------------------
# Pallas kernels
# ---------------------------------------------------------------------------
def _conv_kernel(xq_ref, w1_ref, b1_ref, m_ref, w2_ref, b2_ref, o_ref):
    """Fused conv1+ReLU+pool + conv2+ReLU+pool for one image, all in VMEM.

    xq_ref : (1, 16, 361)  quad-layout input (16 quad channels, positions in lanes)
    w1_ref : (4, 256, 16)  conv1 slab weights (rows = pooltap*64 + parity*16 + c)
    b1_ref : (256, 1)
    m_ref  : (64, 324)     zero-mask for conv padding / junk positions
    w2_ref : (4, 128, 64)  conv2 slab weights (rows = pooltap*32 + c)
    b2_ref : (128, 1)
    o_ref  : (1, 32, 256)  features, CHW order: [c, h2*16 + w2], lane-dense
    """
    f32 = jnp.float32
    xq = xq_ref[0]                                            # (16, 361)

    # ---- conv1 (pool-fused): 4 slab matmuls, N = 4 pool taps x 4 parities x 16ch
    acc1 = jnp.zeros((256, _NPOS1), f32)
    for uh in range(2):
        for vh in range(2):
            off = uh * _S + vh
            acc1 = acc1 + jnp.dot(w1_ref[uh * 2 + vh],
                                  xq[:, off:off + _NPOS1],
                                  preferred_element_type=f32)
    acc1 = jnp.maximum(acc1 + b1_ref[...], 0.0)               # bias + ReLU
    # maxpool 2x2 == max over the 4 pool-tap row groups (ReLU is monotone)
    y1 = jnp.maximum(jnp.maximum(acc1[0:64], acc1[64:128]),
                     jnp.maximum(acc1[128:192], acc1[192:256]))   # (64, 324)
    cp2 = y1 * m_ref[...]                                     # zero conv-pad / junk

    # ---- conv2 (pool-fused), input = parity-split pooled conv1 map (VMEM value)
    acc2 = jnp.zeros((128, _NPOS2), f32)
    for uh in range(2):
        for vh in range(2):
            off = uh * _S + vh
            acc2 = acc2 + jnp.dot(w2_ref[uh * 2 + vh],
                                  cp2[:, off:off + _NPOS2],
                                  preferred_element_type=f32)
    acc2 = jnp.maximum(acc2 + b2_ref[...], 0.0)
    y2 = jnp.maximum(jnp.maximum(acc2[0:32], acc2[32:64]),
                     jnp.maximum(acc2[64:96], acc2[96:128]))      # (32, 304)

    # Drop the junk position columns; emit lane-dense (32, 256) in CHW order.
    for h2 in range(16):
        o_ref[0, :, 16 * h2:16 * (h2 + 1)] = \
            y2[:, _S * h2:_S * h2 + 16].astype(o_ref.dtype)


def _mlp_kernel(x_ref, w1_ref, b1_ref, w2_ref, b2_ref, w3_ref, b3_ref,
                o_ref, acc_ref):
    """fc1 (K-split accumulation) + ReLU + fc2 + ReLU + fc3(padded to 128)."""
    @pl.when(pl.program_id(1) == 0)
    def _():
        acc_ref[...] = jnp.zeros_like(acc_ref)

    acc_ref[...] += jnp.dot(x_ref[...], w1_ref[...],
                            preferred_element_type=jnp.float32)

    @pl.when(pl.program_id(1) == pl.num_programs(1) - 1)
    def _():
        h = jnp.maximum(acc_ref[...] + b1_ref[...], 0.0)
        # TODO(synk): Dropout(0.25) is identity in eval mode.
        h = jnp.maximum(jnp.dot(h, w2_ref[...],
                                preferred_element_type=jnp.float32) + b2_ref[...], 0.0)
        y = jnp.dot(h, w3_ref[...], preferred_element_type=jnp.float32) + b3_ref[...]
        o_ref[...] = y.astype(o_ref.dtype)


# ---------------------------------------------------------------------------
# pallas_call wrappers
# ---------------------------------------------------------------------------
def conv_features(xq, kp):
    """(B, 16, 361) quad-layout input -> (B, 32, 256) CHW-ordered features."""
    B = xq.shape[0]
    return pl.pallas_call(
        _conv_kernel,
        out_shape=jax.ShapeDtypeStruct((B, 32, 256), jnp.float32),
        grid_spec=pltpu.PrefetchScalarGridSpec(
            num_scalar_prefetch=0,
            grid=(B,),
            in_specs=[
                pl.BlockSpec((1, 16, _XQW), lambda b: (b, 0, 0)),
                pl.BlockSpec((4, 256, 16), lambda b: (0, 0, 0)),
                pl.BlockSpec((256, 1), lambda b: (0, 0)),
                pl.BlockSpec((64, _NPOS1), lambda b: (0, 0)),
                pl.BlockSpec((4, 128, 64), lambda b: (0, 0, 0)),
                pl.BlockSpec((128, 1), lambda b: (0, 0)),
            ],
            out_specs=pl.BlockSpec((1, 32, 256), lambda b: (b, 0, 0)),
        ),
        compiler_params=pltpu.CompilerParams(
            dimension_semantics=("parallel",),
            vmem_limit_bytes=32 * 1024 * 1024,
        ),
    )(xq, kp["w1qt"], kp["b1t"], kp["mask"], kp["w2qt"], kp["b2t"])


def mlp_head(feat, kp, tk=1024):
    """Fused fc1+ReLU+fc2+ReLU+fc3, fc1 contraction pipelined in tk chunks."""
    Bp, F = feat.shape
    tb = max(t for t in (128, 64, 32, 16, 8) if Bp % t == 0)
    grid = (Bp // tb, F // tk)
    return pl.pallas_call(
        _mlp_kernel,
        out_shape=jax.ShapeDtypeStruct((Bp, 128), jnp.float32),
        grid_spec=pltpu.PrefetchScalarGridSpec(
            num_scalar_prefetch=0,
            grid=grid,
            in_specs=[
                pl.BlockSpec((tb, tk), lambda i, k: (i, k)),
                pl.BlockSpec((tk, 128), lambda i, k: (k, 0)),
                pl.BlockSpec((1, 128), lambda i, k: (0, 0)),
                pl.BlockSpec((128, 64), lambda i, k: (0, 0)),
                pl.BlockSpec((1, 64), lambda i, k: (0, 0)),
                pl.BlockSpec((64, 128), lambda i, k: (0, 0)),
                pl.BlockSpec((1, 128), lambda i, k: (0, 0)),
            ],
            out_specs=pl.BlockSpec((tb, 128), lambda i, k: (i, 0)),
            scratch_shapes=[pltpu.VMEM((tb, 128), jnp.float32)],
        ),
        compiler_params=pltpu.CompilerParams(
            dimension_semantics=("parallel", "arbitrary"),
            vmem_limit_bytes=32 * 1024 * 1024,
        ),
    )(feat, kp["fc1_w"], kp["fc1_b"], kp["fc2_w"], kp["fc2_b"],
      kp["fc3_wp"], kp["fc3_bp"])


# ---------------------------------------------------------------------------
# Input prep (same-sized layout shuffle of the image, done once per call)
# ---------------------------------------------------------------------------
def prep_conv_input(x_nchw):
    """(B,1,64,64) -> (B,16,361) quads: xq[b, qi*4+qj, s*19+t] = x[b, 4s+qi-3, 4t+qj-3]."""
    B = x_nchw.shape[0]
    x = x_nchw[:, 0, :, :]
    xp = jnp.pad(x, ((0, 0), (3, 9), (3, 9)))                  # (B, 76, 76)
    return xp.reshape(B, 19, 4, 19, 4).transpose(0, 2, 4, 1, 3).reshape(B, 16, _XQW)


# ---------------------------------------------------------------------------
# One-time parameter preparation (layout / pool-fusion folding, offline)
# ---------------------------------------------------------------------------
def _prep_conv1(w1, b1):
    """(16,1,3,3) -> slab weights (4,256,16) + bias (256,1).

    Output rows: pooltap(i,j)*64 + parity(P,Q)*16 + cout, contraction over quad
    channel qi*4+qj of the (uh,vh) input slab.
    """
    w1 = np.asarray(w1, np.float32)
    b1 = np.asarray(b1, np.float32)
    cout = w1.shape[0]
    w1qt = np.zeros((2, 2, 16 * cout, 16), np.float32)
    for P in range(2):
        for Q in range(2):
            for i in range(2):
                for j in range(2):
                    r0 = (i * 2 + j) * 4 * cout + (P * 2 + Q) * cout
                    for dh in range(3):
                        for dw in range(3):
                            uh, qi = divmod(2 * P + i + dh, 4)
                            vh, qj = divmod(2 * Q + j + dw, 4)
                            w1qt[uh, vh, r0:r0 + cout, qi * 4 + qj] += w1[:, 0, dh, dw]
    b1t = np.tile(b1, 16).reshape(16 * cout, 1)
    return jnp.asarray(w1qt.reshape(4, 16 * cout, 16)), jnp.asarray(b1t)


def _prep_conv2(w2, b2):
    """(32,16,3,3) -> slab weights (4,128,64) + bias (128,1).

    Output rows: pooltap(i,j)*32 + cout; contraction columns: parity(P,Q)*16 + cin.
    """
    w2 = np.asarray(w2, np.float32)
    b2 = np.asarray(b2, np.float32)
    cout, cin = w2.shape[0], w2.shape[1]
    w2qt = np.zeros((2, 2, 4 * cout, 4 * cin), np.float32)
    for i in range(2):
        for j in range(2):
            tap = i * 2 + j
            for dh in range(3):
                for dw in range(3):
                    uh, P = divmod(i + dh, 2)
                    vh, Q = divmod(j + dw, 2)
                    pq = P * 2 + Q
                    w2qt[uh, vh,
                         tap * cout:(tap + 1) * cout,
                         pq * cin:(pq + 1) * cin] += w2[:, :, dh, dw]
    b2t = np.tile(b2, 4).reshape(4 * cout, 1)
    return jnp.asarray(w2qt.reshape(4, 4 * cout, 4 * cin)), jnp.asarray(b2t)


def _conv_mask():
    """(64, 324) mask: 1 where the pooled conv1 position is inside the image."""
    m = np.zeros((64, _NPOS1), np.float32)
    for pq in range(4):
        P, Q = divmod(pq, 2)
        for n in range(_NPOS1):
            A, B = divmod(n, _S)
            h1 = 2 * A + P - 1
            w1 = 2 * B + Q - 1
            if 0 <= h1 <= 31 and 0 <= w1 <= 31:
                m[pq * 16:(pq + 1) * 16, n] = 1.0
    return jnp.asarray(m)


def prepare_params(params):
    nc = params["fc3_w"].shape[0]
    w1qt, b1t = _prep_conv1(params["conv1_w"], params["conv1_b"])
    w2qt, b2t = _prep_conv2(params["conv2_w"], params["conv2_b"])
    fc3_wp = np.zeros((64, 128), np.float32)
    fc3_wp[:, :nc] = np.asarray(params["fc3_w"], np.float32).T
    fc3_bp = np.zeros((1, 128), np.float32)
    fc3_bp[0, :nc] = np.asarray(params["fc3_b"], np.float32)
    return {
        "w1qt": w1qt, "b1t": b1t,
        "w2qt": w2qt, "b2t": b2t,
        "mask": _conv_mask(),
        # Conv features come out in CHW order already -> fc1 only needs a transpose.
        "fc1_w": jnp.asarray(params["fc1_w"]).T,          # (8192, 128)
        "fc1_b": params["fc1_b"].reshape(1, 128),
        "fc2_w": params["fc2_w"].T,                       # (128, 64)
        "fc2_b": params["fc2_b"].reshape(1, 64),
        "fc3_wp": jnp.asarray(fc3_wp),                    # (64, 128) padded
        "fc3_bp": jnp.asarray(fc3_bp),                    # (1, 128) padded
    }


# ---------------------------------------------------------------------------
# Forward pass
# ---------------------------------------------------------------------------
def thai_char_cnn_forward(x_nchw, kp, num_classes):
    B = x_nchw.shape[0]
    Bp = ((B + 7) // 8) * 8                    # >=8 conv grid steps, MLP row pad
    if Bp != B:
        x_nchw = jnp.pad(x_nchw, ((0, Bp - B), (0, 0), (0, 0), (0, 0)))
    xq = prep_conv_input(x_nchw)               # (Bp, 16, 361)
    feat = conv_features(xq, kp).reshape(Bp, 32 * 16 * 16)   # free view, CHW order
    logits = mlp_head(feat, kp)                # (Bp, 128)
    return logits[:B, :num_classes]


# ---------------------------------------------------------------------------
# Reference (pure JAX) and parameter init
# ---------------------------------------------------------------------------
def reference_forward(x_nchw, params):
    dn = ("NCHW", "OIHW", "NCHW")
    y = jax.lax.conv_general_dilated(x_nchw, params["conv1_w"], (1, 1),
                                     ((1, 1), (1, 1)), dimension_numbers=dn)
    y = jnp.maximum(y + params["conv1_b"][None, :, None, None], 0.0)
    y = jax.lax.reduce_window(y, -jnp.inf, jax.lax.max,
                              (1, 1, 2, 2), (1, 1, 2, 2), "VALID")
    y = jax.lax.conv_general_dilated(y, params["conv2_w"], (1, 1),
                                     ((1, 1), (1, 1)), dimension_numbers=dn)
    y = jnp.maximum(y + params["conv2_b"][None, :, None, None], 0.0)
    y = jax.lax.reduce_window(y, -jnp.inf, jax.lax.max,
                              (1, 1, 2, 2), (1, 1, 2, 2), "VALID")
    y = y.reshape(y.shape[0], -1)
    y = jnp.maximum(y @ params["fc1_w"].T + params["fc1_b"], 0.0)
    y = jnp.maximum(y @ params["fc2_w"].T + params["fc2_b"], 0.0)
    return y @ params["fc3_w"].T + params["fc3_b"]


def init_params(key, num_classes):
    ks = jax.random.split(key, 10)

    def u(k, shape, fan_in):
        bound = 1.0 / (fan_in ** 0.5)
        return jax.random.uniform(k, shape, jnp.float32, -bound, bound)

    return {
        "conv1_w": u(ks[0], (16, 1, 3, 3), 1 * 9),
        "conv1_b": u(ks[1], (16,), 1 * 9),
        "conv2_w": u(ks[2], (32, 16, 3, 3), 16 * 9),
        "conv2_b": u(ks[3], (32,), 16 * 9),
        "fc1_w":   u(ks[4], (128, 32 * 16 * 16), 32 * 16 * 16),
        "fc1_b":   u(ks[5], (128,), 32 * 16 * 16),
        "fc2_w":   u(ks[6], (64, 128), 128),
        "fc2_b":   u(ks[7], (64,), 128),
        "fc3_w":   u(ks[8], (num_classes, 64), 64),
        "fc3_b":   u(ks[9], (num_classes,), 64),
    }


if __name__ == "__main__":
    num_classes = 10
    key = jax.random.PRNGKey(0)
    k_param, k_x = jax.random.split(key)

    params = init_params(k_param, num_classes)
    kparams = prepare_params(params)                 # one-time layout folding
    # fc1 expects 32*16*16 features -> input must be (B, 1, 64, 64)
    x = jax.random.normal(k_x, (2, 1, 64, 64), dtype=jnp.float32)

    fwd = jax.jit(functools.partial(thai_char_cnn_forward, num_classes=num_classes))
    out = jax.block_until_ready(fwd(x, kparams))

    ref = jax.block_until_ready(reference_forward(x, params))
    assert out.shape == (2, num_classes)
    assert jnp.allclose(out, ref, atol=2e-3, rtol=2e-3), "mismatch vs reference"

    print("KERNEL_OK")
</pallas_src>

<mosaic_0001>
module attributes {stable_mosaic.version = 11 : i64} {
  func.func @_conv_kernel(%arg0: i32, %arg1: memref<1x16x361xf32, #tpu.memory_space<vmem>>, %arg2: memref<4x256x16xf32, #tpu.memory_space<vmem>>, %arg3: memref<256x1xf32, #tpu.memory_space<vmem>>, %arg4: memref<64x324xf32, #tpu.memory_space<vmem>>, %arg5: memref<4x128x64xf32, #tpu.memory_space<vmem>>, %arg6: memref<128x1xf32, #tpu.memory_space<vmem>>, %arg7: memref<1x32x256xf32, #tpu.memory_space<vmem>>) attributes {dimension_semantics = [#tpu.dimension_semantics<parallel>], iteration_bounds = array<i64: 8>, scalar_prefetch = 0 : i64, scratch_operands = 0 : i64, tpu.core_type = #tpu.core_type<tc>, window_params = [{transform_indices = @transform_0, window_bounds = array<i64: 1, 16, 361>}, {pipeline_mode = #tpu.pipeline_mode<synchronous>, transform_indices = @transform_1, window_bounds = array<i64: 4, 256, 16>}, {pipeline_mode = #tpu.pipeline_mode<synchronous>, transform_indices = @transform_2, window_bounds = array<i64: 256, 1>}, {pipeline_mode = #tpu.pipeline_mode<synchronous>, transform_indices = @transform_3, window_bounds = array<i64: 64, 324>}, {pipeline_mode = #tpu.pipeline_mode<synchronous>, transform_indices = @transform_4, window_bounds = array<i64: 4, 128, 64>}, {pipeline_mode = #tpu.pipeline_mode<synchronous>, transform_indices = @transform_5, window_bounds = array<i64: 128, 1>}, {transform_indices = @transform_6, window_bounds = array<i64: 1, 32, 256>}]} {
    %c0 = arith.constant 0 : index
    %c0_0 = arith.constant 0 : index
    %c0_1 = arith.constant 0 : index
    %0 = vector.load %arg1[%c0, %c0_0, %c0_1] : memref<1x16x361xf32, #tpu.memory_space<vmem>>, vector<1x16x361xf32>
    %1 = vector.shape_cast %0 : vector<1x16x361xf32> to vector<16x361xf32>
    %cst = arith.constant 0.000000e+00 : f32
    %2 = vector.broadcast %cst : f32 to vector<256x324xf32>
    %c0_2 = arith.constant 0 : index
    %c0_3 = arith.constant 0 : index
    %c0_4 = arith.constant 0 : index
    %3 = vector.load %arg2[%c0_2, %c0_3, %c0_4] : memref<4x256x16xf32, #tpu.memory_space<vmem>>, vector<1x256x16xf32>
    %4 = vector.shape_cast %3 : vector<1x256x16xf32> to vector<256x16xf32>
    %5 = vector.extract_strided_slice %1 {offsets = [0, 0], sizes = [16, 324], strides = [1, 1]} : vector<16x361xf32> to vector<16x324xf32>
    %cst_5 = arith.constant dense<0.000000e+00> : vector<256x324xf32>
    %6 = tpu.matmul %4, %5, %cst_5 {dimension_numbers = #tpu.dot_dimension_numbers<[1], [0], [0], [1], [0, 0, 1, 1], [], []>} : vector<256x16xf32>, vector<16x324xf32>, vector<256x324xf32> -> vector<256x324xf32>
    %7 = arith.addf %2, %6 : vector<256x324xf32>
    %c1 = arith.constant 1 : index
    %c0_6 = arith.constant 0 : index
    %c0_7 = arith.constant 0 : index
    %8 = vector.load %arg2[%c1, %c0_6, %c0_7] : memref<4x256x16xf32, #tpu.memory_space<vmem>>, vector<1x256x16xf32>
    %9 = vector.shape_cast %8 : vector<1x256x16xf32> to vector<256x16xf32>
    %10 = vector.extract_strided_slice %1 {offsets = [0, 1], sizes = [16, 324], strides = [1, 1]} : vector<16x361xf32> to vector<16x324xf32>
    %cst_8 = arith.constant dense<0.000000e+00> : vector<256x324xf32>
    %11 = tpu.matmul %9, %10, %cst_8 {dimension_numbers = #tpu.dot_dimension_numbers<[1], [0], [0], [1], [0, 0, 1, 1], [], []>} : vector<256x16xf32>, vector<16x324xf32>, vector<256x324xf32> -> vector<256x324xf32>
    %12 = arith.addf %7, %11 : vector<256x324xf32>
    %c2 = arith.constant 2 : index
    %c0_9 = arith.constant 0 : index
    %c0_10 = arith.constant 0 : index
    %13 = vector.load %arg2[%c2, %c0_9, %c0_10] : memref<4x256x16xf32, #tpu.memory_space<vmem>>, vector<1x256x16xf32>
    %14 = vector.shape_cast %13 : vector<1x256x16xf32> to vector<256x16xf32>
    %15 = vector.extract_strided_slice %1 {offsets = [0, 19], sizes = [16, 324], strides = [1, 1]} : vector<16x361xf32> to vector<16x324xf32>
    %cst_11 = arith.constant dense<0.000000e+00> : vector<256x324xf32>
    %16 = tpu.matmul %14, %15, %cst_11 {dimension_numbers = #tpu.dot_dimension_numbers<[1], [0], [0], [1], [0, 0, 1, 1], [], []>} : vector<256x16xf32>, vector<16x324xf32>, vector<256x324xf32> -> vector<256x324xf32>
    %17 = arith.addf %12, %16 : vector<256x324xf32>
    %c3 = arith.constant 3 : index
    %c0_12 = arith.constant 0 : index
    %c0_13 = arith.constant 0 : index
    %18 = vector.load %arg2[%c3, %c0_12, %c0_13] : memref<4x256x16xf32, #tpu.memory_space<vmem>>, vector<1x256x16xf32>
    %19 = vector.shape_cast %18 : vector<1x256x16xf32> to vector<256x16xf32>
    %20 = vector.extract_strided_slice %1 {offsets = [0, 20], sizes = [16, 324], strides = [1, 1]} : vector<16x361xf32> to vector<16x324xf32>
    %cst_14 = arith.constant dense<0.000000e+00> : vector<256x324xf32>
    %21 = tpu.matmul %19, %20, %cst_14 {dimension_numbers = #tpu.dot_dimension_numbers<[1], [0], [0], [1], [0, 0, 1, 1], [], []>} : vector<256x16xf32>, vector<16x324xf32>, vector<256x324xf32> -> vector<256x324xf32>
    %22 = arith.addf %17, %21 : vector<256x324xf32>
    %c0_15 = arith.constant 0 : index
    %c0_16 = arith.constant 0 : index
    %23 = vector.load %arg3[%c0_15, %c0_16] : memref<256x1xf32, #tpu.memory_space<vmem>>, vector<256x1xf32>
    %24 = vector.broadcast %23 : vector<256x1xf32> to vector<256x324xf32>
    %25 = arith.addf %22, %24 : vector<256x324xf32>
    %cst_17 = arith.constant 0.000000e+00 : f32
    %26 = vector.broadcast %cst_17 : f32 to vector<256x324xf32>
    %27 = arith.maximumf %25, %26 : vector<256x324xf32>
    %28 = vector.extract_strided_slice %27 {offsets = [0, 0], sizes = [64, 324], strides = [1, 1]} : vector<256x324xf32> to vector<64x324xf32>
    %29 = vector.extract_strided_slice %27 {offsets = [64, 0], sizes = [64, 324], strides = [1, 1]} : vector<256x324xf32> to vector<64x324xf32>
    %30 = arith.maximumf %28, %29 : vector<64x324xf32>
    %31 = vector.extract_strided_slice %27 {offsets = [128, 0], sizes = [64, 324], strides = [1, 1]} : vector<256x324xf32> to vector<64x324xf32>
    %32 = vector.extract_strided_slice %27 {offsets = [192, 0], sizes = [64, 324], strides = [1, 1]} : vector<256x324xf32> to vector<64x324xf32>
    %33 = arith.maximumf %31, %32 : vector<64x324xf32>
    %34 = arith.maximumf %30, %33 : vector<64x324xf32>
    %c0_18 = arith.constant 0 : index
    %c0_19 = arith.constant 0 : index
    %35 = vector.load %arg4[%c0_18, %c0_19] : memref<64x324xf32, #tpu.memory_space<vmem>>, vector<64x324xf32>
    %36 = arith.mulf %34, %35 : vector<64x324xf32>
    %cst_20 = arith.constant 0.000000e+00 : f32
    %37 = vector.broadcast %cst_20 : f32 to vector<128x304xf32>
    %c0_21 = arith.constant 0 : index
    %c0_22 = arith.constant 0 : index
    %c0_23 = arith.constant 0 : index
    %38 = vector.load %arg5[%c0_21, %c0_22, %c0_23] : memref<4x128x64xf32, #tpu.memory_space<vmem>>, vector<1x128x64xf32>
    %39 = vector.shape_cast %38 : vector<1x128x64xf32> to vector<128x64xf32>
    %40 = vector.extract_strided_slice %36 {offsets = [0, 0], sizes = [64, 304], strides = [1, 1]} : vector<64x324xf32> to vector<64x304xf32>
    %cst_24 = arith.constant dense<0.000000e+00> : vector<128x304xf32>
    %41 = tpu.matmul %39, %40, %cst_24 {dimension_numbers = #tpu.dot_dimension_numbers<[1], [0], [0], [1], [0, 0, 1, 1], [], []>} : vector<128x64xf32>, vector<64x304xf32>, vector<128x304xf32> -> vector<128x304xf32>
    %42 = arith.addf %37, %41 : vector<128x304xf32>
    %c1_25 = arith.constant 1 : index
    %c0_26 = arith.constant 0 : index
    %c0_27 = arith.constant 0 : index
    %43 = vector.load %arg5[%c1_25, %c0_26, %c0_27] : memref<4x128x64xf32, #tpu.memory_space<vmem>>, vector<1x128x64xf32>
    %44 = vector.shape_cast %43 : vector<1x128x64xf32> to vector<128x64xf32>
    %45 = vector.extract_strided_slice %36 {offsets = [0, 1], sizes = [64, 304], strides = [1, 1]} : vector<64x324xf32> to vector<64x304xf32>
    %cst_28 = arith.constant dense<0.000000e+00> : vector<128x304xf32>
    %46 = tpu.matmul %44, %45, %cst_28 {dimension_numbers = #tpu.dot_dimension_numbers<[1], [0], [0], [1], [0, 0, 1, 1], [], []>} : vector<128x64xf32>, vector<64x304xf32>, vector<128x304xf32> -> vector<128x304xf32>
    %47 = arith.addf %42, %46 : vector<128x304xf32>
    %c2_29 = arith.constant 2 : index
    %c0_30 = arith.constant 0 : index
    %c0_31 = arith.constant 0 : index
    %48 = vector.load %arg5[%c2_29, %c0_30, %c0_31] : memref<4x128x64xf32, #tpu.memory_space<vmem>>, vector<1x128x64xf32>
    %49 = vector.shape_cast %48 : vector<1x128x64xf32> to vector<128x64xf32>
    %50 = vector.extract_strided_slice %36 {offsets = [0, 19], sizes = [64, 304], strides = [1, 1]} : vector<64x324xf32> to vector<64x304xf32>
    %cst_32 = arith.constant dense<0.000000e+00> : vector<128x304xf32>
    %51 = tpu.matmul %49, %50, %cst_32 {dimension_numbers = #tpu.dot_dimension_numbers<[1], [0], [0], [1], [0, 0, 1, 1], [], []>} : vector<128x64xf32>, vector<64x304xf32>, vector<128x304xf32> -> vector<128x304xf32>
    %52 = arith.addf %47, %51 : vector<128x304xf32>
    %c3_33 = arith.constant 3 : index
    %c0_34 = arith.constant 0 : index
    %c0_35 = arith.constant 0 : index
    %53 = vector.load %arg5[%c3_33, %c0_34, %c0_35] : memref<4x128x64xf32, #tpu.memory_space<vmem>>, vector<1x128x64xf32>
    %54 = vector.shape_cast %53 : vector<1x128x64xf32> to vector<128x64xf32>
    %55 = vector.extract_strided_slice %36 {offsets = [0, 20], sizes = [64, 304], strides = [1, 1]} : vector<64x324xf32> to vector<64x304xf32>
    %cst_36 = arith.constant dense<0.000000e+00> : vector<128x304xf32>
    %56 = tpu.matmul %54, %55, %cst_36 {dimension_numbers = #tpu.dot_dimension_numbers<[1], [0], [0], [1], [0, 0, 1, 1], [], []>} : vector<128x64xf32>, vector<64x304xf32>, vector<128x304xf32> -> vector<128x304xf32>
    %57 = arith.addf %52, %56 : vector<128x304xf32>
    %c0_37 = arith.constant 0 : index
    %c0_38 = arith.constant 0 : index
    %58 = vector.load %arg6[%c0_37, %c0_38] : memref<128x1xf32, #tpu.memory_space<vmem>>, vector<128x1xf32>
    %59 = vector.broadcast %58 : vector<128x1xf32> to vector<128x304xf32>
    %60 = arith.addf %57, %59 : vector<128x304xf32>
    %cst_39 = arith.constant 0.000000e+00 : f32
    %61 = vector.broadcast %cst_39 : f32 to vector<128x304xf32>
    %62 = arith.maximumf %60, %61 : vector<128x304xf32>
    %63 = vector.extract_strided_slice %62 {offsets = [0, 0], sizes = [32, 304], strides = [1, 1]} : vector<128x304xf32> to vector<32x304xf32>
    %64 = vector.extract_strided_slice %62 {offsets = [32, 0], sizes = [32, 304], strides = [1, 1]} : vector<128x304xf32> to vector<32x304xf32>
    %65 = arith.maximumf %63, %64 : vector<32x304xf32>
    %66 = vector.extract_strided_slice %62 {offsets = [64, 0], sizes = [32, 304], strides = [1, 1]} : vector<128x304xf32> to vector<32x304xf32>
    %67 = vector.extract_strided_slice %62 {offsets = [96, 0], sizes = [32, 304], strides = [1, 1]} : vector<128x304xf32> to vector<32x304xf32>
    %68 = arith.maximumf %66, %67 : vector<32x304xf32>
    %69 = arith.maximumf %65, %68 : vector<32x304xf32>
    %70 = vector.extract_strided_slice %69 {offsets = [0, 0], sizes = [32, 16], strides = [1, 1]} : vector<32x304xf32> to vector<32x16xf32>
    %c0_40 = arith.constant 0 : index
    %c0_41 = arith.constant 0 : index
    %c0_42 = arith.constant 0 : index
    %71 = vector.load %arg7[%c0_40, %c0_41, %c0_42] : memref<1x32x256xf32, #tpu.memory_space<vmem>>, vector<1x32x16xf32>
    %72 = vector.shape_cast %71 : vector<1x32x16xf32> to vector<32x16xf32>
    %73 = vector.shape_cast %70 : vector<32x16xf32> to vector<1x32x16xf32>
    tpu.vector_store %arg7[%c0_40, %c0_41, %c0_42], %73 {strides = array<i32>} : memref<1x32x256xf32, #tpu.memory_space<vmem>>, vector<1x32x16xf32>,
    %74 = vector.extract_strided_slice %69 {offsets = [0, 19], sizes = [32, 16], strides = [1, 1]} : vector<32x304xf32> to vector<32x16xf32>
    %c0_43 = arith.constant 0 : index
    %c0_44 = arith.constant 0 : index
    %c16 = arith.constant 16 : index
    %75 = vector.load %arg7[%c0_43, %c0_44, %c16] : memref<1x32x256xf32, #tpu.memory_space<vmem>>, vector<1x32x16xf32>
    %76 = vector.shape_cast %75 : vector<1x32x16xf32> to vector<32x16xf32>
    %77 = vector.shape_cast %74 : vector<32x16xf32> to vector<1x32x16xf32>
    tpu.vector_store %arg7[%c0_43, %c0_44, %c16], %77 {strides = array<i32>} : memref<1x32x256xf32, #tpu.memory_space<vmem>>, vector<1x32x16xf32>,
    %78 = vector.extract_strided_slice %69 {offsets = [0, 38], sizes = [32, 16], strides = [1, 1]} : vector<32x304xf32> to vector<32x16xf32>
    %c0_45 = arith.constant 0 : index
    %c0_46 = arith.constant 0 : index
    %c32 = arith.constant 32 : index
    %79 = vector.load %arg7[%c0_45, %c0_46, %c32] : memref<1x32x256xf32, #tpu.memory_space<vmem>>, vector<1x32x16xf32>
    %80 = vector.shape_cast %79 : vector<1x32x16xf32> to vector<32x16xf32>
    %81 = vector.shape_cast %78 : vector<32x16xf32> to vector<1x32x16xf32>
    tpu.vector_store %arg7[%c0_45, %c0_46, %c32], %81 {strides = array<i32>} : memref<1x32x256xf32, #tpu.memory_space<vmem>>, vector<1x32x16xf32>,
    %82 = vector.extract_strided_slice %69 {offsets = [0, 57], sizes = [32, 16], strides = [1, 1]} : vector<32x304xf32> to vector<32x16xf32>
    %c0_47 = arith.constant 0 : index
    %c0_48 = arith.constant 0 : index
    %c48 = arith.constant 48 : index
    %83 = vector.load %arg7[%c0_47, %c0_48, %c48] : memref<1x32x256xf32, #tpu.memory_space<vmem>>, vector<1x32x16xf32>
    %84 = vector.shape_cast %83 : vector<1x32x16xf32> to vector<32x16xf32>
    %85 = vector.shape_cast %82 : vector<32x16xf32> to vector<1x32x16xf32>
    tpu.vector_store %arg7[%c0_47, %c0_48, %c48], %85 {strides = array<i32>} : memref<1x32x256xf32, #tpu.memory_space<vmem>>, vector<1x32x16xf32>,
    %86 = vector.extract_strided_slice %69 {offsets = [0, 76], sizes = [32, 16], strides = [1, 1]} : vector<32x304xf32> to vector<32x16xf32>
    %c0_49 = arith.constant 0 : index
    %c0_50 = arith.constant 0 : index
    %c64 = arith.constant 64 : index
    %87 = vector.load %arg7[%c0_49, %c0_50, %c64] : memref<1x32x256xf32, #tpu.memory_space<vmem>>, vector<1x32x16xf32>
    %88 = vector.shape_cast %87 : vector<1x32x16xf32> to vector<32x16xf32>
    %89 = vector.shape_cast %86 : vector<32x16xf32> to vector<1x32x16xf32>
    tpu.vector_store %arg7[%c0_49, %c0_50, %c64], %89 {strides = array<i32>} : memref<1x32x256xf32, #tpu.memory_space<vmem>>, vector<1x32x16xf32>,
    %90 = vector.extract_strided_slice %69 {offsets = [0, 95], sizes = [32, 16], strides = [1, 1]} : vector<32x304xf32> to vector<32x16xf32>
    %c0_51 = arith.constant 0 : index
    %c0_52 = arith.constant 0 : index
    %c80 = arith.constant 80 : index
    %91 = vector.load %arg7[%c0_51, %c0_52, %c80] : memref<1x32x256xf32, #tpu.memory_space<vmem>>, vector<1x32x16xf32>
    %92 = vector.shape_cast %91 : vector<1x32x16xf32> to vector<32x16xf32>
    %93 = vector.shape_cast %90 : vector<32x16xf32> to vector<1x32x16xf32>
    tpu.vector_store %arg7[%c0_51, %c0_52, %c80], %93 {strides = array<i32>} : memref<1x32x256xf32, #tpu.memory_space<vmem>>, vector<1x32x16xf32>,
    %94 = vector.extract_strided_slice %69 {offsets = [0, 114], sizes = [32, 16], strides = [1, 1]} : vector<32x304xf32> to vector<32x16xf32>
    %c0_53 = arith.constant 0 : index
    %c0_54 = arith.constant 0 : index
    %c96 = arith.constant 96 : index
    %95 = vector.load %arg7[%c0_53, %c0_54, %c96] : memref<1x32x256xf32, #tpu.memory_space<vmem>>, vector<1x32x16xf32>
    %96 = vector.shape_cast %95 : vector<1x32x16xf32> to vector<32x16xf32>
    %97 = vector.shape_cast %94 : vector<32x16xf32> to vector<1x32x16xf32>
    tpu.vector_store %arg7[%c0_53, %c0_54, %c96], %97 {strides = array<i32>} : memref<1x32x256xf32, #tpu.memory_space<vmem>>, vector<1x32x16xf32>,
    %98 = vector.extract_strided_slice %69 {offsets = [0, 133], sizes = [32, 16], strides = [1, 1]} : vector<32x304xf32> to vector<32x16xf32>
    %c0_55 = arith.constant 0 : index
    %c0_56 = arith.constant 0 : index
    %c112 = arith.constant 112 : index
    %99 = vector.load %arg7[%c0_55, %c0_56, %c112] : memref<1x32x256xf32, #tpu.memory_space<vmem>>, vector<1x32x16xf32>
    %100 = vector.shape_cast %99 : vector<1x32x16xf32> to vector<32x16xf32>
    %101 = vector.shape_cast %98 : vector<32x16xf32> to vector<1x32x16xf32>
    tpu.vector_store %arg7[%c0_55, %c0_56, %c112], %101 {strides = array<i32>} : memref<1x32x256xf32, #tpu.memory_space<vmem>>, vector<1x32x16xf32>,
    %102 = vector.extract_strided_slice %69 {offsets = [0, 152], sizes = [32, 16], strides = [1, 1]} : vector<32x304xf32> to vector<32x16xf32>
    %c0_57 = arith.constant 0 : index
    %c0_58 = arith.constant 0 : index
    %c128 = arith.constant 128 : index
    %103 = vector.load %arg7[%c0_57, %c0_58, %c128] : memref<1x32x256xf32, #tpu.memory_space<vmem>>, vector<1x32x16xf32>
    %104 = vector.shape_cast %103 : vector<1x32x16xf32> to vector<32x16xf32>
    %105 = vector.shape_cast %102 : vector<32x16xf32> to vector<1x32x16xf32>
    tpu.vector_store %arg7[%c0_57, %c0_58, %c128], %105 {strides = array<i32>} : memref<1x32x256xf32, #tpu.memory_space<vmem>>, vector<1x32x16xf32>,
    %106 = vector.extract_strided_slice %69 {offsets = [0, 171], sizes = [32, 16], strides = [1, 1]} : vector<32x304xf32> to vector<32x16xf32>
    %c0_59 = arith.constant 0 : index
    %c0_60 = arith.constant 0 : index
    %c144 = arith.constant 144 : index
    %107 = vector.load %arg7[%c0_59, %c0_60, %c144] : memref<1x32x256xf32, #tpu.memory_space<vmem>>, vector<1x32x16xf32>
    %108 = vector.shape_cast %107 : vector<1x32x16xf32> to vector<32x16xf32>
    %109 = vector.shape_cast %106 : vector<32x16xf32> to vector<1x32x16xf32>
    tpu.vector_store %arg7[%c0_59, %c0_60, %c144], %109 {strides = array<i32>} : memref<1x32x256xf32, #tpu.memory_space<vmem>>, vector<1x32x16xf32>,
    %110 = vector.extract_strided_slice %69 {offsets = [0, 190], sizes = [32, 16], strides = [1, 1]} : vector<32x304xf32> to vector<32x16xf32>
    %c0_61 = arith.constant 0 : index
    %c0_62 = arith.constant 0 : index
    %c160 = arith.constant 160 : index
    %111 = vector.load %arg7[%c0_61, %c0_62, %c160] : memref<1x32x256xf32, #tpu.memory_space<vmem>>, vector<1x32x16xf32>
    %112 = vector.shape_cast %111 : vector<1x32x16xf32> to vector<32x16xf32>
    %113 = vector.shape_cast %110 : vector<32x16xf32> to vector<1x32x16xf32>
    tpu.vector_store %arg7[%c0_61, %c0_62, %c160], %113 {strides = array<i32>} : memref<1x32x256xf32, #tpu.memory_space<vmem>>, vector<1x32x16xf32>,
    %114 = vector.extract_strided_slice %69 {offsets = [0, 209], sizes = [32, 16], strides = [1, 1]} : vector<32x304xf32> to vector<32x16xf32>
    %c0_63 = arith.constant 0 : index
    %c0_64 = arith.constant 0 : index
    %c176 = arith.constant 176 : index
    %115 = vector.load %arg7[%c0_63, %c0_64, %c176] : memref<1x32x256xf32, #tpu.memory_space<vmem>>, vector<1x32x16xf32>
    %116 = vector.shape_cast %115 : vector<1x32x16xf32> to vector<32x16xf32>
    %117 = vector.shape_cast %114 : vector<32x16xf32> to vector<1x32x16xf32>
    tpu.vector_store %arg7[%c0_63, %c0_64, %c176], %117 {strides = array<i32>} : memref<1x32x256xf32, #tpu.memory_space<vmem>>, vector<1x32x16xf32>,
    %118 = vector.extract_strided_slice %69 {offsets = [0, 228], sizes = [32, 16], strides = [1, 1]} : vector<32x304xf32> to vector<32x16xf32>
    %c0_65 = arith.constant 0 : index
    %c0_66 = arith.constant 0 : index
    %c192 = arith.constant 192 : index
    %119 = vector.load %arg7[%c0_65, %c0_66, %c192] : memref<1x32x256xf32, #tpu.memory_space<vmem>>, vector<1x32x16xf32>
    %120 = vector.shape_cast %119 : vector<1x32x16xf32> to vector<32x16xf32>
    %121 = vector.shape_cast %118 : vector<32x16xf32> to vector<1x32x16xf32>
    tpu.vector_store %arg7[%c0_65, %c0_66, %c192], %121 {strides = array<i32>} : memref<1x32x256xf32, #tpu.memory_space<vmem>>, vector<1x32x16xf32>,
    %122 = vector.extract_strided_slice %69 {offsets = [0, 247], sizes = [32, 16], strides = [1, 1]} : vector<32x304xf32> to vector<32x16xf32>
    %c0_67 = arith.constant 0 : index
    %c0_68 = arith.constant 0 : index
    %c208 = arith.constant 208 : index
    %123 = vector.load %arg7[%c0_67, %c0_68, %c208] : memref<1x32x256xf32, #tpu.memory_space<vmem>>, vector<1x32x16xf32>
    %124 = vector.shape_cast %123 : vector<1x32x16xf32> to vector<32x16xf32>
    %125 = vector.shape_cast %122 : vector<32x16xf32> to vector<1x32x16xf32>
    tpu.vector_store %arg7[%c0_67, %c0_68, %c208], %125 {strides = array<i32>} : memref<1x32x256xf32, #tpu.memory_space<vmem>>, vector<1x32x16xf32>,
    %126 = vector.extract_strided_slice %69 {offsets = [0, 266], sizes = [32, 16], strides = [1, 1]} : vector<32x304xf32> to vector<32x16xf32>
    %c0_69 = arith.constant 0 : index
    %c0_70 = arith.constant 0 : index
    %c224 = arith.constant 224 : index
    %127 = vector.load %arg7[%c0_69, %c0_70, %c224] : memref<1x32x256xf32, #tpu.memory_space<vmem>>, vector<1x32x16xf32>
    %128 = vector.shape_cast %127 : vector<1x32x16xf32> to vector<32x16xf32>
    %129 = vector.shape_cast %126 : vector<32x16xf32> to vector<1x32x16xf32>
    tpu.vector_store %arg7[%c0_69, %c0_70, %c224], %129 {strides = array<i32>} : memref<1x32x256xf32, #tpu.memory_space<vmem>>, vector<1x32x16xf32>,
    %130 = vector.extract_strided_slice %69 {offsets = [0, 285], sizes = [32, 16], strides = [1, 1]} : vector<32x304xf32> to vector<32x16xf32>
    %c0_71 = arith.constant 0 : index
    %c0_72 = arith.constant 0 : index
    %c240 = arith.constant 240 : index
    %131 = vector.load %arg7[%c0_71, %c0_72, %c240] : memref<1x32x256xf32, #tpu.memory_space<vmem>>, vector<1x32x16xf32>
    %132 = vector.shape_cast %131 : vector<1x32x16xf32> to vector<32x16xf32>
    %133 = vector.shape_cast %130 : vector<32x16xf32> to vector<1x32x16xf32>
    tpu.vector_store %arg7[%c0_71, %c0_72, %c240], %133 {strides = array<i32>} : memref<1x32x256xf32, #tpu.memory_space<vmem>>, vector<1x32x16xf32>,
    return
  }
  func.func @transform_0(%arg0: i32) -> (i32, i32, i32) {
    %c0_i32 = arith.constant 0 : i32
    %c0_i32_0 = arith.constant 0 : i32
    %c0_i32_1 = arith.constant 0 : i32
    return %arg0, %c0_i32, %c0_i32_0 : i32, i32, i32
  }
  func.func @transform_1(%arg0: i32) -> (i32, i32, i32) {
    %c0_i32 = arith.constant 0 : i32
    %c0_i32_0 = arith.constant 0 : i32
    %c0_i32_1 = arith.constant 0 : i32
    %c0_i32_2 = arith.constant 0 : i32
    return %c0_i32, %c0_i32_0, %c0_i32_1 : i32, i32, i32
  }
  func.func @transform_2(%arg0: i32) -> (i32, i32) {
    %c0_i32 = arith.constant 0 : i32
    %c0_i32_0 = arith.constant 0 : i32
    %c0_i32_1 = arith.constant 0 : i32
    return %c0_i32, %c0_i32_0 : i32, i32
  }
  func.func @transform_3(%arg0: i32) -> (i32, i32) {
    %c0_i32 = arith.constant 0 : i32
    %c0_i32_0 = arith.constant 0 : i32
    %c0_i32_1 = arith.constant 0 : i32
    return %c0_i32, %c0_i32_0 : i32, i32
  }
  func.func @transform_4(%arg0: i32) -> (i32, i32, i32) {
    %c0_i32 = arith.constant 0 : i32
    %c0_i32_0 = arith.constant 0 : i32
    %c0_i32_1 = arith.constant 0 : i32
    %c0_i32_2 = arith.constant 0 : i32
    return %c0_i32, %c0_i32_0, %c0_i32_1 : i32, i32, i32
  }
  func.func @transform_5(%arg0: i32) -> (i32, i32) {
    %c0_i32 = arith.constant 0 : i32
    %c0_i32_0 = arith.constant 0 : i32
    %c0_i32_1 = arith.constant 0 : i32
    return %c0_i32, %c0_i32_0 : i32, i32
  }
  func.func @transform_6(%arg0: i32) -> (i32, i32, i32) {
    %c0_i32 = arith.constant 0 : i32
    %c0_i32_0 = arith.constant 0 : i32
    %c0_i32_1 = arith.constant 0 : i32
    return %arg0, %c0_i32, %c0_i32_0 : i32, i32, i32
  }
}

module attributes {stable_mosaic.version = 11 : i64} {
  func.func @_mlp_kernel(%arg0: i32, %arg1: i32, %arg2: memref<8x1024xf32, #tpu.memory_space<vmem>>, %arg3: memref<1024x128xf32, #tpu.memory_space<vmem>>, %arg4: memref<1x128xf32, #tpu.memory_space<vmem>>, %arg5: memref<128x64xf32, #tpu.memory_space<vmem>>, %arg6: memref<1x64xf32, #tpu.memory_space<vmem>>, %arg7: memref<64x128xf32, #tpu.memory_space<vmem>>, %arg8: memref<1x128xf32, #tpu.memory_space<vmem>>, %arg9: memref<8x128xf32, #tpu.memory_space<vmem>>, %arg10: memref<8x128xf32, #tpu.memory_space<vmem>>) attributes {dimension_semantics = [#tpu.dimension_semantics<parallel>, #tpu.dimension_semantics<arbitrary>], iteration_bounds = array<i64: 1, 8>, scalar_prefetch = 0 : i64, scratch_operands = 1 : i64, tpu.core_type = #tpu.core_type<tc>, window_params = [{transform_indices = @transform_0, window_bounds = array<i64: 8, 1024>}, {transform_indices = @transform_1, window_bounds = array<i64: 1024, 128>}, {pipeline_mode = #tpu.pipeline_mode<synchronous>, transform_indices = @transform_2, window_bounds = array<i64: 1, 128>}, {pipeline_mode = #tpu.pipeline_mode<synchronous>, transform_indices = @transform_3, window_bounds = array<i64: 128, 64>}, {pipeline_mode = #tpu.pipeline_mode<synchronous>, transform_indices = @transform_4, window_bounds = array<i64: 1, 64>}, {pipeline_mode = #tpu.pipeline_mode<synchronous>, transform_indices = @transform_5, window_bounds = array<i64: 64, 128>}, {pipeline_mode = #tpu.pipeline_mode<synchronous>, transform_indices = @transform_6, window_bounds = array<i64: 1, 128>}, {transform_indices = @transform_7, window_bounds = array<i64: 8, 128>}]} {
    %c0_i32 = arith.constant 0 : i32
    %0 = arith.cmpi eq, %arg1, %c0_i32 : i32
    %1 = arith.extui %0 : i1 to i32
    %c0_i32_0 = arith.constant 0 : i32
    %2 = arith.cmpi ne, %1, %c0_i32_0 : i32
    scf.if %2 {
      %cst_9 = arith.constant 0.000000e+00 : f32
      %12 = vector.broadcast %cst_9 : f32 to vector<8x128xf32>
      %c0_10 = arith.constant 0 : index
      %c0_11 = arith.constant 0 : index
      %13 = vector.load %arg10[%c0_10, %c0_11] : memref<8x128xf32, #tpu.memory_space<vmem>>, vector<8x128xf32>
      tpu.vector_store %arg10[%c0_10, %c0_11], %12 {strides = array<i32>} : memref<8x128xf32, #tpu.memory_space<vmem>>, vector<8x128xf32>,
    } else {
    }
    %c0 = arith.constant 0 : index
    %c0_1 = arith.constant 0 : index
    %3 = vector.load %arg10[%c0, %c0_1] : memref<8x128xf32, #tpu.memory_space<vmem>>, vector<8x128xf32>
    %c0_2 = arith.constant 0 : index
    %c0_3 = arith.constant 0 : index
    %4 = vector.load %arg2[%c0_2, %c0_3] : memref<8x1024xf32, #tpu.memory_space<vmem>>, vector<8x1024xf32>
    %c0_4 = arith.constant 0 : index
    %c0_5 = arith.constant 0 : index
    %5 = vector.load %arg3[%c0_4, %c0_5] : memref<1024x128xf32, #tpu.memory_space<vmem>>, vector<1024x128xf32>
    %cst = arith.constant dense<0.000000e+00> : vector<8x128xf32>
    %6 = tpu.matmul %4, %5, %cst {dimension_numbers = #tpu.dot_dimension_numbers<[1], [0], [0], [1], [0, 0, 1, 1], [], []>} : vector<8x1024xf32>, vector<1024x128xf32>, vector<8x128xf32> -> vector<8x128xf32>
    %7 = arith.addf %3, %6 : vector<8x128xf32>
    %c0_6 = arith.constant 0 : index
    %c0_7 = arith.constant 0 : index
    %8 = vector.load %arg10[%c0_6, %c0_7] : memref<8x128xf32, #tpu.memory_space<vmem>>, vector<8x128xf32>
    tpu.vector_store %arg10[%c0_6, %c0_7], %7 {strides = array<i32>} : memref<8x128xf32, #tpu.memory_space<vmem>>, vector<8x128xf32>,
    %c7_i32 = arith.constant 7 : i32
    %9 = arith.cmpi eq, %arg1, %c7_i32 : i32
    %10 = arith.extui %9 : i1 to i32
    %c0_i32_8 = arith.constant 0 : i32
    %11 = arith.cmpi ne, %10, %c0_i32_8 : i32
    scf.if %11 {
      %c0_9 = arith.constant 0 : index
      %c0_10 = arith.constant 0 : index
      %12 = vector.load %arg10[%c0_9, %c0_10] : memref<8x128xf32, #tpu.memory_space<vmem>>, vector<8x128xf32>
      %c0_11 = arith.constant 0 : index
      %c0_12 = arith.constant 0 : index
      %13 = vector.load %arg4[%c0_11, %c0_12] : memref<1x128xf32, #tpu.memory_space<vmem>>, vector<1x128xf32>
      %14 = vector.broadcast %13 : vector<1x128xf32> to vector<8x128xf32>
      %15 = arith.addf %12, %14 : vector<8x128xf32>
      %cst_13 = arith.constant 0.000000e+00 : f32
      %16 = vector.broadcast %cst_13 : f32 to vector<8x128xf32>
      %17 = arith.maximumf %15, %16 : vector<8x128xf32>
      %c0_14 = arith.constant 0 : index
      %c0_15 = arith.constant 0 : index
      %18 = vector.load %arg5[%c0_14, %c0_15] : memref<128x64xf32, #tpu.memory_space<vmem>>, vector<128x64xf32>
      %cst_16 = arith.constant dense<0.000000e+00> : vector<8x64xf32>
      %19 = tpu.matmul %17, %18, %cst_16 {dimension_numbers = #tpu.dot_dimension_numbers<[1], [0], [0], [1], [0, 0, 1, 1], [], []>} : vector<8x128xf32>, vector<128x64xf32>, vector<8x64xf32> -> vector<8x64xf32>
      %c0_17 = arith.constant 0 : index
      %c0_18 = arith.constant 0 : index
      %20 = vector.load %arg6[%c0_17, %c0_18] : memref<1x64xf32, #tpu.memory_space<vmem>>, vector<1x64xf32>
      %21 = vector.broadcast %20 : vector<1x64xf32> to vector<8x64xf32>
      %22 = arith.addf %19, %21 : vector<8x64xf32>
      %cst_19 = arith.constant 0.000000e+00 : f32
      %23 = vector.broadcast %cst_19 : f32 to vector<8x64xf32>
      %24 = arith.maximumf %22, %23 : vector<8x64xf32>
      %c0_20 = arith.constant 0 : index
      %c0_21 = arith.constant 0 : index
      %25 = vector.load %arg7[%c0_20, %c0_21] : memref<64x128xf32, #tpu.memory_space<vmem>>, vector<64x128xf32>
      %cst_22 = arith.constant dense<0.000000e+00> : vector<8x128xf32>
      %26 = tpu.matmul %24, %25, %cst_22 {dimension_numbers = #tpu.dot_dimension_numbers<[1], [0], [0], [1], [0, 0, 1, 1], [], []>} : vector<8x64xf32>, vector<64x128xf32>, vector<8x128xf32> -> vector<8x128xf32>
      %c0_23 = arith.constant 0 : index
      %c0_24 = arith.constant 0 : index
      %27 = vector.load %arg8[%c0_23, %c0_24] : memref<1x128xf32, #tpu.memory_space<vmem>>, vector<1x128xf32>
      %28 = vector.broadcast %27 : vector<1x128xf32> to vector<8x128xf32>
      %29 = arith.addf %26, %28 : vector<8x128xf32>
      %c0_25 = arith.constant 0 : index
      %c0_26 = arith.constant 0 : index
      %30 = vector.load %arg9[%c0_25, %c0_26] : memref<8x128xf32, #tpu.memory_space<vmem>>, vector<8x128xf32>
      tpu.vector_store %arg9[%c0_25, %c0_26], %29 {strides = array<i32>} : memref<8x128xf32, #tpu.memory_space<vmem>>, vector<8x128xf32>,
    } else {
    }
    return
  }
  func.func @transform_0(%arg0: i32, %arg1: i32) -> (i32, i32) {
    %c0_i32 = arith.constant 0 : i32
    return %arg0, %arg1 : i32, i32
  }
  func.func @transform_1(%arg0: i32, %arg1: i32) -> (i32, i32) {
    %c0_i32 = arith.constant 0 : i32
    %c0_i32_0 = arith.constant 0 : i32
    return %arg1, %c0_i32 : i32, i32
  }
  func.func @transform_2(%arg0: i32, %arg1: i32) -> (i32, i32) {
    %c0_i32 = arith.constant 0 : i32
    %c0_i32_0 = arith.constant 0 : i32
    %c0_i32_1 = arith.constant 0 : i32
    return %c0_i32, %c0_i32_0 : i32, i32
  }
  func.func @transform_3(%arg0: i32, %arg1: i32) -> (i32, i32) {
    %c0_i32 = arith.constant 0 : i32
    %c0_i32_0 = arith.constant 0 : i32
    %c0_i32_1 = arith.constant 0 : i32
    return %c0_i32, %c0_i32_0 : i32, i32
  }
  func.func @transform_4(%arg0: i32, %arg1: i32) -> (i32, i32) {
    %c0_i32 = arith.constant 0 : i32
    %c0_i32_0 = arith.constant 0 : i32
    %c0_i32_1 = arith.constant 0 : i32
    return %c0_i32, %c0_i32_0 : i32, i32
  }
  func.func @transform_5(%arg0: i32, %arg1: i32) -> (i32, i32) {
    %c0_i32 = arith.constant 0 : i32
    %c0_i32_0 = arith.constant 0 : i32
    %c0_i32_1 = arith.constant 0 : i32
    return %c0_i32, %c0_i32_0 : i32, i32
  }
  func.func @transform_6(%arg0: i32, %arg1: i32) -> (i32, i32) {
    %c0_i32 = arith.constant 0 : i32
    %c0_i32_0 = arith.constant 0 : i32
    %c0_i32_1 = arith.constant 0 : i32
    return %c0_i32, %c0_i32_0 : i32, i32
  }
  func.func @transform_7(%arg0: i32, %arg1: i32) -> (i32, i32) {
    %c0_i32 = arith.constant 0 : i32
    %c0_i32_0 = arith.constant 0 : i32
    return %arg0, %c0_i32 : i32, i32
  }
}

</mosaic_0001>

<llo_original>
// kernel: thai_char_cnn_forward.3
$region0: #{thai_char_cnn_forward.3}
  #allocation0 [shape = 'u32[]', space=smem, size = 0x4, offset = 0x4, fixed_abs, tag = 'smem constant byte address 0x4 - core index']
  #allocation1 [shape = 'u32[144,128]{1,0:T(1,128)}', space=vmem, size = 0x12000, scoped, tag = 'internal scratch']
  #allocation2 [shape = 'f32[8,128]{1,0:T(8,128)}', space=vmem, size = 0x1000, scoped, tag = 'scratch operand']
  %s0 = inlined_call_operand.vmem [shape: f32[8,8192], index: 0, kind: input, shape index: {}]
  %s1 = inlined_call_operand.vmem [shape: f32[8192,128], index: 1, kind: input, shape index: {}]
  %s2 = inlined_call_operand.vmem [shape: f32[1,128], index: 2, kind: input, shape index: {}]
  %s3 = inlined_call_operand.vmem [shape: f32[128,64], index: 3, kind: input, shape index: {}]
  %s4 = inlined_call_operand.vmem [shape: f32[1,64], index: 4, kind: input, shape index: {}]
  %s5 = inlined_call_operand.vmem [shape: f32[64,128], index: 5, kind: input, shape index: {}]
  %s6 = inlined_call_operand.vmem [shape: f32[1,128], index: 6, kind: input, shape index: {}]
  %s7 = inlined_call_operand.vmem [shape: f32[8,128], index: 7, kind: output, shape index: {}]
  %s8 = sld [smem:[#allocation0]]
  $region69: #{thai_char_cnn_forward.3} parent=0
    _
  %s10 = ssub.s32 1, %s8
  %s11 = scalar_select 0, %s10, %s8
  loop: start=0, step=1, limit=10
  $region2: #{thai_char_cnn_forward.3} parent=0 // loop_pre_header
    _
  $region3: #{thai_char_cnn_forward.3} parent=0 // loop_header
    %s13 = sphi 0, %s17
    %p14 = scmp.ge.s32.totalorder %s13, 10
    %s20 = sphi 0, %s32
    %s21 = sphi 0, %s28
    %s22 = sphi 0, %s20
    %s23 = sphi 0, %s21
    %s24 = sphi 0, %s22
    %s25 = sphi 0, %s23
    %s37 = sphi 0, %s39
    %s40 = sphi 0, %s37
    %s41 = sphi 0, %s40
    %s57 = sphi 0, %s41
    %s63 = sphi 0, %s65
    %s66 = sphi 0, %s63
    %s67 = sphi 0, %s66
    %s83 = sphi 0, %s67
    %s87 = sphi 0, %s87
    %s89 = sphi 0, %s87
    %s90 = sphi 0, %s89
    %s104 = sphi 0, %s90
    %s108 = sphi 0, %s108
    %s110 = sphi 0, %s108
    %s111 = sphi 0, %s110
    %s125 = sphi 0, %s111
    %s129 = sphi 0, %s129
    %s131 = sphi 0, %s129
    %s132 = sphi 0, %s131
    %s146 = sphi 0, %s132
    %s150 = sphi 0, %s150
    %s152 = sphi 0, %s150
    %s153 = sphi 0, %s152
    %s167 = sphi 0, %s153
    %s171 = sphi 0, %s171
    %s173 = sphi 0, %s171
    %s174 = sphi 0, %s173
    %s188 = sphi 0, %s174
    %s194 = sphi 0, %s196
    %s197 = sphi 0, %s194
    %s198 = sphi 0, %s197
    %s214 = sphi 0, %s198
  $region4: #{thai_char_cnn_forward.3} parent=0 // loop_header_branch
    %16 = sbr.rel (%p14) target = $region8
  $region5: #{thai_char_cnn_forward.3} parent=0 // loop_body
    %s18 = ssub.s32 %s13, 1
    %s19 = ssub.s32 %s13, 2
    %s26 = sadd.s32 1, %s21
    %p27 = scmp.ge.s32.totalorder %s26, 8
    %s28 = scalar_select %p27, 0, %s26
    %s29 = sadd.s32 1, %s20
    %s30 = scalar_select %p27, %s29, %s20
    %p31 = scmp.ge.s32.totalorder %s30, 1
    %s32 = scalar_select %p31, 0, %s30
    %s33 = ssub.s32 %s20, %s32
    %s34 = ssub.s32 %s21, %s28
    %s35 = sor.u32 %s33, %s34
    %p36 = scmp.eq.s32.totalorder %s35, 0
    %s38 = sadd.s32 %s37, 1
    %s39 = scalar_select %p36, %s37, %s38
    %p42 = pneg %p36
    %p43 = scmp.eq.s32.totalorder %s13, 7
    %p44 = por %p42, %p43
    %p45 = scmp.ne.s32.totalorder %s37, %s40
    %p46 = scmp.eq.s32.totalorder %s13, 0
    %p47 = por %p45, %p46
    %p48 = scmp.ne.s32.totalorder %s37, %s40
    %p49 = scmp.eq.s32.totalorder %s18, 7
    %p50 = por %p48, %p49
    %p51 = scmp.ne.s32.totalorder %s40, %s41
    %p52 = scmp.eq.s32.totalorder %s18, 0
    %p53 = por %p51, %p52
    %p54 = scmp.ne.s32.totalorder %s40, %s41
    %p55 = scmp.eq.s32.totalorder %s19, 7
    %p56 = por %p54, %p55
    %p58 = scmp.ne.s32.totalorder %s41, %s57
    %p59 = scmp.eq.s32.totalorder %s19, 0
    %p60 = por %p58, %p59
    %s61 = ssub.s32 %s21, %s28
    %p62 = scmp.eq.s32.totalorder %s61, 0
    %s64 = sadd.s32 %s63, 1
    %s65 = scalar_select %p62, %s63, %s64
    %p68 = pneg %p62
    %p69 = scmp.eq.s32.totalorder %s13, 7
    %p70 = por %p68, %p69
    %p71 = scmp.ne.s32.totalorder %s63, %s66
    %p72 = scmp.eq.s32.totalorder %s13, 0
    %p73 = por %p71, %p72
    %p74 = scmp.ne.s32.totalorder %s63, %s66
    %p75 = scmp.eq.s32.totalorder %s18, 7
    %p76 = por %p74, %p75
    %p77 = scmp.ne.s32.totalorder %s66, %s67
    %p78 = scmp.eq.s32.totalorder %s18, 0
    %p79 = por %p77, %p78
    %p80 = scmp.ne.s32.totalorder %s66, %s67
    %p81 = scmp.eq.s32.totalorder %s19, 7
    %p82 = por %p80, %p81
    %p84 = scmp.ne.s32.totalorder %s67, %s83
    %p85 = scmp.eq.s32.totalorder %s19, 0
    %p86 = por %p84, %p85
    %s88 = sadd.s32 %s87, 1
    %p91 = scmp.eq.s32.totalorder %s13, 7
    %p92 = scmp.ne.s32.totalorder %s87, %s89
    %p93 = scmp.eq.s32.totalorder %s13, 0
    %p94 = por %p92, %p93
    %p95 = scmp.ne.s32.totalorder %s87, %s89
    %p96 = scmp.eq.s32.totalorder %s18, 7
    %p97 = por %p95, %p96
    %p98 = scmp.ne.s32.totalorder %s89, %s90
    %p99 = scmp.eq.s32.totalorder %s18, 0
    %p100 = por %p98, %p99
    %p101 = scmp.ne.s32.totalorder %s89, %s90
    %p102 = scmp.eq.s32.totalorder %s19, 7
    %p103 = por %p101, %p102
    %p105 = scmp.ne.s32.totalorder %s90, %s104
    %p106 = scmp.eq.s32.totalorder %s19, 0
    %p107 = por %p105, %p106
    %s109 = sadd.s32 %s108, 1
    %p112 = scmp.eq.s32.totalorder %s13, 7
    %p113 = scmp.ne.s32.totalorder %s108, %s110
    %p114 = scmp.eq.s32.totalorder %s13, 0
    %p115 = por %p113, %p114
    %p116 = scmp.ne.s32.totalorder %s108, %s110
    %p117 = scmp.eq.s32.totalorder %s18, 7
    %p118 = por %p116, %p117
    %p119 = scmp.ne.s32.totalorder %s110, %s111
    %p120 = scmp.eq.s32.totalorder %s18, 0
    %p121 = por %p119, %p120
    %p122 = scmp.ne.s32.totalorder %s110, %s111
    %p123 = scmp.eq.s32.totalorder %s19, 7
    %p124 = por %p122, %p123
    %p126 = scmp.ne.s32.totalorder %s111, %s125
    %p127 = scmp.eq.s32.totalorder %s19, 0
    %p128 = por %p126, %p127
    %s130 = sadd.s32 %s129, 1
    %p133 = scmp.eq.s32.totalorder %s13, 7
    %p134 = scmp.ne.s32.totalorder %s129, %s131
    %p135 = scmp.eq.s32.totalorder %s13, 0
    %p136 = por %p134, %p135
    %p137 = scmp.ne.s32.totalorder %s129, %s131
    %p138 = scmp.eq.s32.totalorder %s18, 7
    %p139 = por %p137, %p138
    %p140 = scmp.ne.s32.totalorder %s131, %s132
    %p141 = scmp.eq.s32.totalorder %s18, 0
    %p142 = por %p140, %p141
    %p143 = scmp.ne.s32.totalorder %s131, %s132
    %p144 = scmp.eq.s32.totalorder %s19, 7
    %p145 = por %p143, %p144
    %p147 = scmp.ne.s32.totalorder %s132, %s146
    %p148 = scmp.eq.s32.totalorder %s19, 0
    %p149 = por %p147, %p148
    %s151 = sadd.s32 %s150, 1
    %p154 = scmp.eq.s32.totalorder %s13, 7
    %p155 = scmp.ne.s32.totalorder %s150, %s152
    %p156 = scmp.eq.s32.totalorder %s13, 0
    %p157 = por %p155, %p156
    %p158 = scmp.ne.s32.totalorder %s150, %s152
    %p159 = scmp.eq.s32.totalorder %s18, 7
    %p160 = por %p158, %p159
    %p161 = scmp.ne.s32.totalorder %s152, %s153
    %p162 = scmp.eq.s32.totalorder %s18, 0
    %p163 = por %p161, %p162
    %p164 = scmp.ne.s32.totalorder %s152, %s153
    %p165 = scmp.eq.s32.totalorder %s19, 7
    %p166 = por %p164, %p165
    %p168 = scmp.ne.s32.totalorder %s153, %s167
    %p169 = scmp.eq.s32.totalorder %s19, 0
    %p170 = por %p168, %p169
    %s172 = sadd.s32 %s171, 1
    %p175 = scmp.eq.s32.totalorder %s13, 7
    %p176 = scmp.ne.s32.totalorder %s171, %s173
    %p177 = scmp.eq.s32.totalorder %s13, 0
    %p178 = por %p176, %p177
    %p179 = scmp.ne.s32.totalorder %s171, %s173
    %p180 = scmp.eq.s32.totalorder %s18, 7
    %p181 = por %p179, %p180
    %p182 = scmp.ne.s32.totalorder %s173, %s174
    %p183 = scmp.eq.s32.totalorder %s18, 0
    %p184 = por %p182, %p183
    %p185 = scmp.ne.s32.totalorder %s173, %s174
    %p186 = scmp.eq.s32.totalorder %s19, 7
    %p187 = por %p185, %p186
    %p189 = scmp.ne.s32.totalorder %s174, %s188
    %p190 = scmp.eq.s32.totalorder %s19, 0
    %p191 = por %p189, %p190
    %s192 = ssub.s32 %s20, %s32
    %p193 = scmp.eq.s32.totalorder %s192, 0
    %s195 = sadd.s32 %s194, 1
    %s196 = scalar_select %p193, %s194, %s195
    %p199 = pneg %p193
    %p200 = scmp.eq.s32.totalorder %s13, 7
    %p201 = por %p199, %p200
    %p202 = scmp.ne.s32.totalorder %s194, %s197
    %p203 = scmp.eq.s32.totalorder %s13, 0
    %p204 = por %p202, %p203
    %p205 = scmp.ne.s32.totalorder %s194, %s197
    %p206 = scmp.eq.s32.totalorder %s18, 7
    %p207 = por %p205, %p206
    %p208 = scmp.ne.s32.totalorder %s197, %s198
    %p209 = scmp.eq.s32.totalorder %s18, 0
    %p210 = por %p208, %p209
    %p211 = scmp.ne.s32.totalorder %s197, %s198
    %p212 = scmp.eq.s32.totalorder %s19, 7
    %p213 = por %p211, %p212
    %p215 = scmp.ne.s32.totalorder %s198, %s214
    %p216 = scmp.eq.s32.totalorder %s19, 0
    %p217 = por %p215, %p216
    %p218 = scmp.le.s32.totalorder 1, %s13
    %p219 = scmp.lt.s32.totalorder %s13, 9
    %p220 = pnand %p218, %p219
    %p221 = pneg %p220
    // Predicated region
    $region9: #{thai_char_cnn_forward.3} parent=5 // pred_check
      _
    $region10: #{thai_char_cnn_forward.3} parent=5 // pred_check_branch
      %223 = sbr.rel (%p220) target = $region12
    $region11: #{thai_char_cnn_forward.3} parent=5 // pred_region
      %s224 = ssub.s32 %s13, 1
      // Predicated region
      $region13: #{thai_char_cnn_forward.3} parent=11 // pred_check
        %p225 = pneg %p100
      $region14: #{thai_char_cnn_forward.3} parent=11 // pred_check_branch
        %227 = sbr.rel (%p225) target = $region16
      $region15: #{thai_char_cnn_forward.3} parent=11 // pred_region
        _
      $region16: #{thai_char_cnn_forward.3} parent=11 // pred_fallthru
        _
      // Predicated region
      $region17: #{thai_char_cnn_forward.3} parent=11 // pred_check
        %p228 = pneg %p121
      $region18: #{thai_char_cnn_forward.3} parent=11 // pred_check_branch
        %230 = sbr.rel (%p228) target = $region20
      $region19: #{thai_char_cnn_forward.3} parent=11 // pred_region
        _
      $region20: #{thai_char_cnn_forward.3} parent=11 // pred_fallthru
        _
      // Predicated region
      $region21: #{thai_char_cnn_forward.3} parent=11 // pred_check
        %p231 = pneg %p142
      $region22: #{thai_char_cnn_forward.3} parent=11 // pred_check_branch
        %233 = sbr.rel (%p231) target = $region24
      $region23: #{thai_char_cnn_forward.3} parent=11 // pred_region
        _
      $region24: #{thai_char_cnn_forward.3} parent=11 // pred_fallthru
        _
      // Predicated region
      $region25: #{thai_char_cnn_forward.3} parent=11 // pred_check
        %p234 = pneg %p163
      $region26: #{thai_char_cnn_forward.3} parent=11 // pred_check_branch
        %236 = sbr.rel (%p234) target = $region28
      $region27: #{thai_char_cnn_forward.3} parent=11 // pred_region
        _
      $region28: #{thai_char_cnn_forward.3} parent=11 // pred_fallthru
        _
      // Predicated region
      $region29: #{thai_char_cnn_forward.3} parent=11 // pred_check
        %p237 = pneg %p184
      $region30: #{thai_char_cnn_forward.3} parent=11 // pred_check_branch
        %239 = sbr.rel (%p237) target = $region32
      $region31: #{thai_char_cnn_forward.3} parent=11 // pred_region
        _
      $region32: #{thai_char_cnn_forward.3} parent=11 // pred_fallthru
        _
    $region12: #{thai_char_cnn_forward.3} parent=5 // pred_fallthru
      _
    %p240 = scmp.lt.s32.totalorder %s13, 8
    // Predicated region
    $region33: #{thai_char_cnn_forward.3} parent=5 // pred_check
      %p241 = pneg %p240
    $region34: #{thai_char_cnn_forward.3} parent=5 // pred_check_branch
      %243 = sbr.rel (%p241) target = $region36
    $region35: #{thai_char_cnn_forward.3} parent=5 // pred_region
      // Predicated region
      $region37: #{thai_char_cnn_forward.3} parent=35 // pred_check
        %p244 = pneg %p47
      $region38: #{thai_char_cnn_forward.3} parent=35 // pred_check_branch
        %246 = sbr.rel (%p244) target = $region40
      $region39: #{thai_char_cnn_forward.3} parent=35 // pred_region
        %s247 = smul.u32 8, %s21
        %p248 = scmp.lt.s32.totalorder %s20, 0
        %s249 = scalar_select %p248, %s20, 0
        %p250 = scmp.lt.s32.totalorder %s247, 63
        %s251 = scalar_select %p250, %s247, 63
        %s252 = smul.addr %s249, 64
        %s253 = sadd.s32 %s251, %s252
        %s254 = smul.addr %s253, 8
        %s255 = scalar_lea.vmem %s0, %s254
        %s256 = smul.u32 8, %s21
      $region40: #{thai_char_cnn_forward.3} parent=35 // pred_fallthru
        _
      // Predicated region
      $region41: #{thai_char_cnn_forward.3} parent=35 // pred_check
        %p257 = pneg %p73
      $region42: #{thai_char_cnn_forward.3} parent=35 // pred_check_branch
        %259 = sbr.rel (%p257) target = $region44
      $region43: #{thai_char_cnn_forward.3} parent=35 // pred_region
        %s260 = smul.u32 128, %s21
        %p261 = scmp.lt.s32.totalorder %s260, 1023
        %s262 = scalar_select %p261, %s260, 1023
        %s263 = smul.addr %s262, 8
        %s264 = scalar_lea.vmem %s1, %s263
        %s265 = smul.u32 128, %s21
      $region44: #{thai_char_cnn_forward.3} parent=35 // pred_fallthru
        _
    $region36: #{thai_char_cnn_forward.3} parent=5 // pred_fallthru
      _
    %p266 = scmp.le.s32.totalorder 1, %s13
    %p267 = scmp.lt.s32.totalorder %s13, 9
    %p268 = pnand %p266, %p267
    %p269 = pneg %p268
    // Predicated region
    $region45: #{thai_char_cnn_forward.3} parent=5 // pred_check
      _
    $region46: #{thai_char_cnn_forward.3} parent=5 // pred_check_branch
      %271 = sbr.rel (%p268) target = $region48
    $region47: #{thai_char_cnn_forward.3} parent=5 // pred_region
      %s272 = ssub.s32 %s13, 1
      %s273 = smul.u32 8, %s23
      %p274 = scmp.lt.s32.totalorder %s22, 0
      %s275 = scalar_select %p274, %s22, 0
      %p276 = scmp.lt.s32.totalorder %s273, 63
      %s277 = scalar_select %p276, %s273, 63
      %s278 = smul.addr %s275, 64
      %s279 = sadd.s32 %s277, %s278
      %s280 = smul.addr %s279, 8
      %s281 = scalar_lea.vmem %s0, %s280
      %p282 = pneg %p53
      %p283 = pneg %p50
      %s284 = smul.u32 128, %s23
      %p285 = scmp.lt.s32.totalorder %s284, 1023
      %s286 = scalar_select %p285, %s284, 1023
      %s287 = smul.addr %s286, 8
      %s288 = scalar_lea.vmem %s1, %s287
      %p289 = pneg %p79
      %p290 = pneg %p76
      %p291 = pneg %p100
      %p292 = pneg %p97
      %p293 = pneg %p121
      %p294 = pneg %p118
      %p295 = pneg %p142
      %p296 = pneg %p139
      %p297 = pneg %p163
      %p298 = pneg %p160
      %p299 = pneg %p184
      %p300 = pneg %p181
      %p301 = pneg %p210
      %p302 = pneg %p207
      %p303 = scmp.lt.s32.totalorder %s22, 0
      %s304 = scalar_select %p303, %s22, 0
      %s305 = smul.addr %s304, 8
      %s306 = scalar_lea.vmem %s7, %s305
      %s307 = smul.u32 8, %s23
      %p308 = scmp.lt.s32.totalorder %s22, 0
      %s309 = scalar_select %p308, %s22, 0
      %p310 = scmp.lt.s32.totalorder %s307, 63
      %s311 = scalar_select %p310, %s307, 63
      %s312 = smul.addr %s309, 64
      %s313 = sadd.s32 %s311, %s312
      %s314 = smul.addr %s313, 8
      %s315 = scalar_lea.vmem %s0, %s314
      %s316 = smul.u32 8, %s23
      %s317 = smul.u32 128, %s23
      %p318 = scmp.lt.s32.totalorder %s317, 1023
      %s319 = scalar_select %p318, %s317, 1023
      %s320 = smul.addr %s319, 8
      %s321 = scalar_lea.vmem %s1, %s320
      %s322 = smul.u32 128, %s23
      %p323 = scmp.lt.s32.totalorder %s22, 0
      %s324 = scalar_select %p323, %s22, 0
      %s325 = smul.addr %s324, 8
      %s326 = scalar_lea.vmem %s7, %s325
      %p327 = scmp.eq.s32.totalorder %s23, 0
      // Predicated region
      $region49: #{thai_char_cnn_forward.3} parent=47 // pred_check
        %p328 = pneg %p327
      $region50: #{thai_char_cnn_forward.3} parent=47 // pred_check_branch
        %330 = sbr.rel (%p328) target = $region52
      $region51: #{thai_char_cnn_forward.3} parent=47 // pred_region
        %331 = vst [vmem:[#allocation2] sm:$0xff] 0.0
      $region52: #{thai_char_cnn_forward.3} parent=47 // pred_fallthru
        _
      %v332 = vld [vmem:[#allocation2] sm:$0xff]
      %v333 = vld [vmem:[%s315] sm:$0xff]
      %v334 = vld [vmem:[%s315 + $0x8] sm:$0xff]
      %v335 = vld [vmem:[%s315 + $0x10] sm:$0xff]
      %v336 = vld [vmem:[%s315 + $0x18] sm:$0xff]
      %v337 = vld [vmem:[%s315 + $0x20] sm:$0xff]
      %v338 = vld [vmem:[%s315 + $0x28] sm:$0xff]
      %v339 = vld [vmem:[%s315 + $0x30] sm:$0xff]
      %v340 = vld [vmem:[%s315 + $0x38] sm:$0xff]
      %v341 = vld [vmem:[%s321] sm:$0xff]
      %v342 = vld [vmem:[%s321 + $0x8] sm:$0xff]
      %v343 = vld [vmem:[%s321 + $0x10] sm:$0xff]
      %v344 = vld [vmem:[%s321 + $0x18] sm:$0xff]
      %v345 = vld [vmem:[%s321 + $0x20] sm:$0xff]
      %v346 = vld [vmem:[%s321 + $0x28] sm:$0xff]
      %v347 = vld [vmem:[%s321 + $0x30] sm:$0xff]
      %v348 = vld [vmem:[%s321 + $0x38] sm:$0xff]
      %v349 = vld [vmem:[%s321 + $0x40] sm:$0xff]
      %v350 = vld [vmem:[%s321 + $0x48] sm:$0xff]
      %v351 = vld [vmem:[%s321 + $0x50] sm:$0xff]
      %v352 = vld [vmem:[%s321 + $0x58] sm:$0xff]
      %v353 = vld [vmem:[%s321 + $0x60] sm:$0xff]
      %v354 = vld [vmem:[%s321 + $0x68] sm:$0xff]
      %v355 = vld [vmem:[%s321 + $0x70] sm:$0xff]
      %v356 = vld [vmem:[%s321 + $0x78] sm:$0xff]
      %v357 = vld [vmem:[%s321 + $0x80] sm:$0xff]
      %v358 = vld [vmem:[%s321 + $0x88] sm:$0xff]
      %v359 = vld [vmem:[%s321 + $0x90] sm:$0xff]
      %v360 = vld [vmem:[%s321 + $0x98] sm:$0xff]
      %v361 = vld [vmem:[%s321 + $0xa0] sm:$0xff]
      %v362 = vld [vmem:[%s321 + $0xa8] sm:$0xff]
      %v363 = vld [vmem:[%s321 + $0xb0] sm:$0xff]
      %v364 = vld [vmem:[%s321 + $0xb8] sm:$0xff]
      %v365 = vld [vmem:[%s321 + $0xc0] sm:$0xff]
      %v366 = vld [vmem:[%s321 + $0xc8] sm:$0xff]
      %v367 = vld [vmem:[%s321 + $0xd0] sm:$0xff]
      %v368 = vld [vmem:[%s321 + $0xd8] sm:$0xff]
      %v369 = vld [vmem:[%s321 + $0xe0] sm:$0xff]
      %v370 = vld [vmem:[%s321 + $0xe8] sm:$0xff]
      %v371 = vld [vmem:[%s321 + $0xf0] sm:$0xff]
      %v372 = vld [vmem:[%s321 + $0xf8] sm:$0xff]
      %v373 = vld [vmem:[%s321 + $0x100] sm:$0xff]
      %v374 = vld [vmem:[%s321 + $0x108] sm:$0xff]
      %v375 = vld [vmem:[%s321 + $0x110] sm:$0xff]
      %v376 = vld [vmem:[%s321 + $0x118] sm:$0xff]
      %v377 = vld [vmem:[%s321 + $0x120] sm:$0xff]
      %v378 = vld [vmem:[%s321 + $0x128] sm:$0xff]
      %v379 = vld [vmem:[%s321 + $0x130] sm:$0xff]
      %v380 = vld [vmem:[%s321 + $0x138] sm:$0xff]
      %v381 = vld [vmem:[%s321 + $0x140] sm:$0xff]
      %v382 = vld [vmem:[%s321 + $0x148] sm:$0xff]
      %v383 = vld [vmem:[%s321 + $0x150] sm:$0xff]
      %v384 = vld [vmem:[%s321 + $0x158] sm:$0xff]
      %v385 = vld [vmem:[%s321 + $0x160] sm:$0xff]
      %v386 = vld [vmem:[%s321 + $0x168] sm:$0xff]
      %v387 = vld [vmem:[%s321 + $0x170] sm:$0xff]
      %v388 = vld [vmem:[%s321 + $0x178] sm:$0xff]
      %v389 = vld [vmem:[%s321 + $0x180] sm:$0xff]
      %v390 = vld [vmem:[%s321 + $0x188] sm:$0xff]
      %v391 = vld [vmem:[%s321 + $0x190] sm:$0xff]
      %v392 = vld [vmem:[%s321 + $0x198] sm:$0xff]
      %v393 = vld [vmem:[%s321 + $0x1a0] sm:$0xff]
      %v394 = vld [vmem:[%s321 + $0x1a8] sm:$0xff]
      %v395 = vld [vmem:[%s321 + $0x1b0] sm:$0xff]
      %v396 = vld [vmem:[%s321 + $0x1b8] sm:$0xff]
      %v397 = vld [vmem:[%s321 + $0x1c0] sm:$0xff]
      %v398 = vld [vmem:[%s321 + $0x1c8] sm:$0xff]
      %v399 = vld [vmem:[%s321 + $0x1d0] sm:$0xff]
      %v400 = vld [vmem:[%s321 + $0x1d8] sm:$0xff]
      %v401 = vld [vmem:[%s321 + $0x1e0] sm:$0xff]
      %v402 = vld [vmem:[%s321 + $0x1e8] sm:$0xff]
      %v403 = vld [vmem:[%s321 + $0x1f0] sm:$0xff]
      %v404 = vld [vmem:[%s321 + $0x1f8] sm:$0xff]
      %v405 = vld [vmem:[%s321 + $0x200] sm:$0xff]
      %v406 = vld [vmem:[%s321 + $0x208] sm:$0xff]
      %v407 = vld [vmem:[%s321 + $0x210] sm:$0xff]
      %v408 = vld [vmem:[%s321 + $0x218] sm:$0xff]
      %v409 = vld [vmem:[%s321 + $0x220] sm:$0xff]
      %v410 = vld [vmem:[%s321 + $0x228] sm:$0xff]
      %v411 = vld [vmem:[%s321 + $0x230] sm:$0xff]
      %v412 = vld [vmem:[%s321 + $0x238] sm:$0xff]
      %v413 = vld [vmem:[%s321 + $0x240] sm:$0xff]
      %v414 = vld [vmem:[%s321 + $0x248] sm:$0xff]
      %v415 = vld [vmem:[%s321 + $0x250] sm:$0xff]
      %v416 = vld [vmem:[%s321 + $0x258] sm:$0xff]
      %v417 = vld [vmem:[%s321 + $0x260] sm:$0xff]
      %v418 = vld [vmem:[%s321 + $0x268] sm:$0xff]
      %v419 = vld [vmem:[%s321 + $0x270] sm:$0xff]
      %v420 = vld [vmem:[%s321 + $0x278] sm:$0xff]
      %v421 = vld [vmem:[%s321 + $0x280] sm:$0xff]
      %v422 = vld [vmem:[%s321 + $0x288] sm:$0xff]
      %v423 = vld [vmem:[%s321 + $0x290] sm:$0xff]
      %v424 = vld [vmem:[%s321 + $0x298] sm:$0xff]
      %v425 = vld [vmem:[%s321 + $0x2a0] sm:$0xff]
      %v426 = vld [vmem:[%s321 + $0x2a8] sm:$0xff]
      %v427 = vld [vmem:[%s321 + $0x2b0] sm:$0xff]
      %v428 = vld [vmem:[%s321 + $0x2b8] sm:$0xff]
      %v429 = vld [vmem:[%s321 + $0x2c0] sm:$0xff]
      %v430 = vld [vmem:[%s321 + $0x2c8] sm:$0xff]
      %v431 = vld [vmem:[%s321 + $0x2d0] sm:$0xff]
      %v432 = vld [vmem:[%s321 + $0x2d8] sm:$0xff]
      %v433 = vld [vmem:[%s321 + $0x2e0] sm:$0xff]
      %v434 = vld [vmem:[%s321 + $0x2e8] sm:$0xff]
      %v435 = vld [vmem:[%s321 + $0x2f0] sm:$0xff]
      %v436 = vld [vmem:[%s321 + $0x2f8] sm:$0xff]
      %v437 = vld [vmem:[%s321 + $0x300] sm:$0xff]
      %v438 = vld [vmem:[%s321 + $0x308] sm:$0xff]
      %v439 = vld [vmem:[%s321 + $0x310] sm:$0xff]
      %v440 = vld [vmem:[%s321 + $0x318] sm:$0xff]
      %v441 = vld [vmem:[%s321 + $0x320] sm:$0xff]
      %v442 = vld [vmem:[%s321 + $0x328] sm:$0xff]
      %v443 = vld [vmem:[%s321 + $0x330] sm:$0xff]
      %v444 = vld [vmem:[%s321 + $0x338] sm:$0xff]
      %v445 = vld [vmem:[%s321 + $0x340] sm:$0xff]
      %v446 = vld [vmem:[%s321 + $0x348] sm:$0xff]
      %v447 = vld [vmem:[%s321 + $0x350] sm:$0xff]
      %v448 = vld [vmem:[%s321 + $0x358] sm:$0xff]
      %v449 = vld [vmem:[%s321 + $0x360] sm:$0xff]
      %v450 = vld [vmem:[%s321 + $0x368] sm:$0xff]
      %v451 = vld [vmem:[%s321 + $0x370] sm:$0xff]
      %v452 = vld [vmem:[%s321 + $0x378] sm:$0xff]
      %v453 = vld [vmem:[%s321 + $0x380] sm:$0xff]
      %v454 = vld [vmem:[%s321 + $0x388] sm:$0xff]
      %v455 = vld [vmem:[%s321 + $0x390] sm:$0xff]
      %v456 = vld [vmem:[%s321 + $0x398] sm:$0xff]
      %v457 = vld [vmem:[%s321 + $0x3a0] sm:$0xff]
      %v458 = vld [vmem:[%s321 + $0x3a8] sm:$0xff]
      %v459 = vld [vmem:[%s321 + $0x3b0] sm:$0xff]
      %v460 = vld [vmem:[%s321 + $0x3b8] sm:$0xff]
      %v461 = vld [vmem:[%s321 + $0x3c0] sm:$0xff]
      %v462 = vld [vmem:[%s321 + $0x3c8] sm:$0xff]
      %v463 = vld [vmem:[%s321 + $0x3d0] sm:$0xff]
      %v464 = vld [vmem:[%s321 + $0x3d8] sm:$0xff]
      %v465 = vld [vmem:[%s321 + $0x3e0] sm:$0xff]
      %v466 = vld [vmem:[%s321 + $0x3e8] sm:$0xff]
      %v467 = vld [vmem:[%s321 + $0x3f0] sm:$0xff]
      %v468 = vld [vmem:[%s321 + $0x3f8] sm:$0xff]
      %469 = vmatprep.subr.mxu0 0.0
      %470 = vmatpush1.msra.mxu0 %v341
      %471 = vmatprep.subr.mxu0 0.0
      %472 = vmatpush1.msra.mxu0 %v342
      %473 = vmatprep.subr.mxu0 0.0
      %474 = vmatpush1.msra.mxu0 %v343
      %475 = vmatprep.subr.mxu0 0.0
      %476 = vmatpush1.msra.mxu0 %v344
      %477 = vmatprep.subr.mxu0 0.0
      %478 = vmatpush1.msra.mxu0 %v345
      %479 = vmatprep.subr.mxu0 0.0
      %480 = vmatpush1.msra.mxu0 %v346
      %481 = vmatprep.subr.mxu0 0.0
      %482 = vmatpush1.msra.mxu0 %v347
      %483 = vmatprep.subr.mxu0 0.0
      %484 = vmatpush1.msra.mxu0 %v348
      %485 = vmatprep.subr.mxu0 0.0
      %486 = vmatpush1.msra.mxu0 %v349
      %487 = vmatprep.subr.mxu0 0.0
      %488 = vmatpush1.msra.mxu0 %v350
      %489 = vmatprep.subr.mxu0 0.0
      %490 = vmatpush1.msra.mxu0 %v351
      %491 = vmatprep.subr.mxu0 0.0
      %492 = vmatpush1.msra.mxu0 %v352
      %493 = vmatprep.subr.mxu0 0.0
      %494 = vmatpush1.msra.mxu0 %v353
      %495 = vmatprep.subr.mxu0 0.0
      %496 = vmatpush1.msra.mxu0 %v354
      %497 = vmatprep.subr.mxu0 0.0
      %498 = vmatpush1.msra.mxu0 %v355
      %499 = vmatprep.subr.mxu0 0.0
      %500 = vmatpush1.msra.mxu0 %v356
      %501 = vmatprep.subr.mxu0 0.0
      %502 = vmatpush1.msra.mxu0 %v357
      %503 = vmatprep.subr.mxu0 0.0
      %504 = vmatpush1.msra.mxu0 %v358
      %505 = vmatprep.subr.mxu0 0.0
      %506 = vmatpush1.msra.mxu0 %v359
      %507 = vmatprep.subr.mxu0 0.0
      %508 = vmatpush1.msra.mxu0 %v360
      %509 = vmatprep.subr.mxu0 0.0
      %510 = vmatpush1.msra.mxu0 %v361
      %511 = vmatprep.subr.mxu0 0.0
      %512 = vmatpush1.msra.mxu0 %v362
      %513 = vmatprep.subr.mxu0 0.0
      %514 = vmatpush1.msra.mxu0 %v363
      %515 = vmatprep.subr.mxu0 0.0
      %516 = vmatpush1.msra.mxu0 %v364
      %517 = vmatprep.subr.mxu0 0.0
      %518 = vmatpush1.msra.mxu0 %v365
      %519 = vmatprep.subr.mxu0 0.0
      %520 = vmatpush1.msra.mxu0 %v366
      %521 = vmatprep.subr.mxu0 0.0
      %522 = vmatpush1.msra.mxu0 %v367
      %523 = vmatprep.subr.mxu0 0.0
      %524 = vmatpush1.msra.mxu0 %v368
      %525 = vmatprep.subr.mxu0 0.0
      %526 = vmatpush1.msra.mxu0 %v369
      %527 = vmatprep.subr.mxu0 0.0
      %528 = vmatpush1.msra.mxu0 %v370
      %529 = vmatprep.subr.mxu0 0.0
      %530 = vmatpush1.msra.mxu0 %v371
      %531 = vmatprep.subr.mxu0 0.0
      %532 = vmatpush1.msra.mxu0 %v372
      %533 = vmatprep.mubr.f32.mxu0 %v334
      %534 = vmatmul.mubr.f32.gmra.mrb[0].mxu0 %v333
      %v535 = vpop.f32.mrb[0].mxu0
      %v536 = vadd.f32 0.0, %v535
      %v537 = vpop.f32.mrb[0].mxu0
      %538 = vdwg.mxu0
      %539 = vmatprep.subr.mxu0 0.0
      %540 = vmatpush1.msra.mxu0 %v373
      %541 = vmatprep.subr.mxu0 0.0
      %542 = vmatpush1.msra.mxu0 %v374
      %543 = vmatprep.subr.mxu0 0.0
      %544 = vmatpush1.msra.mxu0 %v375
      %545 = vmatprep.subr.mxu0 0.0
      %546 = vmatpush1.msra.mxu0 %v376
      %547 = vmatprep.subr.mxu0 0.0
      %548 = vmatpush1.msra.mxu0 %v377
      %549 = vmatprep.subr.mxu0 0.0
      %550 = vmatpush1.msra.mxu0 %v378
      %551 = vmatprep.subr.mxu0 0.0
      %552 = vmatpush1.msra.mxu0 %v379
      %553 = vmatprep.subr.mxu0 0.0
      %554 = vmatpush1.msra.mxu0 %v380
      %555 = vmatprep.subr.mxu0 0.0
      %556 = vmatpush1.msra.mxu0 %v381
      %557 = vmatprep.subr.mxu0 0.0
      %558 = vmatpush1.msra.mxu0 %v382
      %559 = vmatprep.subr.mxu0 0.0
      %560 = vmatpush1.msra.mxu0 %v383
      %561 = vmatprep.subr.mxu0 0.0
      %562 = vmatpush1.msra.mxu0 %v384
      %563 = vmatprep.subr.mxu0 0.0
      %564 = vmatpush1.msra.mxu0 %v385
      %565 = vmatprep.subr.mxu0 0.0
      %566 = vmatpush1.msra.mxu0 %v386
      %567 = vmatprep.subr.mxu0 0.0
      %568 = vmatpush1.msra.mxu0 %v387
      %569 = vmatprep.subr.mxu0 0.0
      %570 = vmatpush1.msra.mxu0 %v388
      %571 = vmatprep.subr.mxu0 0.0
      %572 = vmatpush1.msra.mxu0 %v389
      %573 = vmatprep.subr.mxu0 0.0
      %574 = vmatpush1.msra.mxu0 %v390
      %575 = vmatprep.subr.mxu0 0.0
      %576 = vmatpush1.msra.mxu0 %v391
      %577 = vmatprep.subr.mxu0 0.0
      %578 = vmatpush1.msra.mxu0 %v392
      %579 = vmatprep.subr.mxu0 0.0
      %580 = vmatpush1.msra.mxu0 %v393
      %581 = vmatprep.subr.mxu0 0.0
      %582 = vmatpush1.msra.mxu0 %v394
      %583 = vmatprep.subr.mxu0 0.0
      %584 = vmatpush1.msra.mxu0 %v395
      %585 = vmatprep.subr.mxu0 0.0
      %586 = vmatpush1.msra.mxu0 %v396
      %587 = vmatprep.subr.mxu0 0.0
      %588 = vmatpush1.msra.mxu0 %v397
      %589 = vmatprep.subr.mxu0 0.0
      %590 = vmatpush1.msra.mxu0 %v398
      %591 = vmatprep.subr.mxu0 0.0
      %592 = vmatpush1.msra.mxu0 %v399
      %593 = vmatprep.subr.mxu0 0.0
      %594 = vmatpush1.msra.mxu0 %v400
      %595 = vmatprep.subr.mxu0 0.0
      %596 = vmatpush1.msra.mxu0 %v401
      %597 = vmatprep.subr.mxu0 0.0
      %598 = vmatpush1.msra.mxu0 %v402
      %599 = vmatprep.subr.mxu0 0.0
      %600 = vmatpush1.msra.mxu0 %v403
      %601 = vmatprep.subr.mxu0 0.0
      %602 = vmatpush1.msra.mxu0 %v404
      %603 = vmatprep.mubr.f32.mxu0 %v336
      %604 = vmatmul.mubr.f32.gmra.mrb[0].mxu0 %v335
      %v605 = vpop.f32.mrb[0].mxu0
      %v606 = vadd.f32 %v536, %v605
      %v607 = vpop.f32.mrb[0].mxu0
      %608 = vdwg.mxu0
      %609 = vmatprep.subr.mxu0 0.0
      %610 = vmatpush1.msra.mxu0 %v405
      %611 = vmatprep.subr.mxu0 0.0
      %612 = vmatpush1.msra.mxu0 %v406
      %613 = vmatprep.subr.mxu0 0.0
      %614 = vmatpush1.msra.mxu0 %v407
      %615 = vmatprep.subr.mxu0 0.0
      %616 = vmatpush1.msra.mxu0 %v408
      %617 = vmatprep.subr.mxu0 0.0
      %618 = vmatpush1.msra.mxu0 %v409
      %619 = vmatprep.subr.mxu0 0.0
      %620 = vmatpush1.msra.mxu0 %v410
      %621 = vmatprep.subr.mxu0 0.0
      %622 = vmatpush1.msra.mxu0 %v411
      %623 = vmatprep.subr.mxu0 0.0
      %624 = vmatpush1.msra.mxu0 %v412
      %625 = vmatprep.subr.mxu0 0.0
      %626 = vmatpush1.msra.mxu0 %v413
      %627 = vmatprep.subr.mxu0 0.0
      %628 = vmatpush1.msra.mxu0 %v414
      %629 = vmatprep.subr.mxu0 0.0
      %630 = vmatpush1.msra.mxu0 %v415
      %631 = vmatprep.subr.mxu0 0.0
      %632 = vmatpush1.msra.mxu0 %v416
      %633 = vmatprep.subr.mxu0 0.0
      %634 = vmatpush1.msra.mxu0 %v417
      %635 = vmatprep.subr.mxu0 0.0
      %636 = vmatpush1.msra.mxu0 %v418
      %637 = vmatprep.subr.mxu0 0.0
      %638 = vmatpush1.msra.mxu0 %v419
      %639 = vmatprep.subr.mxu0 0.0
      %640 = vmatpush1.msra.mxu0 %v420
      %641 = vmatprep.subr.mxu0 0.0
      %642 = vmatpush1.msra.mxu0 %v421
      %643 = vmatprep.subr.mxu0 0.0
      %644 = vmatpush1.msra.mxu0 %v422
      %645 = vmatprep.subr.mxu0 0.0
      %646 = vmatpush1.msra.mxu0 %v423
      %647 = vmatprep.subr.mxu0 0.0
      %648 = vmatpush1.msra.mxu0 %v424
      %649 = vmatprep.subr.mxu0 0.0
      %650 = vmatpush1.msra.mxu0 %v425
      %651 = vmatprep.subr.mxu0 0.0
      %652 = vmatpush1.msra.mxu0 %v426
      %653 = vmatprep.subr.mxu0 0.0
      %654 = vmatpush1.msra.mxu0 %v427
      %655 = vmatprep.subr.mxu0 0.0
      %656 = vmatpush1.msra.mxu0 %v428
      %657 = vmatprep.subr.mxu0 0.0
      %658 = vmatpush1.msra.mxu0 %v429
      %659 = vmatprep.subr.mxu0 0.0
      %660 = vmatpush1.msra.mxu0 %v430
      %661 = vmatprep.subr.mxu0 0.0
      %662 = vmatpush1.msra.mxu0 %v431
      %663 = vmatprep.subr.mxu0 0.0
      %664 = vmatpush1.msra.mxu0 %v432
      %665 = vmatprep.subr.mxu0 0.0
      %666 = vmatpush1.msra.mxu0 %v433
      %667 = vmatprep.subr.mxu0 0.0
      %668 = vmatpush1.msra.mxu0 %v434
      %669 = vmatprep.subr.mxu0 0.0
      %670 = vmatpush1.msra.mxu0 %v435
      %671 = vmatprep.subr.mxu0 0.0
      %672 = vmatpush1.msra.mxu0 %v436
      %673 = vmatprep.mubr.f32.mxu0 %v338
      %674 = vmatmul.mubr.f32.gmra.mrb[0].mxu0 %v337
      %v675 = vpop.f32.mrb[0].mxu0
      %v676 = vadd.f32 %v606, %v675
      %v677 = vpop.f32.mrb[0].mxu0
      %678 = vdwg.mxu0
      %679 = vmatprep.subr.mxu0 0.0
      %680 = vmatpush1.msra.mxu0 %v437
      %681 = vmatprep.subr.mxu0 0.0
      %682 = vmatpush1.msra.mxu0 %v438
      %683 = vmatprep.subr.mxu0 0.0
      %684 = vmatpush1.msra.mxu0 %v439
      %685 = vmatprep.subr.mxu0 0.0
      %686 = vmatpush1.msra.mxu0 %v440
      %687 = vmatprep.subr.mxu0 0.0
      %688 = vmatpush1.msra.mxu0 %v441
      %689 = vmatprep.subr.mxu0 0.0
      %690 = vmatpush1.msra.mxu0 %v442
      %691 = vmatprep.subr.mxu0 0.0
      %692 = vmatpush1.msra.mxu0 %v443
      %693 = vmatprep.subr.mxu0 0.0
      %694 = vmatpush1.msra.mxu0 %v444
      %695 = vmatprep.subr.mxu0 0.0
      %696 = vmatpush1.msra.mxu0 %v445
      %697 = vmatprep.subr.mxu0 0.0
      %698 = vmatpush1.msra.mxu0 %v446
      %699 = vmatprep.subr.mxu0 0.0
      %700 = vmatpush1.msra.mxu0 %v447
      %701 = vmatprep.subr.mxu0 0.0
      %702 = vmatpush1.msra.mxu0 %v448
      %703 = vmatprep.subr.mxu0 0.0
      %704 = vmatpush1.msra.mxu0 %v449
      %705 = vmatprep.subr.mxu0 0.0
      %706 = vmatpush1.msra.mxu0 %v450
      %707 = vmatprep.subr.mxu0 0.0
      %708 = vmatpush1.msra.mxu0 %v451
      %709 = vmatprep.subr.mxu0 0.0
      %710 = vmatpush1.msra.mxu0 %v452
      %711 = vmatprep.subr.mxu0 0.0
      %712 = vmatpush1.msra.mxu0 %v453
      %713 = vmatprep.subr.mxu0 0.0
      %714 = vmatpush1.msra.mxu0 %v454
      %715 = vmatprep.subr.mxu0 0.0
      %716 = vmatpush1.msra.mxu0 %v455
      %717 = vmatprep.subr.mxu0 0.0
      %718 = vmatpush1.msra.mxu0 %v456
      %719 = vmatprep.subr.mxu0 0.0
      %720 = vmatpush1.msra.mxu0 %v457
      %721 = vmatprep.subr.mxu0 0.0
      %722 = vmatpush1.msra.mxu0 %v458
      %723 = vmatprep.subr.mxu0 0.0
      %724 = vmatpush1.msra.mxu0 %v459
      %725 = vmatprep.subr.mxu0 0.0
      %726 = vmatpush1.msra.mxu0 %v460
      %727 = vmatprep.subr.mxu0 0.0
      %728 = vmatpush1.msra.mxu0 %v461
      %729 = vmatprep.subr.mxu0 0.0
      %730 = vmatpush1.msra.mxu0 %v462
      %731 = vmatprep.subr.mxu0 0.0
      %732 = vmatpush1.msra.mxu0 %v463
      %733 = vmatprep.subr.mxu0 0.0
      %734 = vmatpush1.msra.mxu0 %v464
      %735 = vmatprep.subr.mxu0 0.0
      %736 = vmatpush1.msra.mxu0 %v465
      %737 = vmatprep.subr.mxu0 0.0
      %738 = vmatpush1.msra.mxu0 %v466
      %739 = vmatprep.subr.mxu0 0.0
      %740 = vmatpush1.msra.mxu0 %v467
      %741 = vmatprep.subr.mxu0 0.0
      %742 = vmatpush1.msra.mxu0 %v468
      %743 = vmatprep.mubr.f32.mxu0 %v340
      %744 = vmatmul.mubr.f32.gmra.mrb[0].mxu0 %v339
      %v745 = vpop.f32.mrb[0].mxu0
      %v746 = vadd.f32 %v676, %v745
      %v747 = vpop.f32.mrb[0].mxu0
      %748 = vdwg.mxu0
      %v749 = vadd.f32 %v332, %v746
      %750 = vst [vmem:[#allocation2] sm:$0xff] %v749
      %p751 = scmp.eq.s32.totalorder %s23, 7
      // Predicated region
      $region53: #{thai_char_cnn_forward.3} parent=47 // pred_check
        %p752 = pneg %p751
      $region54: #{thai_char_cnn_forward.3} parent=47 // pred_check_branch
        %754 = sbr.rel (%p752) target = $region56
      $region55: #{thai_char_cnn_forward.3} parent=47 // pred_region
        %v755 = vld [vmem:[#allocation2] sm:$0xff]
        %v756 = vld [vmem:[%s2] sm:$0x1]
        %v758 = vlaneseq
        %v759 = vshrl.u32 %v758, 7
        %v760 = vsub.s32 0, %v759
        %v761 = vrot.slane %v756, %v760
        %v763 = vadd.f32 %v755, %v761
        %v764 = vmax.f32 %v763, 0.0
        %v765 = vld [vmem:[%s3] sm:$0xff]
        %v766 = vld [vmem:[%s3 + $0x8] sm:$0xff]
        %v767 = vld [vmem:[%s3 + $0x10] sm:$0xff]
        %v768 = vld [vmem:[%s3 + $0x18] sm:$0xff]
        %v769 = vld [vmem:[%s3 + $0x20] sm:$0xff]
        %v770 = vld [vmem:[%s3 + $0x28] sm:$0xff]
        %v771 = vld [vmem:[%s3 + $0x30] sm:$0xff]
        %v772 = vld [vmem:[%s3 + $0x38] sm:$0xff]
        %v773 = vld [vmem:[%s3 + $0x40] sm:$0xff]
        %v774 = vld [vmem:[%s3 + $0x48] sm:$0xff]
        %v775 = vld [vmem:[%s3 + $0x50] sm:$0xff]
        %v776 = vld [vmem:[%s3 + $0x58] sm:$0xff]
        %v777 = vld [vmem:[%s3 + $0x60] sm:$0xff]
        %v778 = vld [vmem:[%s3 + $0x68] sm:$0xff]
        %v779 = vld [vmem:[%s3 + $0x70] sm:$0xff]
        %v780 = vld [vmem:[%s3 + $0x78] sm:$0xff]
        %v781 = vld [vmem:[%s4] sm:$0x1]
        %v783 = vlaneseq
        %v784 = vshrl.u32 %v783, 7
        %v785 = vsub.s32 0, %v784
        %v786 = vrot.slane %v781, %v785
        %788 = vmatprep.subr.mxu0 0.0
        %789 = vmatpush1.msra.mxu0 %v765
        %790 = vmatprep.subr.mxu0 0.0
        %791 = vmatpush1.msra.mxu0 %v766
        %792 = vmatprep.subr.mxu0 0.0
        %793 = vmatpush1.msra.mxu0 %v767
        %794 = vmatprep.subr.mxu0 0.0
        %795 = vmatpush1.msra.mxu0 %v768
        %796 = vmatprep.subr.mxu0 0.0
        %797 = vmatpush1.msra.mxu0 %v769
        %798 = vmatprep.subr.mxu0 0.0
        %799 = vmatpush1.msra.mxu0 %v770
        %800 = vmatprep.subr.mxu0 0.0
        %801 = vmatpush1.msra.mxu0 %v771
        %802 = vmatprep.subr.mxu0 0.0
        %803 = vmatpush1.msra.mxu0 %v772
        %804 = vmatprep.subr.mxu0 0.0
        %805 = vmatpush1.msra.mxu0 %v773
        %806 = vmatprep.subr.mxu0 0.0
        %807 = vmatpush1.msra.mxu0 %v774
        %808 = vmatprep.subr.mxu0 0.0
        %809 = vmatpush1.msra.mxu0 %v775
        %810 = vmatprep.subr.mxu0 0.0
        %811 = vmatpush1.msra.mxu0 %v776
        %812 = vmatprep.subr.mxu0 0.0
        %813 = vmatpush1.msra.mxu0 %v777
        %814 = vmatprep.subr.mxu0 0.0
        %815 = vmatpush1.msra.mxu0 %v778
        %816 = vmatprep.subr.mxu0 0.0
        %817 = vmatpush1.msra.mxu0 %v779
        %818 = vmatprep.subr.mxu0 0.0
        %819 = vmatpush1.msra.mxu0 %v780
        %820 = vmatprep.subr.mxu0 0.0
        %821 = vmatpush1.msra.mxu0 0.0
        %822 = vmatprep.subr.mxu0 0.0
        %823 = vmatpush1.msra.mxu0 0.0
        %824 = vmatprep.subr.mxu0 0.0
        %825 = vmatpush1.msra.mxu0 0.0
        %826 = vmatprep.subr.mxu0 0.0
        %827 = vmatpush1.msra.mxu0 0.0
        %828 = vmatprep.subr.mxu0 0.0
        %829 = vmatpush1.msra.mxu0 0.0
        %830 = vmatprep.subr.mxu0 0.0
        %831 = vmatpush1.msra.mxu0 0.0
        %832 = vmatprep.subr.mxu0 0.0
        %833 = vmatpush1.msra.mxu0 0.0
        %834 = vmatprep.subr.mxu0 0.0
        %835 = vmatpush1.msra.mxu0 0.0
        %836 = vmatprep.subr.mxu0 0.0
        %837 = vmatpush1.msra.mxu0 0.0
        %838 = vmatprep.subr.mxu0 0.0
        %839 = vmatpush1.msra.mxu0 0.0
        %840 = vmatprep.subr.mxu0 0.0
        %841 = vmatpush1.msra.mxu0 0.0
        %842 = vmatprep.subr.mxu0 0.0
        %843 = vmatpush1.msra.mxu0 0.0
        %844 = vmatprep.subr.mxu0 0.0
        %845 = vmatpush1.msra.mxu0 0.0
        %846 = vmatprep.subr.mxu0 0.0
        %847 = vmatpush1.msra.mxu0 0.0
        %848 = vmatprep.subr.mxu0 0.0
        %849 = vmatpush1.msra.mxu0 0.0
        %850 = vmatprep.subr.mxu0 0.0
        %851 = vmatpush1.msra.mxu0 0.0
        %852 = vmatprep.mubr.f32.mxu0 0.0
        %853 = vmatmul.mubr.f32.gmra.mrb[0].mxu0 %v764
        %v854 = vpop.f32.mrb[0].mxu0
        %v855 = vadd.f32 %v786, %v854
        %v856 = vpop.f32.mrb[0].mxu0
        %857 = vdwg.mxu0
        %v858 = vmax.f32 %v855, 0.0
        %v859 = vld [vmem:[%s5] sm:$0xff]
        %v860 = vld [vmem:[%s5 + $0x8] sm:$0xff]
        %v861 = vld [vmem:[%s5 + $0x10] sm:$0xff]
        %v862 = vld [vmem:[%s5 + $0x18] sm:$0xff]
        %v863 = vld [vmem:[%s5 + $0x20] sm:$0xff]
        %v864 = vld [vmem:[%s5 + $0x28] sm:$0xff]
        %v865 = vld [vmem:[%s5 + $0x30] sm:$0xff]
        %v866 = vld [vmem:[%s5 + $0x38] sm:$0xff]
        %v867 = vld [vmem:[%s6] sm:$0x1]
        %v869 = vlaneseq
        %v870 = vshrl.u32 %v869, 7
        %v871 = vsub.s32 0, %v870
        %v872 = vrot.slane %v867, %v871
        %vm874 = vcmask 523264
        %v876 = vsel %vm874, %v858, 0
        %878 = vmatprep.subr.mxu0 0.0
        %879 = vmatpush1.msra.mxu0 %v859
        %880 = vmatprep.subr.mxu0 0.0
        %881 = vmatpush1.msra.mxu0 %v860
        %882 = vmatprep.subr.mxu0 0.0
        %883 = vmatpush1.msra.mxu0 %v861
        %884 = vmatprep.subr.mxu0 0.0
        %885 = vmatpush1.msra.mxu0 %v862
        %886 = vmatprep.subr.mxu0 0.0
        %887 = vmatpush1.msra.mxu0 %v863
        %888 = vmatprep.subr.mxu0 0.0
        %889 = vmatpush1.msra.mxu0 %v864
        %890 = vmatprep.subr.mxu0 0.0
        %891 = vmatpush1.msra.mxu0 %v865
        %892 = vmatprep.subr.mxu0 0.0
        %893 = vmatpush1.msra.mxu0 %v866
        %894 = vmatprep.subr.mxu0 0.0
        %895 = vmatpush1.msra.mxu0 0.0
        %896 = vmatprep.subr.mxu0 0.0
        %897 = vmatpush1.msra.mxu0 0.0
        %898 = vmatprep.subr.mxu0 0.0
        %899 = vmatpush1.msra.mxu0 0.0
        %900 = vmatprep.subr.mxu0 0.0
        %901 = vmatpush1.msra.mxu0 0.0
        %902 = vmatprep.subr.mxu0 0.0
        %903 = vmatpush1.msra.mxu0 0.0
        %904 = vmatprep.subr.mxu0 0.0
        %905 = vmatpush1.msra.mxu0 0.0
        %906 = vmatprep.subr.mxu0 0.0
        %907 = vmatpush1.msra.mxu0 0.0
        %908 = vmatprep.subr.mxu0 0.0
        %909 = vmatpush1.msra.mxu0 0.0
        %910 = vmatprep.subr.mxu0 0.0
        %911 = vmatpush1.msra.mxu0 0.0
        %912 = vmatprep.subr.mxu0 0.0
        %913 = vmatpush1.msra.mxu0 0.0
        %914 = vmatprep.subr.mxu0 0.0
        %915 = vmatpush1.msra.mxu0 0.0
        %916 = vmatprep.subr.mxu0 0.0
        %917 = vmatpush1.msra.mxu0 0.0
        %918 = vmatprep.subr.mxu0 0.0
        %919 = vmatpush1.msra.mxu0 0.0
        %920 = vmatprep.subr.mxu0 0.0
        %921 = vmatpush1.msra.mxu0 0.0
        %922 = vmatprep.subr.mxu0 0.0
        %923 = vmatpush1.msra.mxu0 0.0
        %924 = vmatprep.subr.mxu0 0.0
        %925 = vmatpush1.msra.mxu0 0.0
        %926 = vmatprep.subr.mxu0 0.0
        %927 = vmatpush1.msra.mxu0 0.0
        %928 = vmatprep.subr.mxu0 0.0
        %929 = vmatpush1.msra.mxu0 0.0
        %930 = vmatprep.subr.mxu0 0.0
        %931 = vmatpush1.msra.mxu0 0.0
        %932 = vmatprep.subr.mxu0 0.0
        %933 = vmatpush1.msra.mxu0 0.0
        %934 = vmatprep.subr.mxu0 0.0
        %935 = vmatpush1.msra.mxu0 0.0
        %936 = vmatprep.subr.mxu0 0.0
        %937 = vmatpush1.msra.mxu0 0.0
        %938 = vmatprep.subr.mxu0 0.0
        %939 = vmatpush1.msra.mxu0 0.0
        %940 = vmatprep.subr.mxu0 0.0
        %941 = vmatpush1.msra.mxu0 0.0
        %942 = vmatprep.mubr.f32.mxu0 0.0
        %943 = vmatmul.mubr.f32.gmra.mrb[0].mxu0 %v876
        %v944 = vpop.f32.mrb[0].mxu0
        %v945 = vadd.f32 %v872, %v944
        %v946 = vpop.f32.mrb[0].mxu0
        %947 = vdwg.mxu0
        %948 = vst [vmem:[%s326] sm:$0xff] %v945
      $region56: #{thai_char_cnn_forward.3} parent=47 // pred_fallthru
        _
      %p949 = scmp.lt.s32.totalorder %s22, 0
      %s950 = scalar_select %p949, %s22, 0
      %s951 = smul.addr %s950, 8
      %s952 = scalar_lea.vmem %s7, %s951
      // Predicated region
      $region57: #{thai_char_cnn_forward.3} parent=47 // pred_check
        %p953 = pneg %p207
      $region58: #{thai_char_cnn_forward.3} parent=47 // pred_check_branch
        %955 = sbr.rel (%p953) target = $region60
      $region59: #{thai_char_cnn_forward.3} parent=47 // pred_region
        _
      $region60: #{thai_char_cnn_forward.3} parent=47 // pred_fallthru
        _
      // Predicated region
      $region61: #{thai_char_cnn_forward.3} parent=47 // pred_check
        %p956 = pneg %p207
      $region62: #{thai_char_cnn_forward.3} parent=47 // pred_check_branch
        %958 = sbr.rel (%p956) target = $region64
      $region63: #{thai_char_cnn_forward.3} parent=47 // pred_region
        %p959 = scmp.lt.s32.totalorder %s22, 0
        %s960 = scalar_select %p959, %s22, 0
        %s961 = smul.addr %s960, 8
        %s962 = scalar_lea.vmem %s7, %s961
      $region64: #{thai_char_cnn_forward.3} parent=47 // pred_fallthru
        _
    $region48: #{thai_char_cnn_forward.3} parent=5 // pred_fallthru
      _
    %p963 = scmp.le.s32.totalorder 2, %s13
    // Predicated region
    $region65: #{thai_char_cnn_forward.3} parent=5 // pred_check
      %p964 = pneg %p963
    $region66: #{thai_char_cnn_forward.3} parent=5 // pred_check_branch
      %966 = sbr.rel (%p964) target = $region68
    $region67: #{thai_char_cnn_forward.3} parent=5 // pred_region
      %s967 = ssub.s32 %s13, 2
    $region68: #{thai_char_cnn_forward.3} parent=5 // pred_fallthru
      _
  $region6: #{thai_char_cnn_forward.3} parent=0 // loop_footer
    %s17 = sadd.s32 1, %s13
  $region7: #{thai_char_cnn_forward.3} parent=0 // loop_footer_branch
    %12 = sbr.rel target = $region3
  $region8: #{thai_char_cnn_forward.3} parent=0 // loop_exit
    _

// kernel: thai_char_cnn_forward.2
$region0: #{thai_char_cnn_forward.2}
  #allocation0 [shape = 'u32[]', space=smem, size = 0x4, offset = 0x4, fixed_abs, tag = 'smem constant byte address 0x4 - core index']
  #allocation1 [shape = 'u32[144,128]{1,0:T(1,128)}', space=vmem, size = 0x12000, scoped, tag = 'internal scratch']
  %s0 = inlined_call_operand.vmem [shape: f32[8,16,361], index: 0, kind: input, shape index: {}]
  %s1 = inlined_call_operand.vmem [shape: f32[4,256,16], index: 1, kind: input, shape index: {}]
  %s2 = inlined_call_operand.vmem [shape: f32[256,1], index: 2, kind: input, shape index: {}]
  %s3 = inlined_call_operand.vmem [shape: f32[64,324], index: 3, kind: input, shape index: {}]
  %s4 = inlined_call_operand.vmem [shape: f32[4,128,64], index: 4, kind: input, shape index: {}]
  %s5 = inlined_call_operand.vmem [shape: f32[128,1], index: 5, kind: input, shape index: {}]
  %s6 = inlined_call_operand.vmem [shape: f32[8,32,256], index: 6, kind: output, shape index: {}]
  %s7 = sld [smem:[#allocation0]]
  $region57: #{thai_char_cnn_forward.2} parent=0
    _
  %s9 = ssub.s32 1, %s7
  %s10 = scalar_select 0, %s9, %s7
  loop: start=0, step=1, limit=10
  $region2: #{thai_char_cnn_forward.2} parent=0 // loop_pre_header
    _
  $region3: #{thai_char_cnn_forward.2} parent=0 // loop_header
    %s12 = sphi 0, %s16
    %p13 = scmp.ge.s32.totalorder %s12, 10
    %s22 = sphi 0, %s24
    %s25 = sphi 0, %s22
    %s26 = sphi 0, %s25
    %s42 = sphi 0, %s26
    %s46 = sphi 0, %s46
    %s48 = sphi 0, %s46
    %s49 = sphi 0, %s48
    %s63 = sphi 0, %s49
    %s67 = sphi 0, %s67
    %s69 = sphi 0, %s67
    %s70 = sphi 0, %s69
    %s84 = sphi 0, %s70
    %s88 = sphi 0, %s88
    %s90 = sphi 0, %s88
    %s91 = sphi 0, %s90
    %s105 = sphi 0, %s91
    %s109 = sphi 0, %s109
    %s111 = sphi 0, %s109
    %s112 = sphi 0, %s111
    %s126 = sphi 0, %s112
    %s130 = sphi 0, %s130
    %s132 = sphi 0, %s130
    %s133 = sphi 0, %s132
    %s147 = sphi 0, %s133
    %s153 = sphi 0, %s155
    %s156 = sphi 0, %s153
    %s157 = sphi 0, %s156
    %s173 = sphi 0, %s157
  $region4: #{thai_char_cnn_forward.2} parent=0 // loop_header_branch
    %15 = sbr.rel (%p13) target = $region8
  $region5: #{thai_char_cnn_forward.2} parent=0 // loop_body
    %s17 = ssub.s32 %s12, 1
    %s18 = ssub.s32 %s12, 2
    %s19 = sadd.s32 %s12, 1
    %s20 = ssub.s32 %s12, %s19
    %p21 = scmp.eq.s32.totalorder %s20, 0
    %s23 = sadd.s32 %s22, 1
    %s24 = scalar_select %p21, %s22, %s23
    %p27 = pneg %p21
    %p28 = scmp.eq.s32.totalorder %s12, 7
    %p29 = por %p27, %p28
    %p30 = scmp.ne.s32.totalorder %s22, %s25
    %p31 = scmp.eq.s32.totalorder %s12, 0
    %p32 = por %p30, %p31
    %p33 = scmp.ne.s32.totalorder %s22, %s25
    %p34 = scmp.eq.s32.totalorder %s17, 7
    %p35 = por %p33, %p34
    %p36 = scmp.ne.s32.totalorder %s25, %s26
    %p37 = scmp.eq.s32.totalorder %s17, 0
    %p38 = por %p36, %p37
    %p39 = scmp.ne.s32.totalorder %s25, %s26
    %p40 = scmp.eq.s32.totalorder %s18, 7
    %p41 = por %p39, %p40
    %p43 = scmp.ne.s32.totalorder %s26, %s42
    %p44 = scmp.eq.s32.totalorder %s18, 0
    %p45 = por %p43, %p44
    %s47 = sadd.s32 %s46, 1
    %p50 = scmp.eq.s32.totalorder %s12, 7
    %p51 = scmp.ne.s32.totalorder %s46, %s48
    %p52 = scmp.eq.s32.totalorder %s12, 0
    %p53 = por %p51, %p52
    %p54 = scmp.ne.s32.totalorder %s46, %s48
    %p55 = scmp.eq.s32.totalorder %s17, 7
    %p56 = por %p54, %p55
    %p57 = scmp.ne.s32.totalorder %s48, %s49
    %p58 = scmp.eq.s32.totalorder %s17, 0
    %p59 = por %p57, %p58
    %p60 = scmp.ne.s32.totalorder %s48, %s49
    %p61 = scmp.eq.s32.totalorder %s18, 7
    %p62 = por %p60, %p61
    %p64 = scmp.ne.s32.totalorder %s49, %s63
    %p65 = scmp.eq.s32.totalorder %s18, 0
    %p66 = por %p64, %p65
    %s68 = sadd.s32 %s67, 1
    %p71 = scmp.eq.s32.totalorder %s12, 7
    %p72 = scmp.ne.s32.totalorder %s67, %s69
    %p73 = scmp.eq.s32.totalorder %s12, 0
    %p74 = por %p72, %p73
    %p75 = scmp.ne.s32.totalorder %s67, %s69
    %p76 = scmp.eq.s32.totalorder %s17, 7
    %p77 = por %p75, %p76
    %p78 = scmp.ne.s32.totalorder %s69, %s70
    %p79 = scmp.eq.s32.totalorder %s17, 0
    %p80 = por %p78, %p79
    %p81 = scmp.ne.s32.totalorder %s69, %s70
    %p82 = scmp.eq.s32.totalorder %s18, 7
    %p83 = por %p81, %p82
    %p85 = scmp.ne.s32.totalorder %s70, %s84
    %p86 = scmp.eq.s32.totalorder %s18, 0
    %p87 = por %p85, %p86
    %s89 = sadd.s32 %s88, 1
    %p92 = scmp.eq.s32.totalorder %s12, 7
    %p93 = scmp.ne.s32.totalorder %s88, %s90
    %p94 = scmp.eq.s32.totalorder %s12, 0
    %p95 = por %p93, %p94
    %p96 = scmp.ne.s32.totalorder %s88, %s90
    %p97 = scmp.eq.s32.totalorder %s17, 7
    %p98 = por %p96, %p97
    %p99 = scmp.ne.s32.totalorder %s90, %s91
    %p100 = scmp.eq.s32.totalorder %s17, 0
    %p101 = por %p99, %p100
    %p102 = scmp.ne.s32.totalorder %s90, %s91
    %p103 = scmp.eq.s32.totalorder %s18, 7
    %p104 = por %p102, %p103
    %p106 = scmp.ne.s32.totalorder %s91, %s105
    %p107 = scmp.eq.s32.totalorder %s18, 0
    %p108 = por %p106, %p107
    %s110 = sadd.s32 %s109, 1
    %p113 = scmp.eq.s32.totalorder %s12, 7
    %p114 = scmp.ne.s32.totalorder %s109, %s111
    %p115 = scmp.eq.s32.totalorder %s12, 0
    %p116 = por %p114, %p115
    %p117 = scmp.ne.s32.totalorder %s109, %s111
    %p118 = scmp.eq.s32.totalorder %s17, 7
    %p119 = por %p117, %p118
    %p120 = scmp.ne.s32.totalorder %s111, %s112
    %p121 = scmp.eq.s32.totalorder %s17, 0
    %p122 = por %p120, %p121
    %p123 = scmp.ne.s32.totalorder %s111, %s112
    %p124 = scmp.eq.s32.totalorder %s18, 7
    %p125 = por %p123, %p124
    %p127 = scmp.ne.s32.totalorder %s112, %s126
    %p128 = scmp.eq.s32.totalorder %s18, 0
    %p129 = por %p127, %p128
    %s131 = sadd.s32 %s130, 1
    %p134 = scmp.eq.s32.totalorder %s12, 7
    %p135 = scmp.ne.s32.totalorder %s130, %s132
    %p136 = scmp.eq.s32.totalorder %s12, 0
    %p137 = por %p135, %p136
    %p138 = scmp.ne.s32.totalorder %s130, %s132
    %p139 = scmp.eq.s32.totalorder %s17, 7
    %p140 = por %p138, %p139
    %p141 = scmp.ne.s32.totalorder %s132, %s133
    %p142 = scmp.eq.s32.totalorder %s17, 0
    %p143 = por %p141, %p142
    %p144 = scmp.ne.s32.totalorder %s132, %s133
    %p145 = scmp.eq.s32.totalorder %s18, 7
    %p146 = por %p144, %p145
    %p148 = scmp.ne.s32.totalorder %s133, %s147
    %p149 = scmp.eq.s32.totalorder %s18, 0
    %p150 = por %p148, %p149
    %s151 = ssub.s32 %s12, %s19
    %p152 = scmp.eq.s32.totalorder %s151, 0
    %s154 = sadd.s32 %s153, 1
    %s155 = scalar_select %p152, %s153, %s154
    %p158 = pneg %p152
    %p159 = scmp.eq.s32.totalorder %s12, 7
    %p160 = por %p158, %p159
    %p161 = scmp.ne.s32.totalorder %s153, %s156
    %p162 = scmp.eq.s32.totalorder %s12, 0
    %p163 = por %p161, %p162
    %p164 = scmp.ne.s32.totalorder %s153, %s156
    %p165 = scmp.eq.s32.totalorder %s17, 7
    %p166 = por %p164, %p165
    %p167 = scmp.ne.s32.totalorder %s156, %s157
    %p168 = scmp.eq.s32.totalorder %s17, 0
    %p169 = por %p167, %p168
    %p170 = scmp.ne.s32.totalorder %s156, %s157
    %p171 = scmp.eq.s32.totalorder %s18, 7
    %p172 = por %p170, %p171
    %p174 = scmp.ne.s32.totalorder %s157, %s173
    %p175 = scmp.eq.s32.totalorder %s18, 0
    %p176 = por %p174, %p175
    %p177 = scmp.le.s32.totalorder 1, %s12
    %p178 = scmp.lt.s32.totalorder %s12, 9
    %p179 = pnand %p177, %p178
    %p180 = pneg %p179
    // Predicated region
    $region9: #{thai_char_cnn_forward.2} parent=5 // pred_check
      _
    $region10: #{thai_char_cnn_forward.2} parent=5 // pred_check_branch
      %182 = sbr.rel (%p179) target = $region12
    $region11: #{thai_char_cnn_forward.2} parent=5 // pred_region
      %s183 = ssub.s32 %s12, 1
      // Predicated region
      $region13: #{thai_char_cnn_forward.2} parent=11 // pred_check
        %p184 = pneg %p59
      $region14: #{thai_char_cnn_forward.2} parent=11 // pred_check_branch
        %186 = sbr.rel (%p184) target = $region16
      $region15: #{thai_char_cnn_forward.2} parent=11 // pred_region
        _
      $region16: #{thai_char_cnn_forward.2} parent=11 // pred_fallthru
        _
      // Predicated region
      $region17: #{thai_char_cnn_forward.2} parent=11 // pred_check
        %p187 = pneg %p80
      $region18: #{thai_char_cnn_forward.2} parent=11 // pred_check_branch
        %189 = sbr.rel (%p187) target = $region20
      $region19: #{thai_char_cnn_forward.2} parent=11 // pred_region
        _
      $region20: #{thai_char_cnn_forward.2} parent=11 // pred_fallthru
        _
      // Predicated region
      $region21: #{thai_char_cnn_forward.2} parent=11 // pred_check
        %p190 = pneg %p101
      $region22: #{thai_char_cnn_forward.2} parent=11 // pred_check_branch
        %192 = sbr.rel (%p190) target = $region24
      $region23: #{thai_char_cnn_forward.2} parent=11 // pred_region
        _
      $region24: #{thai_char_cnn_forward.2} parent=11 // pred_fallthru
        _
      // Predicated region
      $region25: #{thai_char_cnn_forward.2} parent=11 // pred_check
        %p193 = pneg %p122
      $region26: #{thai_char_cnn_forward.2} parent=11 // pred_check_branch
        %195 = sbr.rel (%p193) target = $region28
      $region27: #{thai_char_cnn_forward.2} parent=11 // pred_region
        _
      $region28: #{thai_char_cnn_forward.2} parent=11 // pred_fallthru
        _
      // Predicated region
      $region29: #{thai_char_cnn_forward.2} parent=11 // pred_check
        %p196 = pneg %p143
      $region30: #{thai_char_cnn_forward.2} parent=11 // pred_check_branch
        %198 = sbr.rel (%p196) target = $region32
      $region31: #{thai_char_cnn_forward.2} parent=11 // pred_region
        _
      $region32: #{thai_char_cnn_forward.2} parent=11 // pred_fallthru
        _
    $region12: #{thai_char_cnn_forward.2} parent=5 // pred_fallthru
      _
    %p199 = scmp.lt.s32.totalorder %s12, 8
    // Predicated region
    $region33: #{thai_char_cnn_forward.2} parent=5 // pred_check
      %p200 = pneg %p199
    $region34: #{thai_char_cnn_forward.2} parent=5 // pred_check_branch
      %202 = sbr.rel (%p200) target = $region36
    $region35: #{thai_char_cnn_forward.2} parent=5 // pred_region
      // Predicated region
      $region37: #{thai_char_cnn_forward.2} parent=35 // pred_check
        %p203 = pneg %p32
      $region38: #{thai_char_cnn_forward.2} parent=35 // pred_check_branch
        %205 = sbr.rel (%p203) target = $region40
      $region39: #{thai_char_cnn_forward.2} parent=35 // pred_region
        %p206 = scmp.lt.s32.totalorder %s12, 7
        %s207 = scalar_select %p206, %s12, 7
        %s208 = smul.addr %s207, 6
        %s209 = smul.addr %s208, 8
        %s210 = scalar_lea.vmem %s0, %s209
      $region40: #{thai_char_cnn_forward.2} parent=35 // pred_fallthru
        _
    $region36: #{thai_char_cnn_forward.2} parent=5 // pred_fallthru
      _
    %p211 = scmp.le.s32.totalorder 1, %s12
    %p212 = scmp.lt.s32.totalorder %s12, 9
    %p213 = pnand %p211, %p212
    %p214 = pneg %p213
    // Predicated region
    $region41: #{thai_char_cnn_forward.2} parent=5 // pred_check
      _
    $region42: #{thai_char_cnn_forward.2} parent=5 // pred_check_branch
      %216 = sbr.rel (%p213) target = $region44
    $region43: #{thai_char_cnn_forward.2} parent=5 // pred_region
      %s217 = ssub.s32 %s12, 1
      %p218 = scmp.lt.s32.totalorder %s17, 7
      %s219 = scalar_select %p218, %s17, 7
      %s220 = smul.addr %s219, 6
      %s221 = smul.addr %s220, 8
      %s222 = scalar_lea.vmem %s0, %s221
      %p223 = pneg %p38
      %p224 = pneg %p35
      %p225 = pneg %p59
      %p226 = pneg %p56
      %p227 = pneg %p80
      %p228 = pneg %p77
      %p229 = pneg %p101
      %p230 = pneg %p98
      %p231 = pneg %p122
      %p232 = pneg %p119
      %p233 = pneg %p143
      %p234 = pneg %p140
      %p235 = pneg %p169
      %p236 = pneg %p166
      %p237 = scmp.lt.s32.totalorder %s17, 7
      %s238 = scalar_select %p237, %s17, 7
      %s239 = smul.addr %s238, 8
      %s240 = smul.addr %s239, 8
      %s241 = scalar_lea.vmem %s6, %s240
      %p242 = scmp.lt.s32.totalorder %s17, 7
      %s243 = scalar_select %p242, %s17, 7
      %s244 = smul.addr %s243, 6
      %s245 = smul.addr %s244, 8
      %s246 = scalar_lea.vmem %s0, %s245
      %p247 = scmp.lt.s32.totalorder %s17, 7
      %s248 = scalar_select %p247, %s17, 7
      %s249 = smul.addr %s248, 8
      %s250 = smul.addr %s249, 8
      %s251 = scalar_lea.vmem %s6, %s250
      %v252 = vld [vmem:[%s246] sm:$0xff]
      %v253 = vld [vmem:[%s246 + $0x8] sm:$0xff]
      %v254 = vld [vmem:[%s246 + $0x10] sm:$0xff]
      %v255 = vld [vmem:[%s246 + $0x18] sm:$0xff]
      %v256 = vld [vmem:[%s246 + $0x20] sm:$0xff]
      %v257 = vld [vmem:[%s246 + $0x28] sm:$0xff]
      %v258 = vld [vmem:[%s1] sm:$0xff]
      %v259 = vld [vmem:[%s1 + $0x8] sm:$0xff]
      %v260 = vld [vmem:[%s1 + $0x10] sm:$0xff]
      %v261 = vld [vmem:[%s1 + $0x18] sm:$0xff]
      %v262 = vld [vmem:[%s1 + $0x20] sm:$0xff]
      %v263 = vld [vmem:[%s1 + $0x28] sm:$0xff]
      %v264 = vld [vmem:[%s1 + $0x30] sm:$0xff]
      %v265 = vld [vmem:[%s1 + $0x38] sm:$0xff]
      %v266 = vld [vmem:[%s1 + $0x40] sm:$0xff]
      %v267 = vld [vmem:[%s1 + $0x48] sm:$0xff]
      %v268 = vld [vmem:[%s1 + $0x50] sm:$0xff]
      %v269 = vld [vmem:[%s1 + $0x58] sm:$0xff]
      %v270 = vld [vmem:[%s1 + $0x60] sm:$0xff]
      %v271 = vld [vmem:[%s1 + $0x68] sm:$0xff]
      %v272 = vld [vmem:[%s1 + $0x70] sm:$0xff]
      %v273 = vld [vmem:[%s1 + $0x78] sm:$0xff]
      %v274 = vld [vmem:[%s1 + $0x80] sm:$0xff]
      %v275 = vld [vmem:[%s1 + $0x88] sm:$0xff]
      %v276 = vld [vmem:[%s1 + $0x90] sm:$0xff]
      %v277 = vld [vmem:[%s1 + $0x98] sm:$0xff]
      %v278 = vld [vmem:[%s1 + $0xa0] sm:$0xff]
      %v279 = vld [vmem:[%s1 + $0xa8] sm:$0xff]
      %v280 = vld [vmem:[%s1 + $0xb0] sm:$0xff]
      %v281 = vld [vmem:[%s1 + $0xb8] sm:$0xff]
      %v282 = vld [vmem:[%s1 + $0xc0] sm:$0xff]
      %v283 = vld [vmem:[%s1 + $0xc8] sm:$0xff]
      %v284 = vld [vmem:[%s1 + $0xd0] sm:$0xff]
      %v285 = vld [vmem:[%s1 + $0xd8] sm:$0xff]
      %v286 = vld [vmem:[%s1 + $0xe0] sm:$0xff]
      %v287 = vld [vmem:[%s1 + $0xe8] sm:$0xff]
      %v288 = vld [vmem:[%s1 + $0xf0] sm:$0xff]
      %v289 = vld [vmem:[%s1 + $0xf8] sm:$0xff]
      %s290 = scalar_lea.vmem %s1, 256
      %v291 = vld [vmem:[%s290] sm:$0xff]
      %v292 = vld [vmem:[%s290 + $0x8] sm:$0xff]
      %v293 = vld [vmem:[%s290 + $0x10] sm:$0xff]
      %v294 = vld [vmem:[%s290 + $0x18] sm:$0xff]
      %v295 = vld [vmem:[%s290 + $0x20] sm:$0xff]
      %v296 = vld [vmem:[%s290 + $0x28] sm:$0xff]
      %v297 = vld [vmem:[%s290 + $0x30] sm:$0xff]
      %v298 = vld [vmem:[%s290 + $0x38] sm:$0xff]
      %v299 = vld [vmem:[%s290 + $0x40] sm:$0xff]
      %v300 = vld [vmem:[%s290 + $0x48] sm:$0xff]
      %v301 = vld [vmem:[%s290 + $0x50] sm:$0xff]
      %v302 = vld [vmem:[%s290 + $0x58] sm:$0xff]
      %v303 = vld [vmem:[%s290 + $0x60] sm:$0xff]
      %v304 = vld [vmem:[%s290 + $0x68] sm:$0xff]
      %v305 = vld [vmem:[%s290 + $0x70] sm:$0xff]
      %v306 = vld [vmem:[%s290 + $0x78] sm:$0xff]
      %v307 = vld [vmem:[%s290 + $0x80] sm:$0xff]
      %v308 = vld [vmem:[%s290 + $0x88] sm:$0xff]
      %v309 = vld [vmem:[%s290 + $0x90] sm:$0xff]
      %v310 = vld [vmem:[%s290 + $0x98] sm:$0xff]
      %v311 = vld [vmem:[%s290 + $0xa0] sm:$0xff]
      %v312 = vld [vmem:[%s290 + $0xa8] sm:$0xff]
      %v313 = vld [vmem:[%s290 + $0xb0] sm:$0xff]
      %v314 = vld [vmem:[%s290 + $0xb8] sm:$0xff]
      %v315 = vld [vmem:[%s290 + $0xc0] sm:$0xff]
      %v316 = vld [vmem:[%s290 + $0xc8] sm:$0xff]
      %v317 = vld [vmem:[%s290 + $0xd0] sm:$0xff]
      %v318 = vld [vmem:[%s290 + $0xd8] sm:$0xff]
      %v319 = vld [vmem:[%s290 + $0xe0] sm:$0xff]
      %v320 = vld [vmem:[%s290 + $0xe8] sm:$0xff]
      %v321 = vld [vmem:[%s290 + $0xf0] sm:$0xff]
      %v322 = vld [vmem:[%s290 + $0xf8] sm:$0xff]
      %329 = vrot.lane.b32.xlu0 %v252, 127
      %v330 = vpop.permute.xlu0 %329
      %331 = vrot.lane.b32.xlu0 %v253, 127
      %v332 = vpop.permute.xlu0 %331
      %333 = vrot.lane.b32.xlu0 %v254, 127
      %v334 = vpop.permute.xlu0 %333
      %335 = vrot.lane.b32.xlu0 %v255, 127
      %v336 = vpop.permute.xlu0 %335
      %337 = vrot.lane.b32.xlu0 %v256, 127
      %v338 = vpop.permute.xlu0 %337
      %339 = vrot.lane.b32.xlu0 %v257, 127
      %v340 = vpop.permute.xlu0 %339
      %vm341 = vcmask 1039360
      %v342 = vsel %vm341, %v330, %v332
      %v343 = vsel %vm341, %v332, %v334
      %v344 = vsel %vm341, %v336, %v338
      %v345 = vsel %vm341, %v338, %v340
      %vm352 = vcmask 130048
      %v354 = vsel %vm352, %v291, 0
      %v357 = vsel %vm352, %v292, 0
      %v360 = vsel %vm352, %v293, 0
      %v363 = vsel %vm352, %v294, 0
      %v366 = vsel %vm352, %v295, 0
      %v369 = vsel %vm352, %v296, 0
      %v372 = vsel %vm352, %v297, 0
      %v375 = vsel %vm352, %v298, 0
      %v378 = vsel %vm352, %v299, 0
      %v381 = vsel %vm352, %v300, 0
      %v384 = vsel %vm352, %v301, 0
      %v387 = vsel %vm352, %v302, 0
      %v390 = vsel %vm352, %v303, 0
      %v393 = vsel %vm352, %v304, 0
      %v396 = vsel %vm352, %v305, 0
      %v399 = vsel %vm352, %v306, 0
      %v402 = vsel %vm352, %v307, 0
      %v405 = vsel %vm352, %v308, 0
      %v408 = vsel %vm352, %v309, 0
      %v411 = vsel %vm352, %v310, 0
      %v414 = vsel %vm352, %v311, 0
      %v417 = vsel %vm352, %v312, 0
      %v420 = vsel %vm352, %v313, 0
      %v423 = vsel %vm352, %v314, 0
      %v426 = vsel %vm352, %v315, 0
      %v429 = vsel %vm352, %v316, 0
      %v432 = vsel %vm352, %v317, 0
      %v435 = vsel %vm352, %v318, 0
      %v438 = vsel %vm352, %v319, 0
      %v441 = vsel %vm352, %v320, 0
      %v444 = vsel %vm352, %v321, 0
      %v447 = vsel %vm352, %v322, 0
      %449 = vmatprep.subr.mxu0 %v343
      %450 = vmatpush1.msra.mxu0 %v342
      %451 = vmatprep.subr.mxu0 %v345
      %452 = vmatpush1.msra.mxu0 %v344
      %453 = vmatprep.subr.mxu0 0.0
      %454 = vmatpush1.msra.mxu0 0.0
      %455 = vmatprep.subr.mxu0 0.0
      %456 = vmatpush1.msra.mxu0 0.0
      %457 = vmatprep.subr.mxu0 0.0
      %458 = vmatpush1.msra.mxu0 0.0
      %459 = vmatprep.subr.mxu0 0.0
      %460 = vmatpush1.msra.mxu0 0.0
      %461 = vmatprep.subr.mxu0 0.0
      %462 = vmatpush1.msra.mxu0 0.0
      %463 = vmatprep.subr.mxu0 0.0
      %464 = vmatpush1.msra.mxu0 0.0
      %465 = vmatprep.subr.mxu0 0.0
      %466 = vmatpush1.msra.mxu0 0.0
      %467 = vmatprep.subr.mxu0 0.0
      %468 = vmatpush1.msra.mxu0 0.0
      %469 = vmatprep.subr.mxu0 0.0
      %470 = vmatpush1.msra.mxu0 0.0
      %471 = vmatprep.subr.mxu0 0.0
      %472 = vmatpush1.msra.mxu0 0.0
      %473 = vmatprep.subr.mxu0 0.0
      %474 = vmatpush1.msra.mxu0 0.0
      %475 = vmatprep.subr.mxu0 0.0
      %476 = vmatpush1.msra.mxu0 0.0
      %477 = vmatprep.subr.mxu0 0.0
      %478 = vmatpush1.msra.mxu0 0.0
      %479 = vmatprep.subr.mxu0 0.0
      %480 = vmatpush1.msra.mxu0 0.0
      %481 = vmatprep.subr.mxu0 0.0
      %482 = vmatpush1.msra.mxu0 0.0
      %483 = vmatprep.subr.mxu0 0.0
      %484 = vmatpush1.msra.mxu0 0.0
      %485 = vmatprep.subr.mxu0 0.0
      %486 = vmatpush1.msra.mxu0 0.0
      %487 = vmatprep.subr.mxu0 0.0
      %488 = vmatpush1.msra.mxu0 0.0
      %489 = vmatprep.subr.mxu0 0.0
      %490 = vmatpush1.msra.mxu0 0.0
      %491 = vmatprep.subr.mxu0 0.0
      %492 = vmatpush1.msra.mxu0 0.0
      %493 = vmatprep.subr.mxu0 0.0
      %494 = vmatpush1.msra.mxu0 0.0
      %495 = vmatprep.subr.mxu0 0.0
      %496 = vmatpush1.msra.mxu0 0.0
      %497 = vmatprep.subr.mxu0 0.0
      %498 = vmatpush1.msra.mxu0 0.0
      %499 = vmatprep.subr.mxu0 0.0
      %500 = vmatpush1.msra.mxu0 0.0
      %501 = vmatprep.subr.mxu0 0.0
      %502 = vmatpush1.msra.mxu0 0.0
      %503 = vmatprep.subr.mxu0 0.0
      %504 = vmatpush1.msra.mxu0 0.0
      %505 = vmatprep.subr.mxu0 0.0
      %506 = vmatpush1.msra.mxu0 0.0
      %507 = vmatprep.subr.mxu0 0.0
      %508 = vmatpush1.msra.mxu0 0.0
      %509 = vmatprep.subr.mxu0 0.0
      %510 = vmatpush1.msra.mxu0 0.0
      %511 = vmatprep.subr.mxu0 0.0
      %512 = vmatpush1.msra.mxu0 0.0
      %513 = vmatprep.mubr.f32.mxu0 0.0
      %514 = vmatmul.mubr.f32.gmra.mrb[0].mxu0 %v354
      %v515 = vpop.f32.mrb[0].mxu0
      %v516 = vadd.f32 0.0, %v515
      %v517 = vpop.f32.mrb[0].mxu0
      %v518 = vadd.f32 0.0, %v517
      %519 = vmatprep.mubr.f32.mxu0 0.0
      %520 = vmatmul.mubr.f32.gmra.mrb[0].mxu0 %v357
      %v521 = vpop.f32.mrb[0].mxu0
      %v522 = vadd.f32 0.0, %v521
      %v523 = vpop.f32.mrb[0].mxu0
      %v524 = vadd.f32 0.0, %v523
      %525 = vmatprep.mubr.f32.mxu0 0.0
      %526 = vmatmul.mubr.f32.gmra.mrb[0].mxu0 %v360
      %v527 = vpop.f32.mrb[0].mxu0
      %v528 = vadd.f32 0.0, %v527
      %v529 = vpop.f32.mrb[0].mxu0
      %v530 = vadd.f32 0.0, %v529
      %531 = vmatprep.mubr.f32.mxu0 0.0
      %532 = vmatmul.mubr.f32.gmra.mrb[0].mxu0 %v363
      %v533 = vpop.f32.mrb[0].mxu0
      %v534 = vadd.f32 0.0, %v533
      %v535 = vpop.f32.mrb[0].mxu0
      %v536 = vadd.f32 0.0, %v535
      %537 = vmatprep.mubr.f32.mxu0 0.0
      %538 = vmatmul.mubr.f32.gmra.mrb[0].mxu0 %v366
      %v539 = vpop.f32.mrb[0].mxu0
      %v540 = vadd.f32 0.0, %v539
      %v541 = vpop.f32.mrb[0].mxu0
      %v542 = vadd.f32 0.0, %v541
      %543 = vmatprep.mubr.f32.mxu0 0.0
      %544 = vmatmul.mubr.f32.gmra.mrb[0].mxu0 %v369
      %v545 = vpop.f32.mrb[0].mxu0
      %v546 = vadd.f32 0.0, %v545
      %v547 = vpop.f32.mrb[0].mxu0
      %v548 = vadd.f32 0.0, %v547
      %549 = vmatprep.mubr.f32.mxu0 0.0
      %550 = vmatmul.mubr.f32.gmra.mrb[0].mxu0 %v372
      %v551 = vpop.f32.mrb[0].mxu0
      %v552 = vadd.f32 0.0, %v551
      %v553 = vpop.f32.mrb[0].mxu0
      %v554 = vadd.f32 0.0, %v553
      %555 = vmatprep.mubr.f32.mxu0 0.0
      %556 = vmatmul.mubr.f32.gmra.mrb[0].mxu0 %v375
      %v557 = vpop.f32.mrb[0].mxu0
      %v558 = vadd.f32 0.0, %v557
      %v559 = vpop.f32.mrb[0].mxu0
      %v560 = vadd.f32 0.0, %v559
      %561 = vmatprep.mubr.f32.mxu0 0.0
      %562 = vmatmul.mubr.f32.gmra.mrb[0].mxu0 %v378
      %v563 = vpop.f32.mrb[0].mxu0
      %v564 = vadd.f32 0.0, %v563
      %v565 = vpop.f32.mrb[0].mxu0
      %v566 = vadd.f32 0.0, %v565
      %567 = vmatprep.mubr.f32.mxu0 0.0
      %568 = vmatmul.mubr.f32.gmra.mrb[0].mxu0 %v381
      %v569 = vpop.f32.mrb[0].mxu0
      %v570 = vadd.f32 0.0, %v569
      %v571 = vpop.f32.mrb[0].mxu0
      %v572 = vadd.f32 0.0, %v571
      %573 = vmatprep.mubr.f32.mxu0 0.0
      %574 = vmatmul.mubr.f32.gmra.mrb[0].mxu0 %v384
      %v575 = vpop.f32.mrb[0].mxu0
      %v576 = vadd.f32 0.0, %v575
      %v577 = vpop.f32.mrb[0].mxu0
      %v578 = vadd.f32 0.0, %v577
      %579 = vmatprep.mubr.f32.mxu0 0.0
      %580 = vmatmul.mubr.f32.gmra.mrb[0].mxu0 %v387
      %v581 = vpop.f32.mrb[0].mxu0
      %v582 = vadd.f32 0.0, %v581
      %v583 = vpop.f32.mrb[0].mxu0
      %v584 = vadd.f32 0.0, %v583
      %585 = vmatprep.mubr.f32.mxu0 0.0
      %586 = vmatmul.mubr.f32.gmra.mrb[0].mxu0 %v390
      %v587 = vpop.f32.mrb[0].mxu0
      %v588 = vadd.f32 0.0, %v587
      %v589 = vpop.f32.mrb[0].mxu0
      %v590 = vadd.f32 0.0, %v589
      %591 = vmatprep.mubr.f32.mxu0 0.0
      %592 = vmatmul.mubr.f32.gmra.mrb[0].mxu0 %v393
      %v593 = vpop.f32.mrb[0].mxu0
      %v594 = vadd.f32 0.0, %v593
      %v595 = vpop.f32.mrb[0].mxu0
      %v596 = vadd.f32 0.0, %v595
      %597 = vmatprep.mubr.f32.mxu0 0.0
      %598 = vmatmul.mubr.f32.gmra.mrb[0].mxu0 %v396
      %v599 = vpop.f32.mrb[0].mxu0
      %v600 = vadd.f32 0.0, %v599
      %v601 = vpop.f32.mrb[0].mxu0
      %v602 = vadd.f32 0.0, %v601
      %603 = vmatprep.mubr.f32.mxu0 0.0
      %604 = vmatmul.mubr.f32.gmra.mrb[0].mxu0 %v399
      %v605 = vpop.f32.mrb[0].mxu0
      %v606 = vadd.f32 0.0, %v605
      %v607 = vpop.f32.mrb[0].mxu0
      %v608 = vadd.f32 0.0, %v607
      %609 = vmatprep.mubr.f32.mxu0 0.0
      %610 = vmatmul.mubr.f32.gmra.mrb[0].mxu0 %v402
      %v611 = vpop.f32.mrb[0].mxu0
      %v612 = vadd.f32 0.0, %v611
      %v613 = vpop.f32.mrb[0].mxu0
      %v614 = vadd.f32 0.0, %v613
      %615 = vmatprep.mubr.f32.mxu0 0.0
      %616 = vmatmul.mubr.f32.gmra.mrb[0].mxu0 %v405
      %v617 = vpop.f32.mrb[0].mxu0
      %v618 = vadd.f32 0.0, %v617
      %v619 = vpop.f32.mrb[0].mxu0
      %v620 = vadd.f32 0.0, %v619
      %621 = vmatprep.mubr.f32.mxu0 0.0
      %622 = vmatmul.mubr.f32.gmra.mrb[0].mxu0 %v408
      %v623 = vpop.f32.mrb[0].mxu0
      %v624 = vadd.f32 0.0, %v623
      %v625 = vpop.f32.mrb[0].mxu0
      %v626 = vadd.f32 0.0, %v625
      %627 = vmatprep.mubr.f32.mxu0 0.0
      %628 = vmatmul.mubr.f32.gmra.mrb[0].mxu0 %v411
      %v629 = vpop.f32.mrb[0].mxu0
      %v630 = vadd.f32 0.0, %v629
      %v631 = vpop.f32.mrb[0].mxu0
      %v632 = vadd.f32 0.0, %v631
      %633 = vmatprep.mubr.f32.mxu0 0.0
      %634 = vmatmul.mubr.f32.gmra.mrb[0].mxu0 %v414
      %v635 = vpop.f32.mrb[0].mxu0
      %v636 = vadd.f32 0.0, %v635
      %v637 = vpop.f32.mrb[0].mxu0
      %v638 = vadd.f32 0.0, %v637
      %639 = vmatprep.mubr.f32.mxu0 0.0
      %640 = vmatmul.mubr.f32.gmra.mrb[0].mxu0 %v417
      %v641 = vpop.f32.mrb[0].mxu0
      %v642 = vadd.f32 0.0, %v641
      %v643 = vpop.f32.mrb[0].mxu0
      %v644 = vadd.f32 0.0, %v643
      %645 = vmatprep.mubr.f32.mxu0 0.0
      %646 = vmatmul.mubr.f32.gmra.mrb[0].mxu0 %v420
      %v647 = vpop.f32.mrb[0].mxu0
      %v648 = vadd.f32 0.0, %v647
      %v649 = vpop.f32.mrb[0].mxu0
      %v650 = vadd.f32 0.0, %v649
      %651 = vmatprep.mubr.f32.mxu0 0.0
      %652 = vmatmul.mubr.f32.gmra.mrb[0].mxu0 %v423
      %v653 = vpop.f32.mrb[0].mxu0
      %v654 = vadd.f32 0.0, %v653
      %v655 = vpop.f32.mrb[0].mxu0
      %v656 = vadd.f32 0.0, %v655
      %657 = vmatprep.mubr.f32.mxu0 0.0
      %658 = vmatmul.mubr.f32.gmra.mrb[0].mxu0 %v426
      %v659 = vpop.f32.mrb[0].mxu0
      %v660 = vadd.f32 0.0, %v659
      %v661 = vpop.f32.mrb[0].mxu0
      %v662 = vadd.f32 0.0, %v661
      %663 = vmatprep.mubr.f32.mxu0 0.0
      %664 = vmatmul.mubr.f32.gmra.mrb[0].mxu0 %v429
      %v665 = vpop.f32.mrb[0].mxu0
      %v666 = vadd.f32 0.0, %v665
      %v667 = vpop.f32.mrb[0].mxu0
      %v668 = vadd.f32 0.0, %v667
      %669 = vmatprep.mubr.f32.mxu0 0.0
      %670 = vmatmul.mubr.f32.gmra.mrb[0].mxu0 %v432
      %v671 = vpop.f32.mrb[0].mxu0
      %v672 = vadd.f32 0.0, %v671
      %v673 = vpop.f32.mrb[0].mxu0
      %v674 = vadd.f32 0.0, %v673
      %675 = vmatprep.mubr.f32.mxu0 0.0
      %676 = vmatmul.mubr.f32.gmra.mrb[0].mxu0 %v435
      %v677 = vpop.f32.mrb[0].mxu0
      %v678 = vadd.f32 0.0, %v677
      %v679 = vpop.f32.mrb[0].mxu0
      %v680 = vadd.f32 0.0, %v679
      %681 = vmatprep.mubr.f32.mxu0 0.0
      %682 = vmatmul.mubr.f32.gmra.mrb[0].mxu0 %v438
      %v683 = vpop.f32.mrb[0].mxu0
      %v684 = vadd.f32 0.0, %v683
      %v685 = vpop.f32.mrb[0].mxu0
      %v686 = vadd.f32 0.0, %v685
      %687 = vmatprep.mubr.f32.mxu0 0.0
      %688 = vmatmul.mubr.f32.gmra.mrb[0].mxu0 %v441
      %v689 = vpop.f32.mrb[0].mxu0
      %v690 = vadd.f32 0.0, %v689
      %v691 = vpop.f32.mrb[0].mxu0
      %v692 = vadd.f32 0.0, %v691
      %693 = vmatprep.mubr.f32.mxu0 0.0
      %694 = vmatmul.mubr.f32.gmra.mrb[0].mxu0 %v444
      %v695 = vpop.f32.mrb[0].mxu0
      %v696 = vadd.f32 0.0, %v695
      %v697 = vpop.f32.mrb[0].mxu0
      %v698 = vadd.f32 0.0, %v697
      %699 = vmatprep.mubr.f32.mxu0 0.0
      %700 = vmatmul.mubr.f32.gmra.mrb[0].mxu0 %v447
      %v701 = vpop.f32.mrb[0].mxu0
      %v702 = vadd.f32 0.0, %v701
      %v703 = vpop.f32.mrb[0].mxu0
      %v704 = vadd.f32 0.0, %v703
      %705 = vdwg.mxu0
      %706 = vmatprep.subr.mxu0 0.0
      %707 = vmatpush1.msra.mxu0 %v334
      %708 = vmatprep.subr.mxu0 0.0
      %709 = vmatpush1.msra.mxu0 %v340
      %710 = vmatprep.subr.mxu0 0.0
      %711 = vmatpush1.msra.mxu0 0.0
      %712 = vmatprep.subr.mxu0 0.0
      %713 = vmatpush1.msra.mxu0 0.0
      %714 = vmatprep.subr.mxu0 0.0
      %715 = vmatpush1.msra.mxu0 0.0
      %716 = vmatprep.subr.mxu0 0.0
      %717 = vmatpush1.msra.mxu0 0.0
      %718 = vmatprep.subr.mxu0 0.0
      %719 = vmatpush1.msra.mxu0 0.0
      %720 = vmatprep.subr.mxu0 0.0
      %721 = vmatpush1.msra.mxu0 0.0
      %722 = vmatprep.subr.mxu0 0.0
      %723 = vmatpush1.msra.mxu0 0.0
      %724 = vmatprep.subr.mxu0 0.0
      %725 = vmatpush1.msra.mxu0 0.0
      %726 = vmatprep.subr.mxu0 0.0
      %727 = vmatpush1.msra.mxu0 0.0
      %728 = vmatprep.subr.mxu0 0.0
      %729 = vmatpush1.msra.mxu0 0.0
      %730 = vmatprep.subr.mxu0 0.0
      %731 = vmatpush1.msra.mxu0 0.0
      %732 = vmatprep.subr.mxu0 0.0
      %733 = vmatpush1.msra.mxu0 0.0
      %734 = vmatprep.subr.mxu0 0.0
      %735 = vmatpush1.msra.mxu0 0.0
      %736 = vmatprep.subr.mxu0 0.0
      %737 = vmatpush1.msra.mxu0 0.0
      %738 = vmatprep.subr.mxu0 0.0
      %739 = vmatpush1.msra.mxu0 0.0
      %740 = vmatprep.subr.mxu0 0.0
      %741 = vmatpush1.msra.mxu0 0.0
      %742 = vmatprep.subr.mxu0 0.0
      %743 = vmatpush1.msra.mxu0 0.0
      %744 = vmatprep.subr.mxu0 0.0
      %745 = vmatpush1.msra.mxu0 0.0
      %746 = vmatprep.subr.mxu0 0.0
      %747 = vmatpush1.msra.mxu0 0.0
      %748 = vmatprep.subr.mxu0 0.0
      %749 = vmatpush1.msra.mxu0 0.0
      %750 = vmatprep.subr.mxu0 0.0
      %751 = vmatpush1.msra.mxu0 0.0
      %752 = vmatprep.subr.mxu0 0.0
      %753 = vmatpush1.msra.mxu0 0.0
      %754 = vmatprep.subr.mxu0 0.0
      %755 = vmatpush1.msra.mxu0 0.0
      %756 = vmatprep.subr.mxu0 0.0
      %757 = vmatpush1.msra.mxu0 0.0
      %758 = vmatprep.subr.mxu0 0.0
      %759 = vmatpush1.msra.mxu0 0.0
      %760 = vmatprep.subr.mxu0 0.0
      %761 = vmatpush1.msra.mxu0 0.0
      %762 = vmatprep.subr.mxu0 0.0
      %763 = vmatpush1.msra.mxu0 0.0
      %764 = vmatprep.subr.mxu0 0.0
      %765 = vmatpush1.msra.mxu0 0.0
      %766 = vmatprep.subr.mxu0 0.0
      %767 = vmatpush1.msra.mxu0 0.0
      %768 = vmatprep.subr.mxu0 0.0
      %769 = vmatpush1.msra.mxu0 0.0
      %770 = vmatprep.mubr.f32.mxu0 0.0
      %771 = vmatmul.mubr.f32.gmra.mrb[0].mxu0 %v354
      %v772 = vpop.f32.mrb[0].mxu0
      %v773 = vadd.f32 0.0, %v772
      %v774 = vpop.f32.mrb[0].mxu0
      %775 = vmatprep.mubr.f32.mxu0 0.0
      %776 = vmatmul.mubr.f32.gmra.mrb[0].mxu0 %v357
      %v777 = vpop.f32.mrb[0].mxu0
      %v778 = vadd.f32 0.0, %v777
      %v779 = vpop.f32.mrb[0].mxu0
      %780 = vmatprep.mubr.f32.mxu0 0.0
      %781 = vmatmul.mubr.f32.gmra.mrb[0].mxu0 %v360
      %v782 = vpop.f32.mrb[0].mxu0
      %v783 = vadd.f32 0.0, %v782
      %v784 = vpop.f32.mrb[0].mxu0
      %785 = vmatprep.mubr.f32.mxu0 0.0
      %786 = vmatmul.mubr.f32.gmra.mrb[0].mxu0 %v363
      %v787 = vpop.f32.mrb[0].mxu0
      %v788 = vadd.f32 0.0, %v787
      %v789 = vpop.f32.mrb[0].mxu0
      %790 = vmatprep.mubr.f32.mxu0 0.0
      %791 = vmatmul.mubr.f32.gmra.mrb[0].mxu0 %v366
      %v792 = vpop.f32.mrb[0].mxu0
      %v793 = vadd.f32 0.0, %v792
      %v794 = vpop.f32.mrb[0].mxu0
      %795 = vmatprep.mubr.f32.mxu0 0.0
      %796 = vmatmul.mubr.f32.gmra.mrb[0].mxu0 %v369
      %v797 = vpop.f32.mrb[0].mxu0
      %v798 = vadd.f32 0.0, %v797
      %v799 = vpop.f32.mrb[0].mxu0
      %800 = vmatprep.mubr.f32.mxu0 0.0
      %801 = vmatmul.mubr.f32.gmra.mrb[0].mxu0 %v372
      %v802 = vpop.f32.mrb[0].mxu0
      %v803 = vadd.f32 0.0, %v802
      %v804 = vpop.f32.mrb[0].mxu0
      %805 = vmatprep.mubr.f32.mxu0 0.0
      %806 = vmatmul.mubr.f32.gmra.mrb[0].mxu0 %v375
      %v807 = vpop.f32.mrb[0].mxu0
      %v808 = vadd.f32 0.0, %v807
      %v809 = vpop.f32.mrb[0].mxu0
      %810 = vmatprep.mubr.f32.mxu0 0.0
      %811 = vmatmul.mubr.f32.gmra.mrb[0].mxu0 %v378
      %v812 = vpop.f32.mrb[0].mxu0
      %v813 = vadd.f32 0.0, %v812
      %v814 = vpop.f32.mrb[0].mxu0
      %815 = vmatprep.mubr.f32.mxu0 0.0
      %816 = vmatmul.mubr.f32.gmra.mrb[0].mxu0 %v381
      %v817 = vpop.f32.mrb[0].mxu0
      %v818 = vadd.f32 0.0, %v817
      %v819 = vpop.f32.mrb[0].mxu0
      %820 = vmatprep.mubr.f32.mxu0 0.0
      %821 = vmatmul.mubr.f32.gmra.mrb[0].mxu0 %v384
      %v822 = vpop.f32.mrb[0].mxu0
      %v823 = vadd.f32 0.0, %v822
      %v824 = vpop.f32.mrb[0].mxu0
      %825 = vmatprep.mubr.f32.mxu0 0.0
      %826 = vmatmul.mubr.f32.gmra.mrb[0].mxu0 %v387
      %v827 = vpop.f32.mrb[0].mxu0
      %v828 = vadd.f32 0.0, %v827
      %v829 = vpop.f32.mrb[0].mxu0
      %830 = vmatprep.mubr.f32.mxu0 0.0
      %831 = vmatmul.mubr.f32.gmra.mrb[0].mxu0 %v390
      %v832 = vpop.f32.mrb[0].mxu0
      %v833 = vadd.f32 0.0, %v832
      %v834 = vpop.f32.mrb[0].mxu0
      %835 = vmatprep.mubr.f32.mxu0 0.0
      %836 = vmatmul.mubr.f32.gmra.mrb[0].mxu0 %v393
      %v837 = vpop.f32.mrb[0].mxu0
      %v838 = vadd.f32 0.0, %v837
      %v839 = vpop.f32.mrb[0].mxu0
      %840 = vmatprep.mubr.f32.mxu0 0.0
      %841 = vmatmul.mubr.f32.gmra.mrb[0].mxu0 %v396
      %v842 = vpop.f32.mrb[0].mxu0
      %v843 = vadd.f32 0.0, %v842
      %v844 = vpop.f32.mrb[0].mxu0
      %845 = vmatprep.mubr.f32.mxu0 0.0
      %846 = vmatmul.mubr.f32.gmra.mrb[0].mxu0 %v399
      %v847 = vpop.f32.mrb[0].mxu0
      %v848 = vadd.f32 0.0, %v847
      %v849 = vpop.f32.mrb[0].mxu0
      %850 = vmatprep.mubr.f32.mxu0 0.0
      %851 = vmatmul.mubr.f32.gmra.mrb[0].mxu0 %v402
      %v852 = vpop.f32.mrb[0].mxu0
      %v853 = vadd.f32 0.0, %v852
      %v854 = vpop.f32.mrb[0].mxu0
      %855 = vmatprep.mubr.f32.mxu0 0.0
      %856 = vmatmul.mubr.f32.gmra.mrb[0].mxu0 %v405
      %v857 = vpop.f32.mrb[0].mxu0
      %v858 = vadd.f32 0.0, %v857
      %v859 = vpop.f32.mrb[0].mxu0
      %860 = vmatprep.mubr.f32.mxu0 0.0
      %861 = vmatmul.mubr.f32.gmra.mrb[0].mxu0 %v408
      %v862 = vpop.f32.mrb[0].mxu0
      %v863 = vadd.f32 0.0, %v862
      %v864 = vpop.f32.mrb[0].mxu0
      %865 = vmatprep.mubr.f32.mxu0 0.0
      %866 = vmatmul.mubr.f32.gmra.mrb[0].mxu0 %v411
      %v867 = vpop.f32.mrb[0].mxu0
      %v868 = vadd.f32 0.0, %v867
      %v869 = vpop.f32.mrb[0].mxu0
      %870 = vmatprep.mubr.f32.mxu0 0.0
      %871 = vmatmul.mubr.f32.gmra.mrb[0].mxu0 %v414
      %v872 = vpop.f32.mrb[0].mxu0
      %v873 = vadd.f32 0.0, %v872
      %v874 = vpop.f32.mrb[0].mxu0
      %875 = vmatprep.mubr.f32.mxu0 0.0
      %876 = vmatmul.mubr.f32.gmra.mrb[0].mxu0 %v417
      %v877 = vpop.f32.mrb[0].mxu0
      %v878 = vadd.f32 0.0, %v877
      %v879 = vpop.f32.mrb[0].mxu0
      %880 = vmatprep.mubr.f32.mxu0 0.0
      %881 = vmatmul.mubr.f32.gmra.mrb[0].mxu0 %v420
      %v882 = vpop.f32.mrb[0].mxu0
      %v883 = vadd.f32 0.0, %v882
      %v884 = vpop.f32.mrb[0].mxu0
      %885 = vmatprep.mubr.f32.mxu0 0.0
      %886 = vmatmul.mubr.f32.gmra.mrb[0].mxu0 %v423
      %v887 = vpop.f32.mrb[0].mxu0
      %v888 = vadd.f32 0.0, %v887
      %v889 = vpop.f32.mrb[0].mxu0
      %890 = vmatprep.mubr.f32.mxu0 0.0
      %891 = vmatmul.mubr.f32.gmra.mrb[0].mxu0 %v426
      %v892 = vpop.f32.mrb[0].mxu0
      %v893 = vadd.f32 0.0, %v892
      %v894 = vpop.f32.mrb[0].mxu0
      %895 = vmatprep.mubr.f32.mxu0 0.0
      %896 = vmatmul.mubr.f32.gmra.mrb[0].mxu0 %v429
      %v897 = vpop.f32.mrb[0].mxu0
      %v898 = vadd.f32 0.0, %v897
      %v899 = vpop.f32.mrb[0].mxu0
      %900 = vmatprep.mubr.f32.mxu0 0.0
      %901 = vmatmul.mubr.f32.gmra.mrb[0].mxu0 %v432
      %v902 = vpop.f32.mrb[0].mxu0
      %v903 = vadd.f32 0.0, %v902
      %v904 = vpop.f32.mrb[0].mxu0
      %905 = vmatprep.mubr.f32.mxu0 0.0
      %906 = vmatmul.mubr.f32.gmra.mrb[0].mxu0 %v435
      %v907 = vpop.f32.mrb[0].mxu0
      %v908 = vadd.f32 0.0, %v907
      %v909 = vpop.f32.mrb[0].mxu0
      %910 = vmatprep.mubr.f32.mxu0 0.0
      %911 = vmatmul.mubr.f32.gmra.mrb[0].mxu0 %v438
      %v912 = vpop.f32.mrb[0].mxu0
      %v913 = vadd.f32 0.0, %v912
      %v914 = vpop.f32.mrb[0].mxu0
      %915 = vmatprep.mubr.f32.mxu0 0.0
      %916 = vmatmul.mubr.f32.gmra.mrb[0].mxu0 %v441
      %v917 = vpop.f32.mrb[0].mxu0
      %v918 = vadd.f32 0.0, %v917
      %v919 = vpop.f32.mrb[0].mxu0
      %920 = vmatprep.mubr.f32.mxu0 0.0
      %921 = vmatmul.mubr.f32.gmra.mrb[0].mxu0 %v444
      %v922 = vpop.f32.mrb[0].mxu0
      %v923 = vadd.f32 0.0, %v922
      %v924 = vpop.f32.mrb[0].mxu0
      %925 = vmatprep.mubr.f32.mxu0 0.0
      %926 = vmatmul.mubr.f32.gmra.mrb[0].mxu0 %v447
      %v927 = vpop.f32.mrb[0].mxu0
      %v928 = vadd.f32 0.0, %v927
      %v929 = vpop.f32.mrb[0].mxu0
      %930 = vdwg.mxu0
      %v932 = vsel %vm352, %v258, 0
      %v935 = vsel %vm352, %v259, 0
      %v938 = vsel %vm352, %v260, 0
      %v941 = vsel %vm352, %v261, 0
      %v944 = vsel %vm352, %v262, 0
      %v947 = vsel %vm352, %v263, 0
      %v950 = vsel %vm352, %v264, 0
      %v953 = vsel %vm352, %v265, 0
      %v956 = vsel %vm352, %v266, 0
      %v959 = vsel %vm352, %v267, 0
      %v962 = vsel %vm352, %v268, 0
      %v965 = vsel %vm352, %v269, 0
      %v968 = vsel %vm352, %v270, 0
      %v971 = vsel %vm352, %v271, 0
      %v974 = vsel %vm352, %v272, 0
      %v977 = vsel %vm352, %v273, 0
      %v980 = vsel %vm352, %v274, 0
      %v983 = vsel %vm352, %v275, 0
      %v986 = vsel %vm352, %v276, 0
      %v989 = vsel %vm352, %v277, 0
      %v992 = vsel %vm352, %v278, 0
      %v995 = vsel %vm352, %v279, 0
      %v998 = vsel %vm352, %v280, 0
      %v1001 = vsel %vm352, %v281, 0
      %v1004 = vsel %vm352, %v282, 0
      %v1007 = vsel %vm352, %v283, 0
      %v1010 = vsel %vm352, %v284, 0
      %v1013 = vsel %vm352, %v285, 0
      %v1016 = vsel %vm352, %v286, 0
      %v1019 = vsel %vm352, %v287, 0
      %v1022 = vsel %vm352, %v288, 0
      %v1025 = vsel %vm352, %v289, 0
      %1027 = vmatprep.subr.mxu0 %v253
      %1028 = vmatpush1.msra.mxu0 %v252
      %1029 = vmatprep.subr.mxu0 %v256
      %1030 = vmatpush1.msra.mxu0 %v255
      %1031 = vmatprep.subr.mxu0 0.0
      %1032 = vmatpush1.msra.mxu0 0.0
      %1033 = vmatprep.subr.mxu0 0.0
      %1034 = vmatpush1.msra.mxu0 0.0
      %1035 = vmatprep.subr.mxu0 0.0
      %1036 = vmatpush1.msra.mxu0 0.0
      %1037 = vmatprep.subr.mxu0 0.0
      %1038 = vmatpush1.msra.mxu0 0.0
      %1039 = vmatprep.subr.mxu0 0.0
      %1040 = vmatpush1.msra.mxu0 0.0
      %1041 = vmatprep.subr.mxu0 0.0
      %1042 = vmatpush1.msra.mxu0 0.0
      %1043 = vmatprep.subr.mxu0 0.0
      %1044 = vmatpush1.msra.mxu0 0.0
      %1045 = vmatprep.subr.mxu0 0.0
      %1046 = vmatpush1.msra.mxu0 0.0
      %1047 = vmatprep.subr.mxu0 0.0
      %1048 = vmatpush1.msra.mxu0 0.0
      %1049 = vmatprep.subr.mxu0 0.0
      %1050 = vmatpush1.msra.mxu0 0.0
      %1051 = vmatprep.subr.mxu0 0.0
      %1052 = vmatpush1.msra.mxu0 0.0
      %1053 = vmatprep.subr.mxu0 0.0
      %1054 = vmatpush1.msra.mxu0 0.0
      %1055 = vmatprep.subr.mxu0 0.0
      %1056 = vmatpush1.msra.mxu0 0.0
      %1057 = vmatprep.subr.mxu0 0.0
      %1058 = vmatpush1.msra.mxu0 0.0
      %1059 = vmatprep.subr.mxu0 0.0
      %1060 = vmatpush1.msra.mxu0 0.0
      %1061 = vmatprep.subr.mxu0 0.0
      %1062 = vmatpush1.msra.mxu0 0.0
      %1063 = vmatprep.subr.mxu0 0.0
      %1064 = vmatpush1.msra.mxu0 0.0
      %1065 = vmatprep.subr.mxu0 0.0
      %1066 = vmatpush1.msra.mxu0 0.0
      %1067 = vmatprep.subr.mxu0 0.0
      %1068 = vmatpush1.msra.mxu0 0.0
      %1069 = vmatprep.subr.mxu0 0.0
      %1070 = vmatpush1.msra.mxu0 0.0
      %1071 = vmatprep.subr.mxu0 0.0
      %1072 = vmatpush1.msra.mxu0 0.0
      %1073 = vmatprep.subr.mxu0 0.0
      %1074 = vmatpush1.msra.mxu0 0.0
      %1075 = vmatprep.subr.mxu0 0.0
      %1076 = vmatpush1.msra.mxu0 0.0
      %1077 = vmatprep.subr.mxu0 0.0
      %1078 = vmatpush1.msra.mxu0 0.0
      %1079 = vmatprep.subr.mxu0 0.0
      %1080 = vmatpush1.msra.mxu0 0.0
      %1081 = vmatprep.subr.mxu0 0.0
      %1082 = vmatpush1.msra.mxu0 0.0
      %1083 = vmatprep.subr.mxu0 0.0
      %1084 = vmatpush1.msra.mxu0 0.0
      %1085 = vmatprep.subr.mxu0 0.0
      %1086 = vmatpush1.msra.mxu0 0.0
      %1087 = vmatprep.subr.mxu0 0.0
      %1088 = vmatpush1.msra.mxu0 0.0
      %1089 = vmatprep.subr.mxu0 0.0
      %1090 = vmatpush1.msra.mxu0 0.0
      %1091 = vmatprep.mubr.f32.mxu0 0.0
      %1092 = vmatmul.mubr.f32.gmra.mrb[0].mxu0 %v932
      %v1093 = vpop.f32.mrb[0].mxu0
      %v1094 = vadd.f32 %v516, %v1093
      %v1095 = vpop.f32.mrb[0].mxu0
      %v1096 = vadd.f32 %v518, %v1095
      %1097 = vmatprep.mubr.f32.mxu0 0.0
      %1098 = vmatmul.mubr.f32.gmra.mrb[0].mxu0 %v935
      %v1099 = vpop.f32.mrb[0].mxu0
      %v1100 = vadd.f32 %v522, %v1099
      %v1101 = vpop.f32.mrb[0].mxu0
      %v1102 = vadd.f32 %v524, %v1101
      %1103 = vmatprep.mubr.f32.mxu0 0.0
      %1104 = vmatmul.mubr.f32.gmra.mrb[0].mxu0 %v938
      %v1105 = vpop.f32.mrb[0].mxu0
      %v1106 = vadd.f32 %v528, %v1105
      %v1107 = vpop.f32.mrb[0].mxu0
      %v1108 = vadd.f32 %v530, %v1107
      %1109 = vmatprep.mubr.f32.mxu0 0.0
      %1110 = vmatmul.mubr.f32.gmra.mrb[0].mxu0 %v941
      %v1111 = vpop.f32.mrb[0].mxu0
      %v1112 = vadd.f32 %v534, %v1111
      %v1113 = vpop.f32.mrb[0].mxu0
      %v1114 = vadd.f32 %v536, %v1113
      %1115 = vmatprep.mubr.f32.mxu0 0.0
      %1116 = vmatmul.mubr.f32.gmra.mrb[0].mxu0 %v944
      %v1117 = vpop.f32.mrb[0].mxu0
      %v1118 = vadd.f32 %v540, %v1117
      %v1119 = vpop.f32.mrb[0].mxu0
      %v1120 = vadd.f32 %v542, %v1119
      %1121 = vmatprep.mubr.f32.mxu0 0.0
      %1122 = vmatmul.mubr.f32.gmra.mrb[0].mxu0 %v947
      %v1123 = vpop.f32.mrb[0].mxu0
      %v1124 = vadd.f32 %v546, %v1123
      %v1125 = vpop.f32.mrb[0].mxu0
      %v1126 = vadd.f32 %v548, %v1125
      %1127 = vmatprep.mubr.f32.mxu0 0.0
      %1128 = vmatmul.mubr.f32.gmra.mrb[0].mxu0 %v950
      %v1129 = vpop.f32.mrb[0].mxu0
      %v1130 = vadd.f32 %v552, %v1129
      %v1131 = vpop.f32.mrb[0].mxu0
      %v1132 = vadd.f32 %v554, %v1131
      %1133 = vmatprep.mubr.f32.mxu0 0.0
      %1134 = vmatmul.mubr.f32.gmra.mrb[0].mxu0 %v953
      %v1135 = vpop.f32.mrb[0].mxu0
      %v1136 = vadd.f32 %v558, %v1135
      %v1137 = vpop.f32.mrb[0].mxu0
      %v1138 = vadd.f32 %v560, %v1137
      %1139 = vmatprep.mubr.f32.mxu0 0.0
      %1140 = vmatmul.mubr.f32.gmra.mrb[0].mxu0 %v956
      %v1141 = vpop.f32.mrb[0].mxu0
      %v1142 = vadd.f32 %v564, %v1141
      %v1143 = vpop.f32.mrb[0].mxu0
      %v1144 = vadd.f32 %v566, %v1143
      %1145 = vmatprep.mubr.f32.mxu0 0.0
      %1146 = vmatmul.mubr.f32.gmra.mrb[0].mxu0 %v959
      %v1147 = vpop.f32.mrb[0].mxu0
      %v1148 = vadd.f32 %v570, %v1147
      %v1149 = vpop.f32.mrb[0].mxu0
      %v1150 = vadd.f32 %v572, %v1149
      %1151 = vmatprep.mubr.f32.mxu0 0.0
      %1152 = vmatmul.mubr.f32.gmra.mrb[0].mxu0 %v962
      %v1153 = vpop.f32.mrb[0].mxu0
      %v1154 = vadd.f32 %v576, %v1153
      %v1155 = vpop.f32.mrb[0].mxu0
      %v1156 = vadd.f32 %v578, %v1155
      %1157 = vmatprep.mubr.f32.mxu0 0.0
      %1158 = vmatmul.mubr.f32.gmra.mrb[0].mxu0 %v965
      %v1159 = vpop.f32.mrb[0].mxu0
      %v1160 = vadd.f32 %v582, %v1159
      %v1161 = vpop.f32.mrb[0].mxu0
      %v1162 = vadd.f32 %v584, %v1161
      %1163 = vmatprep.mubr.f32.mxu0 0.0
      %1164 = vmatmul.mubr.f32.gmra.mrb[0].mxu0 %v968
      %v1165 = vpop.f32.mrb[0].mxu0
      %v1166 = vadd.f32 %v588, %v1165
      %v1167 = vpop.f32.mrb[0].mxu0
      %v1168 = vadd.f32 %v590, %v1167
      %1169 = vmatprep.mubr.f32.mxu0 0.0
      %1170 = vmatmul.mubr.f32.gmra.mrb[0].mxu0 %v971
      %v1171 = vpop.f32.mrb[0].mxu0
      %v1172 = vadd.f32 %v594, %v1171
      %v1173 = vpop.f32.mrb[0].mxu0
      %v1174 = vadd.f32 %v596, %v1173
      %1175 = vmatprep.mubr.f32.mxu0 0.0
      %1176 = vmatmul.mubr.f32.gmra.mrb[0].mxu0 %v974
      %v1177 = vpop.f32.mrb[0].mxu0
      %v1178 = vadd.f32 %v600, %v1177
      %v1179 = vpop.f32.mrb[0].mxu0
      %v1180 = vadd.f32 %v602, %v1179
      %1181 = vmatprep.mubr.f32.mxu0 0.0
      %1182 = vmatmul.mubr.f32.gmra.mrb[0].mxu0 %v977
      %v1183 = vpop.f32.mrb[0].mxu0
      %v1184 = vadd.f32 %v606, %v1183
      %v1185 = vpop.f32.mrb[0].mxu0
      %v1186 = vadd.f32 %v608, %v1185
      %1187 = vmatprep.mubr.f32.mxu0 0.0
      %1188 = vmatmul.mubr.f32.gmra.mrb[0].mxu0 %v980
      %v1189 = vpop.f32.mrb[0].mxu0
      %v1190 = vadd.f32 %v612, %v1189
      %v1191 = vpop.f32.mrb[0].mxu0
      %v1192 = vadd.f32 %v614, %v1191
      %1193 = vmatprep.mubr.f32.mxu0 0.0
      %1194 = vmatmul.mubr.f32.gmra.mrb[0].mxu0 %v983
      %v1195 = vpop.f32.mrb[0].mxu0
      %v1196 = vadd.f32 %v618, %v1195
      %v1197 = vpop.f32.mrb[0].mxu0
      %v1198 = vadd.f32 %v620, %v1197
      %1199 = vmatprep.mubr.f32.mxu0 0.0
      %1200 = vmatmul.mubr.f32.gmra.mrb[0].mxu0 %v986
      %v1201 = vpop.f32.mrb[0].mxu0
      %v1202 = vadd.f32 %v624, %v1201
      %v1203 = vpop.f32.mrb[0].mxu0
      %v1204 = vadd.f32 %v626, %v1203
      %1205 = vmatprep.mubr.f32.mxu0 0.0
      %1206 = vmatmul.mubr.f32.gmra.mrb[0].mxu0 %v989
      %v1207 = vpop.f32.mrb[0].mxu0
      %v1208 = vadd.f32 %v630, %v1207
      %v1209 = vpop.f32.mrb[0].mxu0
      %v1210 = vadd.f32 %v632, %v1209
      %1211 = vmatprep.mubr.f32.mxu0 0.0
      %1212 = vmatmul.mubr.f32.gmra.mrb[0].mxu0 %v992
      %v1213 = vpop.f32.mrb[0].mxu0
      %v1214 = vadd.f32 %v636, %v1213
      %v1215 = vpop.f32.mrb[0].mxu0
      %v1216 = vadd.f32 %v638, %v1215
      %1217 = vmatprep.mubr.f32.mxu0 0.0
      %1218 = vmatmul.mubr.f32.gmra.mrb[0].mxu0 %v995
      %v1219 = vpop.f32.mrb[0].mxu0
      %v1220 = vadd.f32 %v642, %v1219
      %v1221 = vpop.f32.mrb[0].mxu0
      %v1222 = vadd.f32 %v644, %v1221
      %1223 = vmatprep.mubr.f32.mxu0 0.0
      %1224 = vmatmul.mubr.f32.gmra.mrb[0].mxu0 %v998
      %v1225 = vpop.f32.mrb[0].mxu0
      %v1226 = vadd.f32 %v648, %v1225
      %v1227 = vpop.f32.mrb[0].mxu0
      %v1228 = vadd.f32 %v650, %v1227
      %1229 = vmatprep.mubr.f32.mxu0 0.0
      %1230 = vmatmul.mubr.f32.gmra.mrb[0].mxu0 %v1001
      %v1231 = vpop.f32.mrb[0].mxu0
      %v1232 = vadd.f32 %v654, %v1231
      %v1233 = vpop.f32.mrb[0].mxu0
      %v1234 = vadd.f32 %v656, %v1233
      %1235 = vmatprep.mubr.f32.mxu0 0.0
      %1236 = vmatmul.mubr.f32.gmra.mrb[0].mxu0 %v1004
      %v1237 = vpop.f32.mrb[0].mxu0
      %v1238 = vadd.f32 %v660, %v1237
      %v1239 = vpop.f32.mrb[0].mxu0
      %v1240 = vadd.f32 %v662, %v1239
      %1241 = vmatprep.mubr.f32.mxu0 0.0
      %1242 = vmatmul.mubr.f32.gmra.mrb[0].mxu0 %v1007
      %v1243 = vpop.f32.mrb[0].mxu0
      %v1244 = vadd.f32 %v666, %v1243
      %v1245 = vpop.f32.mrb[0].mxu0
      %v1246 = vadd.f32 %v668, %v1245
      %1247 = vmatprep.mubr.f32.mxu0 0.0
      %1248 = vmatmul.mubr.f32.gmra.mrb[0].mxu0 %v1010
      %v1249 = vpop.f32.mrb[0].mxu0
      %v1250 = vadd.f32 %v672, %v1249
      %v1251 = vpop.f32.mrb[0].mxu0
      %v1252 = vadd.f32 %v674, %v1251
      %1253 = vmatprep.mubr.f32.mxu0 0.0
      %1254 = vmatmul.mubr.f32.gmra.mrb[0].mxu0 %v1013
      %v1255 = vpop.f32.mrb[0].mxu0
      %v1256 = vadd.f32 %v678, %v1255
      %v1257 = vpop.f32.mrb[0].mxu0
      %v1258 = vadd.f32 %v680, %v1257
      %1259 = vmatprep.mubr.f32.mxu0 0.0
      %1260 = vmatmul.mubr.f32.gmra.mrb[0].mxu0 %v1016
      %v1261 = vpop.f32.mrb[0].mxu0
      %v1262 = vadd.f32 %v684, %v1261
      %v1263 = vpop.f32.mrb[0].mxu0
      %v1264 = vadd.f32 %v686, %v1263
      %1265 = vmatprep.mubr.f32.mxu0 0.0
      %1266 = vmatmul.mubr.f32.gmra.mrb[0].mxu0 %v1019
      %v1267 = vpop.f32.mrb[0].mxu0
      %v1268 = vadd.f32 %v690, %v1267
      %v1269 = vpop.f32.mrb[0].mxu0
      %v1270 = vadd.f32 %v692, %v1269
      %1271 = vmatprep.mubr.f32.mxu0 0.0
      %1272 = vmatmul.mubr.f32.gmra.mrb[0].mxu0 %v1022
      %v1273 = vpop.f32.mrb[0].mxu0
      %v1274 = vadd.f32 %v696, %v1273
      %v1275 = vpop.f32.mrb[0].mxu0
      %v1276 = vadd.f32 %v698, %v1275
      %1277 = vmatprep.mubr.f32.mxu0 0.0
      %1278 = vmatmul.mubr.f32.gmra.mrb[0].mxu0 %v1025
      %v1279 = vpop.f32.mrb[0].mxu0
      %v1280 = vadd.f32 %v702, %v1279
      %v1281 = vpop.f32.mrb[0].mxu0
      %v1282 = vadd.f32 %v704, %v1281
      %1283 = vdwg.mxu0
      %1284 = vmatprep.subr.mxu0 0.0
      %1285 = vmatpush1.msra.mxu0 %v254
      %1286 = vmatprep.subr.mxu0 0.0
      %1287 = vmatpush1.msra.mxu0 %v257
      %1288 = vmatprep.subr.mxu0 0.0
      %1289 = vmatpush1.msra.mxu0 0.0
      %1290 = vmatprep.subr.mxu0 0.0
      %1291 = vmatpush1.msra.mxu0 0.0
      %1292 = vmatprep.subr.mxu0 0.0
      %1293 = vmatpush1.msra.mxu0 0.0
      %1294 = vmatprep.subr.mxu0 0.0
      %1295 = vmatpush1.msra.mxu0 0.0
      %1296 = vmatprep.subr.mxu0 0.0
      %1297 = vmatpush1.msra.mxu0 0.0
      %1298 = vmatprep.subr.mxu0 0.0
      %1299 = vmatpush1.msra.mxu0 0.0
      %1300 = vmatprep.subr.mxu0 0.0
      %1301 = vmatpush1.msra.mxu0 0.0
      %1302 = vmatprep.subr.mxu0 0.0
      %1303 = vmatpush1.msra.mxu0 0.0
      %1304 = vmatprep.subr.mxu0 0.0
      %1305 = vmatpush1.msra.mxu0 0.0
      %1306 = vmatprep.subr.mxu0 0.0
      %1307 = vmatpush1.msra.mxu0 0.0
      %1308 = vmatprep.subr.mxu0 0.0
      %1309 = vmatpush1.msra.mxu0 0.0
      %1310 = vmatprep.subr.mxu0 0.0
      %1311 = vmatpush1.msra.mxu0 0.0
      %1312 = vmatprep.subr.mxu0 0.0
      %1313 = vmatpush1.msra.mxu0 0.0
      %1314 = vmatprep.subr.mxu0 0.0
      %1315 = vmatpush1.msra.mxu0 0.0
      %1316 = vmatprep.subr.mxu0 0.0
      %1317 = vmatpush1.msra.mxu0 0.0
      %1318 = vmatprep.subr.mxu0 0.0
      %1319 = vmatpush1.msra.mxu0 0.0
      %1320 = vmatprep.subr.mxu0 0.0
      %1321 = vmatpush1.msra.mxu0 0.0
      %1322 = vmatprep.subr.mxu0 0.0
      %1323 = vmatpush1.msra.mxu0 0.0
      %1324 = vmatprep.subr.mxu0 0.0
      %1325 = vmatpush1.msra.mxu0 0.0
      %1326 = vmatprep.subr.mxu0 0.0
      %1327 = vmatpush1.msra.mxu0 0.0
      %1328 = vmatprep.subr.mxu0 0.0
      %1329 = vmatpush1.msra.mxu0 0.0
      %1330 = vmatprep.subr.mxu0 0.0
      %1331 = vmatpush1.msra.mxu0 0.0
      %1332 = vmatprep.subr.mxu0 0.0
      %1333 = vmatpush1.msra.mxu0 0.0
      %1334 = vmatprep.subr.mxu0 0.0
      %1335 = vmatpush1.msra.mxu0 0.0
      %1336 = vmatprep.subr.mxu0 0.0
      %1337 = vmatpush1.msra.mxu0 0.0
      %1338 = vmatprep.subr.mxu0 0.0
      %1339 = vmatpush1.msra.mxu0 0.0
      %1340 = vmatprep.subr.mxu0 0.0
      %1341 = vmatpush1.msra.mxu0 0.0
      %1342 = vmatprep.subr.mxu0 0.0
      %1343 = vmatpush1.msra.mxu0 0.0
      %1344 = vmatprep.subr.mxu0 0.0
      %1345 = vmatpush1.msra.mxu0 0.0
      %1346 = vmatprep.subr.mxu0 0.0
      %1347 = vmatpush1.msra.mxu0 0.0
      %1348 = vmatprep.mubr.f32.mxu0 0.0
      %1349 = vmatmul.mubr.f32.gmra.mrb[0].mxu0 %v932
      %v1350 = vpop.f32.mrb[0].mxu0
      %v1351 = vadd.f32 %v773, %v1350
      %v1352 = vpop.f32.mrb[0].mxu0
      %1353 = vmatprep.mubr.f32.mxu0 0.0
      %1354 = vmatmul.mubr.f32.gmra.mrb[0].mxu0 %v935
      %v1355 = vpop.f32.mrb[0].mxu0
      %v1356 = vadd.f32 %v778, %v1355
      %v1357 = vpop.f32.mrb[0].mxu0
      %1358 = vmatprep.mubr.f32.mxu0 0.0
      %1359 = vmatmul.mubr.f32.gmra.mrb[0].mxu0 %v938
      %v1360 = vpop.f32.mrb[0].mxu0
      %v1361 = vadd.f32 %v783, %v1360
      %v1362 = vpop.f32.mrb[0].mxu0
      %1363 = vmatprep.mubr.f32.mxu0 0.0
      %1364 = vmatmul.mubr.f32.gmra.mrb[0].mxu0 %v941
      %v1365 = vpop.f32.mrb[0].mxu0
      %v1366 = vadd.f32 %v788, %v1365
      %v1367 = vpop.f32.mrb[0].mxu0
      %1368 = vmatprep.mubr.f32.mxu0 0.0
      %1369 = vmatmul.mubr.f32.gmra.mrb[0].mxu0 %v944
      %v1370 = vpop.f32.mrb[0].mxu0
      %v1371 = vadd.f32 %v793, %v1370
      %v1372 = vpop.f32.mrb[0].mxu0
      %1373 = vmatprep.mubr.f32.mxu0 0.0
      %1374 = vmatmul.mubr.f32.gmra.mrb[0].mxu0 %v947
      %v1375 = vpop.f32.mrb[0].mxu0
      %v1376 = vadd.f32 %v798, %v1375
      %v1377 = vpop.f32.mrb[0].mxu0
      %1378 = vmatprep.mubr.f32.mxu0 0.0
      %1379 = vmatmul.mubr.f32.gmra.mrb[0].mxu0 %v950
      %v1380 = vpop.f32.mrb[0].mxu0
      %v1381 = vadd.f32 %v803, %v1380
      %v1382 = vpop.f32.mrb[0].mxu0
      %1383 = vmatprep.mubr.f32.mxu0 0.0
      %1384 = vmatmul.mubr.f32.gmra.mrb[0].mxu0 %v953
      %v1385 = vpop.f32.mrb[0].mxu0
      %v1386 = vadd.f32 %v808, %v1385
      %v1387 = vpop.f32.mrb[0].mxu0
      %1388 = vmatprep.mubr.f32.mxu0 0.0
      %1389 = vmatmul.mubr.f32.gmra.mrb[0].mxu0 %v956
      %v1390 = vpop.f32.mrb[0].mxu0
      %v1391 = vadd.f32 %v813, %v1390
      %v1392 = vpop.f32.mrb[0].mxu0
      %1393 = vmatprep.mubr.f32.mxu0 0.0
      %1394 = vmatmul.mubr.f32.gmra.mrb[0].mxu0 %v959
      %v1395 = vpop.f32.mrb[0].mxu0
      %v1396 = vadd.f32 %v818, %v1395
      %v1397 = vpop.f32.mrb[0].mxu0
      %1398 = vmatprep.mubr.f32.mxu0 0.0
      %1399 = vmatmul.mubr.f32.gmra.mrb[0].mxu0 %v962
      %v1400 = vpop.f32.mrb[0].mxu0
      %v1401 = vadd.f32 %v823, %v1400
      %v1402 = vpop.f32.mrb[0].mxu0
      %1403 = vmatprep.mubr.f32.mxu0 0.0
      %1404 = vmatmul.mubr.f32.gmra.mrb[0].mxu0 %v965
      %v1405 = vpop.f32.mrb[0].mxu0
      %v1406 = vadd.f32 %v828, %v1405
      %v1407 = vpop.f32.mrb[0].mxu0
      %1408 = vmatprep.mubr.f32.mxu0 0.0
      %1409 = vmatmul.mubr.f32.gmra.mrb[0].mxu0 %v968
      %v1410 = vpop.f32.mrb[0].mxu0
      %v1411 = vadd.f32 %v833, %v1410
      %v1412 = vpop.f32.mrb[0].mxu0
      %1413 = vmatprep.mubr.f32.mxu0 0.0
      %1414 = vmatmul.mubr.f32.gmra.mrb[0].mxu0 %v971
      %v1415 = vpop.f32.mrb[0].mxu0
      %v1416 = vadd.f32 %v838, %v1415
      %v1417 = vpop.f32.mrb[0].mxu0
      %1418 = vmatprep.mubr.f32.mxu0 0.0
      %1419 = vmatmul.mubr.f32.gmra.mrb[0].mxu0 %v974
      %v1420 = vpop.f32.mrb[0].mxu0
      %v1421 = vadd.f32 %v843, %v1420
      %v1422 = vpop.f32.mrb[0].mxu0
      %1423 = vmatprep.mubr.f32.mxu0 0.0
      %1424 = vmatmul.mubr.f32.gmra.mrb[0].mxu0 %v977
      %v1425 = vpop.f32.mrb[0].mxu0
      %v1426 = vadd.f32 %v848, %v1425
      %v1427 = vpop.f32.mrb[0].mxu0
      %1428 = vmatprep.mubr.f32.mxu0 0.0
      %1429 = vmatmul.mubr.f32.gmra.mrb[0].mxu0 %v980
      %v1430 = vpop.f32.mrb[0].mxu0
      %v1431 = vadd.f32 %v853, %v1430
      %v1432 = vpop.f32.mrb[0].mxu0
      %1433 = vmatprep.mubr.f32.mxu0 0.0
      %1434 = vmatmul.mubr.f32.gmra.mrb[0].mxu0 %v983
      %v1435 = vpop.f32.mrb[0].mxu0
      %v1436 = vadd.f32 %v858, %v1435
      %v1437 = vpop.f32.mrb[0].mxu0
      %1438 = vmatprep.mubr.f32.mxu0 0.0
      %1439 = vmatmul.mubr.f32.gmra.mrb[0].mxu0 %v986
      %v1440 = vpop.f32.mrb[0].mxu0
      %v1441 = vadd.f32 %v863, %v1440
      %v1442 = vpop.f32.mrb[0].mxu0
      %1443 = vmatprep.mubr.f32.mxu0 0.0
      %1444 = vmatmul.mubr.f32.gmra.mrb[0].mxu0 %v989
      %v1445 = vpop.f32.mrb[0].mxu0
      %v1446 = vadd.f32 %v868, %v1445
      %v1447 = vpop.f32.mrb[0].mxu0
      %1448 = vmatprep.mubr.f32.mxu0 0.0
      %1449 = vmatmul.mubr.f32.gmra.mrb[0].mxu0 %v992
      %v1450 = vpop.f32.mrb[0].mxu0
      %v1451 = vadd.f32 %v873, %v1450
      %v1452 = vpop.f32.mrb[0].mxu0
      %1453 = vmatprep.mubr.f32.mxu0 0.0
      %1454 = vmatmul.mubr.f32.gmra.mrb[0].mxu0 %v995
      %v1455 = vpop.f32.mrb[0].mxu0
      %v1456 = vadd.f32 %v878, %v1455
      %v1457 = vpop.f32.mrb[0].mxu0
      %1458 = vmatprep.mubr.f32.mxu0 0.0
      %1459 = vmatmul.mubr.f32.gmra.mrb[0].mxu0 %v998
      %v1460 = vpop.f32.mrb[0].mxu0
      %v1461 = vadd.f32 %v883, %v1460
      %v1462 = vpop.f32.mrb[0].mxu0
      %1463 = vmatprep.mubr.f32.mxu0 0.0
      %1464 = vmatmul.mubr.f32.gmra.mrb[0].mxu0 %v1001
      %v1465 = vpop.f32.mrb[0].mxu0
      %v1466 = vadd.f32 %v888, %v1465
      %v1467 = vpop.f32.mrb[0].mxu0
      %1468 = vmatprep.mubr.f32.mxu0 0.0
      %1469 = vmatmul.mubr.f32.gmra.mrb[0].mxu0 %v1004
      %v1470 = vpop.f32.mrb[0].mxu0
      %v1471 = vadd.f32 %v893, %v1470
      %v1472 = vpop.f32.mrb[0].mxu0
      %1473 = vmatprep.mubr.f32.mxu0 0.0
      %1474 = vmatmul.mubr.f32.gmra.mrb[0].mxu0 %v1007
      %v1475 = vpop.f32.mrb[0].mxu0
      %v1476 = vadd.f32 %v898, %v1475
      %v1477 = vpop.f32.mrb[0].mxu0
      %1478 = vmatprep.mubr.f32.mxu0 0.0
      %1479 = vmatmul.mubr.f32.gmra.mrb[0].mxu0 %v1010
      %v1480 = vpop.f32.mrb[0].mxu0
      %v1481 = vadd.f32 %v903, %v1480
      %v1482 = vpop.f32.mrb[0].mxu0
      %1483 = vmatprep.mubr.f32.mxu0 0.0
      %1484 = vmatmul.mubr.f32.gmra.mrb[0].mxu0 %v1013
      %v1485 = vpop.f32.mrb[0].mxu0
      %v1486 = vadd.f32 %v908, %v1485
      %v1487 = vpop.f32.mrb[0].mxu0
      %1488 = vmatprep.mubr.f32.mxu0 0.0
      %1489 = vmatmul.mubr.f32.gmra.mrb[0].mxu0 %v1016
      %v1490 = vpop.f32.mrb[0].mxu0
      %v1491 = vadd.f32 %v913, %v1490
      %v1492 = vpop.f32.mrb[0].mxu0
      %1493 = vmatprep.mubr.f32.mxu0 0.0
      %1494 = vmatmul.mubr.f32.gmra.mrb[0].mxu0 %v1019
      %v1495 = vpop.f32.mrb[0].mxu0
      %v1496 = vadd.f32 %v918, %v1495
      %v1497 = vpop.f32.mrb[0].mxu0
      %1498 = vmatprep.mubr.f32.mxu0 0.0
      %1499 = vmatmul.mubr.f32.gmra.mrb[0].mxu0 %v1022
      %v1500 = vpop.f32.mrb[0].mxu0
      %v1501 = vadd.f32 %v923, %v1500
      %v1502 = vpop.f32.mrb[0].mxu0
      %1503 = vmatprep.mubr.f32.mxu0 0.0
      %1504 = vmatmul.mubr.f32.gmra.mrb[0].mxu0 %v1025
      %v1505 = vpop.f32.mrb[0].mxu0
      %v1506 = vadd.f32 %v928, %v1505
      %v1507 = vpop.f32.mrb[0].mxu0
      %1508 = vdwg.mxu0
      %s1509 = scalar_lea.vmem %s1, 512
      %v1510 = vld [vmem:[%s1509] sm:$0xff]
      %v1511 = vld [vmem:[%s1509 + $0x8] sm:$0xff]
      %v1512 = vld [vmem:[%s1509 + $0x10] sm:$0xff]
      %v1513 = vld [vmem:[%s1509 + $0x18] sm:$0xff]
      %v1514 = vld [vmem:[%s1509 + $0x20] sm:$0xff]
      %v1515 = vld [vmem:[%s1509 + $0x28] sm:$0xff]
      %v1516 = vld [vmem:[%s1509 + $0x30] sm:$0xff]
      %v1517 = vld [vmem:[%s1509 + $0x38] sm:$0xff]
      %v1518 = vld [vmem:[%s1509 + $0x40] sm:$0xff]
      %v1519 = vld [vmem:[%s1509 + $0x48] sm:$0xff]
      %v1520 = vld [vmem:[%s1509 + $0x50] sm:$0xff]
      %v1521 = vld [vmem:[%s1509 + $0x58] sm:$0xff]
      %v1522 = vld [vmem:[%s1509 + $0x60] sm:$0xff]
      %v1523 = vld [vmem:[%s1509 + $0x68] sm:$0xff]
      %v1524 = vld [vmem:[%s1509 + $0x70] sm:$0xff]
      %v1525 = vld [vmem:[%s1509 + $0x78] sm:$0xff]
      %v1526 = vld [vmem:[%s1509 + $0x80] sm:$0xff]
      %v1527 = vld [vmem:[%s1509 + $0x88] sm:$0xff]
      %v1528 = vld [vmem:[%s1509 + $0x90] sm:$0xff]
      %v1529 = vld [vmem:[%s1509 + $0x98] sm:$0xff]
      %v1530 = vld [vmem:[%s1509 + $0xa0] sm:$0xff]
      %v1531 = vld [vmem:[%s1509 + $0xa8] sm:$0xff]
      %v1532 = vld [vmem:[%s1509 + $0xb0] sm:$0xff]
      %v1533 = vld [vmem:[%s1509 + $0xb8] sm:$0xff]
      %v1534 = vld [vmem:[%s1509 + $0xc0] sm:$0xff]
      %v1535 = vld [vmem:[%s1509 + $0xc8] sm:$0xff]
      %v1536 = vld [vmem:[%s1509 + $0xd0] sm:$0xff]
      %v1537 = vld [vmem:[%s1509 + $0xd8] sm:$0xff]
      %v1538 = vld [vmem:[%s1509 + $0xe0] sm:$0xff]
      %v1539 = vld [vmem:[%s1509 + $0xe8] sm:$0xff]
      %v1540 = vld [vmem:[%s1509 + $0xf0] sm:$0xff]
      %v1541 = vld [vmem:[%s1509 + $0xf8] sm:$0xff]
      %1542 = vrot.lane.b32.xlu0 %v252, 109
      %v1543 = vpop.permute.xlu0 %1542
      %1544 = vrot.lane.b32.xlu0 %v253, 109
      %v1545 = vpop.permute.xlu0 %1544
      %1546 = vrot.lane.b32.xlu0 %v254, 109
      %v1547 = vpop.permute.xlu0 %1546
      %1548 = vrot.lane.b32.xlu0 %v255, 109
      %v1549 = vpop.permute.xlu0 %1548
      %1550 = vrot.lane.b32.xlu0 %v256, 109
      %v1551 = vpop.permute.xlu0 %1550
      %1552 = vrot.lane.b32.xlu0 %v257, 109
      %v1553 = vpop.permute.xlu0 %1552
      %vm1554 = vcmask 891904
      %v1555 = vsel %vm1554, %v1543, %v1545
      %v1556 = vsel %vm1554, %v1545, %v1547
      %v1557 = vsel %vm1554, %v1549, %v1551
      %v1558 = vsel %vm1554, %v1551, %v1553
      %v1566 = vsel %vm352, %v1510, 0
      %v1569 = vsel %vm352, %v1511, 0
      %v1572 = vsel %vm352, %v1512, 0
      %v1575 = vsel %vm352, %v1513, 0
      %v1578 = vsel %vm352, %v1514, 0
      %v1581 = vsel %vm352, %v1515, 0
      %v1584 = vsel %vm352, %v1516, 0
      %v1587 = vsel %vm352, %v1517, 0
      %v1590 = vsel %vm352, %v1518, 0
      %v1593 = vsel %vm352, %v1519, 0
      %v1596 = vsel %vm352, %v1520, 0
      %v1599 = vsel %vm352, %v1521, 0
      %v1602 = vsel %vm352, %v1522, 0
      %v1605 = vsel %vm352, %v1523, 0
      %v1608 = vsel %vm352, %v1524, 0
      %v1611 = vsel %vm352, %v1525, 0
      %v1614 = vsel %vm352, %v1526, 0
      %v1617 = vsel %vm352, %v1527, 0
      %v1620 = vsel %vm352, %v1528, 0
      %v1623 = vsel %vm352, %v1529, 0
      %v1626 = vsel %vm352, %v1530, 0
      %v1629 = vsel %vm352, %v1531, 0
      %v1632 = vsel %vm352, %v1532, 0
      %v1635 = vsel %vm352, %v1533, 0
      %v1638 = vsel %vm352, %v1534, 0
      %v1641 = vsel %vm352, %v1535, 0
      %v1644 = vsel %vm352, %v1536, 0
      %v1647 = vsel %vm352, %v1537, 0
      %v1650 = vsel %vm352, %v1538, 0
      %v1653 = vsel %vm352, %v1539, 0
      %v1656 = vsel %vm352, %v1540, 0
      %v1659 = vsel %vm352, %v1541, 0
      %1661 = vmatprep.subr.mxu0 %v1556
      %1662 = vmatpush1.msra.mxu0 %v1555
      %1663 = vmatprep.subr.mxu0 %v1558
      %1664 = vmatpush1.msra.mxu0 %v1557
      %1665 = vmatprep.subr.mxu0 0.0
      %1666 = vmatpush1.msra.mxu0 0.0
      %1667 = vmatprep.subr.mxu0 0.0
      %1668 = vmatpush1.msra.mxu0 0.0
      %1669 = vmatprep.subr.mxu0 0.0
      %1670 = vmatpush1.msra.mxu0 0.0
      %1671 = vmatprep.subr.mxu0 0.0
      %1672 = vmatpush1.msra.mxu0 0.0
      %1673 = vmatprep.subr.mxu0 0.0
      %1674 = vmatpush1.msra.mxu0 0.0
      %1675 = vmatprep.subr.mxu0 0.0
      %1676 = vmatpush1.msra.mxu0 0.0
      %1677 = vmatprep.subr.mxu0 0.0
      %1678 = vmatpush1.msra.mxu0 0.0
      %1679 = vmatprep.subr.mxu0 0.0
      %1680 = vmatpush1.msra.mxu0 0.0
      %1681 = vmatprep.subr.mxu0 0.0
      %1682 = vmatpush1.msra.mxu0 0.0
      %1683 = vmatprep.subr.mxu0 0.0
      %1684 = vmatpush1.msra.mxu0 0.0
      %1685 = vmatprep.subr.mxu0 0.0
      %1686 = vmatpush1.msra.mxu0 0.0
      %1687 = vmatprep.subr.mxu0 0.0
      %1688 = vmatpush1.msra.mxu0 0.0
      %1689 = vmatprep.subr.mxu0 0.0
      %1690 = vmatpush1.msra.mxu0 0.0
      %1691 = vmatprep.subr.mxu0 0.0
      %1692 = vmatpush1.msra.mxu0 0.0
      %1693 = vmatprep.subr.mxu0 0.0
      %1694 = vmatpush1.msra.mxu0 0.0
      %1695 = vmatprep.subr.mxu0 0.0
      %1696 = vmatpush1.msra.mxu0 0.0
      %1697 = vmatprep.subr.mxu0 0.0
      %1698 = vmatpush1.msra.mxu0 0.0
      %1699 = vmatprep.subr.mxu0 0.0
      %1700 = vmatpush1.msra.mxu0 0.0
      %1701 = vmatprep.subr.mxu0 0.0
      %1702 = vmatpush1.msra.mxu0 0.0
      %1703 = vmatprep.subr.mxu0 0.0
      %1704 = vmatpush1.msra.mxu0 0.0
      %1705 = vmatprep.subr.mxu0 0.0
      %1706 = vmatpush1.msra.mxu0 0.0
      %1707 = vmatprep.subr.mxu0 0.0
      %1708 = vmatpush1.msra.mxu0 0.0
      %1709 = vmatprep.subr.mxu0 0.0
      %1710 = vmatpush1.msra.mxu0 0.0
      %1711 = vmatprep.subr.mxu0 0.0
      %1712 = vmatpush1.msra.mxu0 0.0
      %1713 = vmatprep.subr.mxu0 0.0
      %1714 = vmatpush1.msra.mxu0 0.0
      %1715 = vmatprep.subr.mxu0 0.0
      %1716 = vmatpush1.msra.mxu0 0.0
      %1717 = vmatprep.subr.mxu0 0.0
      %1718 = vmatpush1.msra.mxu0 0.0
      %1719 = vmatprep.subr.mxu0 0.0
      %1720 = vmatpush1.msra.mxu0 0.0
      %1721 = vmatprep.subr.mxu0 0.0
      %1722 = vmatpush1.msra.mxu0 0.0
      %1723 = vmatprep.subr.mxu0 0.0
      %1724 = vmatpush1.msra.mxu0 0.0
      %1725 = vmatprep.mubr.f32.mxu0 0.0
      %1726 = vmatmul.mubr.f32.gmra.mrb[0].mxu0 %v1566
      %v1727 = vpop.f32.mrb[0].mxu0
      %v1728 = vadd.f32 0.0, %v1727
      %v1729 = vpop.f32.mrb[0].mxu0
      %v1730 = vadd.f32 0.0, %v1729
      %1731 = vmatprep.mubr.f32.mxu0 0.0
      %1732 = vmatmul.mubr.f32.gmra.mrb[0].mxu0 %v1569
      %v1733 = vpop.f32.mrb[0].mxu0
      %v1734 = vadd.f32 0.0, %v1733
      %v1735 = vpop.f32.mrb[0].mxu0
      %v1736 = vadd.f32 0.0, %v1735
      %1737 = vmatprep.mubr.f32.mxu0 0.0
      %1738 = vmatmul.mubr.f32.gmra.mrb[0].mxu0 %v1572
      %v1739 = vpop.f32.mrb[0].mxu0
      %v1740 = vadd.f32 0.0, %v1739
      %v1741 = vpop.f32.mrb[0].mxu0
      %v1742 = vadd.f32 0.0, %v1741
      %1743 = vmatprep.mubr.f32.mxu0 0.0
      %1744 = vmatmul.mubr.f32.gmra.mrb[0].mxu0 %v1575
      %v1745 = vpop.f32.mrb[0].mxu0
      %v1746 = vadd.f32 0.0, %v1745
      %v1747 = vpop.f32.mrb[0].mxu0
      %v1748 = vadd.f32 0.0, %v1747
      %1749 = vmatprep.mubr.f32.mxu0 0.0
      %1750 = vmatmul.mubr.f32.gmra.mrb[0].mxu0 %v1578
      %v1751 = vpop.f32.mrb[0].mxu0
      %v1752 = vadd.f32 0.0, %v1751
      %v1753 = vpop.f32.mrb[0].mxu0
      %v1754 = vadd.f32 0.0, %v1753
      %1755 = vmatprep.mubr.f32.mxu0 0.0
      %1756 = vmatmul.mubr.f32.gmra.mrb[0].mxu0 %v1581
      %v1757 = vpop.f32.mrb[0].mxu0
      %v1758 = vadd.f32 0.0, %v1757
      %v1759 = vpop.f32.mrb[0].mxu0
      %v1760 = vadd.f32 0.0, %v1759
      %1761 = vmatprep.mubr.f32.mxu0 0.0
      %1762 = vmatmul.mubr.f32.gmra.mrb[0].mxu0 %v1584
      %v1763 = vpop.f32.mrb[0].mxu0
      %v1764 = vadd.f32 0.0, %v1763
      %v1765 = vpop.f32.mrb[0].mxu0
      %v1766 = vadd.f32 0.0, %v1765
      %1767 = vmatprep.mubr.f32.mxu0 0.0
      %1768 = vmatmul.mubr.f32.gmra.mrb[0].mxu0 %v1587
      %v1769 = vpop.f32.mrb[0].mxu0
      %v1770 = vadd.f32 0.0, %v1769
      %v1771 = vpop.f32.mrb[0].mxu0
      %v1772 = vadd.f32 0.0, %v1771
      %1773 = vmatprep.mubr.f32.mxu0 0.0
      %1774 = vmatmul.mubr.f32.gmra.mrb[0].mxu0 %v1590
      %v1775 = vpop.f32.mrb[0].mxu0
      %v1776 = vadd.f32 0.0, %v1775
      %v1777 = vpop.f32.mrb[0].mxu0
      %v1778 = vadd.f32 0.0, %v1777
      %1779 = vmatprep.mubr.f32.mxu0 0.0
      %1780 = vmatmul.mubr.f32.gmra.mrb[0].mxu0 %v1593
      %v1781 = vpop.f32.mrb[0].mxu0
      %v1782 = vadd.f32 0.0, %v1781
      %v1783 = vpop.f32.mrb[0].mxu0
      %v1784 = vadd.f32 0.0, %v1783
      %1785 = vmatprep.mubr.f32.mxu0 0.0
      %1786 = vmatmul.mubr.f32.gmra.mrb[0].mxu0 %v1596
      %v1787 = vpop.f32.mrb[0].mxu0
      %v1788 = vadd.f32 0.0, %v1787
      %v1789 = vpop.f32.mrb[0].mxu0
      %v1790 = vadd.f32 0.0, %v1789
      %1791 = vmatprep.mubr.f32.mxu0 0.0
      %1792 = vmatmul.mubr.f32.gmra.mrb[0].mxu0 %v1599
      %v1793 = vpop.f32.mrb[0].mxu0
      %v1794 = vadd.f32 0.0, %v1793
      %v1795 = vpop.f32.mrb[0].mxu0
      %v1796 = vadd.f32 0.0, %v1795
      %1797 = vmatprep.mubr.f32.mxu0 0.0
      %1798 = vmatmul.mubr.f32.gmra.mrb[0].mxu0 %v1602
      %v1799 = vpop.f32.mrb[0].mxu0
      %v1800 = vadd.f32 0.0, %v1799
      %v1801 = vpop.f32.mrb[0].mxu0
      %v1802 = vadd.f32 0.0, %v1801
      %1803 = vmatprep.mubr.f32.mxu0 0.0
      %1804 = vmatmul.mubr.f32.gmra.mrb[0].mxu0 %v1605
      %v1805 = vpop.f32.mrb[0].mxu0
      %v1806 = vadd.f32 0.0, %v1805
      %v1807 = vpop.f32.mrb[0].mxu0
      %v1808 = vadd.f32 0.0, %v1807
      %1809 = vmatprep.mubr.f32.mxu0 0.0
      %1810 = vmatmul.mubr.f32.gmra.mrb[0].mxu0 %v1608
      %v1811 = vpop.f32.mrb[0].mxu0
      %v1812 = vadd.f32 0.0, %v1811
      %v1813 = vpop.f32.mrb[0].mxu0
      %v1814 = vadd.f32 0.0, %v1813
      %1815 = vmatprep.mubr.f32.mxu0 0.0
      %1816 = vmatmul.mubr.f32.gmra.mrb[0].mxu0 %v1611
      %v1817 = vpop.f32.mrb[0].mxu0
      %v1818 = vadd.f32 0.0, %v1817
      %v1819 = vpop.f32.mrb[0].mxu0
      %v1820 = vadd.f32 0.0, %v1819
      %1821 = vmatprep.mubr.f32.mxu0 0.0
      %1822 = vmatmul.mubr.f32.gmra.mrb[0].mxu0 %v1614
      %v1823 = vpop.f32.mrb[0].mxu0
      %v1824 = vadd.f32 0.0, %v1823
      %v1825 = vpop.f32.mrb[0].mxu0
      %v1826 = vadd.f32 0.0, %v1825
      %1827 = vmatprep.mubr.f32.mxu0 0.0
      %1828 = vmatmul.mubr.f32.gmra.mrb[0].mxu0 %v1617
      %v1829 = vpop.f32.mrb[0].mxu0
      %v1830 = vadd.f32 0.0, %v1829
      %v1831 = vpop.f32.mrb[0].mxu0
      %v1832 = vadd.f32 0.0, %v1831
      %1833 = vmatprep.mubr.f32.mxu0 0.0
      %1834 = vmatmul.mubr.f32.gmra.mrb[0].mxu0 %v1620
      %v1835 = vpop.f32.mrb[0].mxu0
      %v1836 = vadd.f32 0.0, %v1835
      %v1837 = vpop.f32.mrb[0].mxu0
      %v1838 = vadd.f32 0.0, %v1837
      %1839 = vmatprep.mubr.f32.mxu0 0.0
      %1840 = vmatmul.mubr.f32.gmra.mrb[0].mxu0 %v1623
      %v1841 = vpop.f32.mrb[0].mxu0
      %v1842 = vadd.f32 0.0, %v1841
      %v1843 = vpop.f32.mrb[0].mxu0
      %v1844 = vadd.f32 0.0, %v1843
      %1845 = vmatprep.mubr.f32.mxu0 0.0
      %1846 = vmatmul.mubr.f32.gmra.mrb[0].mxu0 %v1626
      %v1847 = vpop.f32.mrb[0].mxu0
      %v1848 = vadd.f32 0.0, %v1847
      %v1849 = vpop.f32.mrb[0].mxu0
      %v1850 = vadd.f32 0.0, %v1849
      %1851 = vmatprep.mubr.f32.mxu0 0.0
      %1852 = vmatmul.mubr.f32.gmra.mrb[0].mxu0 %v1629
      %v1853 = vpop.f32.mrb[0].mxu0
      %v1854 = vadd.f32 0.0, %v1853
      %v1855 = vpop.f32.mrb[0].mxu0
      %v1856 = vadd.f32 0.0, %v1855
      %1857 = vmatprep.mubr.f32.mxu0 0.0
      %1858 = vmatmul.mubr.f32.gmra.mrb[0].mxu0 %v1632
      %v1859 = vpop.f32.mrb[0].mxu0
      %v1860 = vadd.f32 0.0, %v1859
      %v1861 = vpop.f32.mrb[0].mxu0
      %v1862 = vadd.f32 0.0, %v1861
      %1863 = vmatprep.mubr.f32.mxu0 0.0
      %1864 = vmatmul.mubr.f32.gmra.mrb[0].mxu0 %v1635
      %v1865 = vpop.f32.mrb[0].mxu0
      %v1866 = vadd.f32 0.0, %v1865
      %v1867 = vpop.f32.mrb[0].mxu0
      %v1868 = vadd.f32 0.0, %v1867
      %1869 = vmatprep.mubr.f32.mxu0 0.0
      %1870 = vmatmul.mubr.f32.gmra.mrb[0].mxu0 %v1638
      %v1871 = vpop.f32.mrb[0].mxu0
      %v1872 = vadd.f32 0.0, %v1871
      %v1873 = vpop.f32.mrb[0].mxu0
      %v1874 = vadd.f32 0.0, %v1873
      %1875 = vmatprep.mubr.f32.mxu0 0.0
      %1876 = vmatmul.mubr.f32.gmra.mrb[0].mxu0 %v1641
      %v1877 = vpop.f32.mrb[0].mxu0
      %v1878 = vadd.f32 0.0, %v1877
      %v1879 = vpop.f32.mrb[0].mxu0
      %v1880 = vadd.f32 0.0, %v1879
      %1881 = vmatprep.mubr.f32.mxu0 0.0
      %1882 = vmatmul.mubr.f32.gmra.mrb[0].mxu0 %v1644
      %v1883 = vpop.f32.mrb[0].mxu0
      %v1884 = vadd.f32 0.0, %v1883
      %v1885 = vpop.f32.mrb[0].mxu0
      %v1886 = vadd.f32 0.0, %v1885
      %1887 = vmatprep.mubr.f32.mxu0 0.0
      %1888 = vmatmul.mubr.f32.gmra.mrb[0].mxu0 %v1647
      %v1889 = vpop.f32.mrb[0].mxu0
      %v1890 = vadd.f32 0.0, %v1889
      %v1891 = vpop.f32.mrb[0].mxu0
      %v1892 = vadd.f32 0.0, %v1891
      %1893 = vmatprep.mubr.f32.mxu0 0.0
      %1894 = vmatmul.mubr.f32.gmra.mrb[0].mxu0 %v1650
      %v1895 = vpop.f32.mrb[0].mxu0
      %v1896 = vadd.f32 0.0, %v1895
      %v1897 = vpop.f32.mrb[0].mxu0
      %v1898 = vadd.f32 0.0, %v1897
      %1899 = vmatprep.mubr.f32.mxu0 0.0
      %1900 = vmatmul.mubr.f32.gmra.mrb[0].mxu0 %v1653
      %v1901 = vpop.f32.mrb[0].mxu0
      %v1902 = vadd.f32 0.0, %v1901
      %v1903 = vpop.f32.mrb[0].mxu0
      %v1904 = vadd.f32 0.0, %v1903
      %1905 = vmatprep.mubr.f32.mxu0 0.0
      %1906 = vmatmul.mubr.f32.gmra.mrb[0].mxu0 %v1656
      %v1907 = vpop.f32.mrb[0].mxu0
      %v1908 = vadd.f32 0.0, %v1907
      %v1909 = vpop.f32.mrb[0].mxu0
      %v1910 = vadd.f32 0.0, %v1909
      %1911 = vmatprep.mubr.f32.mxu0 0.0
      %1912 = vmatmul.mubr.f32.gmra.mrb[0].mxu0 %v1659
      %v1913 = vpop.f32.mrb[0].mxu0
      %v1914 = vadd.f32 0.0, %v1913
      %v1915 = vpop.f32.mrb[0].mxu0
      %v1916 = vadd.f32 0.0, %v1915
      %1917 = vdwg.mxu0
      %1918 = vmatprep.subr.mxu0 0.0
      %1919 = vmatpush1.msra.mxu0 %v1547
      %1920 = vmatprep.subr.mxu0 0.0
      %1921 = vmatpush1.msra.mxu0 %v1553
      %1922 = vmatprep.subr.mxu0 0.0
      %1923 = vmatpush1.msra.mxu0 0.0
      %1924 = vmatprep.subr.mxu0 0.0
      %1925 = vmatpush1.msra.mxu0 0.0
      %1926 = vmatprep.subr.mxu0 0.0
      %1927 = vmatpush1.msra.mxu0 0.0
      %1928 = vmatprep.subr.mxu0 0.0
      %1929 = vmatpush1.msra.mxu0 0.0
      %1930 = vmatprep.subr.mxu0 0.0
      %1931 = vmatpush1.msra.mxu0 0.0
      %1932 = vmatprep.subr.mxu0 0.0
      %1933 = vmatpush1.msra.mxu0 0.0
      %1934 = vmatprep.subr.mxu0 0.0
      %1935 = vmatpush1.msra.mxu0 0.0
      %1936 = vmatprep.subr.mxu0 0.0
      %1937 = vmatpush1.msra.mxu0 0.0
      %1938 = vmatprep.subr.mxu0 0.0
      %1939 = vmatpush1.msra.mxu0 0.0
      %1940 = vmatprep.subr.mxu0 0.0
      %1941 = vmatpush1.msra.mxu0 0.0
      %1942 = vmatprep.subr.mxu0 0.0
      %1943 = vmatpush1.msra.mxu0 0.0
      %1944 = vmatprep.subr.mxu0 0.0
      %1945 = vmatpush1.msra.mxu0 0.0
      %1946 = vmatprep.subr.mxu0 0.0
      %1947 = vmatpush1.msra.mxu0 0.0
      %1948 = vmatprep.subr.mxu0 0.0
      %1949 = vmatpush1.msra.mxu0 0.0
      %1950 = vmatprep.subr.mxu0 0.0
      %1951 = vmatpush1.msra.mxu0 0.0
      %1952 = vmatprep.subr.mxu0 0.0
      %1953 = vmatpush1.msra.mxu0 0.0
      %1954 = vmatprep.subr.mxu0 0.0
      %1955 = vmatpush1.msra.mxu0 0.0
      %1956 = vmatprep.subr.mxu0 0.0
      %1957 = vmatpush1.msra.mxu0 0.0
      %1958 = vmatprep.subr.mxu0 0.0
      %1959 = vmatpush1.msra.mxu0 0.0
      %1960 = vmatprep.subr.mxu0 0.0
      %1961 = vmatpush1.msra.mxu0 0.0
      %1962 = vmatprep.subr.mxu0 0.0
      %1963 = vmatpush1.msra.mxu0 0.0
      %1964 = vmatprep.subr.mxu0 0.0
      %1965 = vmatpush1.msra.mxu0 0.0
      %1966 = vmatprep.subr.mxu0 0.0
      %1967 = vmatpush1.msra.mxu0 0.0
      %1968 = vmatprep.subr.mxu0 0.0
      %1969 = vmatpush1.msra.mxu0 0.0
      %1970 = vmatprep.subr.mxu0 0.0
      %1971 = vmatpush1.msra.mxu0 0.0
      %1972 = vmatprep.subr.mxu0 0.0
      %1973 = vmatpush1.msra.mxu0 0.0
      %1974 = vmatprep.subr.mxu0 0.0
      %1975 = vmatpush1.msra.mxu0 0.0
      %1976 = vmatprep.subr.mxu0 0.0
      %1977 = vmatpush1.msra.mxu0 0.0
      %1978 = vmatprep.subr.mxu0 0.0
      %1979 = vmatpush1.msra.mxu0 0.0
      %1980 = vmatprep.subr.mxu0 0.0
      %1981 = vmatpush1.msra.mxu0 0.0
      %1982 = vmatprep.mubr.f32.mxu0 0.0
      %1983 = vmatmul.mubr.f32.gmra.mrb[0].mxu0 %v1566
      %v1984 = vpop.f32.mrb[0].mxu0
      %v1985 = vadd.f32 0.0, %v1984
      %v1986 = vpop.f32.mrb[0].mxu0
      %1987 = vmatprep.mubr.f32.mxu0 0.0
      %1988 = vmatmul.mubr.f32.gmra.mrb[0].mxu0 %v1569
      %v1989 = vpop.f32.mrb[0].mxu0
      %v1990 = vadd.f32 0.0, %v1989
      %v1991 = vpop.f32.mrb[0].mxu0
      %1992 = vmatprep.mubr.f32.mxu0 0.0
      %1993 = vmatmul.mubr.f32.gmra.mrb[0].mxu0 %v1572
      %v1994 = vpop.f32.mrb[0].mxu0
      %v1995 = vadd.f32 0.0, %v1994
      %v1996 = vpop.f32.mrb[0].mxu0
      %1997 = vmatprep.mubr.f32.mxu0 0.0
      %1998 = vmatmul.mubr.f32.gmra.mrb[0].mxu0 %v1575
      %v1999 = vpop.f32.mrb[0].mxu0
      %v2000 = vadd.f32 0.0, %v1999
      %v2001 = vpop.f32.mrb[0].mxu0
      %2002 = vmatprep.mubr.f32.mxu0 0.0
      %2003 = vmatmul.mubr.f32.gmra.mrb[0].mxu0 %v1578
      %v2004 = vpop.f32.mrb[0].mxu0
      %v2005 = vadd.f32 0.0, %v2004
      %v2006 = vpop.f32.mrb[0].mxu0
      %2007 = vmatprep.mubr.f32.mxu0 0.0
      %2008 = vmatmul.mubr.f32.gmra.mrb[0].mxu0 %v1581
      %v2009 = vpop.f32.mrb[0].mxu0
      %v2010 = vadd.f32 0.0, %v2009
      %v2011 = vpop.f32.mrb[0].mxu0
      %2012 = vmatprep.mubr.f32.mxu0 0.0
      %2013 = vmatmul.mubr.f32.gmra.mrb[0].mxu0 %v1584
      %v2014 = vpop.f32.mrb[0].mxu0
      %v2015 = vadd.f32 0.0, %v2014
      %v2016 = vpop.f32.mrb[0].mxu0
      %2017 = vmatprep.mubr.f32.mxu0 0.0
      %2018 = vmatmul.mubr.f32.gmra.mrb[0].mxu0 %v1587
      %v2019 = vpop.f32.mrb[0].mxu0
      %v2020 = vadd.f32 0.0, %v2019
      %v2021 = vpop.f32.mrb[0].mxu0
      %2022 = vmatprep.mubr.f32.mxu0 0.0
      %2023 = vmatmul.mubr.f32.gmra.mrb[0].mxu0 %v1590
      %v2024 = vpop.f32.mrb[0].mxu0
      %v2025 = vadd.f32 0.0, %v2024
      %v2026 = vpop.f32.mrb[0].mxu0
      %2027 = vmatprep.mubr.f32.mxu0 0.0
      %2028 = vmatmul.mubr.f32.gmra.mrb[0].mxu0 %v1593
      %v2029 = vpop.f32.mrb[0].mxu0
      %v2030 = vadd.f32 0.0, %v2029
      %v2031 = vpop.f32.mrb[0].mxu0
      %2032 = vmatprep.mubr.f32.mxu0 0.0
      %2033 = vmatmul.mubr.f32.gmra.mrb[0].mxu0 %v1596
      %v2034 = vpop.f32.mrb[0].mxu0
      %v2035 = vadd.f32 0.0, %v2034
      %v2036 = vpop.f32.mrb[0].mxu0
      %2037 = vmatprep.mubr.f32.mxu0 0.0
      %2038 = vmatmul.mubr.f32.gmra.mrb[0].mxu0 %v1599
      %v2039 = vpop.f32.mrb[0].mxu0
      %v2040 = vadd.f32 0.0, %v2039
      %v2041 = vpop.f32.mrb[0].mxu0
      %2042 = vmatprep.mubr.f32.mxu0 0.0
      %2043 = vmatmul.mubr.f32.gmra.mrb[0].mxu0 %v1602
      %v2044 = vpop.f32.mrb[0].mxu0
      %v2045 = vadd.f32 0.0, %v2044
      %v2046 = vpop.f32.mrb[0].mxu0
      %2047 = vmatprep.mubr.f32.mxu0 0.0
      %2048 = vmatmul.mubr.f32.gmra.mrb[0].mxu0 %v1605
      %v2049 = vpop.f32.mrb[0].mxu0
      %v2050 = vadd.f32 0.0, %v2049
      %v2051 = vpop.f32.mrb[0].mxu0
      %2052 = vmatprep.mubr.f32.mxu0 0.0
      %2053 = vmatmul.mubr.f32.gmra.mrb[0].mxu0 %v1608
      %v2054 = vpop.f32.mrb[0].mxu0
      %v2055 = vadd.f32 0.0, %v2054
      %v2056 = vpop.f32.mrb[0].mxu0
      %2057 = vmatprep.mubr.f32.mxu0 0.0
      %2058 = vmatmul.mubr.f32.gmra.mrb[0].mxu0 %v1611
      %v2059 = vpop.f32.mrb[0].mxu0
      %v2060 = vadd.f32 0.0, %v2059
      %v2061 = vpop.f32.mrb[0].mxu0
      %2062 = vmatprep.mubr.f32.mxu0 0.0
      %2063 = vmatmul.mubr.f32.gmra.mrb[0].mxu0 %v1614
      %v2064 = vpop.f32.mrb[0].mxu0
      %v2065 = vadd.f32 0.0, %v2064
      %v2066 = vpop.f32.mrb[0].mxu0
      %2067 = vmatprep.mubr.f32.mxu0 0.0
      %2068 = vmatmul.mubr.f32.gmra.mrb[0].mxu0 %v1617
      %v2069 = vpop.f32.mrb[0].mxu0
      %v2070 = vadd.f32 0.0, %v2069
      %v2071 = vpop.f32.mrb[0].mxu0
      %2072 = vmatprep.mubr.f32.mxu0 0.0
      %2073 = vmatmul.mubr.f32.gmra.mrb[0].mxu0 %v1620
      %v2074 = vpop.f32.mrb[0].mxu0
      %v2075 = vadd.f32 0.0, %v2074
      %v2076 = vpop.f32.mrb[0].mxu0
      %2077 = vmatprep.mubr.f32.mxu0 0.0
      %2078 = vmatmul.mubr.f32.gmra.mrb[0].mxu0 %v1623
      %v2079 = vpop.f32.mrb[0].mxu0
      %v2080 = vadd.f32 0.0, %v2079
      %v2081 = vpop.f32.mrb[0].mxu0
      %2082 = vmatprep.mubr.f32.mxu0 0.0
      %2083 = vmatmul.mubr.f32.gmra.mrb[0].mxu0 %v1626
      %v2084 = vpop.f32.mrb[0].mxu0
      %v2085 = vadd.f32 0.0, %v2084
      %v2086 = vpop.f32.mrb[0].mxu0
      %2087 = vmatprep.mubr.f32.mxu0 0.0
      %2088 = vmatmul.mubr.f32.gmra.mrb[0].mxu0 %v1629
      %v2089 = vpop.f32.mrb[0].mxu0
      %v2090 = vadd.f32 0.0, %v2089
      %v2091 = vpop.f32.mrb[0].mxu0
      %2092 = vmatprep.mubr.f32.mxu0 0.0
      %2093 = vmatmul.mubr.f32.gmra.mrb[0].mxu0 %v1632
      %v2094 = vpop.f32.mrb[0].mxu0
      %v2095 = vadd.f32 0.0, %v2094
      %v2096 = vpop.f32.mrb[0].mxu0
      %2097 = vmatprep.mubr.f32.mxu0 0.0
      %2098 = vmatmul.mubr.f32.gmra.mrb[0].mxu0 %v1635
      %v2099 = vpop.f32.mrb[0].mxu0
      %v2100 = vadd.f32 0.0, %v2099
      %v2101 = vpop.f32.mrb[0].mxu0
      %2102 = vmatprep.mubr.f32.mxu0 0.0
      %2103 = vmatmul.mubr.f32.gmra.mrb[0].mxu0 %v1638
      %v2104 = vpop.f32.mrb[0].mxu0
      %v2105 = vadd.f32 0.0, %v2104
      %v2106 = vpop.f32.mrb[0].mxu0
      %2107 = vmatprep.mubr.f32.mxu0 0.0
      %2108 = vmatmul.mubr.f32.gmra.mrb[0].mxu0 %v1641
      %v2109 = vpop.f32.mrb[0].mxu0
      %v2110 = vadd.f32 0.0, %v2109
      %v2111 = vpop.f32.mrb[0].mxu0
      %2112 = vmatprep.mubr.f32.mxu0 0.0
      %2113 = vmatmul.mubr.f32.gmra.mrb[0].mxu0 %v1644
      %v2114 = vpop.f32.mrb[0].mxu0
      %v2115 = vadd.f32 0.0, %v2114
      %v2116 = vpop.f32.mrb[0].mxu0
      %2117 = vmatprep.mubr.f32.mxu0 0.0
      %2118 = vmatmul.mubr.f32.gmra.mrb[0].mxu0 %v1647
      %v2119 = vpop.f32.mrb[0].mxu0
      %v2120 = vadd.f32 0.0, %v2119
      %v2121 = vpop.f32.mrb[0].mxu0
      %2122 = vmatprep.mubr.f32.mxu0 0.0
      %2123 = vmatmul.mubr.f32.gmra.mrb[0].mxu0 %v1650
      %v2124 = vpop.f32.mrb[0].mxu0
      %v2125 = vadd.f32 0.0, %v2124
      %v2126 = vpop.f32.mrb[0].mxu0
      %2127 = vmatprep.mubr.f32.mxu0 0.0
      %2128 = vmatmul.mubr.f32.gmra.mrb[0].mxu0 %v1653
      %v2129 = vpop.f32.mrb[0].mxu0
      %v2130 = vadd.f32 0.0, %v2129
      %v2131 = vpop.f32.mrb[0].mxu0
      %2132 = vmatprep.mubr.f32.mxu0 0.0
      %2133 = vmatmul.mubr.f32.gmra.mrb[0].mxu0 %v1656
      %v2134 = vpop.f32.mrb[0].mxu0
      %v2135 = vadd.f32 0.0, %v2134
      %v2136 = vpop.f32.mrb[0].mxu0
      %2137 = vmatprep.mubr.f32.mxu0 0.0
      %2138 = vmatmul.mubr.f32.gmra.mrb[0].mxu0 %v1659
      %v2139 = vpop.f32.mrb[0].mxu0
      %v2140 = vadd.f32 0.0, %v2139
      %v2141 = vpop.f32.mrb[0].mxu0
      %2142 = vdwg.mxu0
      %v2143 = vadd.f32 %v1094, %v1728
      %v2144 = vadd.f32 %v1096, %v1730
      %v2145 = vadd.f32 %v1351, %v1985
      %v2146 = vadd.f32 %v1100, %v1734
      %v2147 = vadd.f32 %v1102, %v1736
      %v2148 = vadd.f32 %v1356, %v1990
      %v2149 = vadd.f32 %v1106, %v1740
      %v2150 = vadd.f32 %v1108, %v1742
      %v2151 = vadd.f32 %v1361, %v1995
      %v2152 = vadd.f32 %v1112, %v1746
      %v2153 = vadd.f32 %v1114, %v1748
      %v2154 = vadd.f32 %v1366, %v2000
      %v2155 = vadd.f32 %v1118, %v1752
      %v2156 = vadd.f32 %v1120, %v1754
      %v2157 = vadd.f32 %v1371, %v2005
      %v2158 = vadd.f32 %v1124, %v1758
      %v2159 = vadd.f32 %v1126, %v1760
      %v2160 = vadd.f32 %v1376, %v2010
      %v2161 = vadd.f32 %v1130, %v1764
      %v2162 = vadd.f32 %v1132, %v1766
      %v2163 = vadd.f32 %v1381, %v2015
      %v2164 = vadd.f32 %v1136, %v1770
      %v2165 = vadd.f32 %v1138, %v1772
      %v2166 = vadd.f32 %v1386, %v2020
      %v2167 = vadd.f32 %v1142, %v1776
      %v2168 = vadd.f32 %v1144, %v1778
      %v2169 = vadd.f32 %v1391, %v2025
      %v2170 = vadd.f32 %v1148, %v1782
      %v2171 = vadd.f32 %v1150, %v1784
      %v2172 = vadd.f32 %v1396, %v2030
      %v2173 = vadd.f32 %v1154, %v1788
      %v2174 = vadd.f32 %v1156, %v1790
      %v2175 = vadd.f32 %v1401, %v2035
      %v2176 = vadd.f32 %v1160, %v1794
      %v2177 = vadd.f32 %v1162, %v1796
      %v2178 = vadd.f32 %v1406, %v2040
      %v2179 = vadd.f32 %v1166, %v1800
      %v2180 = vadd.f32 %v1168, %v1802
      %v2181 = vadd.f32 %v1411, %v2045
      %v2182 = vadd.f32 %v1172, %v1806
      %v2183 = vadd.f32 %v1174, %v1808
      %v2184 = vadd.f32 %v1416, %v2050
      %v2185 = vadd.f32 %v1178, %v1812
      %v2186 = vadd.f32 %v1180, %v1814
      %v2187 = vadd.f32 %v1421, %v2055
      %v2188 = vadd.f32 %v1184, %v1818
      %v2189 = vadd.f32 %v1186, %v1820
      %v2190 = vadd.f32 %v1426, %v2060
      %v2191 = vadd.f32 %v1190, %v1824
      %v2192 = vadd.f32 %v1192, %v1826
      %v2193 = vadd.f32 %v1431, %v2065
      %v2194 = vadd.f32 %v1196, %v1830
      %v2195 = vadd.f32 %v1198, %v1832
      %v2196 = vadd.f32 %v1436, %v2070
      %v2197 = vadd.f32 %v1202, %v1836
      %v2198 = vadd.f32 %v1204, %v1838
      %v2199 = vadd.f32 %v1441, %v2075
      %v2200 = vadd.f32 %v1208, %v1842
      %v2201 = vadd.f32 %v1210, %v1844
      %v2202 = vadd.f32 %v1446, %v2080
      %v2203 = vadd.f32 %v1214, %v1848
      %v2204 = vadd.f32 %v1216, %v1850
      %v2205 = vadd.f32 %v1451, %v2085
      %v2206 = vadd.f32 %v1220, %v1854
      %v2207 = vadd.f32 %v1222, %v1856
      %v2208 = vadd.f32 %v1456, %v2090
      %v2209 = vadd.f32 %v1226, %v1860
      %v2210 = vadd.f32 %v1228, %v1862
      %v2211 = vadd.f32 %v1461, %v2095
      %v2212 = vadd.f32 %v1232, %v1866
      %v2213 = vadd.f32 %v1234, %v1868
      %v2214 = vadd.f32 %v1466, %v2100
      %v2215 = vadd.f32 %v1238, %v1872
      %v2216 = vadd.f32 %v1240, %v1874
      %v2217 = vadd.f32 %v1471, %v2105
      %v2218 = vadd.f32 %v1244, %v1878
      %v2219 = vadd.f32 %v1246, %v1880
      %v2220 = vadd.f32 %v1476, %v2110
      %v2221 = vadd.f32 %v1250, %v1884
      %v2222 = vadd.f32 %v1252, %v1886
      %v2223 = vadd.f32 %v1481, %v2115
      %v2224 = vadd.f32 %v1256, %v1890
      %v2225 = vadd.f32 %v1258, %v1892
      %v2226 = vadd.f32 %v1486, %v2120
      %v2227 = vadd.f32 %v1262, %v1896
      %v2228 = vadd.f32 %v1264, %v1898
      %v2229 = vadd.f32 %v1491, %v2125
      %v2230 = vadd.f32 %v1268, %v1902
      %v2231 = vadd.f32 %v1270, %v1904
      %v2232 = vadd.f32 %v1496, %v2130
      %v2233 = vadd.f32 %v1274, %v1908
      %v2234 = vadd.f32 %v1276, %v1910
      %v2235 = vadd.f32 %v1501, %v2135
      %v2236 = vadd.f32 %v1280, %v1914
      %v2237 = vadd.f32 %v1282, %v1916
      %v2238 = vadd.f32 %v1506, %v2140
      %s2239 = scalar_lea.vmem %s1, 768
      %v2240 = vld [vmem:[%s2239] sm:$0xff]
      %v2241 = vld [vmem:[%s2239 + $0x8] sm:$0xff]
      %v2242 = vld [vmem:[%s2239 + $0x10] sm:$0xff]
      %v2243 = vld [vmem:[%s2239 + $0x18] sm:$0xff]
      %v2244 = vld [vmem:[%s2239 + $0x20] sm:$0xff]
      %v2245 = vld [vmem:[%s2239 + $0x28] sm:$0xff]
      %v2246 = vld [vmem:[%s2239 + $0x30] sm:$0xff]
      %v2247 = vld [vmem:[%s2239 + $0x38] sm:$0xff]
      %v2248 = vld [vmem:[%s2239 + $0x40] sm:$0xff]
      %v2249 = vld [vmem:[%s2239 + $0x48] sm:$0xff]
      %v2250 = vld [vmem:[%s2239 + $0x50] sm:$0xff]
      %v2251 = vld [vmem:[%s2239 + $0x58] sm:$0xff]
      %v2252 = vld [vmem:[%s2239 + $0x60] sm:$0xff]
      %v2253 = vld [vmem:[%s2239 + $0x68] sm:$0xff]
      %v2254 = vld [vmem:[%s2239 + $0x70] sm:$0xff]
      %v2255 = vld [vmem:[%s2239 + $0x78] sm:$0xff]
      %v2256 = vld [vmem:[%s2239 + $0x80] sm:$0xff]
      %v2257 = vld [vmem:[%s2239 + $0x88] sm:$0xff]
      %v2258 = vld [vmem:[%s2239 + $0x90] sm:$0xff]
      %v2259 = vld [vmem:[%s2239 + $0x98] sm:$0xff]
      %v2260 = vld [vmem:[%s2239 + $0xa0] sm:$0xff]
      %v2261 = vld [vmem:[%s2239 + $0xa8] sm:$0xff]
      %v2262 = vld [vmem:[%s2239 + $0xb0] sm:$0xff]
      %v2263 = vld [vmem:[%s2239 + $0xb8] sm:$0xff]
      %v2264 = vld [vmem:[%s2239 + $0xc0] sm:$0xff]
      %v2265 = vld [vmem:[%s2239 + $0xc8] sm:$0xff]
      %v2266 = vld [vmem:[%s2239 + $0xd0] sm:$0xff]
      %v2267 = vld [vmem:[%s2239 + $0xd8] sm:$0xff]
      %v2268 = vld [vmem:[%s2239 + $0xe0] sm:$0xff]
      %v2269 = vld [vmem:[%s2239 + $0xe8] sm:$0xff]
      %v2270 = vld [vmem:[%s2239 + $0xf0] sm:$0xff]
      %v2271 = vld [vmem:[%s2239 + $0xf8] sm:$0xff]
      %2272 = vrot.lane.b32.xlu0 %v252, 108
      %v2273 = vpop.permute.xlu0 %2272
      %2274 = vrot.lane.b32.xlu0 %v253, 108
      %v2275 = vpop.permute.xlu0 %2274
      %2276 = vrot.lane.b32.xlu0 %v254, 108
      %v2277 = vpop.permute.xlu0 %2276
      %2278 = vrot.lane.b32.xlu0 %v255, 108
      %v2279 = vpop.permute.xlu0 %2278
      %2280 = vrot.lane.b32.xlu0 %v256, 108
      %v2281 = vpop.permute.xlu0 %2280
      %2282 = vrot.lane.b32.xlu0 %v257, 108
      %v2283 = vpop.permute.xlu0 %2282
      %vm2284 = vcmask 883712
      %v2285 = vsel %vm2284, %v2273, %v2275
      %v2286 = vsel %vm2284, %v2275, %v2277
      %v2287 = vsel %vm2284, %v2279, %v2281
      %v2288 = vsel %vm2284, %v2281, %v2283
      %v2296 = vsel %vm352, %v2240, 0
      %v2299 = vsel %vm352, %v2241, 0
      %v2302 = vsel %vm352, %v2242, 0
      %v2305 = vsel %vm352, %v2243, 0
      %v2308 = vsel %vm352, %v2244, 0
      %v2311 = vsel %vm352, %v2245, 0
      %v2314 = vsel %vm352, %v2246, 0
      %v2317 = vsel %vm352, %v2247, 0
      %v2320 = vsel %vm352, %v2248, 0
      %v2323 = vsel %vm352, %v2249, 0
      %v2326 = vsel %vm352, %v2250, 0
      %v2329 = vsel %vm352, %v2251, 0
      %v2332 = vsel %vm352, %v2252, 0
      %v2335 = vsel %vm352, %v2253, 0
      %v2338 = vsel %vm352, %v2254, 0
      %v2341 = vsel %vm352, %v2255, 0
      %v2344 = vsel %vm352, %v2256, 0
      %v2347 = vsel %vm352, %v2257, 0
      %v2350 = vsel %vm352, %v2258, 0
      %v2353 = vsel %vm352, %v2259, 0
      %v2356 = vsel %vm352, %v2260, 0
      %v2359 = vsel %vm352, %v2261, 0
      %v2362 = vsel %vm352, %v2262, 0
      %v2365 = vsel %vm352, %v2263, 0
      %v2368 = vsel %vm352, %v2264, 0
      %v2371 = vsel %vm352, %v2265, 0
      %v2374 = vsel %vm352, %v2266, 0
      %v2377 = vsel %vm352, %v2267, 0
      %v2380 = vsel %vm352, %v2268, 0
      %v2383 = vsel %vm352, %v2269, 0
      %v2386 = vsel %vm352, %v2270, 0
      %v2389 = vsel %vm352, %v2271, 0
      %2391 = vmatprep.subr.mxu0 %v2286
      %2392 = vmatpush1.msra.mxu0 %v2285
      %2393 = vmatprep.subr.mxu0 %v2288
      %2394 = vmatpush1.msra.mxu0 %v2287
      %2395 = vmatprep.subr.mxu0 0.0
      %2396 = vmatpush1.msra.mxu0 0.0
      %2397 = vmatprep.subr.mxu0 0.0
      %2398 = vmatpush1.msra.mxu0 0.0
      %2399 = vmatprep.subr.mxu0 0.0
      %2400 = vmatpush1.msra.mxu0 0.0
      %2401 = vmatprep.subr.mxu0 0.0
      %2402 = vmatpush1.msra.mxu0 0.0
      %2403 = vmatprep.subr.mxu0 0.0
      %2404 = vmatpush1.msra.mxu0 0.0
      %2405 = vmatprep.subr.mxu0 0.0
      %2406 = vmatpush1.msra.mxu0 0.0
      %2407 = vmatprep.subr.mxu0 0.0
      %2408 = vmatpush1.msra.mxu0 0.0
      %2409 = vmatprep.subr.mxu0 0.0
      %2410 = vmatpush1.msra.mxu0 0.0
      %2411 = vmatprep.subr.mxu0 0.0
      %2412 = vmatpush1.msra.mxu0 0.0
      %2413 = vmatprep.subr.mxu0 0.0
      %2414 = vmatpush1.msra.mxu0 0.0
      %2415 = vmatprep.subr.mxu0 0.0
      %2416 = vmatpush1.msra.mxu0 0.0
      %2417 = vmatprep.subr.mxu0 0.0
      %2418 = vmatpush1.msra.mxu0 0.0
      %2419 = vmatprep.subr.mxu0 0.0
      %2420 = vmatpush1.msra.mxu0 0.0
      %2421 = vmatprep.subr.mxu0 0.0
      %2422 = vmatpush1.msra.mxu0 0.0
      %2423 = vmatprep.subr.mxu0 0.0
      %2424 = vmatpush1.msra.mxu0 0.0
      %2425 = vmatprep.subr.mxu0 0.0
      %2426 = vmatpush1.msra.mxu0 0.0
      %2427 = vmatprep.subr.mxu0 0.0
      %2428 = vmatpush1.msra.mxu0 0.0
      %2429 = vmatprep.subr.mxu0 0.0
      %2430 = vmatpush1.msra.mxu0 0.0
      %2431 = vmatprep.subr.mxu0 0.0
      %2432 = vmatpush1.msra.mxu0 0.0
      %2433 = vmatprep.subr.mxu0 0.0
      %2434 = vmatpush1.msra.mxu0 0.0
      %2435 = vmatprep.subr.mxu0 0.0
      %2436 = vmatpush1.msra.mxu0 0.0
      %2437 = vmatprep.subr.mxu0 0.0
      %2438 = vmatpush1.msra.mxu0 0.0
      %2439 = vmatprep.subr.mxu0 0.0
      %2440 = vmatpush1.msra.mxu0 0.0
      %2441 = vmatprep.subr.mxu0 0.0
      %2442 = vmatpush1.msra.mxu0 0.0
      %2443 = vmatprep.subr.mxu0 0.0
      %2444 = vmatpush1.msra.mxu0 0.0
      %2445 = vmatprep.subr.mxu0 0.0
      %2446 = vmatpush1.msra.mxu0 0.0
      %2447 = vmatprep.subr.mxu0 0.0
      %2448 = vmatpush1.msra.mxu0 0.0
      %2449 = vmatprep.subr.mxu0 0.0
      %2450 = vmatpush1.msra.mxu0 0.0
      %2451 = vmatprep.subr.mxu0 0.0
      %2452 = vmatpush1.msra.mxu0 0.0
      %2453 = vmatprep.subr.mxu0 0.0
      %2454 = vmatpush1.msra.mxu0 0.0
      %2455 = vmatprep.mubr.f32.mxu0 0.0
      %2456 = vmatmul.mubr.f32.gmra.mrb[0].mxu0 %v2296
      %v2457 = vpop.f32.mrb[0].mxu0
      %v2458 = vadd.f32 0.0, %v2457
      %v2459 = vpop.f32.mrb[0].mxu0
      %v2460 = vadd.f32 0.0, %v2459
      %2461 = vmatprep.mubr.f32.mxu0 0.0
      %2462 = vmatmul.mubr.f32.gmra.mrb[0].mxu0 %v2299
      %v2463 = vpop.f32.mrb[0].mxu0
      %v2464 = vadd.f32 0.0, %v2463
      %v2465 = vpop.f32.mrb[0].mxu0
      %v2466 = vadd.f32 0.0, %v2465
      %2467 = vmatprep.mubr.f32.mxu0 0.0
      %2468 = vmatmul.mubr.f32.gmra.mrb[0].mxu0 %v2302
      %v2469 = vpop.f32.mrb[0].mxu0
      %v2470 = vadd.f32 0.0, %v2469
      %v2471 = vpop.f32.mrb[0].mxu0
      %v2472 = vadd.f32 0.0, %v2471
      %2473 = vmatprep.mubr.f32.mxu0 0.0
      %2474 = vmatmul.mubr.f32.gmra.mrb[0].mxu0 %v2305
      %v2475 = vpop.f32.mrb[0].mxu0
      %v2476 = vadd.f32 0.0, %v2475
      %v2477 = vpop.f32.mrb[0].mxu0
      %v2478 = vadd.f32 0.0, %v2477
      %2479 = vmatprep.mubr.f32.mxu0 0.0
      %2480 = vmatmul.mubr.f32.gmra.mrb[0].mxu0 %v2308
      %v2481 = vpop.f32.mrb[0].mxu0
      %v2482 = vadd.f32 0.0, %v2481
      %v2483 = vpop.f32.mrb[0].mxu0
      %v2484 = vadd.f32 0.0, %v2483
      %2485 = vmatprep.mubr.f32.mxu0 0.0
      %2486 = vmatmul.mubr.f32.gmra.mrb[0].mxu0 %v2311
      %v2487 = vpop.f32.mrb[0].mxu0
      %v2488 = vadd.f32 0.0, %v2487
      %v2489 = vpop.f32.mrb[0].mxu0
      %v2490 = vadd.f32 0.0, %v2489
      %2491 = vmatprep.mubr.f32.mxu0 0.0
      %2492 = vmatmul.mubr.f32.gmra.mrb[0].mxu0 %v2314
      %v2493 = vpop.f32.mrb[0].mxu0
      %v2494 = vadd.f32 0.0, %v2493
      %v2495 = vpop.f32.mrb[0].mxu0
      %v2496 = vadd.f32 0.0, %v2495
      %2497 = vmatprep.mubr.f32.mxu0 0.0
      %2498 = vmatmul.mubr.f32.gmra.mrb[0].mxu0 %v2317
      %v2499 = vpop.f32.mrb[0].mxu0
      %v2500 = vadd.f32 0.0, %v2499
      %v2501 = vpop.f32.mrb[0].mxu0
      %v2502 = vadd.f32 0.0, %v2501
      %2503 = vmatprep.mubr.f32.mxu0 0.0
      %2504 = vmatmul.mubr.f32.gmra.mrb[0].mxu0 %v2320
      %v2505 = vpop.f32.mrb[0].mxu0
      %v2506 = vadd.f32 0.0, %v2505
      %v2507 = vpop.f32.mrb[0].mxu0
      %v2508 = vadd.f32 0.0, %v2507
      %2509 = vmatprep.mubr.f32.mxu0 0.0
      %2510 = vmatmul.mubr.f32.gmra.mrb[0].mxu0 %v2323
      %v2511 = vpop.f32.mrb[0].mxu0
      %v2512 = vadd.f32 0.0, %v2511
      %v2513 = vpop.f32.mrb[0].mxu0
      %v2514 = vadd.f32 0.0, %v2513
      %2515 = vmatprep.mubr.f32.mxu0 0.0
      %2516 = vmatmul.mubr.f32.gmra.mrb[0].mxu0 %v2326
      %v2517 = vpop.f32.mrb[0].mxu0
      %v2518 = vadd.f32 0.0, %v2517
      %v2519 = vpop.f32.mrb[0].mxu0
      %v2520 = vadd.f32 0.0, %v2519
      %2521 = vmatprep.mubr.f32.mxu0 0.0
      %2522 = vmatmul.mubr.f32.gmra.mrb[0].mxu0 %v2329
      %v2523 = vpop.f32.mrb[0].mxu0
      %v2524 = vadd.f32 0.0, %v2523
      %v2525 = vpop.f32.mrb[0].mxu0
      %v2526 = vadd.f32 0.0, %v2525
      %2527 = vmatprep.mubr.f32.mxu0 0.0
      %2528 = vmatmul.mubr.f32.gmra.mrb[0].mxu0 %v2332
      %v2529 = vpop.f32.mrb[0].mxu0
      %v2530 = vadd.f32 0.0, %v2529
      %v2531 = vpop.f32.mrb[0].mxu0
      %v2532 = vadd.f32 0.0, %v2531
      %2533 = vmatprep.mubr.f32.mxu0 0.0
      %2534 = vmatmul.mubr.f32.gmra.mrb[0].mxu0 %v2335
      %v2535 = vpop.f32.mrb[0].mxu0
      %v2536 = vadd.f32 0.0, %v2535
      %v2537 = vpop.f32.mrb[0].mxu0
      %v2538 = vadd.f32 0.0, %v2537
      %2539 = vmatprep.mubr.f32.mxu0 0.0
      %2540 = vmatmul.mubr.f32.gmra.mrb[0].mxu0 %v2338
      %v2541 = vpop.f32.mrb[0].mxu0
      %v2542 = vadd.f32 0.0, %v2541
      %v2543 = vpop.f32.mrb[0].mxu0
      %v2544 = vadd.f32 0.0, %v2543
      %2545 = vmatprep.mubr.f32.mxu0 0.0
      %2546 = vmatmul.mubr.f32.gmra.mrb[0].mxu0 %v2341
      %v2547 = vpop.f32.mrb[0].mxu0
      %v2548 = vadd.f32 0.0, %v2547
      %v2549 = vpop.f32.mrb[0].mxu0
      %v2550 = vadd.f32 0.0, %v2549
      %2551 = vmatprep.mubr.f32.mxu0 0.0
      %2552 = vmatmul.mubr.f32.gmra.mrb[0].mxu0 %v2344
      %v2553 = vpop.f32.mrb[0].mxu0
      %v2554 = vadd.f32 0.0, %v2553
      %v2555 = vpop.f32.mrb[0].mxu0
      %v2556 = vadd.f32 0.0, %v2555
      %2557 = vmatprep.mubr.f32.mxu0 0.0
      %2558 = vmatmul.mubr.f32.gmra.mrb[0].mxu0 %v2347
      %v2559 = vpop.f32.mrb[0].mxu0
      %v2560 = vadd.f32 0.0, %v2559
      %v2561 = vpop.f32.mrb[0].mxu0
      %v2562 = vadd.f32 0.0, %v2561
      %2563 = vmatprep.mubr.f32.mxu0 0.0
      %2564 = vmatmul.mubr.f32.gmra.mrb[0].mxu0 %v2350
      %v2565 = vpop.f32.mrb[0].mxu0
      %v2566 = vadd.f32 0.0, %v2565
      %v2567 = vpop.f32.mrb[0].mxu0
      %v2568 = vadd.f32 0.0, %v2567
      %2569 = vmatprep.mubr.f32.mxu0 0.0
      %2570 = vmatmul.mubr.f32.gmra.mrb[0].mxu0 %v2353
      %v2571 = vpop.f32.mrb[0].mxu0
      %v2572 = vadd.f32 0.0, %v2571
      %v2573 = vpop.f32.mrb[0].mxu0
      %v2574 = vadd.f32 0.0, %v2573
      %2575 = vmatprep.mubr.f32.mxu0 0.0
      %2576 = vmatmul.mubr.f32.gmra.mrb[0].mxu0 %v2356
      %v2577 = vpop.f32.mrb[0].mxu0
      %v2578 = vadd.f32 0.0, %v2577
      %v2579 = vpop.f32.mrb[0].mxu0
      %v2580 = vadd.f32 0.0, %v2579
      %2581 = vmatprep.mubr.f32.mxu0 0.0
      %2582 = vmatmul.mubr.f32.gmra.mrb[0].mxu0 %v2359
      %v2583 = vpop.f32.mrb[0].mxu0
      %v2584 = vadd.f32 0.0, %v2583
      %v2585 = vpop.f32.mrb[0].mxu0
      %v2586 = vadd.f32 0.0, %v2585
      %2587 = vmatprep.mubr.f32.mxu0 0.0
      %2588 = vmatmul.mubr.f32.gmra.mrb[0].mxu0 %v2362
      %v2589 = vpop.f32.mrb[0].mxu0
      %v2590 = vadd.f32 0.0, %v2589
      %v2591 = vpop.f32.mrb[0].mxu0
      %v2592 = vadd.f32 0.0, %v2591
      %2593 = vmatprep.mubr.f32.mxu0 0.0
      %2594 = vmatmul.mubr.f32.gmra.mrb[0].mxu0 %v2365
      %v2595 = vpop.f32.mrb[0].mxu0
      %v2596 = vadd.f32 0.0, %v2595
      %v2597 = vpop.f32.mrb[0].mxu0
      %v2598 = vadd.f32 0.0, %v2597
      %2599 = vmatprep.mubr.f32.mxu0 0.0
      %2600 = vmatmul.mubr.f32.gmra.mrb[0].mxu0 %v2368
      %v2601 = vpop.f32.mrb[0].mxu0
      %v2602 = vadd.f32 0.0, %v2601
      %v2603 = vpop.f32.mrb[0].mxu0
      %v2604 = vadd.f32 0.0, %v2603
      %2605 = vmatprep.mubr.f32.mxu0 0.0
      %2606 = vmatmul.mubr.f32.gmra.mrb[0].mxu0 %v2371
      %v2607 = vpop.f32.mrb[0].mxu0
      %v2608 = vadd.f32 0.0, %v2607
      %v2609 = vpop.f32.mrb[0].mxu0
      %v2610 = vadd.f32 0.0, %v2609
      %2611 = vmatprep.mubr.f32.mxu0 0.0
      %2612 = vmatmul.mubr.f32.gmra.mrb[0].mxu0 %v2374
      %v2613 = vpop.f32.mrb[0].mxu0
      %v2614 = vadd.f32 0.0, %v2613
      %v2615 = vpop.f32.mrb[0].mxu0
      %v2616 = vadd.f32 0.0, %v2615
      %2617 = vmatprep.mubr.f32.mxu0 0.0
      %2618 = vmatmul.mubr.f32.gmra.mrb[0].mxu0 %v2377
      %v2619 = vpop.f32.mrb[0].mxu0
      %v2620 = vadd.f32 0.0, %v2619
      %v2621 = vpop.f32.mrb[0].mxu0
      %v2622 = vadd.f32 0.0, %v2621
      %2623 = vmatprep.mubr.f32.mxu0 0.0
      %2624 = vmatmul.mubr.f32.gmra.mrb[0].mxu0 %v2380
      %v2625 = vpop.f32.mrb[0].mxu0
      %v2626 = vadd.f32 0.0, %v2625
      %v2627 = vpop.f32.mrb[0].mxu0
      %v2628 = vadd.f32 0.0, %v2627
      %2629 = vmatprep.mubr.f32.mxu0 0.0
      %2630 = vmatmul.mubr.f32.gmra.mrb[0].mxu0 %v2383
      %v2631 = vpop.f32.mrb[0].mxu0
      %v2632 = vadd.f32 0.0, %v2631
      %v2633 = vpop.f32.mrb[0].mxu0
      %v2634 = vadd.f32 0.0, %v2633
      %2635 = vmatprep.mubr.f32.mxu0 0.0
      %2636 = vmatmul.mubr.f32.gmra.mrb[0].mxu0 %v2386
      %v2637 = vpop.f32.mrb[0].mxu0
      %v2638 = vadd.f32 0.0, %v2637
      %v2639 = vpop.f32.mrb[0].mxu0
      %v2640 = vadd.f32 0.0, %v2639
      %2641 = vmatprep.mubr.f32.mxu0 0.0
      %2642 = vmatmul.mubr.f32.gmra.mrb[0].mxu0 %v2389
      %v2643 = vpop.f32.mrb[0].mxu0
      %v2644 = vadd.f32 0.0, %v2643
      %v2645 = vpop.f32.mrb[0].mxu0
      %v2646 = vadd.f32 0.0, %v2645
      %2647 = vdwg.mxu0
      %2648 = vmatprep.subr.mxu0 0.0
      %2649 = vmatpush1.msra.mxu0 %v2277
      %2650 = vmatprep.subr.mxu0 0.0
      %2651 = vmatpush1.msra.mxu0 %v2283
      %2652 = vmatprep.subr.mxu0 0.0
      %2653 = vmatpush1.msra.mxu0 0.0
      %2654 = vmatprep.subr.mxu0 0.0
      %2655 = vmatpush1.msra.mxu0 0.0
      %2656 = vmatprep.subr.mxu0 0.0
      %2657 = vmatpush1.msra.mxu0 0.0
      %2658 = vmatprep.subr.mxu0 0.0
      %2659 = vmatpush1.msra.mxu0 0.0
      %2660 = vmatprep.subr.mxu0 0.0
      %2661 = vmatpush1.msra.mxu0 0.0
      %2662 = vmatprep.subr.mxu0 0.0
      %2663 = vmatpush1.msra.mxu0 0.0
      %2664 = vmatprep.subr.mxu0 0.0
      %2665 = vmatpush1.msra.mxu0 0.0
      %2666 = vmatprep.subr.mxu0 0.0
      %2667 = vmatpush1.msra.mxu0 0.0
      %2668 = vmatprep.subr.mxu0 0.0
      %2669 = vmatpush1.msra.mxu0 0.0
      %2670 = vmatprep.subr.mxu0 0.0
      %2671 = vmatpush1.msra.mxu0 0.0
      %2672 = vmatprep.subr.mxu0 0.0
      %2673 = vmatpush1.msra.mxu0 0.0
      %2674 = vmatprep.subr.mxu0 0.0
      %2675 = vmatpush1.msra.mxu0 0.0
      %2676 = vmatprep.subr.mxu0 0.0
      %2677 = vmatpush1.msra.mxu0 0.0
      %2678 = vmatprep.subr.mxu0 0.0
      %2679 = vmatpush1.msra.mxu0 0.0
      %2680 = vmatprep.subr.mxu0 0.0
      %2681 = vmatpush1.msra.mxu0 0.0
      %2682 = vmatprep.subr.mxu0 0.0
      %2683 = vmatpush1.msra.mxu0 0.0
      %2684 = vmatprep.subr.mxu0 0.0
      %2685 = vmatpush1.msra.mxu0 0.0
      %2686 = vmatprep.subr.mxu0 0.0
      %2687 = vmatpush1.msra.mxu0 0.0
      %2688 = vmatprep.subr.mxu0 0.0
      %2689 = vmatpush1.msra.mxu0 0.0
      %2690 = vmatprep.subr.mxu0 0.0
      %2691 = vmatpush1.msra.mxu0 0.0
      %2692 = vmatprep.subr.mxu0 0.0
      %2693 = vmatpush1.msra.mxu0 0.0
      %2694 = vmatprep.subr.mxu0 0.0
      %2695 = vmatpush1.msra.mxu0 0.0
      %2696 = vmatprep.subr.mxu0 0.0
      %2697 = vmatpush1.msra.mxu0 0.0
      %2698 = vmatprep.subr.mxu0 0.0
      %2699 = vmatpush1.msra.mxu0 0.0
      %2700 = vmatprep.subr.mxu0 0.0
      %2701 = vmatpush1.msra.mxu0 0.0
      %2702 = vmatprep.subr.mxu0 0.0
      %2703 = vmatpush1.msra.mxu0 0.0
      %2704 = vmatprep.subr.mxu0 0.0
      %2705 = vmatpush1.msra.mxu0 0.0
      %2706 = vmatprep.subr.mxu0 0.0
      %2707 = vmatpush1.msra.mxu0 0.0
      %2708 = vmatprep.subr.mxu0 0.0
      %2709 = vmatpush1.msra.mxu0 0.0
      %2710 = vmatprep.subr.mxu0 0.0
      %2711 = vmatpush1.msra.mxu0 0.0
      %2712 = vmatprep.mubr.f32.mxu0 0.0
      %2713 = vmatmul.mubr.f32.gmra.mrb[0].mxu0 %v2296
      %v2714 = vpop.f32.mrb[0].mxu0
      %v2715 = vadd.f32 0.0, %v2714
      %v2716 = vpop.f32.mrb[0].mxu0
      %2717 = vmatprep.mubr.f32.mxu0 0.0
      %2718 = vmatmul.mubr.f32.gmra.mrb[0].mxu0 %v2299
      %v2719 = vpop.f32.mrb[0].mxu0
      %v2720 = vadd.f32 0.0, %v2719
      %v2721 = vpop.f32.mrb[0].mxu0
      %2722 = vmatprep.mubr.f32.mxu0 0.0
      %2723 = vmatmul.mubr.f32.gmra.mrb[0].mxu0 %v2302
      %v2724 = vpop.f32.mrb[0].mxu0
      %v2725 = vadd.f32 0.0, %v2724
      %v2726 = vpop.f32.mrb[0].mxu0
      %2727 = vmatprep.mubr.f32.mxu0 0.0
      %2728 = vmatmul.mubr.f32.gmra.mrb[0].mxu0 %v2305
      %v2729 = vpop.f32.mrb[0].mxu0
      %v2730 = vadd.f32 0.0, %v2729
      %v2731 = vpop.f32.mrb[0].mxu0
      %2732 = vmatprep.mubr.f32.mxu0 0.0
      %2733 = vmatmul.mubr.f32.gmra.mrb[0].mxu0 %v2308
      %v2734 = vpop.f32.mrb[0].mxu0
      %v2735 = vadd.f32 0.0, %v2734
      %v2736 = vpop.f32.mrb[0].mxu0
      %2737 = vmatprep.mubr.f32.mxu0 0.0
      %2738 = vmatmul.mubr.f32.gmra.mrb[0].mxu0 %v2311
      %v2739 = vpop.f32.mrb[0].mxu0
      %v2740 = vadd.f32 0.0, %v2739
      %v2741 = vpop.f32.mrb[0].mxu0
      %2742 = vmatprep.mubr.f32.mxu0 0.0
      %2743 = vmatmul.mubr.f32.gmra.mrb[0].mxu0 %v2314
      %v2744 = vpop.f32.mrb[0].mxu0
      %v2745 = vadd.f32 0.0, %v2744
      %v2746 = vpop.f32.mrb[0].mxu0
      %2747 = vmatprep.mubr.f32.mxu0 0.0
      %2748 = vmatmul.mubr.f32.gmra.mrb[0].mxu0 %v2317
      %v2749 = vpop.f32.mrb[0].mxu0
      %v2750 = vadd.f32 0.0, %v2749
      %v2751 = vpop.f32.mrb[0].mxu0
      %2752 = vmatprep.mubr.f32.mxu0 0.0
      %2753 = vmatmul.mubr.f32.gmra.mrb[0].mxu0 %v2320
      %v2754 = vpop.f32.mrb[0].mxu0
      %v2755 = vadd.f32 0.0, %v2754
      %v2756 = vpop.f32.mrb[0].mxu0
      %2757 = vmatprep.mubr.f32.mxu0 0.0
      %2758 = vmatmul.mubr.f32.gmra.mrb[0].mxu0 %v2323
      %v2759 = vpop.f32.mrb[0].mxu0
      %v2760 = vadd.f32 0.0, %v2759
      %v2761 = vpop.f32.mrb[0].mxu0
      %2762 = vmatprep.mubr.f32.mxu0 0.0
      %2763 = vmatmul.mubr.f32.gmra.mrb[0].mxu0 %v2326
      %v2764 = vpop.f32.mrb[0].mxu0
      %v2765 = vadd.f32 0.0, %v2764
      %v2766 = vpop.f32.mrb[0].mxu0
      %2767 = vmatprep.mubr.f32.mxu0 0.0
      %2768 = vmatmul.mubr.f32.gmra.mrb[0].mxu0 %v2329
      %v2769 = vpop.f32.mrb[0].mxu0
      %v2770 = vadd.f32 0.0, %v2769
      %v2771 = vpop.f32.mrb[0].mxu0
      %2772 = vmatprep.mubr.f32.mxu0 0.0
      %2773 = vmatmul.mubr.f32.gmra.mrb[0].mxu0 %v2332
      %v2774 = vpop.f32.mrb[0].mxu0
      %v2775 = vadd.f32 0.0, %v2774
      %v2776 = vpop.f32.mrb[0].mxu0
      %2777 = vmatprep.mubr.f32.mxu0 0.0
      %2778 = vmatmul.mubr.f32.gmra.mrb[0].mxu0 %v2335
      %v2779 = vpop.f32.mrb[0].mxu0
      %v2780 = vadd.f32 0.0, %v2779
      %v2781 = vpop.f32.mrb[0].mxu0
      %2782 = vmatprep.mubr.f32.mxu0 0.0
      %2783 = vmatmul.mubr.f32.gmra.mrb[0].mxu0 %v2338
      %v2784 = vpop.f32.mrb[0].mxu0
      %v2785 = vadd.f32 0.0, %v2784
      %v2786 = vpop.f32.mrb[0].mxu0
      %2787 = vmatprep.mubr.f32.mxu0 0.0
      %2788 = vmatmul.mubr.f32.gmra.mrb[0].mxu0 %v2341
      %v2789 = vpop.f32.mrb[0].mxu0
      %v2790 = vadd.f32 0.0, %v2789
      %v2791 = vpop.f32.mrb[0].mxu0
      %2792 = vmatprep.mubr.f32.mxu0 0.0
      %2793 = vmatmul.mubr.f32.gmra.mrb[0].mxu0 %v2344
      %v2794 = vpop.f32.mrb[0].mxu0
      %v2795 = vadd.f32 0.0, %v2794
      %v2796 = vpop.f32.mrb[0].mxu0
      %2797 = vmatprep.mubr.f32.mxu0 0.0
      %2798 = vmatmul.mubr.f32.gmra.mrb[0].mxu0 %v2347
      %v2799 = vpop.f32.mrb[0].mxu0
      %v2800 = vadd.f32 0.0, %v2799
      %v2801 = vpop.f32.mrb[0].mxu0
      %2802 = vmatprep.mubr.f32.mxu0 0.0
      %2803 = vmatmul.mubr.f32.gmra.mrb[0].mxu0 %v2350
      %v2804 = vpop.f32.mrb[0].mxu0
      %v2805 = vadd.f32 0.0, %v2804
      %v2806 = vpop.f32.mrb[0].mxu0
      %2807 = vmatprep.mubr.f32.mxu0 0.0
      %2808 = vmatmul.mubr.f32.gmra.mrb[0].mxu0 %v2353
      %v2809 = vpop.f32.mrb[0].mxu0
      %v2810 = vadd.f32 0.0, %v2809
      %v2811 = vpop.f32.mrb[0].mxu0
      %2812 = vmatprep.mubr.f32.mxu0 0.0
      %2813 = vmatmul.mubr.f32.gmra.mrb[0].mxu0 %v2356
      %v2814 = vpop.f32.mrb[0].mxu0
      %v2815 = vadd.f32 0.0, %v2814
      %v2816 = vpop.f32.mrb[0].mxu0
      %2817 = vmatprep.mubr.f32.mxu0 0.0
      %2818 = vmatmul.mubr.f32.gmra.mrb[0].mxu0 %v2359
      %v2819 = vpop.f32.mrb[0].mxu0
      %v2820 = vadd.f32 0.0, %v2819
      %v2821 = vpop.f32.mrb[0].mxu0
      %2822 = vmatprep.mubr.f32.mxu0 0.0
      %2823 = vmatmul.mubr.f32.gmra.mrb[0].mxu0 %v2362
      %v2824 = vpop.f32.mrb[0].mxu0
      %v2825 = vadd.f32 0.0, %v2824
      %v2826 = vpop.f32.mrb[0].mxu0
      %2827 = vmatprep.mubr.f32.mxu0 0.0
      %2828 = vmatmul.mubr.f32.gmra.mrb[0].mxu0 %v2365
      %v2829 = vpop.f32.mrb[0].mxu0
      %v2830 = vadd.f32 0.0, %v2829
      %v2831 = vpop.f32.mrb[0].mxu0
      %2832 = vmatprep.mubr.f32.mxu0 0.0
      %2833 = vmatmul.mubr.f32.gmra.mrb[0].mxu0 %v2368
      %v2834 = vpop.f32.mrb[0].mxu0
      %v2835 = vadd.f32 0.0, %v2834
      %v2836 = vpop.f32.mrb[0].mxu0
      %2837 = vmatprep.mubr.f32.mxu0 0.0
      %2838 = vmatmul.mubr.f32.gmra.mrb[0].mxu0 %v2371
      %v2839 = vpop.f32.mrb[0].mxu0
      %v2840 = vadd.f32 0.0, %v2839
      %v2841 = vpop.f32.mrb[0].mxu0
      %2842 = vmatprep.mubr.f32.mxu0 0.0
      %2843 = vmatmul.mubr.f32.gmra.mrb[0].mxu0 %v2374
      %v2844 = vpop.f32.mrb[0].mxu0
      %v2845 = vadd.f32 0.0, %v2844
      %v2846 = vpop.f32.mrb[0].mxu0
      %2847 = vmatprep.mubr.f32.mxu0 0.0
      %2848 = vmatmul.mubr.f32.gmra.mrb[0].mxu0 %v2377
      %v2849 = vpop.f32.mrb[0].mxu0
      %v2850 = vadd.f32 0.0, %v2849
      %v2851 = vpop.f32.mrb[0].mxu0
      %2852 = vmatprep.mubr.f32.mxu0 0.0
      %2853 = vmatmul.mubr.f32.gmra.mrb[0].mxu0 %v2380
      %v2854 = vpop.f32.mrb[0].mxu0
      %v2855 = vadd.f32 0.0, %v2854
      %v2856 = vpop.f32.mrb[0].mxu0
      %2857 = vmatprep.mubr.f32.mxu0 0.0
      %2858 = vmatmul.mubr.f32.gmra.mrb[0].mxu0 %v2383
      %v2859 = vpop.f32.mrb[0].mxu0
      %v2860 = vadd.f32 0.0, %v2859
      %v2861 = vpop.f32.mrb[0].mxu0
      %2862 = vmatprep.mubr.f32.mxu0 0.0
      %2863 = vmatmul.mubr.f32.gmra.mrb[0].mxu0 %v2386
      %v2864 = vpop.f32.mrb[0].mxu0
      %v2865 = vadd.f32 0.0, %v2864
      %v2866 = vpop.f32.mrb[0].mxu0
      %2867 = vmatprep.mubr.f32.mxu0 0.0
      %2868 = vmatmul.mubr.f32.gmra.mrb[0].mxu0 %v2389
      %v2869 = vpop.f32.mrb[0].mxu0
      %v2870 = vadd.f32 0.0, %v2869
      %v2871 = vpop.f32.mrb[0].mxu0
      %2872 = vdwg.mxu0
      %v2873 = vadd.f32 %v2143, %v2458
      %v2874 = vadd.f32 %v2144, %v2460
      %v2875 = vadd.f32 %v2145, %v2715
      %v2876 = vadd.f32 %v2146, %v2464
      %v2877 = vadd.f32 %v2147, %v2466
      %v2878 = vadd.f32 %v2148, %v2720
      %v2879 = vadd.f32 %v2149, %v2470
      %v2880 = vadd.f32 %v2150, %v2472
      %v2881 = vadd.f32 %v2151, %v2725
      %v2882 = vadd.f32 %v2152, %v2476
      %v2883 = vadd.f32 %v2153, %v2478
      %v2884 = vadd.f32 %v2154, %v2730
      %v2885 = vadd.f32 %v2155, %v2482
      %v2886 = vadd.f32 %v2156, %v2484
      %v2887 = vadd.f32 %v2157, %v2735
      %v2888 = vadd.f32 %v2158, %v2488
      %v2889 = vadd.f32 %v2159, %v2490
      %v2890 = vadd.f32 %v2160, %v2740
      %v2891 = vadd.f32 %v2161, %v2494
      %v2892 = vadd.f32 %v2162, %v2496
      %v2893 = vadd.f32 %v2163, %v2745
      %v2894 = vadd.f32 %v2164, %v2500
      %v2895 = vadd.f32 %v2165, %v2502
      %v2896 = vadd.f32 %v2166, %v2750
      %v2897 = vadd.f32 %v2167, %v2506
      %v2898 = vadd.f32 %v2168, %v2508
      %v2899 = vadd.f32 %v2169, %v2755
      %v2900 = vadd.f32 %v2170, %v2512
      %v2901 = vadd.f32 %v2171, %v2514
      %v2902 = vadd.f32 %v2172, %v2760
      %v2903 = vadd.f32 %v2173, %v2518
      %v2904 = vadd.f32 %v2174, %v2520
      %v2905 = vadd.f32 %v2175, %v2765
      %v2906 = vadd.f32 %v2176, %v2524
      %v2907 = vadd.f32 %v2177, %v2526
      %v2908 = vadd.f32 %v2178, %v2770
      %v2909 = vadd.f32 %v2179, %v2530
      %v2910 = vadd.f32 %v2180, %v2532
      %v2911 = vadd.f32 %v2181, %v2775
      %v2912 = vadd.f32 %v2182, %v2536
      %v2913 = vadd.f32 %v2183, %v2538
      %v2914 = vadd.f32 %v2184, %v2780
      %v2915 = vadd.f32 %v2185, %v2542
      %v2916 = vadd.f32 %v2186, %v2544
      %v2917 = vadd.f32 %v2187, %v2785
      %v2918 = vadd.f32 %v2188, %v2548
      %v2919 = vadd.f32 %v2189, %v2550
      %v2920 = vadd.f32 %v2190, %v2790
      %v2921 = vadd.f32 %v2191, %v2554
      %v2922 = vadd.f32 %v2192, %v2556
      %v2923 = vadd.f32 %v2193, %v2795
      %v2924 = vadd.f32 %v2194, %v2560
      %v2925 = vadd.f32 %v2195, %v2562
      %v2926 = vadd.f32 %v2196, %v2800
      %v2927 = vadd.f32 %v2197, %v2566
      %v2928 = vadd.f32 %v2198, %v2568
      %v2929 = vadd.f32 %v2199, %v2805
      %v2930 = vadd.f32 %v2200, %v2572
      %v2931 = vadd.f32 %v2201, %v2574
      %v2932 = vadd.f32 %v2202, %v2810
      %v2933 = vadd.f32 %v2203, %v2578
      %v2934 = vadd.f32 %v2204, %v2580
      %v2935 = vadd.f32 %v2205, %v2815
      %v2936 = vadd.f32 %v2206, %v2584
      %v2937 = vadd.f32 %v2207, %v2586
      %v2938 = vadd.f32 %v2208, %v2820
      %v2939 = vadd.f32 %v2209, %v2590
      %v2940 = vadd.f32 %v2210, %v2592
      %v2941 = vadd.f32 %v2211, %v2825
      %v2942 = vadd.f32 %v2212, %v2596
      %v2943 = vadd.f32 %v2213, %v2598
      %v2944 = vadd.f32 %v2214, %v2830
      %v2945 = vadd.f32 %v2215, %v2602
      %v2946 = vadd.f32 %v2216, %v2604
      %v2947 = vadd.f32 %v2217, %v2835
      %v2948 = vadd.f32 %v2218, %v2608
      %v2949 = vadd.f32 %v2219, %v2610
      %v2950 = vadd.f32 %v2220, %v2840
      %v2951 = vadd.f32 %v2221, %v2614
      %v2952 = vadd.f32 %v2222, %v2616
      %v2953 = vadd.f32 %v2223, %v2845
      %v2954 = vadd.f32 %v2224, %v2620
      %v2955 = vadd.f32 %v2225, %v2622
      %v2956 = vadd.f32 %v2226, %v2850
      %v2957 = vadd.f32 %v2227, %v2626
      %v2958 = vadd.f32 %v2228, %v2628
      %v2959 = vadd.f32 %v2229, %v2855
      %v2960 = vadd.f32 %v2230, %v2632
      %v2961 = vadd.f32 %v2231, %v2634
      %v2962 = vadd.f32 %v2232, %v2860
      %v2963 = vadd.f32 %v2233, %v2638
      %v2964 = vadd.f32 %v2234, %v2640
      %v2965 = vadd.f32 %v2235, %v2865
      %v2966 = vadd.f32 %v2236, %v2644
      %v2967 = vadd.f32 %v2237, %v2646
      %v2968 = vadd.f32 %v2238, %v2870
      %v2969 = vld [vmem:[%s2] sm:$0xff]
      %v2970 = vld [vmem:[%s2 + $0x8] sm:$0xff]
      %v2971 = vld [vmem:[%s2 + $0x10] sm:$0xff]
      %v2972 = vld [vmem:[%s2 + $0x18] sm:$0xff]
      %v2973 = vld [vmem:[%s2 + $0x20] sm:$0xff]
      %v2974 = vld [vmem:[%s2 + $0x28] sm:$0xff]
      %v2975 = vld [vmem:[%s2 + $0x30] sm:$0xff]
      %v2976 = vld [vmem:[%s2 + $0x38] sm:$0xff]
      %v2977 = vld [vmem:[%s2 + $0x40] sm:$0xff]
      %v2978 = vld [vmem:[%s2 + $0x48] sm:$0xff]
      %v2979 = vld [vmem:[%s2 + $0x50] sm:$0xff]
      %v2980 = vld [vmem:[%s2 + $0x58] sm:$0xff]
      %v2981 = vld [vmem:[%s2 + $0x60] sm:$0xff]
      %v2982 = vld [vmem:[%s2 + $0x68] sm:$0xff]
      %v2983 = vld [vmem:[%s2 + $0x70] sm:$0xff]
      %v2984 = vld [vmem:[%s2 + $0x78] sm:$0xff]
      %v2985 = vld [vmem:[%s2 + $0x80] sm:$0xff]
      %v2986 = vld [vmem:[%s2 + $0x88] sm:$0xff]
      %v2987 = vld [vmem:[%s2 + $0x90] sm:$0xff]
      %v2988 = vld [vmem:[%s2 + $0x98] sm:$0xff]
      %v2989 = vld [vmem:[%s2 + $0xa0] sm:$0xff]
      %v2990 = vld [vmem:[%s2 + $0xa8] sm:$0xff]
      %v2991 = vld [vmem:[%s2 + $0xb0] sm:$0xff]
      %v2992 = vld [vmem:[%s2 + $0xb8] sm:$0xff]
      %v2993 = vld [vmem:[%s2 + $0xc0] sm:$0xff]
      %v2994 = vld [vmem:[%s2 + $0xc8] sm:$0xff]
      %v2995 = vld [vmem:[%s2 + $0xd0] sm:$0xff]
      %v2996 = vld [vmem:[%s2 + $0xd8] sm:$0xff]
      %v2997 = vld [vmem:[%s2 + $0xe0] sm:$0xff]
      %v2998 = vld [vmem:[%s2 + $0xe8] sm:$0xff]
      %v2999 = vld [vmem:[%s2 + $0xf0] sm:$0xff]
      %v3000 = vld [vmem:[%s2 + $0xf8] sm:$0xff]
      %3002 = vset.pattern.permute.xlu0 0
      %3003 = vperm.xlu0 %3002, %v2969
      %v3004 = vpop.permute.xlu0 %3003
      %3007 = vset.pattern.permute.xlu0 0
      %3008 = vperm.xlu0 %3007, %v2970
      %v3009 = vpop.permute.xlu0 %3008
      %3012 = vset.pattern.permute.xlu0 0
      %3013 = vperm.xlu0 %3012, %v2971
      %v3014 = vpop.permute.xlu0 %3013
      %3017 = vset.pattern.permute.xlu0 0
      %3018 = vperm.xlu0 %3017, %v2972
      %v3019 = vpop.permute.xlu0 %3018
      %3022 = vset.pattern.permute.xlu0 0
      %3023 = vperm.xlu0 %3022, %v2973
      %v3024 = vpop.permute.xlu0 %3023
      %3027 = vset.pattern.permute.xlu0 0
      %3028 = vperm.xlu0 %3027, %v2974
      %v3029 = vpop.permute.xlu0 %3028
      %3032 = vset.pattern.permute.xlu0 0
      %3033 = vperm.xlu0 %3032, %v2975
      %v3034 = vpop.permute.xlu0 %3033
      %3037 = vset.pattern.permute.xlu0 0
      %3038 = vperm.xlu0 %3037, %v2976
      %v3039 = vpop.permute.xlu0 %3038
      %3042 = vset.pattern.permute.xlu0 0
      %3043 = vperm.xlu0 %3042, %v2977
      %v3044 = vpop.permute.xlu0 %3043
      %3047 = vset.pattern.permute.xlu0 0
      %3048 = vperm.xlu0 %3047, %v2978
      %v3049 = vpop.permute.xlu0 %3048
      %3052 = vset.pattern.permute.xlu0 0
      %3053 = vperm.xlu0 %3052, %v2979
      %v3054 = vpop.permute.xlu0 %3053
      %3057 = vset.pattern.permute.xlu0 0
      %3058 = vperm.xlu0 %3057, %v2980
      %v3059 = vpop.permute.xlu0 %3058
      %3062 = vset.pattern.permute.xlu0 0
      %3063 = vperm.xlu0 %3062, %v2981
      %v3064 = vpop.permute.xlu0 %3063
      %3067 = vset.pattern.permute.xlu0 0
      %3068 = vperm.xlu0 %3067, %v2982
      %v3069 = vpop.permute.xlu0 %3068
      %3072 = vset.pattern.permute.xlu0 0
      %3073 = vperm.xlu0 %3072, %v2983
      %v3074 = vpop.permute.xlu0 %3073
      %3077 = vset.pattern.permute.xlu0 0
      %3078 = vperm.xlu0 %3077, %v2984
      %v3079 = vpop.permute.xlu0 %3078
      %3082 = vset.pattern.permute.xlu0 0
      %3083 = vperm.xlu0 %3082, %v2985
      %v3084 = vpop.permute.xlu0 %3083
      %3087 = vset.pattern.permute.xlu0 0
      %3088 = vperm.xlu0 %3087, %v2986
      %v3089 = vpop.permute.xlu0 %3088
      %3092 = vset.pattern.permute.xlu0 0
      %3093 = vperm.xlu0 %3092, %v2987
      %v3094 = vpop.permute.xlu0 %3093
      %3097 = vset.pattern.permute.xlu0 0
      %3098 = vperm.xlu0 %3097, %v2988
      %v3099 = vpop.permute.xlu0 %3098
      %3102 = vset.pattern.permute.xlu0 0
      %3103 = vperm.xlu0 %3102, %v2989
      %v3104 = vpop.permute.xlu0 %3103
      %3107 = vset.pattern.permute.xlu0 0
      %3108 = vperm.xlu0 %3107, %v2990
      %v3109 = vpop.permute.xlu0 %3108
      %3112 = vset.pattern.permute.xlu0 0
      %3113 = vperm.xlu0 %3112, %v2991
      %v3114 = vpop.permute.xlu0 %3113
      %3117 = vset.pattern.permute.xlu0 0
      %3118 = vperm.xlu0 %3117, %v2992
      %v3119 = vpop.permute.xlu0 %3118
      %3122 = vset.pattern.permute.xlu0 0
      %3123 = vperm.xlu0 %3122, %v2993
      %v3124 = vpop.permute.xlu0 %3123
      %3127 = vset.pattern.permute.xlu0 0
      %3128 = vperm.xlu0 %3127, %v2994
      %v3129 = vpop.permute.xlu0 %3128
      %3132 = vset.pattern.permute.xlu0 0
      %3133 = vperm.xlu0 %3132, %v2995
      %v3134 = vpop.permute.xlu0 %3133
      %3137 = vset.pattern.permute.xlu0 0
      %3138 = vperm.xlu0 %3137, %v2996
      %v3139 = vpop.permute.xlu0 %3138
      %3142 = vset.pattern.permute.xlu0 0
      %3143 = vperm.xlu0 %3142, %v2997
      %v3144 = vpop.permute.xlu0 %3143
      %3147 = vset.pattern.permute.xlu0 0
      %3148 = vperm.xlu0 %3147, %v2998
      %v3149 = vpop.permute.xlu0 %3148
      %3152 = vset.pattern.permute.xlu0 0
      %3153 = vperm.xlu0 %3152, %v2999
      %v3154 = vpop.permute.xlu0 %3153
      %3157 = vset.pattern.permute.xlu0 0
      %3158 = vperm.xlu0 %3157, %v3000
      %v3159 = vpop.permute.xlu0 %3158
      %v3161 = vadd.f32 %v2873, %v3004
      %v3162 = vadd.f32 %v2874, %v3004
      %v3163 = vadd.f32 %v2875, %v3004
      %v3164 = vadd.f32 %v2876, %v3009
      %v3165 = vadd.f32 %v2877, %v3009
      %v3166 = vadd.f32 %v2878, %v3009
      %v3167 = vadd.f32 %v2879, %v3014
      %v3168 = vadd.f32 %v2880, %v3014
      %v3169 = vadd.f32 %v2881, %v3014
      %v3170 = vadd.f32 %v2882, %v3019
      %v3171 = vadd.f32 %v2883, %v3019
      %v3172 = vadd.f32 %v2884, %v3019
      %v3173 = vadd.f32 %v2885, %v3024
      %v3174 = vadd.f32 %v2886, %v3024
      %v3175 = vadd.f32 %v2887, %v3024
      %v3176 = vadd.f32 %v2888, %v3029
      %v3177 = vadd.f32 %v2889, %v3029
      %v3178 = vadd.f32 %v2890, %v3029
      %v3179 = vadd.f32 %v2891, %v3034
      %v3180 = vadd.f32 %v2892, %v3034
      %v3181 = vadd.f32 %v2893, %v3034
      %v3182 = vadd.f32 %v2894, %v3039
      %v3183 = vadd.f32 %v2895, %v3039
      %v3184 = vadd.f32 %v2896, %v3039
      %v3185 = vadd.f32 %v2897, %v3044
      %v3186 = vadd.f32 %v2898, %v3044
      %v3187 = vadd.f32 %v2899, %v3044
      %v3188 = vadd.f32 %v2900, %v3049
      %v3189 = vadd.f32 %v2901, %v3049
      %v3190 = vadd.f32 %v2902, %v3049
      %v3191 = vadd.f32 %v2903, %v3054
      %v3192 = vadd.f32 %v2904, %v3054
      %v3193 = vadd.f32 %v2905, %v3054
      %v3194 = vadd.f32 %v2906, %v3059
      %v3195 = vadd.f32 %v2907, %v3059
      %v3196 = vadd.f32 %v2908, %v3059
      %v3197 = vadd.f32 %v2909, %v3064
      %v3198 = vadd.f32 %v2910, %v3064
      %v3199 = vadd.f32 %v2911, %v3064
      %v3200 = vadd.f32 %v2912, %v3069
      %v3201 = vadd.f32 %v2913, %v3069
      %v3202 = vadd.f32 %v2914, %v3069
      %v3203 = vadd.f32 %v2915, %v3074
      %v3204 = vadd.f32 %v2916, %v3074
      %v3205 = vadd.f32 %v2917, %v3074
      %v3206 = vadd.f32 %v2918, %v3079
      %v3207 = vadd.f32 %v2919, %v3079
      %v3208 = vadd.f32 %v2920, %v3079
      %v3209 = vadd.f32 %v2921, %v3084
      %v3210 = vadd.f32 %v2922, %v3084
      %v3211 = vadd.f32 %v2923, %v3084
      %v3212 = vadd.f32 %v2924, %v3089
      %v3213 = vadd.f32 %v2925, %v3089
      %v3214 = vadd.f32 %v2926, %v3089
      %v3215 = vadd.f32 %v2927, %v3094
      %v3216 = vadd.f32 %v2928, %v3094
      %v3217 = vadd.f32 %v2929, %v3094
      %v3218 = vadd.f32 %v2930, %v3099
      %v3219 = vadd.f32 %v2931, %v3099
      %v3220 = vadd.f32 %v2932, %v3099
      %v3221 = vadd.f32 %v2933, %v3104
      %v3222 = vadd.f32 %v2934, %v3104
      %v3223 = vadd.f32 %v2935, %v3104
      %v3224 = vadd.f32 %v2936, %v3109
      %v3225 = vadd.f32 %v2937, %v3109
      %v3226 = vadd.f32 %v2938, %v3109
      %v3227 = vadd.f32 %v2939, %v3114
      %v3228 = vadd.f32 %v2940, %v3114
      %v3229 = vadd.f32 %v2941, %v3114
      %v3230 = vadd.f32 %v2942, %v3119
      %v3231 = vadd.f32 %v2943, %v3119
      %v3232 = vadd.f32 %v2944, %v3119
      %v3233 = vadd.f32 %v2945, %v3124
      %v3234 = vadd.f32 %v2946, %v3124
      %v3235 = vadd.f32 %v2947, %v3124
      %v3236 = vadd.f32 %v2948, %v3129
      %v3237 = vadd.f32 %v2949, %v3129
      %v3238 = vadd.f32 %v2950, %v3129
      %v3239 = vadd.f32 %v2951, %v3134
      %v3240 = vadd.f32 %v2952, %v3134
      %v3241 = vadd.f32 %v2953, %v3134
      %v3242 = vadd.f32 %v2954, %v3139
      %v3243 = vadd.f32 %v2955, %v3139
      %v3244 = vadd.f32 %v2956, %v3139
      %v3245 = vadd.f32 %v2957, %v3144
      %v3246 = vadd.f32 %v2958, %v3144
      %v3247 = vadd.f32 %v2959, %v3144
      %v3248 = vadd.f32 %v2960, %v3149
      %v3249 = vadd.f32 %v2961, %v3149
      %v3250 = vadd.f32 %v2962, %v3149
      %v3251 = vadd.f32 %v2963, %v3154
      %v3252 = vadd.f32 %v2964, %v3154
      %v3253 = vadd.f32 %v2965, %v3154
      %v3254 = vadd.f32 %v2966, %v3159
      %v3255 = vadd.f32 %v2967, %v3159
      %v3256 = vadd.f32 %v2968, %v3159
      %v3257 = vmax.f32 %v3161, 0.0
      %v3258 = vmax.f32 %v3162, 0.0
      %v3259 = vmax.f32 %v3163, 0.0
      %v3260 = vmax.f32 %v3164, 0.0
      %v3261 = vmax.f32 %v3165, 0.0
      %v3262 = vmax.f32 %v3166, 0.0
      %v3263 = vmax.f32 %v3167, 0.0
      %v3264 = vmax.f32 %v3168, 0.0
      %v3265 = vmax.f32 %v3169, 0.0
      %v3266 = vmax.f32 %v3170, 0.0
      %v3267 = vmax.f32 %v3171, 0.0
      %v3268 = vmax.f32 %v3172, 0.0
      %v3269 = vmax.f32 %v3173, 0.0
      %v3270 = vmax.f32 %v3174, 0.0
      %v3271 = vmax.f32 %v3175, 0.0
      %v3272 = vmax.f32 %v3176, 0.0
      %v3273 = vmax.f32 %v3177, 0.0
      %v3274 = vmax.f32 %v3178, 0.0
      %v3275 = vmax.f32 %v3179, 0.0
      %v3276 = vmax.f32 %v3180, 0.0
      %v3277 = vmax.f32 %v3181, 0.0
      %v3278 = vmax.f32 %v3182, 0.0
      %v3279 = vmax.f32 %v3183, 0.0
      %v3280 = vmax.f32 %v3184, 0.0
      %v3281 = vmax.f32 %v3185, 0.0
      %v3282 = vmax.f32 %v3186, 0.0
      %v3283 = vmax.f32 %v3187, 0.0
      %v3284 = vmax.f32 %v3188, 0.0
      %v3285 = vmax.f32 %v3189, 0.0
      %v3286 = vmax.f32 %v3190, 0.0
      %v3287 = vmax.f32 %v3191, 0.0
      %v3288 = vmax.f32 %v3192, 0.0
      %v3289 = vmax.f32 %v3193, 0.0
      %v3290 = vmax.f32 %v3194, 0.0
      %v3291 = vmax.f32 %v3195, 0.0
      %v3292 = vmax.f32 %v3196, 0.0
      %v3293 = vmax.f32 %v3197, 0.0
      %v3294 = vmax.f32 %v3198, 0.0
      %v3295 = vmax.f32 %v3199, 0.0
      %v3296 = vmax.f32 %v3200, 0.0
      %v3297 = vmax.f32 %v3201, 0.0
      %v3298 = vmax.f32 %v3202, 0.0
      %v3299 = vmax.f32 %v3203, 0.0
      %v3300 = vmax.f32 %v3204, 0.0
      %v3301 = vmax.f32 %v3205, 0.0
      %v3302 = vmax.f32 %v3206, 0.0
      %v3303 = vmax.f32 %v3207, 0.0
      %v3304 = vmax.f32 %v3208, 0.0
      %v3305 = vmax.f32 %v3209, 0.0
      %v3306 = vmax.f32 %v3210, 0.0
      %v3307 = vmax.f32 %v3211, 0.0
      %v3308 = vmax.f32 %v3212, 0.0
      %v3309 = vmax.f32 %v3213, 0.0
      %v3310 = vmax.f32 %v3214, 0.0
      %v3311 = vmax.f32 %v3215, 0.0
      %v3312 = vmax.f32 %v3216, 0.0
      %v3313 = vmax.f32 %v3217, 0.0
      %v3314 = vmax.f32 %v3218, 0.0
      %v3315 = vmax.f32 %v3219, 0.0
      %v3316 = vmax.f32 %v3220, 0.0
      %v3317 = vmax.f32 %v3221, 0.0
      %v3318 = vmax.f32 %v3222, 0.0
      %v3319 = vmax.f32 %v3223, 0.0
      %v3320 = vmax.f32 %v3224, 0.0
      %v3321 = vmax.f32 %v3225, 0.0
      %v3322 = vmax.f32 %v3226, 0.0
      %v3323 = vmax.f32 %v3227, 0.0
      %v3324 = vmax.f32 %v3228, 0.0
      %v3325 = vmax.f32 %v3229, 0.0
      %v3326 = vmax.f32 %v3230, 0.0
      %v3327 = vmax.f32 %v3231, 0.0
      %v3328 = vmax.f32 %v3232, 0.0
      %v3329 = vmax.f32 %v3233, 0.0
      %v3330 = vmax.f32 %v3234, 0.0
      %v3331 = vmax.f32 %v3235, 0.0
      %v3332 = vmax.f32 %v3236, 0.0
      %v3333 = vmax.f32 %v3237, 0.0
      %v3334 = vmax.f32 %v3238, 0.0
      %v3335 = vmax.f32 %v3239, 0.0
      %v3336 = vmax.f32 %v3240, 0.0
      %v3337 = vmax.f32 %v3241, 0.0
      %v3338 = vmax.f32 %v3242, 0.0
      %v3339 = vmax.f32 %v3243, 0.0
      %v3340 = vmax.f32 %v3244, 0.0
      %v3341 = vmax.f32 %v3245, 0.0
      %v3342 = vmax.f32 %v3246, 0.0
      %v3343 = vmax.f32 %v3247, 0.0
      %v3344 = vmax.f32 %v3248, 0.0
      %v3345 = vmax.f32 %v3249, 0.0
      %v3346 = vmax.f32 %v3250, 0.0
      %v3347 = vmax.f32 %v3251, 0.0
      %v3348 = vmax.f32 %v3252, 0.0
      %v3349 = vmax.f32 %v3253, 0.0
      %v3350 = vmax.f32 %v3254, 0.0
      %v3351 = vmax.f32 %v3255, 0.0
      %v3352 = vmax.f32 %v3256, 0.0
      %v3353 = vmax.f32 %v3257, %v3281
      %v3354 = vmax.f32 %v3258, %v3282
      %v3355 = vmax.f32 %v3259, %v3283
      %v3356 = vmax.f32 %v3260, %v3284
      %v3357 = vmax.f32 %v3261, %v3285
      %v3358 = vmax.f32 %v3262, %v3286
      %v3359 = vmax.f32 %v3263, %v3287
      %v3360 = vmax.f32 %v3264, %v3288
      %v3361 = vmax.f32 %v3265, %v3289
      %v3362 = vmax.f32 %v3266, %v3290
      %v3363 = vmax.f32 %v3267, %v3291
      %v3364 = vmax.f32 %v3268, %v3292
      %v3365 = vmax.f32 %v3269, %v3293
      %v3366 = vmax.f32 %v3270, %v3294
      %v3367 = vmax.f32 %v3271, %v3295
      %v3368 = vmax.f32 %v3272, %v3296
      %v3369 = vmax.f32 %v3273, %v3297
      %v3370 = vmax.f32 %v3274, %v3298
      %v3371 = vmax.f32 %v3275, %v3299
      %v3372 = vmax.f32 %v3276, %v3300
      %v3373 = vmax.f32 %v3277, %v3301
      %v3374 = vmax.f32 %v3278, %v3302
      %v3375 = vmax.f32 %v3279, %v3303
      %v3376 = vmax.f32 %v3280, %v3304
      %v3377 = vmax.f32 %v3305, %v3329
      %v3378 = vmax.f32 %v3306, %v3330
      %v3379 = vmax.f32 %v3307, %v3331
      %v3380 = vmax.f32 %v3308, %v3332
      %v3381 = vmax.f32 %v3309, %v3333
      %v3382 = vmax.f32 %v3310, %v3334
      %v3383 = vmax.f32 %v3311, %v3335
      %v3384 = vmax.f32 %v3312, %v3336
      %v3385 = vmax.f32 %v3313, %v3337
      %v3386 = vmax.f32 %v3314, %v3338
      %v3387 = vmax.f32 %v3315, %v3339
      %v3388 = vmax.f32 %v3316, %v3340
      %v3389 = vmax.f32 %v3317, %v3341
      %v3390 = vmax.f32 %v3318, %v3342
      %v3391 = vmax.f32 %v3319, %v3343
      %v3392 = vmax.f32 %v3320, %v3344
      %v3393 = vmax.f32 %v3321, %v3345
      %v3394 = vmax.f32 %v3322, %v3346
      %v3395 = vmax.f32 %v3323, %v3347
      %v3396 = vmax.f32 %v3324, %v3348
      %v3397 = vmax.f32 %v3325, %v3349
      %v3398 = vmax.f32 %v3326, %v3350
      %v3399 = vmax.f32 %v3327, %v3351
      %v3400 = vmax.f32 %v3328, %v3352
      %v3401 = vmax.f32 %v3353, %v3377
      %v3402 = vmax.f32 %v3354, %v3378
      %v3403 = vmax.f32 %v3355, %v3379
      %v3404 = vmax.f32 %v3356, %v3380
      %v3405 = vmax.f32 %v3357, %v3381
      %v3406 = vmax.f32 %v3358, %v3382
      %v3407 = vmax.f32 %v3359, %v3383
      %v3408 = vmax.f32 %v3360, %v3384
      %v3409 = vmax.f32 %v3361, %v3385
      %v3410 = vmax.f32 %v3362, %v3386
      %v3411 = vmax.f32 %v3363, %v3387
      %v3412 = vmax.f32 %v3364, %v3388
      %v3413 = vmax.f32 %v3365, %v3389
      %v3414 = vmax.f32 %v3366, %v3390
      %v3415 = vmax.f32 %v3367, %v3391
      %v3416 = vmax.f32 %v3368, %v3392
      %v3417 = vmax.f32 %v3369, %v3393
      %v3418 = vmax.f32 %v3370, %v3394
      %v3419 = vmax.f32 %v3371, %v3395
      %v3420 = vmax.f32 %v3372, %v3396
      %v3421 = vmax.f32 %v3373, %v3397
      %v3422 = vmax.f32 %v3374, %v3398
      %v3423 = vmax.f32 %v3375, %v3399
      %v3424 = vmax.f32 %v3376, %v3400
      %v3425 = vld [vmem:[%s3] sm:$0xff]
      %v3426 = vld [vmem:[%s3 + $0x8] sm:$0xff]
      %v3427 = vld [vmem:[%s3 + $0x10] sm:$0xff]
      %v3428 = vld [vmem:[%s3 + $0x18] sm:$0xff]
      %v3429 = vld [vmem:[%s3 + $0x20] sm:$0xff]
      %v3430 = vld [vmem:[%s3 + $0x28] sm:$0xff]
      %v3431 = vld [vmem:[%s3 + $0x30] sm:$0xff]
      %v3432 = vld [vmem:[%s3 + $0x38] sm:$0xff]
      %v3433 = vld [vmem:[%s3 + $0x40] sm:$0xff]
      %v3434 = vld [vmem:[%s3 + $0x48] sm:$0xff]
      %v3435 = vld [vmem:[%s3 + $0x50] sm:$0xff]
      %v3436 = vld [vmem:[%s3 + $0x58] sm:$0xff]
      %v3437 = vld [vmem:[%s3 + $0x60] sm:$0xff]
      %v3438 = vld [vmem:[%s3 + $0x68] sm:$0xff]
      %v3439 = vld [vmem:[%s3 + $0x70] sm:$0xff]
      %v3440 = vld [vmem:[%s3 + $0x78] sm:$0xff]
      %v3441 = vld [vmem:[%s3 + $0x80] sm:$0xff]
      %v3442 = vld [vmem:[%s3 + $0x88] sm:$0xff]
      %v3443 = vld [vmem:[%s3 + $0x90] sm:$0xff]
      %v3444 = vld [vmem:[%s3 + $0x98] sm:$0xff]
      %v3445 = vld [vmem:[%s3 + $0xa0] sm:$0xff]
      %v3446 = vld [vmem:[%s3 + $0xa8] sm:$0xff]
      %v3447 = vld [vmem:[%s3 + $0xb0] sm:$0xff]
      %v3448 = vld [vmem:[%s3 + $0xb8] sm:$0xff]
      %v3449 = vmul.f32 %v3401, %v3425
      %v3450 = vmul.f32 %v3402, %v3426
      %v3451 = vmul.f32 %v3403, %v3427
      %v3452 = vmul.f32 %v3404, %v3428
      %v3453 = vmul.f32 %v3405, %v3429
      %v3454 = vmul.f32 %v3406, %v3430
      %v3455 = vmul.f32 %v3407, %v3431
      %v3456 = vmul.f32 %v3408, %v3432
      %v3457 = vmul.f32 %v3409, %v3433
      %v3458 = vmul.f32 %v3410, %v3434
      %v3459 = vmul.f32 %v3411, %v3435
      %v3460 = vmul.f32 %v3412, %v3436
      %v3461 = vmul.f32 %v3413, %v3437
      %v3462 = vmul.f32 %v3414, %v3438
      %v3463 = vmul.f32 %v3415, %v3439
      %v3464 = vmul.f32 %v3416, %v3440
      %v3465 = vmul.f32 %v3417, %v3441
      %v3466 = vmul.f32 %v3418, %v3442
      %v3467 = vmul.f32 %v3419, %v3443
      %v3468 = vmul.f32 %v3420, %v3444
      %v3469 = vmul.f32 %v3421, %v3445
      %v3470 = vmul.f32 %v3422, %v3446
      %v3471 = vmul.f32 %v3423, %v3447
      %v3472 = vmul.f32 %v3424, %v3448
      %v3473 = vld [vmem:[%s4] sm:$0xff]
      %v3474 = vld [vmem:[%s4 + $0x8] sm:$0xff]
      %v3475 = vld [vmem:[%s4 + $0x10] sm:$0xff]
      %v3476 = vld [vmem:[%s4 + $0x18] sm:$0xff]
      %v3477 = vld [vmem:[%s4 + $0x20] sm:$0xff]
      %v3478 = vld [vmem:[%s4 + $0x28] sm:$0xff]
      %v3479 = vld [vmem:[%s4 + $0x30] sm:$0xff]
      %v3480 = vld [vmem:[%s4 + $0x38] sm:$0xff]
      %v3481 = vld [vmem:[%s4 + $0x40] sm:$0xff]
      %v3482 = vld [vmem:[%s4 + $0x48] sm:$0xff]
      %v3483 = vld [vmem:[%s4 + $0x50] sm:$0xff]
      %v3484 = vld [vmem:[%s4 + $0x58] sm:$0xff]
      %v3485 = vld [vmem:[%s4 + $0x60] sm:$0xff]
      %v3486 = vld [vmem:[%s4 + $0x68] sm:$0xff]
      %v3487 = vld [vmem:[%s4 + $0x70] sm:$0xff]
      %v3488 = vld [vmem:[%s4 + $0x78] sm:$0xff]
      %s3489 = scalar_lea.vmem %s4, 128
      %v3490 = vld [vmem:[%s3489] sm:$0xff]
      %v3491 = vld [vmem:[%s3489 + $0x8] sm:$0xff]
      %v3492 = vld [vmem:[%s3489 + $0x10] sm:$0xff]
      %v3493 = vld [vmem:[%s3489 + $0x18] sm:$0xff]
      %v3494 = vld [vmem:[%s3489 + $0x20] sm:$0xff]
      %v3495 = vld [vmem:[%s3489 + $0x28] sm:$0xff]
      %v3496 = vld [vmem:[%s3489 + $0x30] sm:$0xff]
      %v3497 = vld [vmem:[%s3489 + $0x38] sm:$0xff]
      %v3498 = vld [vmem:[%s3489 + $0x40] sm:$0xff]
      %v3499 = vld [vmem:[%s3489 + $0x48] sm:$0xff]
      %v3500 = vld [vmem:[%s3489 + $0x50] sm:$0xff]
      %v3501 = vld [vmem:[%s3489 + $0x58] sm:$0xff]
      %v3502 = vld [vmem:[%s3489 + $0x60] sm:$0xff]
      %v3503 = vld [vmem:[%s3489 + $0x68] sm:$0xff]
      %v3504 = vld [vmem:[%s3489 + $0x70] sm:$0xff]
      %v3505 = vld [vmem:[%s3489 + $0x78] sm:$0xff]
      %3530 = vrot.lane.b32.xlu0 %v3449, 127
      %v3531 = vpop.permute.xlu0 %3530
      %3532 = vrot.lane.b32.xlu0 %v3450, 127
      %v3533 = vpop.permute.xlu0 %3532
      %3534 = vrot.lane.b32.xlu0 %v3451, 127
      %v3535 = vpop.permute.xlu0 %3534
      %3536 = vrot.lane.b32.xlu0 %v3452, 127
      %v3537 = vpop.permute.xlu0 %3536
      %3538 = vrot.lane.b32.xlu0 %v3453, 127
      %v3539 = vpop.permute.xlu0 %3538
      %3540 = vrot.lane.b32.xlu0 %v3454, 127
      %v3541 = vpop.permute.xlu0 %3540
      %3542 = vrot.lane.b32.xlu0 %v3455, 127
      %v3543 = vpop.permute.xlu0 %3542
      %3544 = vrot.lane.b32.xlu0 %v3456, 127
      %v3545 = vpop.permute.xlu0 %3544
      %3546 = vrot.lane.b32.xlu0 %v3457, 127
      %v3547 = vpop.permute.xlu0 %3546
      %3548 = vrot.lane.b32.xlu0 %v3458, 127
      %v3549 = vpop.permute.xlu0 %3548
      %3550 = vrot.lane.b32.xlu0 %v3459, 127
      %v3551 = vpop.permute.xlu0 %3550
      %3552 = vrot.lane.b32.xlu0 %v3460, 127
      %v3553 = vpop.permute.xlu0 %3552
      %3554 = vrot.lane.b32.xlu0 %v3461, 127
      %v3555 = vpop.permute.xlu0 %3554
      %3556 = vrot.lane.b32.xlu0 %v3462, 127
      %v3557 = vpop.permute.xlu0 %3556
      %3558 = vrot.lane.b32.xlu0 %v3463, 127
      %v3559 = vpop.permute.xlu0 %3558
      %3560 = vrot.lane.b32.xlu0 %v3464, 127
      %v3561 = vpop.permute.xlu0 %3560
      %3562 = vrot.lane.b32.xlu0 %v3465, 127
      %v3563 = vpop.permute.xlu0 %3562
      %3564 = vrot.lane.b32.xlu0 %v3466, 127
      %v3565 = vpop.permute.xlu0 %3564
      %3566 = vrot.lane.b32.xlu0 %v3467, 127
      %v3567 = vpop.permute.xlu0 %3566
      %3568 = vrot.lane.b32.xlu0 %v3468, 127
      %v3569 = vpop.permute.xlu0 %3568
      %3570 = vrot.lane.b32.xlu0 %v3469, 127
      %v3571 = vpop.permute.xlu0 %3570
      %3572 = vrot.lane.b32.xlu0 %v3470, 127
      %v3573 = vpop.permute.xlu0 %3572
      %3574 = vrot.lane.b32.xlu0 %v3471, 127
      %v3575 = vpop.permute.xlu0 %3574
      %3576 = vrot.lane.b32.xlu0 %v3472, 127
      %v3577 = vpop.permute.xlu0 %3576
      %v3578 = vsel %vm341, %v3531, %v3533
      %v3579 = vsel %vm341, %v3533, %v3535
      %v3580 = vsel %vm341, %v3537, %v3539
      %v3581 = vsel %vm341, %v3539, %v3541
      %v3582 = vsel %vm341, %v3543, %v3545
      %v3583 = vsel %vm341, %v3545, %v3547
      %v3584 = vsel %vm341, %v3549, %v3551
      %v3585 = vsel %vm341, %v3551, %v3553
      %v3586 = vsel %vm341, %v3555, %v3557
      %v3587 = vsel %vm341, %v3557, %v3559
      %v3588 = vsel %vm341, %v3561, %v3563
      %v3589 = vsel %vm341, %v3563, %v3565
      %v3590 = vsel %vm341, %v3567, %v3569
      %v3591 = vsel %vm341, %v3569, %v3571
      %v3592 = vsel %vm341, %v3573, %v3575
      %v3593 = vsel %vm341, %v3575, %v3577
      %vm3618 = vcmask 523264
      %v3620 = vsel %vm3618, %v3490, 0
      %v3623 = vsel %vm3618, %v3491, 0
      %v3626 = vsel %vm3618, %v3492, 0
      %v3629 = vsel %vm3618, %v3493, 0
      %v3632 = vsel %vm3618, %v3494, 0
      %v3635 = vsel %vm3618, %v3495, 0
      %v3638 = vsel %vm3618, %v3496, 0
      %v3641 = vsel %vm3618, %v3497, 0
      %v3644 = vsel %vm3618, %v3498, 0
      %v3647 = vsel %vm3618, %v3499, 0
      %v3650 = vsel %vm3618, %v3500, 0
      %v3653 = vsel %vm3618, %v3501, 0
      %v3656 = vsel %vm3618, %v3502, 0
      %v3659 = vsel %vm3618, %v3503, 0
      %v3662 = vsel %vm3618, %v3504, 0
      %v3665 = vsel %vm3618, %v3505, 0
      %3667 = vmatprep.subr.mxu0 %v3579
      %3668 = vmatpush1.msra.mxu0 %v3578
      %3669 = vmatprep.subr.mxu0 %v3581
      %3670 = vmatpush1.msra.mxu0 %v3580
      %3671 = vmatprep.subr.mxu0 %v3583
      %3672 = vmatpush1.msra.mxu0 %v3582
      %3673 = vmatprep.subr.mxu0 %v3585
      %3674 = vmatpush1.msra.mxu0 %v3584
      %3675 = vmatprep.subr.mxu0 %v3587
      %3676 = vmatpush1.msra.mxu0 %v3586
      %3677 = vmatprep.subr.mxu0 %v3589
      %3678 = vmatpush1.msra.mxu0 %v3588
      %3679 = vmatprep.subr.mxu0 %v3591
      %3680 = vmatpush1.msra.mxu0 %v3590
      %3681 = vmatprep.subr.mxu0 %v3593
      %3682 = vmatpush1.msra.mxu0 %v3592
      %3683 = vmatprep.subr.mxu0 0.0
      %3684 = vmatpush1.msra.mxu0 0.0
      %3685 = vmatprep.subr.mxu0 0.0
      %3686 = vmatpush1.msra.mxu0 0.0
      %3687 = vmatprep.subr.mxu0 0.0
      %3688 = vmatpush1.msra.mxu0 0.0
      %3689 = vmatprep.subr.mxu0 0.0
      %3690 = vmatpush1.msra.mxu0 0.0
      %3691 = vmatprep.subr.mxu0 0.0
      %3692 = vmatpush1.msra.mxu0 0.0
      %3693 = vmatprep.subr.mxu0 0.0
      %3694 = vmatpush1.msra.mxu0 0.0
      %3695 = vmatprep.subr.mxu0 0.0
      %3696 = vmatpush1.msra.mxu0 0.0
      %3697 = vmatprep.subr.mxu0 0.0
      %3698 = vmatpush1.msra.mxu0 0.0
      %3699 = vmatprep.subr.mxu0 0.0
      %3700 = vmatpush1.msra.mxu0 0.0
      %3701 = vmatprep.subr.mxu0 0.0
      %3702 = vmatpush1.msra.mxu0 0.0
      %3703 = vmatprep.subr.mxu0 0.0
      %3704 = vmatpush1.msra.mxu0 0.0
      %3705 = vmatprep.subr.mxu0 0.0
      %3706 = vmatpush1.msra.mxu0 0.0
      %3707 = vmatprep.subr.mxu0 0.0
      %3708 = vmatpush1.msra.mxu0 0.0
      %3709 = vmatprep.subr.mxu0 0.0
      %3710 = vmatpush1.msra.mxu0 0.0
      %3711 = vmatprep.subr.mxu0 0.0
      %3712 = vmatpush1.msra.mxu0 0.0
      %3713 = vmatprep.subr.mxu0 0.0
      %3714 = vmatpush1.msra.mxu0 0.0
      %3715 = vmatprep.subr.mxu0 0.0
      %3716 = vmatpush1.msra.mxu0 0.0
      %3717 = vmatprep.subr.mxu0 0.0
      %3718 = vmatpush1.msra.mxu0 0.0
      %3719 = vmatprep.subr.mxu0 0.0
      %3720 = vmatpush1.msra.mxu0 0.0
      %3721 = vmatprep.subr.mxu0 0.0
      %3722 = vmatpush1.msra.mxu0 0.0
      %3723 = vmatprep.subr.mxu0 0.0
      %3724 = vmatpush1.msra.mxu0 0.0
      %3725 = vmatprep.subr.mxu0 0.0
      %3726 = vmatpush1.msra.mxu0 0.0
      %3727 = vmatprep.subr.mxu0 0.0
      %3728 = vmatpush1.msra.mxu0 0.0
      %3729 = vmatprep.subr.mxu0 0.0
      %3730 = vmatpush1.msra.mxu0 0.0
      %3731 = vmatprep.mubr.f32.mxu0 0.0
      %3732 = vmatmul.mubr.f32.gmra.mrb[0].mxu0 %v3620
      %v3733 = vpop.f32.mrb[0].mxu0
      %v3734 = vadd.f32 0.0, %v3733
      %v3735 = vpop.f32.mrb[0].mxu0
      %v3736 = vadd.f32 0.0, %v3735
      %3737 = vmatprep.mubr.f32.mxu0 0.0
      %3738 = vmatmul.mubr.f32.gmra.mrb[0].mxu0 %v3623
      %v3739 = vpop.f32.mrb[0].mxu0
      %v3740 = vadd.f32 0.0, %v3739
      %v3741 = vpop.f32.mrb[0].mxu0
      %v3742 = vadd.f32 0.0, %v3741
      %3743 = vmatprep.mubr.f32.mxu0 0.0
      %3744 = vmatmul.mubr.f32.gmra.mrb[0].mxu0 %v3626
      %v3745 = vpop.f32.mrb[0].mxu0
      %v3746 = vadd.f32 0.0, %v3745
      %v3747 = vpop.f32.mrb[0].mxu0
      %v3748 = vadd.f32 0.0, %v3747
      %3749 = vmatprep.mubr.f32.mxu0 0.0
      %3750 = vmatmul.mubr.f32.gmra.mrb[0].mxu0 %v3629
      %v3751 = vpop.f32.mrb[0].mxu0
      %v3752 = vadd.f32 0.0, %v3751
      %v3753 = vpop.f32.mrb[0].mxu0
      %v3754 = vadd.f32 0.0, %v3753
      %3755 = vmatprep.mubr.f32.mxu0 0.0
      %3756 = vmatmul.mubr.f32.gmra.mrb[0].mxu0 %v3632
      %v3757 = vpop.f32.mrb[0].mxu0
      %v3758 = vadd.f32 0.0, %v3757
      %v3759 = vpop.f32.mrb[0].mxu0
      %v3760 = vadd.f32 0.0, %v3759
      %3761 = vmatprep.mubr.f32.mxu0 0.0
      %3762 = vmatmul.mubr.f32.gmra.mrb[0].mxu0 %v3635
      %v3763 = vpop.f32.mrb[0].mxu0
      %v3764 = vadd.f32 0.0, %v3763
      %v3765 = vpop.f32.mrb[0].mxu0
      %v3766 = vadd.f32 0.0, %v3765
      %3767 = vmatprep.mubr.f32.mxu0 0.0
      %3768 = vmatmul.mubr.f32.gmra.mrb[0].mxu0 %v3638
      %v3769 = vpop.f32.mrb[0].mxu0
      %v3770 = vadd.f32 0.0, %v3769
      %v3771 = vpop.f32.mrb[0].mxu0
      %v3772 = vadd.f32 0.0, %v3771
      %3773 = vmatprep.mubr.f32.mxu0 0.0
      %3774 = vmatmul.mubr.f32.gmra.mrb[0].mxu0 %v3641
      %v3775 = vpop.f32.mrb[0].mxu0
      %v3776 = vadd.f32 0.0, %v3775
      %v3777 = vpop.f32.mrb[0].mxu0
      %v3778 = vadd.f32 0.0, %v3777
      %3779 = vmatprep.mubr.f32.mxu0 0.0
      %3780 = vmatmul.mubr.f32.gmra.mrb[0].mxu0 %v3644
      %v3781 = vpop.f32.mrb[0].mxu0
      %v3782 = vadd.f32 0.0, %v3781
      %v3783 = vpop.f32.mrb[0].mxu0
      %v3784 = vadd.f32 0.0, %v3783
      %3785 = vmatprep.mubr.f32.mxu0 0.0
      %3786 = vmatmul.mubr.f32.gmra.mrb[0].mxu0 %v3647
      %v3787 = vpop.f32.mrb[0].mxu0
      %v3788 = vadd.f32 0.0, %v3787
      %v3789 = vpop.f32.mrb[0].mxu0
      %v3790 = vadd.f32 0.0, %v3789
      %3791 = vmatprep.mubr.f32.mxu0 0.0
      %3792 = vmatmul.mubr.f32.gmra.mrb[0].mxu0 %v3650
      %v3793 = vpop.f32.mrb[0].mxu0
      %v3794 = vadd.f32 0.0, %v3793
      %v3795 = vpop.f32.mrb[0].mxu0
      %v3796 = vadd.f32 0.0, %v3795
      %3797 = vmatprep.mubr.f32.mxu0 0.0
      %3798 = vmatmul.mubr.f32.gmra.mrb[0].mxu0 %v3653
      %v3799 = vpop.f32.mrb[0].mxu0
      %v3800 = vadd.f32 0.0, %v3799
      %v3801 = vpop.f32.mrb[0].mxu0
      %v3802 = vadd.f32 0.0, %v3801
      %3803 = vmatprep.mubr.f32.mxu0 0.0
      %3804 = vmatmul.mubr.f32.gmra.mrb[0].mxu0 %v3656
      %v3805 = vpop.f32.mrb[0].mxu0
      %v3806 = vadd.f32 0.0, %v3805
      %v3807 = vpop.f32.mrb[0].mxu0
      %v3808 = vadd.f32 0.0, %v3807
      %3809 = vmatprep.mubr.f32.mxu0 0.0
      %3810 = vmatmul.mubr.f32.gmra.mrb[0].mxu0 %v3659
      %v3811 = vpop.f32.mrb[0].mxu0
      %v3812 = vadd.f32 0.0, %v3811
      %v3813 = vpop.f32.mrb[0].mxu0
      %v3814 = vadd.f32 0.0, %v3813
      %3815 = vmatprep.mubr.f32.mxu0 0.0
      %3816 = vmatmul.mubr.f32.gmra.mrb[0].mxu0 %v3662
      %v3817 = vpop.f32.mrb[0].mxu0
      %v3818 = vadd.f32 0.0, %v3817
      %v3819 = vpop.f32.mrb[0].mxu0
      %v3820 = vadd.f32 0.0, %v3819
      %3821 = vmatprep.mubr.f32.mxu0 0.0
      %3822 = vmatmul.mubr.f32.gmra.mrb[0].mxu0 %v3665
      %v3823 = vpop.f32.mrb[0].mxu0
      %v3824 = vadd.f32 0.0, %v3823
      %v3825 = vpop.f32.mrb[0].mxu0
      %v3826 = vadd.f32 0.0, %v3825
      %3827 = vdwg.mxu0
      %3828 = vmatprep.subr.mxu0 0.0
      %3829 = vmatpush1.msra.mxu0 %v3535
      %3830 = vmatprep.subr.mxu0 0.0
      %3831 = vmatpush1.msra.mxu0 %v3541
      %3832 = vmatprep.subr.mxu0 0.0
      %3833 = vmatpush1.msra.mxu0 %v3547
      %3834 = vmatprep.subr.mxu0 0.0
      %3835 = vmatpush1.msra.mxu0 %v3553
      %3836 = vmatprep.subr.mxu0 0.0
      %3837 = vmatpush1.msra.mxu0 %v3559
      %3838 = vmatprep.subr.mxu0 0.0
      %3839 = vmatpush1.msra.mxu0 %v3565
      %3840 = vmatprep.subr.mxu0 0.0
      %3841 = vmatpush1.msra.mxu0 %v3571
      %3842 = vmatprep.subr.mxu0 0.0
      %3843 = vmatpush1.msra.mxu0 %v3577
      %3844 = vmatprep.subr.mxu0 0.0
      %3845 = vmatpush1.msra.mxu0 0.0
      %3846 = vmatprep.subr.mxu0 0.0
      %3847 = vmatpush1.msra.mxu0 0.0
      %3848 = vmatprep.subr.mxu0 0.0
      %3849 = vmatpush1.msra.mxu0 0.0
      %3850 = vmatprep.subr.mxu0 0.0
      %3851 = vmatpush1.msra.mxu0 0.0
      %3852 = vmatprep.subr.mxu0 0.0
      %3853 = vmatpush1.msra.mxu0 0.0
      %3854 = vmatprep.subr.mxu0 0.0
      %3855 = vmatpush1.msra.mxu0 0.0
      %3856 = vmatprep.subr.mxu0 0.0
      %3857 = vmatpush1.msra.mxu0 0.0
      %3858 = vmatprep.subr.mxu0 0.0
      %3859 = vmatpush1.msra.mxu0 0.0
      %3860 = vmatprep.subr.mxu0 0.0
      %3861 = vmatpush1.msra.mxu0 0.0
      %3862 = vmatprep.subr.mxu0 0.0
      %3863 = vmatpush1.msra.mxu0 0.0
      %3864 = vmatprep.subr.mxu0 0.0
      %3865 = vmatpush1.msra.mxu0 0.0
      %3866 = vmatprep.subr.mxu0 0.0
      %3867 = vmatpush1.msra.mxu0 0.0
      %3868 = vmatprep.subr.mxu0 0.0
      %3869 = vmatpush1.msra.mxu0 0.0
      %3870 = vmatprep.subr.mxu0 0.0
      %3871 = vmatpush1.msra.mxu0 0.0
      %3872 = vmatprep.subr.mxu0 0.0
      %3873 = vmatpush1.msra.mxu0 0.0
      %3874 = vmatprep.subr.mxu0 0.0
      %3875 = vmatpush1.msra.mxu0 0.0
      %3876 = vmatprep.subr.mxu0 0.0
      %3877 = vmatpush1.msra.mxu0 0.0
      %3878 = vmatprep.subr.mxu0 0.0
      %3879 = vmatpush1.msra.mxu0 0.0
      %3880 = vmatprep.subr.mxu0 0.0
      %3881 = vmatpush1.msra.mxu0 0.0
      %3882 = vmatprep.subr.mxu0 0.0
      %3883 = vmatpush1.msra.mxu0 0.0
      %3884 = vmatprep.subr.mxu0 0.0
      %3885 = vmatpush1.msra.mxu0 0.0
      %3886 = vmatprep.subr.mxu0 0.0
      %3887 = vmatpush1.msra.mxu0 0.0
      %3888 = vmatprep.subr.mxu0 0.0
      %3889 = vmatpush1.msra.mxu0 0.0
      %3890 = vmatprep.subr.mxu0 0.0
      %3891 = vmatpush1.msra.mxu0 0.0
      %3892 = vmatprep.mubr.f32.mxu0 0.0
      %3893 = vmatmul.mubr.f32.gmra.mrb[0].mxu0 %v3620
      %v3894 = vpop.f32.mrb[0].mxu0
      %v3895 = vadd.f32 0.0, %v3894
      %v3896 = vpop.f32.mrb[0].mxu0
      %3897 = vmatprep.mubr.f32.mxu0 0.0
      %3898 = vmatmul.mubr.f32.gmra.mrb[0].mxu0 %v3623
      %v3899 = vpop.f32.mrb[0].mxu0
      %v3900 = vadd.f32 0.0, %v3899
      %v3901 = vpop.f32.mrb[0].mxu0
      %3902 = vmatprep.mubr.f32.mxu0 0.0
      %3903 = vmatmul.mubr.f32.gmra.mrb[0].mxu0 %v3626
      %v3904 = vpop.f32.mrb[0].mxu0
      %v3905 = vadd.f32 0.0, %v3904
      %v3906 = vpop.f32.mrb[0].mxu0
      %3907 = vmatprep.mubr.f32.mxu0 0.0
      %3908 = vmatmul.mubr.f32.gmra.mrb[0].mxu0 %v3629
      %v3909 = vpop.f32.mrb[0].mxu0
      %v3910 = vadd.f32 0.0, %v3909
      %v3911 = vpop.f32.mrb[0].mxu0
      %3912 = vmatprep.mubr.f32.mxu0 0.0
      %3913 = vmatmul.mubr.f32.gmra.mrb[0].mxu0 %v3632
      %v3914 = vpop.f32.mrb[0].mxu0
      %v3915 = vadd.f32 0.0, %v3914
      %v3916 = vpop.f32.mrb[0].mxu0
      %3917 = vmatprep.mubr.f32.mxu0 0.0
      %3918 = vmatmul.mubr.f32.gmra.mrb[0].mxu0 %v3635
      %v3919 = vpop.f32.mrb[0].mxu0
      %v3920 = vadd.f32 0.0, %v3919
      %v3921 = vpop.f32.mrb[0].mxu0
      %3922 = vmatprep.mubr.f32.mxu0 0.0
      %3923 = vmatmul.mubr.f32.gmra.mrb[0].mxu0 %v3638
      %v3924 = vpop.f32.mrb[0].mxu0
      %v3925 = vadd.f32 0.0, %v3924
      %v3926 = vpop.f32.mrb[0].mxu0
      %3927 = vmatprep.mubr.f32.mxu0 0.0
      %3928 = vmatmul.mubr.f32.gmra.mrb[0].mxu0 %v3641
      %v3929 = vpop.f32.mrb[0].mxu0
      %v3930 = vadd.f32 0.0, %v3929
      %v3931 = vpop.f32.mrb[0].mxu0
      %3932 = vmatprep.mubr.f32.mxu0 0.0
      %3933 = vmatmul.mubr.f32.gmra.mrb[0].mxu0 %v3644
      %v3934 = vpop.f32.mrb[0].mxu0
      %v3935 = vadd.f32 0.0, %v3934
      %v3936 = vpop.f32.mrb[0].mxu0
      %3937 = vmatprep.mubr.f32.mxu0 0.0
      %3938 = vmatmul.mubr.f32.gmra.mrb[0].mxu0 %v3647
      %v3939 = vpop.f32.mrb[0].mxu0
      %v3940 = vadd.f32 0.0, %v3939
      %v3941 = vpop.f32.mrb[0].mxu0
      %3942 = vmatprep.mubr.f32.mxu0 0.0
      %3943 = vmatmul.mubr.f32.gmra.mrb[0].mxu0 %v3650
      %v3944 = vpop.f32.mrb[0].mxu0
      %v3945 = vadd.f32 0.0, %v3944
      %v3946 = vpop.f32.mrb[0].mxu0
      %3947 = vmatprep.mubr.f32.mxu0 0.0
      %3948 = vmatmul.mubr.f32.gmra.mrb[0].mxu0 %v3653
      %v3949 = vpop.f32.mrb[0].mxu0
      %v3950 = vadd.f32 0.0, %v3949
      %v3951 = vpop.f32.mrb[0].mxu0
      %3952 = vmatprep.mubr.f32.mxu0 0.0
      %3953 = vmatmul.mubr.f32.gmra.mrb[0].mxu0 %v3656
      %v3954 = vpop.f32.mrb[0].mxu0
      %v3955 = vadd.f32 0.0, %v3954
      %v3956 = vpop.f32.mrb[0].mxu0
      %3957 = vmatprep.mubr.f32.mxu0 0.0
      %3958 = vmatmul.mubr.f32.gmra.mrb[0].mxu0 %v3659
      %v3959 = vpop.f32.mrb[0].mxu0
      %v3960 = vadd.f32 0.0, %v3959
      %v3961 = vpop.f32.mrb[0].mxu0
      %3962 = vmatprep.mubr.f32.mxu0 0.0
      %3963 = vmatmul.mubr.f32.gmra.mrb[0].mxu0 %v3662
      %v3964 = vpop.f32.mrb[0].mxu0
      %v3965 = vadd.f32 0.0, %v3964
      %v3966 = vpop.f32.mrb[0].mxu0
      %3967 = vmatprep.mubr.f32.mxu0 0.0
      %3968 = vmatmul.mubr.f32.gmra.mrb[0].mxu0 %v3665
      %v3969 = vpop.f32.mrb[0].mxu0
      %v3970 = vadd.f32 0.0, %v3969
      %v3971 = vpop.f32.mrb[0].mxu0
      %3972 = vdwg.mxu0
      %v3974 = vsel %vm3618, %v3473, 0
      %v3977 = vsel %vm3618, %v3474, 0
      %v3980 = vsel %vm3618, %v3475, 0
      %v3983 = vsel %vm3618, %v3476, 0
      %v3986 = vsel %vm3618, %v3477, 0
      %v3989 = vsel %vm3618, %v3478, 0
      %v3992 = vsel %vm3618, %v3479, 0
      %v3995 = vsel %vm3618, %v3480, 0
      %v3998 = vsel %vm3618, %v3481, 0
      %v4001 = vsel %vm3618, %v3482, 0
      %v4004 = vsel %vm3618, %v3483, 0
      %v4007 = vsel %vm3618, %v3484, 0
      %v4010 = vsel %vm3618, %v3485, 0
      %v4013 = vsel %vm3618, %v3486, 0
      %v4016 = vsel %vm3618, %v3487, 0
      %v4019 = vsel %vm3618, %v3488, 0
      %4021 = vmatprep.subr.mxu0 %v3450
      %4022 = vmatpush1.msra.mxu0 %v3449
      %4023 = vmatprep.subr.mxu0 %v3453
      %4024 = vmatpush1.msra.mxu0 %v3452
      %4025 = vmatprep.subr.mxu0 %v3456
      %4026 = vmatpush1.msra.mxu0 %v3455
      %4027 = vmatprep.subr.mxu0 %v3459
      %4028 = vmatpush1.msra.mxu0 %v3458
      %4029 = vmatprep.subr.mxu0 %v3462
      %4030 = vmatpush1.msra.mxu0 %v3461
      %4031 = vmatprep.subr.mxu0 %v3465
      %4032 = vmatpush1.msra.mxu0 %v3464
      %4033 = vmatprep.subr.mxu0 %v3468
      %4034 = vmatpush1.msra.mxu0 %v3467
      %4035 = vmatprep.subr.mxu0 %v3471
      %4036 = vmatpush1.msra.mxu0 %v3470
      %4037 = vmatprep.subr.mxu0 0.0
      %4038 = vmatpush1.msra.mxu0 0.0
      %4039 = vmatprep.subr.mxu0 0.0
      %4040 = vmatpush1.msra.mxu0 0.0
      %4041 = vmatprep.subr.mxu0 0.0
      %4042 = vmatpush1.msra.mxu0 0.0
      %4043 = vmatprep.subr.mxu0 0.0
      %4044 = vmatpush1.msra.mxu0 0.0
      %4045 = vmatprep.subr.mxu0 0.0
      %4046 = vmatpush1.msra.mxu0 0.0
      %4047 = vmatprep.subr.mxu0 0.0
      %4048 = vmatpush1.msra.mxu0 0.0
      %4049 = vmatprep.subr.mxu0 0.0
      %4050 = vmatpush1.msra.mxu0 0.0
      %4051 = vmatprep.subr.mxu0 0.0
      %4052 = vmatpush1.msra.mxu0 0.0
      %4053 = vmatprep.subr.mxu0 0.0
      %4054 = vmatpush1.msra.mxu0 0.0
      %4055 = vmatprep.subr.mxu0 0.0
      %4056 = vmatpush1.msra.mxu0 0.0
      %4057 = vmatprep.subr.mxu0 0.0
      %4058 = vmatpush1.msra.mxu0 0.0
      %4059 = vmatprep.subr.mxu0 0.0
      %4060 = vmatpush1.msra.mxu0 0.0
      %4061 = vmatprep.subr.mxu0 0.0
      %4062 = vmatpush1.msra.mxu0 0.0
      %4063 = vmatprep.subr.mxu0 0.0
      %4064 = vmatpush1.msra.mxu0 0.0
      %4065 = vmatprep.subr.mxu0 0.0
      %4066 = vmatpush1.msra.mxu0 0.0
      %4067 = vmatprep.subr.mxu0 0.0
      %4068 = vmatpush1.msra.mxu0 0.0
      %4069 = vmatprep.subr.mxu0 0.0
      %4070 = vmatpush1.msra.mxu0 0.0
      %4071 = vmatprep.subr.mxu0 0.0
      %4072 = vmatpush1.msra.mxu0 0.0
      %4073 = vmatprep.subr.mxu0 0.0
      %4074 = vmatpush1.msra.mxu0 0.0
      %4075 = vmatprep.subr.mxu0 0.0
      %4076 = vmatpush1.msra.mxu0 0.0
      %4077 = vmatprep.subr.mxu0 0.0
      %4078 = vmatpush1.msra.mxu0 0.0
      %4079 = vmatprep.subr.mxu0 0.0
      %4080 = vmatpush1.msra.mxu0 0.0
      %4081 = vmatprep.subr.mxu0 0.0
      %4082 = vmatpush1.msra.mxu0 0.0
      %4083 = vmatprep.subr.mxu0 0.0
      %4084 = vmatpush1.msra.mxu0 0.0
      %4085 = vmatprep.mubr.f32.mxu0 0.0
      %4086 = vmatmul.mubr.f32.gmra.mrb[0].mxu0 %v3974
      %v4087 = vpop.f32.mrb[0].mxu0
      %v4088 = vadd.f32 %v3734, %v4087
      %v4089 = vpop.f32.mrb[0].mxu0
      %v4090 = vadd.f32 %v3736, %v4089
      %4091 = vmatprep.mubr.f32.mxu0 0.0
      %4092 = vmatmul.mubr.f32.gmra.mrb[0].mxu0 %v3977
      %v4093 = vpop.f32.mrb[0].mxu0
      %v4094 = vadd.f32 %v3740, %v4093
      %v4095 = vpop.f32.mrb[0].mxu0
      %v4096 = vadd.f32 %v3742, %v4095
      %4097 = vmatprep.mubr.f32.mxu0 0.0
      %4098 = vmatmul.mubr.f32.gmra.mrb[0].mxu0 %v3980
      %v4099 = vpop.f32.mrb[0].mxu0
      %v4100 = vadd.f32 %v3746, %v4099
      %v4101 = vpop.f32.mrb[0].mxu0
      %v4102 = vadd.f32 %v3748, %v4101
      %4103 = vmatprep.mubr.f32.mxu0 0.0
      %4104 = vmatmul.mubr.f32.gmra.mrb[0].mxu0 %v3983
      %v4105 = vpop.f32.mrb[0].mxu0
      %v4106 = vadd.f32 %v3752, %v4105
      %v4107 = vpop.f32.mrb[0].mxu0
      %v4108 = vadd.f32 %v3754, %v4107
      %4109 = vmatprep.mubr.f32.mxu0 0.0
      %4110 = vmatmul.mubr.f32.gmra.mrb[0].mxu0 %v3986
      %v4111 = vpop.f32.mrb[0].mxu0
      %v4112 = vadd.f32 %v3758, %v4111
      %v4113 = vpop.f32.mrb[0].mxu0
      %v4114 = vadd.f32 %v3760, %v4113
      %4115 = vmatprep.mubr.f32.mxu0 0.0
      %4116 = vmatmul.mubr.f32.gmra.mrb[0].mxu0 %v3989
      %v4117 = vpop.f32.mrb[0].mxu0
      %v4118 = vadd.f32 %v3764, %v4117
      %v4119 = vpop.f32.mrb[0].mxu0
      %v4120 = vadd.f32 %v3766, %v4119
      %4121 = vmatprep.mubr.f32.mxu0 0.0
      %4122 = vmatmul.mubr.f32.gmra.mrb[0].mxu0 %v3992
      %v4123 = vpop.f32.mrb[0].mxu0
      %v4124 = vadd.f32 %v3770, %v4123
      %v4125 = vpop.f32.mrb[0].mxu0
      %v4126 = vadd.f32 %v3772, %v4125
      %4127 = vmatprep.mubr.f32.mxu0 0.0
      %4128 = vmatmul.mubr.f32.gmra.mrb[0].mxu0 %v3995
      %v4129 = vpop.f32.mrb[0].mxu0
      %v4130 = vadd.f32 %v3776, %v4129
      %v4131 = vpop.f32.mrb[0].mxu0
      %v4132 = vadd.f32 %v3778, %v4131
      %4133 = vmatprep.mubr.f32.mxu0 0.0
      %4134 = vmatmul.mubr.f32.gmra.mrb[0].mxu0 %v3998
      %v4135 = vpop.f32.mrb[0].mxu0
      %v4136 = vadd.f32 %v3782, %v4135
      %v4137 = vpop.f32.mrb[0].mxu0
      %v4138 = vadd.f32 %v3784, %v4137
      %4139 = vmatprep.mubr.f32.mxu0 0.0
      %4140 = vmatmul.mubr.f32.gmra.mrb[0].mxu0 %v4001
      %v4141 = vpop.f32.mrb[0].mxu0
      %v4142 = vadd.f32 %v3788, %v4141
      %v4143 = vpop.f32.mrb[0].mxu0
      %v4144 = vadd.f32 %v3790, %v4143
      %4145 = vmatprep.mubr.f32.mxu0 0.0
      %4146 = vmatmul.mubr.f32.gmra.mrb[0].mxu0 %v4004
      %v4147 = vpop.f32.mrb[0].mxu0
      %v4148 = vadd.f32 %v3794, %v4147
      %v4149 = vpop.f32.mrb[0].mxu0
      %v4150 = vadd.f32 %v3796, %v4149
      %4151 = vmatprep.mubr.f32.mxu0 0.0
      %4152 = vmatmul.mubr.f32.gmra.mrb[0].mxu0 %v4007
      %v4153 = vpop.f32.mrb[0].mxu0
      %v4154 = vadd.f32 %v3800, %v4153
      %v4155 = vpop.f32.mrb[0].mxu0
      %v4156 = vadd.f32 %v3802, %v4155
      %4157 = vmatprep.mubr.f32.mxu0 0.0
      %4158 = vmatmul.mubr.f32.gmra.mrb[0].mxu0 %v4010
      %v4159 = vpop.f32.mrb[0].mxu0
      %v4160 = vadd.f32 %v3806, %v4159
      %v4161 = vpop.f32.mrb[0].mxu0
      %v4162 = vadd.f32 %v3808, %v4161
      %4163 = vmatprep.mubr.f32.mxu0 0.0
      %4164 = vmatmul.mubr.f32.gmra.mrb[0].mxu0 %v4013
      %v4165 = vpop.f32.mrb[0].mxu0
      %v4166 = vadd.f32 %v3812, %v4165
      %v4167 = vpop.f32.mrb[0].mxu0
      %v4168 = vadd.f32 %v3814, %v4167
      %4169 = vmatprep.mubr.f32.mxu0 0.0
      %4170 = vmatmul.mubr.f32.gmra.mrb[0].mxu0 %v4016
      %v4171 = vpop.f32.mrb[0].mxu0
      %v4172 = vadd.f32 %v3818, %v4171
      %v4173 = vpop.f32.mrb[0].mxu0
      %v4174 = vadd.f32 %v3820, %v4173
      %4175 = vmatprep.mubr.f32.mxu0 0.0
      %4176 = vmatmul.mubr.f32.gmra.mrb[0].mxu0 %v4019
      %v4177 = vpop.f32.mrb[0].mxu0
      %v4178 = vadd.f32 %v3824, %v4177
      %v4179 = vpop.f32.mrb[0].mxu0
      %v4180 = vadd.f32 %v3826, %v4179
      %4181 = vdwg.mxu0
      %4182 = vmatprep.subr.mxu0 0.0
      %4183 = vmatpush1.msra.mxu0 %v3451
      %4184 = vmatprep.subr.mxu0 0.0
      %4185 = vmatpush1.msra.mxu0 %v3454
      %4186 = vmatprep.subr.mxu0 0.0
      %4187 = vmatpush1.msra.mxu0 %v3457
      %4188 = vmatprep.subr.mxu0 0.0
      %4189 = vmatpush1.msra.mxu0 %v3460
      %4190 = vmatprep.subr.mxu0 0.0
      %4191 = vmatpush1.msra.mxu0 %v3463
      %4192 = vmatprep.subr.mxu0 0.0
      %4193 = vmatpush1.msra.mxu0 %v3466
      %4194 = vmatprep.subr.mxu0 0.0
      %4195 = vmatpush1.msra.mxu0 %v3469
      %4196 = vmatprep.subr.mxu0 0.0
      %4197 = vmatpush1.msra.mxu0 %v3472
      %4198 = vmatprep.subr.mxu0 0.0
      %4199 = vmatpush1.msra.mxu0 0.0
      %4200 = vmatprep.subr.mxu0 0.0
      %4201 = vmatpush1.msra.mxu0 0.0
      %4202 = vmatprep.subr.mxu0 0.0
      %4203 = vmatpush1.msra.mxu0 0.0
      %4204 = vmatprep.subr.mxu0 0.0
      %4205 = vmatpush1.msra.mxu0 0.0
      %4206 = vmatprep.subr.mxu0 0.0
      %4207 = vmatpush1.msra.mxu0 0.0
      %4208 = vmatprep.subr.mxu0 0.0
      %4209 = vmatpush1.msra.mxu0 0.0
      %4210 = vmatprep.subr.mxu0 0.0
      %4211 = vmatpush1.msra.mxu0 0.0
      %4212 = vmatprep.subr.mxu0 0.0
      %4213 = vmatpush1.msra.mxu0 0.0
      %4214 = vmatprep.subr.mxu0 0.0
      %4215 = vmatpush1.msra.mxu0 0.0
      %4216 = vmatprep.subr.mxu0 0.0
      %4217 = vmatpush1.msra.mxu0 0.0
      %4218 = vmatprep.subr.mxu0 0.0
      %4219 = vmatpush1.msra.mxu0 0.0
      %4220 = vmatprep.subr.mxu0 0.0
      %4221 = vmatpush1.msra.mxu0 0.0
      %4222 = vmatprep.subr.mxu0 0.0
      %4223 = vmatpush1.msra.mxu0 0.0
      %4224 = vmatprep.subr.mxu0 0.0
      %4225 = vmatpush1.msra.mxu0 0.0
      %4226 = vmatprep.subr.mxu0 0.0
      %4227 = vmatpush1.msra.mxu0 0.0
      %4228 = vmatprep.subr.mxu0 0.0
      %4229 = vmatpush1.msra.mxu0 0.0
      %4230 = vmatprep.subr.mxu0 0.0
      %4231 = vmatpush1.msra.mxu0 0.0
      %4232 = vmatprep.subr.mxu0 0.0
      %4233 = vmatpush1.msra.mxu0 0.0
      %4234 = vmatprep.subr.mxu0 0.0
      %4235 = vmatpush1.msra.mxu0 0.0
      %4236 = vmatprep.subr.mxu0 0.0
      %4237 = vmatpush1.msra.mxu0 0.0
      %4238 = vmatprep.subr.mxu0 0.0
      %4239 = vmatpush1.msra.mxu0 0.0
      %4240 = vmatprep.subr.mxu0 0.0
      %4241 = vmatpush1.msra.mxu0 0.0
      %4242 = vmatprep.subr.mxu0 0.0
      %4243 = vmatpush1.msra.mxu0 0.0
      %4244 = vmatprep.subr.mxu0 0.0
      %4245 = vmatpush1.msra.mxu0 0.0
      %4246 = vmatprep.mubr.f32.mxu0 0.0
      %4247 = vmatmul.mubr.f32.gmra.mrb[0].mxu0 %v3974
      %v4248 = vpop.f32.mrb[0].mxu0
      %v4249 = vadd.f32 %v3895, %v4248
      %v4250 = vpop.f32.mrb[0].mxu0
      %4251 = vmatprep.mubr.f32.mxu0 0.0
      %4252 = vmatmul.mubr.f32.gmra.mrb[0].mxu0 %v3977
      %v4253 = vpop.f32.mrb[0].mxu0
      %v4254 = vadd.f32 %v3900, %v4253
      %v4255 = vpop.f32.mrb[0].mxu0
      %4256 = vmatprep.mubr.f32.mxu0 0.0
      %4257 = vmatmul.mubr.f32.gmra.mrb[0].mxu0 %v3980
      %v4258 = vpop.f32.mrb[0].mxu0
      %v4259 = vadd.f32 %v3905, %v4258
      %v4260 = vpop.f32.mrb[0].mxu0
      %4261 = vmatprep.mubr.f32.mxu0 0.0
      %4262 = vmatmul.mubr.f32.gmra.mrb[0].mxu0 %v3983
      %v4263 = vpop.f32.mrb[0].mxu0
      %v4264 = vadd.f32 %v3910, %v4263
      %v4265 = vpop.f32.mrb[0].mxu0
      %4266 = vmatprep.mubr.f32.mxu0 0.0
      %4267 = vmatmul.mubr.f32.gmra.mrb[0].mxu0 %v3986
      %v4268 = vpop.f32.mrb[0].mxu0
      %v4269 = vadd.f32 %v3915, %v4268
      %v4270 = vpop.f32.mrb[0].mxu0
      %4271 = vmatprep.mubr.f32.mxu0 0.0
      %4272 = vmatmul.mubr.f32.gmra.mrb[0].mxu0 %v3989
      %v4273 = vpop.f32.mrb[0].mxu0
      %v4274 = vadd.f32 %v3920, %v4273
      %v4275 = vpop.f32.mrb[0].mxu0
      %4276 = vmatprep.mubr.f32.mxu0 0.0
      %4277 = vmatmul.mubr.f32.gmra.mrb[0].mxu0 %v3992
      %v4278 = vpop.f32.mrb[0].mxu0
      %v4279 = vadd.f32 %v3925, %v4278
      %v4280 = vpop.f32.mrb[0].mxu0
      %4281 = vmatprep.mubr.f32.mxu0 0.0
      %4282 = vmatmul.mubr.f32.gmra.mrb[0].mxu0 %v3995
      %v4283 = vpop.f32.mrb[0].mxu0
      %v4284 = vadd.f32 %v3930, %v4283
      %v4285 = vpop.f32.mrb[0].mxu0
      %4286 = vmatprep.mubr.f32.mxu0 0.0
      %4287 = vmatmul.mubr.f32.gmra.mrb[0].mxu0 %v3998
      %v4288 = vpop.f32.mrb[0].mxu0
      %v4289 = vadd.f32 %v3935, %v4288
      %v4290 = vpop.f32.mrb[0].mxu0
      %4291 = vmatprep.mubr.f32.mxu0 0.0
      %4292 = vmatmul.mubr.f32.gmra.mrb[0].mxu0 %v4001
      %v4293 = vpop.f32.mrb[0].mxu0
      %v4294 = vadd.f32 %v3940, %v4293
      %v4295 = vpop.f32.mrb[0].mxu0
      %4296 = vmatprep.mubr.f32.mxu0 0.0
      %4297 = vmatmul.mubr.f32.gmra.mrb[0].mxu0 %v4004
      %v4298 = vpop.f32.mrb[0].mxu0
      %v4299 = vadd.f32 %v3945, %v4298
      %v4300 = vpop.f32.mrb[0].mxu0
      %4301 = vmatprep.mubr.f32.mxu0 0.0
      %4302 = vmatmul.mubr.f32.gmra.mrb[0].mxu0 %v4007
      %v4303 = vpop.f32.mrb[0].mxu0
      %v4304 = vadd.f32 %v3950, %v4303
      %v4305 = vpop.f32.mrb[0].mxu0
      %4306 = vmatprep.mubr.f32.mxu0 0.0
      %4307 = vmatmul.mubr.f32.gmra.mrb[0].mxu0 %v4010
      %v4308 = vpop.f32.mrb[0].mxu0
      %v4309 = vadd.f32 %v3955, %v4308
      %v4310 = vpop.f32.mrb[0].mxu0
      %4311 = vmatprep.mubr.f32.mxu0 0.0
      %4312 = vmatmul.mubr.f32.gmra.mrb[0].mxu0 %v4013
      %v4313 = vpop.f32.mrb[0].mxu0
      %v4314 = vadd.f32 %v3960, %v4313
      %v4315 = vpop.f32.mrb[0].mxu0
      %4316 = vmatprep.mubr.f32.mxu0 0.0
      %4317 = vmatmul.mubr.f32.gmra.mrb[0].mxu0 %v4016
      %v4318 = vpop.f32.mrb[0].mxu0
      %v4319 = vadd.f32 %v3965, %v4318
      %v4320 = vpop.f32.mrb[0].mxu0
      %4321 = vmatprep.mubr.f32.mxu0 0.0
      %4322 = vmatmul.mubr.f32.gmra.mrb[0].mxu0 %v4019
      %v4323 = vpop.f32.mrb[0].mxu0
      %v4324 = vadd.f32 %v3970, %v4323
      %v4325 = vpop.f32.mrb[0].mxu0
      %4326 = vdwg.mxu0
      %s4327 = scalar_lea.vmem %s4, 256
      %v4328 = vld [vmem:[%s4327] sm:$0xff]
      %v4329 = vld [vmem:[%s4327 + $0x8] sm:$0xff]
      %v4330 = vld [vmem:[%s4327 + $0x10] sm:$0xff]
      %v4331 = vld [vmem:[%s4327 + $0x18] sm:$0xff]
      %v4332 = vld [vmem:[%s4327 + $0x20] sm:$0xff]
      %v4333 = vld [vmem:[%s4327 + $0x28] sm:$0xff]
      %v4334 = vld [vmem:[%s4327 + $0x30] sm:$0xff]
      %v4335 = vld [vmem:[%s4327 + $0x38] sm:$0xff]
      %v4336 = vld [vmem:[%s4327 + $0x40] sm:$0xff]
      %v4337 = vld [vmem:[%s4327 + $0x48] sm:$0xff]
      %v4338 = vld [vmem:[%s4327 + $0x50] sm:$0xff]
      %v4339 = vld [vmem:[%s4327 + $0x58] sm:$0xff]
      %v4340 = vld [vmem:[%s4327 + $0x60] sm:$0xff]
      %v4341 = vld [vmem:[%s4327 + $0x68] sm:$0xff]
      %v4342 = vld [vmem:[%s4327 + $0x70] sm:$0xff]
      %v4343 = vld [vmem:[%s4327 + $0x78] sm:$0xff]
      %4344 = vrot.lane.b32.xlu0 %v3449, 109
      %v4345 = vpop.permute.xlu0 %4344
      %4346 = vrot.lane.b32.xlu0 %v3450, 109
      %v4347 = vpop.permute.xlu0 %4346
      %4348 = vrot.lane.b32.xlu0 %v3451, 109
      %v4349 = vpop.permute.xlu0 %4348
      %4350 = vrot.lane.b32.xlu0 %v3452, 109
      %v4351 = vpop.permute.xlu0 %4350
      %4352 = vrot.lane.b32.xlu0 %v3453, 109
      %v4353 = vpop.permute.xlu0 %4352
      %4354 = vrot.lane.b32.xlu0 %v3454, 109
      %v4355 = vpop.permute.xlu0 %4354
      %4356 = vrot.lane.b32.xlu0 %v3455, 109
      %v4357 = vpop.permute.xlu0 %4356
      %4358 = vrot.lane.b32.xlu0 %v3456, 109
      %v4359 = vpop.permute.xlu0 %4358
      %4360 = vrot.lane.b32.xlu0 %v3457, 109
      %v4361 = vpop.permute.xlu0 %4360
      %4362 = vrot.lane.b32.xlu0 %v3458, 109
      %v4363 = vpop.permute.xlu0 %4362
      %4364 = vrot.lane.b32.xlu0 %v3459, 109
      %v4365 = vpop.permute.xlu0 %4364
      %4366 = vrot.lane.b32.xlu0 %v3460, 109
      %v4367 = vpop.permute.xlu0 %4366
      %4368 = vrot.lane.b32.xlu0 %v3461, 109
      %v4369 = vpop.permute.xlu0 %4368
      %4370 = vrot.lane.b32.xlu0 %v3462, 109
      %v4371 = vpop.permute.xlu0 %4370
      %4372 = vrot.lane.b32.xlu0 %v3463, 109
      %v4373 = vpop.permute.xlu0 %4372
      %4374 = vrot.lane.b32.xlu0 %v3464, 109
      %v4375 = vpop.permute.xlu0 %4374
      %4376 = vrot.lane.b32.xlu0 %v3465, 109
      %v4377 = vpop.permute.xlu0 %4376
      %4378 = vrot.lane.b32.xlu0 %v3466, 109
      %v4379 = vpop.permute.xlu0 %4378
      %4380 = vrot.lane.b32.xlu0 %v3467, 109
      %v4381 = vpop.permute.xlu0 %4380
      %4382 = vrot.lane.b32.xlu0 %v3468, 109
      %v4383 = vpop.permute.xlu0 %4382
      %4384 = vrot.lane.b32.xlu0 %v3469, 109
      %v4385 = vpop.permute.xlu0 %4384
      %4386 = vrot.lane.b32.xlu0 %v3470, 109
      %v4387 = vpop.permute.xlu0 %4386
      %4388 = vrot.lane.b32.xlu0 %v3471, 109
      %v4389 = vpop.permute.xlu0 %4388
      %4390 = vrot.lane.b32.xlu0 %v3472, 109
      %v4391 = vpop.permute.xlu0 %4390
      %v4392 = vsel %vm1554, %v4345, %v4347
      %v4393 = vsel %vm1554, %v4347, %v4349
      %v4394 = vsel %vm1554, %v4351, %v4353
      %v4395 = vsel %vm1554, %v4353, %v4355
      %v4396 = vsel %vm1554, %v4357, %v4359
      %v4397 = vsel %vm1554, %v4359, %v4361
      %v4398 = vsel %vm1554, %v4363, %v4365
      %v4399 = vsel %vm1554, %v4365, %v4367
      %v4400 = vsel %vm1554, %v4369, %v4371
      %v4401 = vsel %vm1554, %v4371, %v4373
      %v4402 = vsel %vm1554, %v4375, %v4377
      %v4403 = vsel %vm1554, %v4377, %v4379
      %v4404 = vsel %vm1554, %v4381, %v4383
      %v4405 = vsel %vm1554, %v4383, %v4385
      %v4406 = vsel %vm1554, %v4387, %v4389
      %v4407 = vsel %vm1554, %v4389, %v4391
      %v4433 = vsel %vm3618, %v4328, 0
      %v4436 = vsel %vm3618, %v4329, 0
      %v4439 = vsel %vm3618, %v4330, 0
      %v4442 = vsel %vm3618, %v4331, 0
      %v4445 = vsel %vm3618, %v4332, 0
      %v4448 = vsel %vm3618, %v4333, 0
      %v4451 = vsel %vm3618, %v4334, 0
      %v4454 = vsel %vm3618, %v4335, 0
      %v4457 = vsel %vm3618, %v4336, 0
      %v4460 = vsel %vm3618, %v4337, 0
      %v4463 = vsel %vm3618, %v4338, 0
      %v4466 = vsel %vm3618, %v4339, 0
      %v4469 = vsel %vm3618, %v4340, 0
      %v4472 = vsel %vm3618, %v4341, 0
      %v4475 = vsel %vm3618, %v4342, 0
      %v4478 = vsel %vm3618, %v4343, 0
      %4480 = vmatprep.subr.mxu0 %v4393
      %4481 = vmatpush1.msra.mxu0 %v4392
      %4482 = vmatprep.subr.mxu0 %v4395
      %4483 = vmatpush1.msra.mxu0 %v4394
      %4484 = vmatprep.subr.mxu0 %v4397
      %4485 = vmatpush1.msra.mxu0 %v4396
      %4486 = vmatprep.subr.mxu0 %v4399
      %4487 = vmatpush1.msra.mxu0 %v4398
      %4488 = vmatprep.subr.mxu0 %v4401
      %4489 = vmatpush1.msra.mxu0 %v4400
      %4490 = vmatprep.subr.mxu0 %v4403
      %4491 = vmatpush1.msra.mxu0 %v4402
      %4492 = vmatprep.subr.mxu0 %v4405
      %4493 = vmatpush1.msra.mxu0 %v4404
      %4494 = vmatprep.subr.mxu0 %v4407
      %4495 = vmatpush1.msra.mxu0 %v4406
      %4496 = vmatprep.subr.mxu0 0.0
      %4497 = vmatpush1.msra.mxu0 0.0
      %4498 = vmatprep.subr.mxu0 0.0
      %4499 = vmatpush1.msra.mxu0 0.0
      %4500 = vmatprep.subr.mxu0 0.0
      %4501 = vmatpush1.msra.mxu0 0.0
      %4502 = vmatprep.subr.mxu0 0.0
      %4503 = vmatpush1.msra.mxu0 0.0
      %4504 = vmatprep.subr.mxu0 0.0
      %4505 = vmatpush1.msra.mxu0 0.0
      %4506 = vmatprep.subr.mxu0 0.0
      %4507 = vmatpush1.msra.mxu0 0.0
      %4508 = vmatprep.subr.mxu0 0.0
      %4509 = vmatpush1.msra.mxu0 0.0
      %4510 = vmatprep.subr.mxu0 0.0
      %4511 = vmatpush1.msra.mxu0 0.0
      %4512 = vmatprep.subr.mxu0 0.0
      %4513 = vmatpush1.msra.mxu0 0.0
      %4514 = vmatprep.subr.mxu0 0.0
      %4515 = vmatpush1.msra.mxu0 0.0
      %4516 = vmatprep.subr.mxu0 0.0
      %4517 = vmatpush1.msra.mxu0 0.0
      %4518 = vmatprep.subr.mxu0 0.0
      %4519 = vmatpush1.msra.mxu0 0.0
      %4520 = vmatprep.subr.mxu0 0.0
      %4521 = vmatpush1.msra.mxu0 0.0
      %4522 = vmatprep.subr.mxu0 0.0
      %4523 = vmatpush1.msra.mxu0 0.0
      %4524 = vmatprep.subr.mxu0 0.0
      %4525 = vmatpush1.msra.mxu0 0.0
      %4526 = vmatprep.subr.mxu0 0.0
      %4527 = vmatpush1.msra.mxu0 0.0
      %4528 = vmatprep.subr.mxu0 0.0
      %4529 = vmatpush1.msra.mxu0 0.0
      %4530 = vmatprep.subr.mxu0 0.0
      %4531 = vmatpush1.msra.mxu0 0.0
      %4532 = vmatprep.subr.mxu0 0.0
      %4533 = vmatpush1.msra.mxu0 0.0
      %4534 = vmatprep.subr.mxu0 0.0
      %4535 = vmatpush1.msra.mxu0 0.0
      %4536 = vmatprep.subr.mxu0 0.0
      %4537 = vmatpush1.msra.mxu0 0.0
      %4538 = vmatprep.subr.mxu0 0.0
      %4539 = vmatpush1.msra.mxu0 0.0
      %4540 = vmatprep.subr.mxu0 0.0
      %4541 = vmatpush1.msra.mxu0 0.0
      %4542 = vmatprep.subr.mxu0 0.0
      %4543 = vmatpush1.msra.mxu0 0.0
      %4544 = vmatprep.mubr.f32.mxu0 0.0
      %4545 = vmatmul.mubr.f32.gmra.mrb[0].mxu0 %v4433
      %v4546 = vpop.f32.mrb[0].mxu0
      %v4547 = vadd.f32 0.0, %v4546
      %v4548 = vpop.f32.mrb[0].mxu0
      %v4549 = vadd.f32 0.0, %v4548
      %4550 = vmatprep.mubr.f32.mxu0 0.0
      %4551 = vmatmul.mubr.f32.gmra.mrb[0].mxu0 %v4436
      %v4552 = vpop.f32.mrb[0].mxu0
      %v4553 = vadd.f32 0.0, %v4552
      %v4554 = vpop.f32.mrb[0].mxu0
      %v4555 = vadd.f32 0.0, %v4554
      %4556 = vmatprep.mubr.f32.mxu0 0.0
      %4557 = vmatmul.mubr.f32.gmra.mrb[0].mxu0 %v4439
      %v4558 = vpop.f32.mrb[0].mxu0
      %v4559 = vadd.f32 0.0, %v4558
      %v4560 = vpop.f32.mrb[0].mxu0
      %v4561 = vadd.f32 0.0, %v4560
      %4562 = vmatprep.mubr.f32.mxu0 0.0
      %4563 = vmatmul.mubr.f32.gmra.mrb[0].mxu0 %v4442
      %v4564 = vpop.f32.mrb[0].mxu0
      %v4565 = vadd.f32 0.0, %v4564
      %v4566 = vpop.f32.mrb[0].mxu0
      %v4567 = vadd.f32 0.0, %v4566
      %4568 = vmatprep.mubr.f32.mxu0 0.0
      %4569 = vmatmul.mubr.f32.gmra.mrb[0].mxu0 %v4445
      %v4570 = vpop.f32.mrb[0].mxu0
      %v4571 = vadd.f32 0.0, %v4570
      %v4572 = vpop.f32.mrb[0].mxu0
      %v4573 = vadd.f32 0.0, %v4572
      %4574 = vmatprep.mubr.f32.mxu0 0.0
      %4575 = vmatmul.mubr.f32.gmra.mrb[0].mxu0 %v4448
      %v4576 = vpop.f32.mrb[0].mxu0
      %v4577 = vadd.f32 0.0, %v4576
      %v4578 = vpop.f32.mrb[0].mxu0
      %v4579 = vadd.f32 0.0, %v4578
      %4580 = vmatprep.mubr.f32.mxu0 0.0
      %4581 = vmatmul.mubr.f32.gmra.mrb[0].mxu0 %v4451
      %v4582 = vpop.f32.mrb[0].mxu0
      %v4583 = vadd.f32 0.0, %v4582
      %v4584 = vpop.f32.mrb[0].mxu0
      %v4585 = vadd.f32 0.0, %v4584
      %4586 = vmatprep.mubr.f32.mxu0 0.0
      %4587 = vmatmul.mubr.f32.gmra.mrb[0].mxu0 %v4454
      %v4588 = vpop.f32.mrb[0].mxu0
      %v4589 = vadd.f32 0.0, %v4588
      %v4590 = vpop.f32.mrb[0].mxu0
      %v4591 = vadd.f32 0.0, %v4590
      %4592 = vmatprep.mubr.f32.mxu0 0.0
      %4593 = vmatmul.mubr.f32.gmra.mrb[0].mxu0 %v4457
      %v4594 = vpop.f32.mrb[0].mxu0
      %v4595 = vadd.f32 0.0, %v4594
      %v4596 = vpop.f32.mrb[0].mxu0
      %v4597 = vadd.f32 0.0, %v4596
      %4598 = vmatprep.mubr.f32.mxu0 0.0
      %4599 = vmatmul.mubr.f32.gmra.mrb[0].mxu0 %v4460
      %v4600 = vpop.f32.mrb[0].mxu0
      %v4601 = vadd.f32 0.0, %v4600
      %v4602 = vpop.f32.mrb[0].mxu0
      %v4603 = vadd.f32 0.0, %v4602
      %4604 = vmatprep.mubr.f32.mxu0 0.0
      %4605 = vmatmul.mubr.f32.gmra.mrb[0].mxu0 %v4463
      %v4606 = vpop.f32.mrb[0].mxu0
      %v4607 = vadd.f32 0.0, %v4606
      %v4608 = vpop.f32.mrb[0].mxu0
      %v4609 = vadd.f32 0.0, %v4608
      %4610 = vmatprep.mubr.f32.mxu0 0.0
      %4611 = vmatmul.mubr.f32.gmra.mrb[0].mxu0 %v4466
      %v4612 = vpop.f32.mrb[0].mxu0
      %v4613 = vadd.f32 0.0, %v4612
      %v4614 = vpop.f32.mrb[0].mxu0
      %v4615 = vadd.f32 0.0, %v4614
      %4616 = vmatprep.mubr.f32.mxu0 0.0
      %4617 = vmatmul.mubr.f32.gmra.mrb[0].mxu0 %v4469
      %v4618 = vpop.f32.mrb[0].mxu0
      %v4619 = vadd.f32 0.0, %v4618
      %v4620 = vpop.f32.mrb[0].mxu0
      %v4621 = vadd.f32 0.0, %v4620
      %4622 = vmatprep.mubr.f32.mxu0 0.0
      %4623 = vmatmul.mubr.f32.gmra.mrb[0].mxu0 %v4472
      %v4624 = vpop.f32.mrb[0].mxu0
      %v4625 = vadd.f32 0.0, %v4624
      %v4626 = vpop.f32.mrb[0].mxu0
      %v4627 = vadd.f32 0.0, %v4626
      %4628 = vmatprep.mubr.f32.mxu0 0.0
      %4629 = vmatmul.mubr.f32.gmra.mrb[0].mxu0 %v4475
      %v4630 = vpop.f32.mrb[0].mxu0
      %v4631 = vadd.f32 0.0, %v4630
      %v4632 = vpop.f32.mrb[0].mxu0
      %v4633 = vadd.f32 0.0, %v4632
      %4634 = vmatprep.mubr.f32.mxu0 0.0
      %4635 = vmatmul.mubr.f32.gmra.mrb[0].mxu0 %v4478
      %v4636 = vpop.f32.mrb[0].mxu0
      %v4637 = vadd.f32 0.0, %v4636
      %v4638 = vpop.f32.mrb[0].mxu0
      %v4639 = vadd.f32 0.0, %v4638
      %4640 = vdwg.mxu0
      %4641 = vmatprep.subr.mxu0 0.0
      %4642 = vmatpush1.msra.mxu0 %v4349
      %4643 = vmatprep.subr.mxu0 0.0
      %4644 = vmatpush1.msra.mxu0 %v4355
      %4645 = vmatprep.subr.mxu0 0.0
      %4646 = vmatpush1.msra.mxu0 %v4361
      %4647 = vmatprep.subr.mxu0 0.0
      %4648 = vmatpush1.msra.mxu0 %v4367
      %4649 = vmatprep.subr.mxu0 0.0
      %4650 = vmatpush1.msra.mxu0 %v4373
      %4651 = vmatprep.subr.mxu0 0.0
      %4652 = vmatpush1.msra.mxu0 %v4379
      %4653 = vmatprep.subr.mxu0 0.0
      %4654 = vmatpush1.msra.mxu0 %v4385
      %4655 = vmatprep.subr.mxu0 0.0
      %4656 = vmatpush1.msra.mxu0 %v4391
      %4657 = vmatprep.subr.mxu0 0.0
      %4658 = vmatpush1.msra.mxu0 0.0
      %4659 = vmatprep.subr.mxu0 0.0
      %4660 = vmatpush1.msra.mxu0 0.0
      %4661 = vmatprep.subr.mxu0 0.0
      %4662 = vmatpush1.msra.mxu0 0.0
      %4663 = vmatprep.subr.mxu0 0.0
      %4664 = vmatpush1.msra.mxu0 0.0
      %4665 = vmatprep.subr.mxu0 0.0
      %4666 = vmatpush1.msra.mxu0 0.0
      %4667 = vmatprep.subr.mxu0 0.0
      %4668 = vmatpush1.msra.mxu0 0.0
      %4669 = vmatprep.subr.mxu0 0.0
      %4670 = vmatpush1.msra.mxu0 0.0
      %4671 = vmatprep.subr.mxu0 0.0
      %4672 = vmatpush1.msra.mxu0 0.0
      %4673 = vmatprep.subr.mxu0 0.0
      %4674 = vmatpush1.msra.mxu0 0.0
      %4675 = vmatprep.subr.mxu0 0.0
      %4676 = vmatpush1.msra.mxu0 0.0
      %4677 = vmatprep.subr.mxu0 0.0
      %4678 = vmatpush1.msra.mxu0 0.0
      %4679 = vmatprep.subr.mxu0 0.0
      %4680 = vmatpush1.msra.mxu0 0.0
      %4681 = vmatprep.subr.mxu0 0.0
      %4682 = vmatpush1.msra.mxu0 0.0
      %4683 = vmatprep.subr.mxu0 0.0
      %4684 = vmatpush1.msra.mxu0 0.0
      %4685 = vmatprep.subr.mxu0 0.0
      %4686 = vmatpush1.msra.mxu0 0.0
      %4687 = vmatprep.subr.mxu0 0.0
      %4688 = vmatpush1.msra.mxu0 0.0
      %4689 = vmatprep.subr.mxu0 0.0
      %4690 = vmatpush1.msra.mxu0 0.0
      %4691 = vmatprep.subr.mxu0 0.0
      %4692 = vmatpush1.msra.mxu0 0.0
      %4693 = vmatprep.subr.mxu0 0.0
      %4694 = vmatpush1.msra.mxu0 0.0
      %4695 = vmatprep.subr.mxu0 0.0
      %4696 = vmatpush1.msra.mxu0 0.0
      %4697 = vmatprep.subr.mxu0 0.0
      %4698 = vmatpush1.msra.mxu0 0.0
      %4699 = vmatprep.subr.mxu0 0.0
      %4700 = vmatpush1.msra.mxu0 0.0
      %4701 = vmatprep.subr.mxu0 0.0
      %4702 = vmatpush1.msra.mxu0 0.0
      %4703 = vmatprep.subr.mxu0 0.0
      %4704 = vmatpush1.msra.mxu0 0.0
      %4705 = vmatprep.mubr.f32.mxu0 0.0
      %4706 = vmatmul.mubr.f32.gmra.mrb[0].mxu0 %v4433
      %v4707 = vpop.f32.mrb[0].mxu0
      %v4708 = vadd.f32 0.0, %v4707
      %v4709 = vpop.f32.mrb[0].mxu0
      %4710 = vmatprep.mubr.f32.mxu0 0.0
      %4711 = vmatmul.mubr.f32.gmra.mrb[0].mxu0 %v4436
      %v4712 = vpop.f32.mrb[0].mxu0
      %v4713 = vadd.f32 0.0, %v4712
      %v4714 = vpop.f32.mrb[0].mxu0
      %4715 = vmatprep.mubr.f32.mxu0 0.0
      %4716 = vmatmul.mubr.f32.gmra.mrb[0].mxu0 %v4439
      %v4717 = vpop.f32.mrb[0].mxu0
      %v4718 = vadd.f32 0.0, %v4717
      %v4719 = vpop.f32.mrb[0].mxu0
      %4720 = vmatprep.mubr.f32.mxu0 0.0
      %4721 = vmatmul.mubr.f32.gmra.mrb[0].mxu0 %v4442
      %v4722 = vpop.f32.mrb[0].mxu0
      %v4723 = vadd.f32 0.0, %v4722
      %v4724 = vpop.f32.mrb[0].mxu0
      %4725 = vmatprep.mubr.f32.mxu0 0.0
      %4726 = vmatmul.mubr.f32.gmra.mrb[0].mxu0 %v4445
      %v4727 = vpop.f32.mrb[0].mxu0
      %v4728 = vadd.f32 0.0, %v4727
      %v4729 = vpop.f32.mrb[0].mxu0
      %4730 = vmatprep.mubr.f32.mxu0 0.0
      %4731 = vmatmul.mubr.f32.gmra.mrb[0].mxu0 %v4448
      %v4732 = vpop.f32.mrb[0].mxu0
      %v4733 = vadd.f32 0.0, %v4732
      %v4734 = vpop.f32.mrb[0].mxu0
      %4735 = vmatprep.mubr.f32.mxu0 0.0
      %4736 = vmatmul.mubr.f32.gmra.mrb[0].mxu0 %v4451
      %v4737 = vpop.f32.mrb[0].mxu0
      %v4738 = vadd.f32 0.0, %v4737
      %v4739 = vpop.f32.mrb[0].mxu0
      %4740 = vmatprep.mubr.f32.mxu0 0.0
      %4741 = vmatmul.mubr.f32.gmra.mrb[0].mxu0 %v4454
      %v4742 = vpop.f32.mrb[0].mxu0
      %v4743 = vadd.f32 0.0, %v4742
      %v4744 = vpop.f32.mrb[0].mxu0
      %4745 = vmatprep.mubr.f32.mxu0 0.0
      %4746 = vmatmul.mubr.f32.gmra.mrb[0].mxu0 %v4457
      %v4747 = vpop.f32.mrb[0].mxu0
      %v4748 = vadd.f32 0.0, %v4747
      %v4749 = vpop.f32.mrb[0].mxu0
      %4750 = vmatprep.mubr.f32.mxu0 0.0
      %4751 = vmatmul.mubr.f32.gmra.mrb[0].mxu0 %v4460
      %v4752 = vpop.f32.mrb[0].mxu0
      %v4753 = vadd.f32 0.0, %v4752
      %v4754 = vpop.f32.mrb[0].mxu0
      %4755 = vmatprep.mubr.f32.mxu0 0.0
      %4756 = vmatmul.mubr.f32.gmra.mrb[0].mxu0 %v4463
      %v4757 = vpop.f32.mrb[0].mxu0
      %v4758 = vadd.f32 0.0, %v4757
      %v4759 = vpop.f32.mrb[0].mxu0
      %4760 = vmatprep.mubr.f32.mxu0 0.0
      %4761 = vmatmul.mubr.f32.gmra.mrb[0].mxu0 %v4466
      %v4762 = vpop.f32.mrb[0].mxu0
      %v4763 = vadd.f32 0.0, %v4762
      %v4764 = vpop.f32.mrb[0].mxu0
      %4765 = vmatprep.mubr.f32.mxu0 0.0
      %4766 = vmatmul.mubr.f32.gmra.mrb[0].mxu0 %v4469
      %v4767 = vpop.f32.mrb[0].mxu0
      %v4768 = vadd.f32 0.0, %v4767
      %v4769 = vpop.f32.mrb[0].mxu0
      %4770 = vmatprep.mubr.f32.mxu0 0.0
      %4771 = vmatmul.mubr.f32.gmra.mrb[0].mxu0 %v4472
      %v4772 = vpop.f32.mrb[0].mxu0
      %v4773 = vadd.f32 0.0, %v4772
      %v4774 = vpop.f32.mrb[0].mxu0
      %4775 = vmatprep.mubr.f32.mxu0 0.0
      %4776 = vmatmul.mubr.f32.gmra.mrb[0].mxu0 %v4475
      %v4777 = vpop.f32.mrb[0].mxu0
      %v4778 = vadd.f32 0.0, %v4777
      %v4779 = vpop.f32.mrb[0].mxu0
      %4780 = vmatprep.mubr.f32.mxu0 0.0
      %4781 = vmatmul.mubr.f32.gmra.mrb[0].mxu0 %v4478
      %v4782 = vpop.f32.mrb[0].mxu0
      %v4783 = vadd.f32 0.0, %v4782
      %v4784 = vpop.f32.mrb[0].mxu0
      %4785 = vdwg.mxu0
      %v4786 = vadd.f32 %v4088, %v4547
      %v4787 = vadd.f32 %v4090, %v4549
      %v4788 = vadd.f32 %v4249, %v4708
      %v4789 = vadd.f32 %v4094, %v4553
      %v4790 = vadd.f32 %v4096, %v4555
      %v4791 = vadd.f32 %v4254, %v4713
      %v4792 = vadd.f32 %v4100, %v4559
      %v4793 = vadd.f32 %v4102, %v4561
      %v4794 = vadd.f32 %v4259, %v4718
      %v4795 = vadd.f32 %v4106, %v4565
      %v4796 = vadd.f32 %v4108, %v4567
      %v4797 = vadd.f32 %v4264, %v4723
      %v4798 = vadd.f32 %v4112, %v4571
      %v4799 = vadd.f32 %v4114, %v4573
      %v4800 = vadd.f32 %v4269, %v4728
      %v4801 = vadd.f32 %v4118, %v4577
      %v4802 = vadd.f32 %v4120, %v4579
      %v4803 = vadd.f32 %v4274, %v4733
      %v4804 = vadd.f32 %v4124, %v4583
      %v4805 = vadd.f32 %v4126, %v4585
      %v4806 = vadd.f32 %v4279, %v4738
      %v4807 = vadd.f32 %v4130, %v4589
      %v4808 = vadd.f32 %v4132, %v4591
      %v4809 = vadd.f32 %v4284, %v4743
      %v4810 = vadd.f32 %v4136, %v4595
      %v4811 = vadd.f32 %v4138, %v4597
      %v4812 = vadd.f32 %v4289, %v4748
      %v4813 = vadd.f32 %v4142, %v4601
      %v4814 = vadd.f32 %v4144, %v4603
      %v4815 = vadd.f32 %v4294, %v4753
      %v4816 = vadd.f32 %v4148, %v4607
      %v4817 = vadd.f32 %v4150, %v4609
      %v4818 = vadd.f32 %v4299, %v4758
      %v4819 = vadd.f32 %v4154, %v4613
      %v4820 = vadd.f32 %v4156, %v4615
      %v4821 = vadd.f32 %v4304, %v4763
      %v4822 = vadd.f32 %v4160, %v4619
      %v4823 = vadd.f32 %v4162, %v4621
      %v4824 = vadd.f32 %v4309, %v4768
      %v4825 = vadd.f32 %v4166, %v4625
      %v4826 = vadd.f32 %v4168, %v4627
      %v4827 = vadd.f32 %v4314, %v4773
      %v4828 = vadd.f32 %v4172, %v4631
      %v4829 = vadd.f32 %v4174, %v4633
      %v4830 = vadd.f32 %v4319, %v4778
      %v4831 = vadd.f32 %v4178, %v4637
      %v4832 = vadd.f32 %v4180, %v4639
      %v4833 = vadd.f32 %v4324, %v4783
      %s4834 = scalar_lea.vmem %s4, 384
      %v4835 = vld [vmem:[%s4834] sm:$0xff]
      %v4836 = vld [vmem:[%s4834 + $0x8] sm:$0xff]
      %v4837 = vld [vmem:[%s4834 + $0x10] sm:$0xff]
      %v4838 = vld [vmem:[%s4834 + $0x18] sm:$0xff]
      %v4839 = vld [vmem:[%s4834 + $0x20] sm:$0xff]
      %v4840 = vld [vmem:[%s4834 + $0x28] sm:$0xff]
      %v4841 = vld [vmem:[%s4834 + $0x30] sm:$0xff]
      %v4842 = vld [vmem:[%s4834 + $0x38] sm:$0xff]
      %v4843 = vld [vmem:[%s4834 + $0x40] sm:$0xff]
      %v4844 = vld [vmem:[%s4834 + $0x48] sm:$0xff]
      %v4845 = vld [vmem:[%s4834 + $0x50] sm:$0xff]
      %v4846 = vld [vmem:[%s4834 + $0x58] sm:$0xff]
      %v4847 = vld [vmem:[%s4834 + $0x60] sm:$0xff]
      %v4848 = vld [vmem:[%s4834 + $0x68] sm:$0xff]
      %v4849 = vld [vmem:[%s4834 + $0x70] sm:$0xff]
      %v4850 = vld [vmem:[%s4834 + $0x78] sm:$0xff]
      %4851 = vrot.lane.b32.xlu0 %v3449, 108
      %v4852 = vpop.permute.xlu0 %4851
      %4853 = vrot.lane.b32.xlu0 %v3450, 108
      %v4854 = vpop.permute.xlu0 %4853
      %4855 = vrot.lane.b32.xlu0 %v3451, 108
      %v4856 = vpop.permute.xlu0 %4855
      %4857 = vrot.lane.b32.xlu0 %v3452, 108
      %v4858 = vpop.permute.xlu0 %4857
      %4859 = vrot.lane.b32.xlu0 %v3453, 108
      %v4860 = vpop.permute.xlu0 %4859
      %4861 = vrot.lane.b32.xlu0 %v3454, 108
      %v4862 = vpop.permute.xlu0 %4861
      %4863 = vrot.lane.b32.xlu0 %v3455, 108
      %v4864 = vpop.permute.xlu0 %4863
      %4865 = vrot.lane.b32.xlu0 %v3456, 108
      %v4866 = vpop.permute.xlu0 %4865
      %4867 = vrot.lane.b32.xlu0 %v3457, 108
      %v4868 = vpop.permute.xlu0 %4867
      %4869 = vrot.lane.b32.xlu0 %v3458, 108
      %v4870 = vpop.permute.xlu0 %4869
      %4871 = vrot.lane.b32.xlu0 %v3459, 108
      %v4872 = vpop.permute.xlu0 %4871
      %4873 = vrot.lane.b32.xlu0 %v3460, 108
      %v4874 = vpop.permute.xlu0 %4873
      %4875 = vrot.lane.b32.xlu0 %v3461, 108
      %v4876 = vpop.permute.xlu0 %4875
      %4877 = vrot.lane.b32.xlu0 %v3462, 108
      %v4878 = vpop.permute.xlu0 %4877
      %4879 = vrot.lane.b32.xlu0 %v3463, 108
      %v4880 = vpop.permute.xlu0 %4879
      %4881 = vrot.lane.b32.xlu0 %v3464, 108
      %v4882 = vpop.permute.xlu0 %4881
      %4883 = vrot.lane.b32.xlu0 %v3465, 108
      %v4884 = vpop.permute.xlu0 %4883
      %4885 = vrot.lane.b32.xlu0 %v3466, 108
      %v4886 = vpop.permute.xlu0 %4885
      %4887 = vrot.lane.b32.xlu0 %v3467, 108
      %v4888 = vpop.permute.xlu0 %4887
      %4889 = vrot.lane.b32.xlu0 %v3468, 108
      %v4890 = vpop.permute.xlu0 %4889
      %4891 = vrot.lane.b32.xlu0 %v3469, 108
      %v4892 = vpop.permute.xlu0 %4891
      %4893 = vrot.lane.b32.xlu0 %v3470, 108
      %v4894 = vpop.permute.xlu0 %4893
      %4895 = vrot.lane.b32.xlu0 %v3471, 108
      %v4896 = vpop.permute.xlu0 %4895
      %4897 = vrot.lane.b32.xlu0 %v3472, 108
      %v4898 = vpop.permute.xlu0 %4897
      %v4899 = vsel %vm2284, %v4852, %v4854
      %v4900 = vsel %vm2284, %v4854, %v4856
      %v4901 = vsel %vm2284, %v4858, %v4860
      %v4902 = vsel %vm2284, %v4860, %v4862
      %v4903 = vsel %vm2284, %v4864, %v4866
      %v4904 = vsel %vm2284, %v4866, %v4868
      %v4905 = vsel %vm2284, %v4870, %v4872
      %v4906 = vsel %vm2284, %v4872, %v4874
      %v4907 = vsel %vm2284, %v4876, %v4878
      %v4908 = vsel %vm2284, %v4878, %v4880
      %v4909 = vsel %vm2284, %v4882, %v4884
      %v4910 = vsel %vm2284, %v4884, %v4886
      %v4911 = vsel %vm2284, %v4888, %v4890
      %v4912 = vsel %vm2284, %v4890, %v4892
      %v4913 = vsel %vm2284, %v4894, %v4896
      %v4914 = vsel %vm2284, %v4896, %v4898
      %v4940 = vsel %vm3618, %v4835, 0
      %v4943 = vsel %vm3618, %v4836, 0
      %v4946 = vsel %vm3618, %v4837, 0
      %v4949 = vsel %vm3618, %v4838, 0
      %v4952 = vsel %vm3618, %v4839, 0
      %v4955 = vsel %vm3618, %v4840, 0
      %v4958 = vsel %vm3618, %v4841, 0
      %v4961 = vsel %vm3618, %v4842, 0
      %v4964 = vsel %vm3618, %v4843, 0
      %v4967 = vsel %vm3618, %v4844, 0
      %v4970 = vsel %vm3618, %v4845, 0
      %v4973 = vsel %vm3618, %v4846, 0
      %v4976 = vsel %vm3618, %v4847, 0
      %v4979 = vsel %vm3618, %v4848, 0
      %v4982 = vsel %vm3618, %v4849, 0
      %v4985 = vsel %vm3618, %v4850, 0
      %4987 = vmatprep.subr.mxu0 %v4900
      %4988 = vmatpush1.msra.mxu0 %v4899
      %4989 = vmatprep.subr.mxu0 %v4902
      %4990 = vmatpush1.msra.mxu0 %v4901
      %4991 = vmatprep.subr.mxu0 %v4904
      %4992 = vmatpush1.msra.mxu0 %v4903
      %4993 = vmatprep.subr.mxu0 %v4906
      %4994 = vmatpush1.msra.mxu0 %v4905
      %4995 = vmatprep.subr.mxu0 %v4908
      %4996 = vmatpush1.msra.mxu0 %v4907
      %4997 = vmatprep.subr.mxu0 %v4910
      %4998 = vmatpush1.msra.mxu0 %v4909
      %4999 = vmatprep.subr.mxu0 %v4912
      %5000 = vmatpush1.msra.mxu0 %v4911
      %5001 = vmatprep.subr.mxu0 %v4914
      %5002 = vmatpush1.msra.mxu0 %v4913
      %5003 = vmatprep.subr.mxu0 0.0
      %5004 = vmatpush1.msra.mxu0 0.0
      %5005 = vmatprep.subr.mxu0 0.0
      %5006 = vmatpush1.msra.mxu0 0.0
      %5007 = vmatprep.subr.mxu0 0.0
      %5008 = vmatpush1.msra.mxu0 0.0
      %5009 = vmatprep.subr.mxu0 0.0
      %5010 = vmatpush1.msra.mxu0 0.0
      %5011 = vmatprep.subr.mxu0 0.0
      %5012 = vmatpush1.msra.mxu0 0.0
      %5013 = vmatprep.subr.mxu0 0.0
      %5014 = vmatpush1.msra.mxu0 0.0
      %5015 = vmatprep.subr.mxu0 0.0
      %5016 = vmatpush1.msra.mxu0 0.0
      %5017 = vmatprep.subr.mxu0 0.0
      %5018 = vmatpush1.msra.mxu0 0.0
      %5019 = vmatprep.subr.mxu0 0.0
      %5020 = vmatpush1.msra.mxu0 0.0
      %5021 = vmatprep.subr.mxu0 0.0
      %5022 = vmatpush1.msra.mxu0 0.0
      %5023 = vmatprep.subr.mxu0 0.0
      %5024 = vmatpush1.msra.mxu0 0.0
      %5025 = vmatprep.subr.mxu0 0.0
      %5026 = vmatpush1.msra.mxu0 0.0
      %5027 = vmatprep.subr.mxu0 0.0
      %5028 = vmatpush1.msra.mxu0 0.0
      %5029 = vmatprep.subr.mxu0 0.0
      %5030 = vmatpush1.msra.mxu0 0.0
      %5031 = vmatprep.subr.mxu0 0.0
      %5032 = vmatpush1.msra.mxu0 0.0
      %5033 = vmatprep.subr.mxu0 0.0
      %5034 = vmatpush1.msra.mxu0 0.0
      %5035 = vmatprep.subr.mxu0 0.0
      %5036 = vmatpush1.msra.mxu0 0.0
      %5037 = vmatprep.subr.mxu0 0.0
      %5038 = vmatpush1.msra.mxu0 0.0
      %5039 = vmatprep.subr.mxu0 0.0
      %5040 = vmatpush1.msra.mxu0 0.0
      %5041 = vmatprep.subr.mxu0 0.0
      %5042 = vmatpush1.msra.mxu0 0.0
      %5043 = vmatprep.subr.mxu0 0.0
      %5044 = vmatpush1.msra.mxu0 0.0
      %5045 = vmatprep.subr.mxu0 0.0
      %5046 = vmatpush1.msra.mxu0 0.0
      %5047 = vmatprep.subr.mxu0 0.0
      %5048 = vmatpush1.msra.mxu0 0.0
      %5049 = vmatprep.subr.mxu0 0.0
      %5050 = vmatpush1.msra.mxu0 0.0
      %5051 = vmatprep.mubr.f32.mxu0 0.0
      %5052 = vmatmul.mubr.f32.gmra.mrb[0].mxu0 %v4940
      %v5053 = vpop.f32.mrb[0].mxu0
      %v5054 = vadd.f32 0.0, %v5053
      %v5055 = vpop.f32.mrb[0].mxu0
      %v5056 = vadd.f32 0.0, %v5055
      %5057 = vmatprep.mubr.f32.mxu0 0.0
      %5058 = vmatmul.mubr.f32.gmra.mrb[0].mxu0 %v4943
      %v5059 = vpop.f32.mrb[0].mxu0
      %v5060 = vadd.f32 0.0, %v5059
      %v5061 = vpop.f32.mrb[0].mxu0
      %v5062 = vadd.f32 0.0, %v5061
      %5063 = vmatprep.mubr.f32.mxu0 0.0
      %5064 = vmatmul.mubr.f32.gmra.mrb[0].mxu0 %v4946
      %v5065 = vpop.f32.mrb[0].mxu0
      %v5066 = vadd.f32 0.0, %v5065
      %v5067 = vpop.f32.mrb[0].mxu0
      %v5068 = vadd.f32 0.0, %v5067
      %5069 = vmatprep.mubr.f32.mxu0 0.0
      %5070 = vmatmul.mubr.f32.gmra.mrb[0].mxu0 %v4949
      %v5071 = vpop.f32.mrb[0].mxu0
      %v5072 = vadd.f32 0.0, %v5071
      %v5073 = vpop.f32.mrb[0].mxu0
      %v5074 = vadd.f32 0.0, %v5073
      %5075 = vmatprep.mubr.f32.mxu0 0.0
      %5076 = vmatmul.mubr.f32.gmra.mrb[0].mxu0 %v4952
      %v5077 = vpop.f32.mrb[0].mxu0
      %v5078 = vadd.f32 0.0, %v5077
      %v5079 = vpop.f32.mrb[0].mxu0
      %v5080 = vadd.f32 0.0, %v5079
      %5081 = vmatprep.mubr.f32.mxu0 0.0
      %5082 = vmatmul.mubr.f32.gmra.mrb[0].mxu0 %v4955
      %v5083 = vpop.f32.mrb[0].mxu0
      %v5084 = vadd.f32 0.0, %v5083
      %v5085 = vpop.f32.mrb[0].mxu0
      %v5086 = vadd.f32 0.0, %v5085
      %5087 = vmatprep.mubr.f32.mxu0 0.0
      %5088 = vmatmul.mubr.f32.gmra.mrb[0].mxu0 %v4958
      %v5089 = vpop.f32.mrb[0].mxu0
      %v5090 = vadd.f32 0.0, %v5089
      %v5091 = vpop.f32.mrb[0].mxu0
      %v5092 = vadd.f32 0.0, %v5091
      %5093 = vmatprep.mubr.f32.mxu0 0.0
      %5094 = vmatmul.mubr.f32.gmra.mrb[0].mxu0 %v4961
      %v5095 = vpop.f32.mrb[0].mxu0
      %v5096 = vadd.f32 0.0, %v5095
      %v5097 = vpop.f32.mrb[0].mxu0
      %v5098 = vadd.f32 0.0, %v5097
      %5099 = vmatprep.mubr.f32.mxu0 0.0
      %5100 = vmatmul.mubr.f32.gmra.mrb[0].mxu0 %v4964
      %v5101 = vpop.f32.mrb[0].mxu0
      %v5102 = vadd.f32 0.0, %v5101
      %v5103 = vpop.f32.mrb[0].mxu0
      %v5104 = vadd.f32 0.0, %v5103
      %5105 = vmatprep.mubr.f32.mxu0 0.0
      %5106 = vmatmul.mubr.f32.gmra.mrb[0].mxu0 %v4967
      %v5107 = vpop.f32.mrb[0].mxu0
      %v5108 = vadd.f32 0.0, %v5107
      %v5109 = vpop.f32.mrb[0].mxu0
      %v5110 = vadd.f32 0.0, %v5109
      %5111 = vmatprep.mubr.f32.mxu0 0.0
      %5112 = vmatmul.mubr.f32.gmra.mrb[0].mxu0 %v4970
      %v5113 = vpop.f32.mrb[0].mxu0
      %v5114 = vadd.f32 0.0, %v5113
      %v5115 = vpop.f32.mrb[0].mxu0
      %v5116 = vadd.f32 0.0, %v5115
      %5117 = vmatprep.mubr.f32.mxu0 0.0
      %5118 = vmatmul.mubr.f32.gmra.mrb[0].mxu0 %v4973
      %v5119 = vpop.f32.mrb[0].mxu0
      %v5120 = vadd.f32 0.0, %v5119
      %v5121 = vpop.f32.mrb[0].mxu0
      %v5122 = vadd.f32 0.0, %v5121
      %5123 = vmatprep.mubr.f32.mxu0 0.0
      %5124 = vmatmul.mubr.f32.gmra.mrb[0].mxu0 %v4976
      %v5125 = vpop.f32.mrb[0].mxu0
      %v5126 = vadd.f32 0.0, %v5125
      %v5127 = vpop.f32.mrb[0].mxu0
      %v5128 = vadd.f32 0.0, %v5127
      %5129 = vmatprep.mubr.f32.mxu0 0.0
      %5130 = vmatmul.mubr.f32.gmra.mrb[0].mxu0 %v4979
      %v5131 = vpop.f32.mrb[0].mxu0
      %v5132 = vadd.f32 0.0, %v5131
      %v5133 = vpop.f32.mrb[0].mxu0
      %v5134 = vadd.f32 0.0, %v5133
      %5135 = vmatprep.mubr.f32.mxu0 0.0
      %5136 = vmatmul.mubr.f32.gmra.mrb[0].mxu0 %v4982
      %v5137 = vpop.f32.mrb[0].mxu0
      %v5138 = vadd.f32 0.0, %v5137
      %v5139 = vpop.f32.mrb[0].mxu0
      %v5140 = vadd.f32 0.0, %v5139
      %5141 = vmatprep.mubr.f32.mxu0 0.0
      %5142 = vmatmul.mubr.f32.gmra.mrb[0].mxu0 %v4985
      %v5143 = vpop.f32.mrb[0].mxu0
      %v5144 = vadd.f32 0.0, %v5143
      %v5145 = vpop.f32.mrb[0].mxu0
      %v5146 = vadd.f32 0.0, %v5145
      %5147 = vdwg.mxu0
      %5148 = vmatprep.subr.mxu0 0.0
      %5149 = vmatpush1.msra.mxu0 %v4856
      %5150 = vmatprep.subr.mxu0 0.0
      %5151 = vmatpush1.msra.mxu0 %v4862
      %5152 = vmatprep.subr.mxu0 0.0
      %5153 = vmatpush1.msra.mxu0 %v4868
      %5154 = vmatprep.subr.mxu0 0.0
      %5155 = vmatpush1.msra.mxu0 %v4874
      %5156 = vmatprep.subr.mxu0 0.0
      %5157 = vmatpush1.msra.mxu0 %v4880
      %5158 = vmatprep.subr.mxu0 0.0
      %5159 = vmatpush1.msra.mxu0 %v4886
      %5160 = vmatprep.subr.mxu0 0.0
      %5161 = vmatpush1.msra.mxu0 %v4892
      %5162 = vmatprep.subr.mxu0 0.0
      %5163 = vmatpush1.msra.mxu0 %v4898
      %5164 = vmatprep.subr.mxu0 0.0
      %5165 = vmatpush1.msra.mxu0 0.0
      %5166 = vmatprep.subr.mxu0 0.0
      %5167 = vmatpush1.msra.mxu0 0.0
      %5168 = vmatprep.subr.mxu0 0.0
      %5169 = vmatpush1.msra.mxu0 0.0
      %5170 = vmatprep.subr.mxu0 0.0
      %5171 = vmatpush1.msra.mxu0 0.0
      %5172 = vmatprep.subr.mxu0 0.0
      %5173 = vmatpush1.msra.mxu0 0.0
      %5174 = vmatprep.subr.mxu0 0.0
      %5175 = vmatpush1.msra.mxu0 0.0
      %5176 = vmatprep.subr.mxu0 0.0
      %5177 = vmatpush1.msra.mxu0 0.0
      %5178 = vmatprep.subr.mxu0 0.0
      %5179 = vmatpush1.msra.mxu0 0.0
      %5180 = vmatprep.subr.mxu0 0.0
      %5181 = vmatpush1.msra.mxu0 0.0
      %5182 = vmatprep.subr.mxu0 0.0
      %5183 = vmatpush1.msra.mxu0 0.0
      %5184 = vmatprep.subr.mxu0 0.0
      %5185 = vmatpush1.msra.mxu0 0.0
      %5186 = vmatprep.subr.mxu0 0.0
      %5187 = vmatpush1.msra.mxu0 0.0
      %5188 = vmatprep.subr.mxu0 0.0
      %5189 = vmatpush1.msra.mxu0 0.0
      %5190 = vmatprep.subr.mxu0 0.0
      %5191 = vmatpush1.msra.mxu0 0.0
      %5192 = vmatprep.subr.mxu0 0.0
      %5193 = vmatpush1.msra.mxu0 0.0
      %5194 = vmatprep.subr.mxu0 0.0
      %5195 = vmatpush1.msra.mxu0 0.0
      %5196 = vmatprep.subr.mxu0 0.0
      %5197 = vmatpush1.msra.mxu0 0.0
      %5198 = vmatprep.subr.mxu0 0.0
      %5199 = vmatpush1.msra.mxu0 0.0
      %5200 = vmatprep.subr.mxu0 0.0
      %5201 = vmatpush1.msra.mxu0 0.0
      %5202 = vmatprep.subr.mxu0 0.0
      %5203 = vmatpush1.msra.mxu0 0.0
      %5204 = vmatprep.subr.mxu0 0.0
      %5205 = vmatpush1.msra.mxu0 0.0
      %5206 = vmatprep.subr.mxu0 0.0
      %5207 = vmatpush1.msra.mxu0 0.0
      %5208 = vmatprep.subr.mxu0 0.0
      %5209 = vmatpush1.msra.mxu0 0.0
      %5210 = vmatprep.subr.mxu0 0.0
      %5211 = vmatpush1.msra.mxu0 0.0
      %5212 = vmatprep.mubr.f32.mxu0 0.0
      %5213 = vmatmul.mubr.f32.gmra.mrb[0].mxu0 %v4940
      %v5214 = vpop.f32.mrb[0].mxu0
      %v5215 = vadd.f32 0.0, %v5214
      %v5216 = vpop.f32.mrb[0].mxu0
      %5217 = vmatprep.mubr.f32.mxu0 0.0
      %5218 = vmatmul.mubr.f32.gmra.mrb[0].mxu0 %v4943
      %v5219 = vpop.f32.mrb[0].mxu0
      %v5220 = vadd.f32 0.0, %v5219
      %v5221 = vpop.f32.mrb[0].mxu0
      %5222 = vmatprep.mubr.f32.mxu0 0.0
      %5223 = vmatmul.mubr.f32.gmra.mrb[0].mxu0 %v4946
      %v5224 = vpop.f32.mrb[0].mxu0
      %v5225 = vadd.f32 0.0, %v5224
      %v5226 = vpop.f32.mrb[0].mxu0
      %5227 = vmatprep.mubr.f32.mxu0 0.0
      %5228 = vmatmul.mubr.f32.gmra.mrb[0].mxu0 %v4949
      %v5229 = vpop.f32.mrb[0].mxu0
      %v5230 = vadd.f32 0.0, %v5229
      %v5231 = vpop.f32.mrb[0].mxu0
      %5232 = vmatprep.mubr.f32.mxu0 0.0
      %5233 = vmatmul.mubr.f32.gmra.mrb[0].mxu0 %v4952
      %v5234 = vpop.f32.mrb[0].mxu0
      %v5235 = vadd.f32 0.0, %v5234
      %v5236 = vpop.f32.mrb[0].mxu0
      %5237 = vmatprep.mubr.f32.mxu0 0.0
      %5238 = vmatmul.mubr.f32.gmra.mrb[0].mxu0 %v4955
      %v5239 = vpop.f32.mrb[0].mxu0
      %v5240 = vadd.f32 0.0, %v5239
      %v5241 = vpop.f32.mrb[0].mxu0
      %5242 = vmatprep.mubr.f32.mxu0 0.0
      %5243 = vmatmul.mubr.f32.gmra.mrb[0].mxu0 %v4958
      %v5244 = vpop.f32.mrb[0].mxu0
      %v5245 = vadd.f32 0.0, %v5244
      %v5246 = vpop.f32.mrb[0].mxu0
      %5247 = vmatprep.mubr.f32.mxu0 0.0
      %5248 = vmatmul.mubr.f32.gmra.mrb[0].mxu0 %v4961
      %v5249 = vpop.f32.mrb[0].mxu0
      %v5250 = vadd.f32 0.0, %v5249
      %v5251 = vpop.f32.mrb[0].mxu0
      %5252 = vmatprep.mubr.f32.mxu0 0.0
      %5253 = vmatmul.mubr.f32.gmra.mrb[0].mxu0 %v4964
      %v5254 = vpop.f32.mrb[0].mxu0
      %v5255 = vadd.f32 0.0, %v5254
      %v5256 = vpop.f32.mrb[0].mxu0
      %5257 = vmatprep.mubr.f32.mxu0 0.0
      %5258 = vmatmul.mubr.f32.gmra.mrb[0].mxu0 %v4967
      %v5259 = vpop.f32.mrb[0].mxu0
      %v5260 = vadd.f32 0.0, %v5259
      %v5261 = vpop.f32.mrb[0].mxu0
      %5262 = vmatprep.mubr.f32.mxu0 0.0
      %5263 = vmatmul.mubr.f32.gmra.mrb[0].mxu0 %v4970
      %v5264 = vpop.f32.mrb[0].mxu0
      %v5265 = vadd.f32 0.0, %v5264
      %v5266 = vpop.f32.mrb[0].mxu0
      %5267 = vmatprep.mubr.f32.mxu0 0.0
      %5268 = vmatmul.mubr.f32.gmra.mrb[0].mxu0 %v4973
      %v5269 = vpop.f32.mrb[0].mxu0
      %v5270 = vadd.f32 0.0, %v5269
      %v5271 = vpop.f32.mrb[0].mxu0
      %5272 = vmatprep.mubr.f32.mxu0 0.0
      %5273 = vmatmul.mubr.f32.gmra.mrb[0].mxu0 %v4976
      %v5274 = vpop.f32.mrb[0].mxu0
      %v5275 = vadd.f32 0.0, %v5274
      %v5276 = vpop.f32.mrb[0].mxu0
      %5277 = vmatprep.mubr.f32.mxu0 0.0
      %5278 = vmatmul.mubr.f32.gmra.mrb[0].mxu0 %v4979
      %v5279 = vpop.f32.mrb[0].mxu0
      %v5280 = vadd.f32 0.0, %v5279
      %v5281 = vpop.f32.mrb[0].mxu0
      %5282 = vmatprep.mubr.f32.mxu0 0.0
      %5283 = vmatmul.mubr.f32.gmra.mrb[0].mxu0 %v4982
      %v5284 = vpop.f32.mrb[0].mxu0
      %v5285 = vadd.f32 0.0, %v5284
      %v5286 = vpop.f32.mrb[0].mxu0
      %5287 = vmatprep.mubr.f32.mxu0 0.0
      %5288 = vmatmul.mubr.f32.gmra.mrb[0].mxu0 %v4985
      %v5289 = vpop.f32.mrb[0].mxu0
      %v5290 = vadd.f32 0.0, %v5289
      %v5291 = vpop.f32.mrb[0].mxu0
      %5292 = vdwg.mxu0
      %v5293 = vadd.f32 %v4786, %v5054
      %v5294 = vadd.f32 %v4787, %v5056
      %v5295 = vadd.f32 %v4788, %v5215
      %v5296 = vadd.f32 %v4789, %v5060
      %v5297 = vadd.f32 %v4790, %v5062
      %v5298 = vadd.f32 %v4791, %v5220
      %v5299 = vadd.f32 %v4792, %v5066
      %v5300 = vadd.f32 %v4793, %v5068
      %v5301 = vadd.f32 %v4794, %v5225
      %v5302 = vadd.f32 %v4795, %v5072
      %v5303 = vadd.f32 %v4796, %v5074
      %v5304 = vadd.f32 %v4797, %v5230
      %v5305 = vadd.f32 %v4798, %v5078
      %v5306 = vadd.f32 %v4799, %v5080
      %v5307 = vadd.f32 %v4800, %v5235
      %v5308 = vadd.f32 %v4801, %v5084
      %v5309 = vadd.f32 %v4802, %v5086
      %v5310 = vadd.f32 %v4803, %v5240
      %v5311 = vadd.f32 %v4804, %v5090
      %v5312 = vadd.f32 %v4805, %v5092
      %v5313 = vadd.f32 %v4806, %v5245
      %v5314 = vadd.f32 %v4807, %v5096
      %v5315 = vadd.f32 %v4808, %v5098
      %v5316 = vadd.f32 %v4809, %v5250
      %v5317 = vadd.f32 %v4810, %v5102
      %v5318 = vadd.f32 %v4811, %v5104
      %v5319 = vadd.f32 %v4812, %v5255
      %v5320 = vadd.f32 %v4813, %v5108
      %v5321 = vadd.f32 %v4814, %v5110
      %v5322 = vadd.f32 %v4815, %v5260
      %v5323 = vadd.f32 %v4816, %v5114
      %v5324 = vadd.f32 %v4817, %v5116
      %v5325 = vadd.f32 %v4818, %v5265
      %v5326 = vadd.f32 %v4819, %v5120
      %v5327 = vadd.f32 %v4820, %v5122
      %v5328 = vadd.f32 %v4821, %v5270
      %v5329 = vadd.f32 %v4822, %v5126
      %v5330 = vadd.f32 %v4823, %v5128
      %v5331 = vadd.f32 %v4824, %v5275
      %v5332 = vadd.f32 %v4825, %v5132
      %v5333 = vadd.f32 %v4826, %v5134
      %v5334 = vadd.f32 %v4827, %v5280
      %v5335 = vadd.f32 %v4828, %v5138
      %v5336 = vadd.f32 %v4829, %v5140
      %v5337 = vadd.f32 %v4830, %v5285
      %v5338 = vadd.f32 %v4831, %v5144
      %v5339 = vadd.f32 %v4832, %v5146
      %v5340 = vadd.f32 %v4833, %v5290
      %v5341 = vld [vmem:[%s5] sm:$0xff]
      %v5342 = vld [vmem:[%s5 + $0x8] sm:$0xff]
      %v5343 = vld [vmem:[%s5 + $0x10] sm:$0xff]
      %v5344 = vld [vmem:[%s5 + $0x18] sm:$0xff]
      %v5345 = vld [vmem:[%s5 + $0x20] sm:$0xff]
      %v5346 = vld [vmem:[%s5 + $0x28] sm:$0xff]
      %v5347 = vld [vmem:[%s5 + $0x30] sm:$0xff]
      %v5348 = vld [vmem:[%s5 + $0x38] sm:$0xff]
      %v5349 = vld [vmem:[%s5 + $0x40] sm:$0xff]
      %v5350 = vld [vmem:[%s5 + $0x48] sm:$0xff]
      %v5351 = vld [vmem:[%s5 + $0x50] sm:$0xff]
      %v5352 = vld [vmem:[%s5 + $0x58] sm:$0xff]
      %v5353 = vld [vmem:[%s5 + $0x60] sm:$0xff]
      %v5354 = vld [vmem:[%s5 + $0x68] sm:$0xff]
      %v5355 = vld [vmem:[%s5 + $0x70] sm:$0xff]
      %v5356 = vld [vmem:[%s5 + $0x78] sm:$0xff]
      %5358 = vset.pattern.permute.xlu0 0
      %5359 = vperm.xlu0 %5358, %v5341
      %v5360 = vpop.permute.xlu0 %5359
      %5363 = vset.pattern.permute.xlu0 0
      %5364 = vperm.xlu0 %5363, %v5342
      %v5365 = vpop.permute.xlu0 %5364
      %5368 = vset.pattern.permute.xlu0 0
      %5369 = vperm.xlu0 %5368, %v5343
      %v5370 = vpop.permute.xlu0 %5369
      %5373 = vset.pattern.permute.xlu0 0
      %5374 = vperm.xlu0 %5373, %v5344
      %v5375 = vpop.permute.xlu0 %5374
      %5378 = vset.pattern.permute.xlu0 0
      %5379 = vperm.xlu0 %5378, %v5345
      %v5380 = vpop.permute.xlu0 %5379
      %5383 = vset.pattern.permute.xlu0 0
      %5384 = vperm.xlu0 %5383, %v5346
      %v5385 = vpop.permute.xlu0 %5384
      %5388 = vset.pattern.permute.xlu0 0
      %5389 = vperm.xlu0 %5388, %v5347
      %v5390 = vpop.permute.xlu0 %5389
      %5393 = vset.pattern.permute.xlu0 0
      %5394 = vperm.xlu0 %5393, %v5348
      %v5395 = vpop.permute.xlu0 %5394
      %5398 = vset.pattern.permute.xlu0 0
      %5399 = vperm.xlu0 %5398, %v5349
      %v5400 = vpop.permute.xlu0 %5399
      %5403 = vset.pattern.permute.xlu0 0
      %5404 = vperm.xlu0 %5403, %v5350
      %v5405 = vpop.permute.xlu0 %5404
      %5408 = vset.pattern.permute.xlu0 0
      %5409 = vperm.xlu0 %5408, %v5351
      %v5410 = vpop.permute.xlu0 %5409
      %5413 = vset.pattern.permute.xlu0 0
      %5414 = vperm.xlu0 %5413, %v5352
      %v5415 = vpop.permute.xlu0 %5414
      %5418 = vset.pattern.permute.xlu0 0
      %5419 = vperm.xlu0 %5418, %v5353
      %v5420 = vpop.permute.xlu0 %5419
      %5423 = vset.pattern.permute.xlu0 0
      %5424 = vperm.xlu0 %5423, %v5354
      %v5425 = vpop.permute.xlu0 %5424
      %5428 = vset.pattern.permute.xlu0 0
      %5429 = vperm.xlu0 %5428, %v5355
      %v5430 = vpop.permute.xlu0 %5429
      %5433 = vset.pattern.permute.xlu0 0
      %5434 = vperm.xlu0 %5433, %v5356
      %v5435 = vpop.permute.xlu0 %5434
      %v5437 = vadd.f32 %v5293, %v5360
      %v5438 = vadd.f32 %v5294, %v5360
      %v5439 = vadd.f32 %v5295, %v5360
      %v5440 = vadd.f32 %v5296, %v5365
      %v5441 = vadd.f32 %v5297, %v5365
      %v5442 = vadd.f32 %v5298, %v5365
      %v5443 = vadd.f32 %v5299, %v5370
      %v5444 = vadd.f32 %v5300, %v5370
      %v5445 = vadd.f32 %v5301, %v5370
      %v5446 = vadd.f32 %v5302, %v5375
      %v5447 = vadd.f32 %v5303, %v5375
      %v5448 = vadd.f32 %v5304, %v5375
      %v5449 = vadd.f32 %v5305, %v5380
      %v5450 = vadd.f32 %v5306, %v5380
      %v5451 = vadd.f32 %v5307, %v5380
      %v5452 = vadd.f32 %v5308, %v5385
      %v5453 = vadd.f32 %v5309, %v5385
      %v5454 = vadd.f32 %v5310, %v5385
      %v5455 = vadd.f32 %v5311, %v5390
      %v5456 = vadd.f32 %v5312, %v5390
      %v5457 = vadd.f32 %v5313, %v5390
      %v5458 = vadd.f32 %v5314, %v5395
      %v5459 = vadd.f32 %v5315, %v5395
      %v5460 = vadd.f32 %v5316, %v5395
      %v5461 = vadd.f32 %v5317, %v5400
      %v5462 = vadd.f32 %v5318, %v5400
      %v5463 = vadd.f32 %v5319, %v5400
      %v5464 = vadd.f32 %v5320, %v5405
      %v5465 = vadd.f32 %v5321, %v5405
      %v5466 = vadd.f32 %v5322, %v5405
      %v5467 = vadd.f32 %v5323, %v5410
      %v5468 = vadd.f32 %v5324, %v5410
      %v5469 = vadd.f32 %v5325, %v5410
      %v5470 = vadd.f32 %v5326, %v5415
      %v5471 = vadd.f32 %v5327, %v5415
      %v5472 = vadd.f32 %v5328, %v5415
      %v5473 = vadd.f32 %v5329, %v5420
      %v5474 = vadd.f32 %v5330, %v5420
      %v5475 = vadd.f32 %v5331, %v5420
      %v5476 = vadd.f32 %v5332, %v5425
      %v5477 = vadd.f32 %v5333, %v5425
      %v5478 = vadd.f32 %v5334, %v5425
      %v5479 = vadd.f32 %v5335, %v5430
      %v5480 = vadd.f32 %v5336, %v5430
      %v5481 = vadd.f32 %v5337, %v5430
      %v5482 = vadd.f32 %v5338, %v5435
      %v5483 = vadd.f32 %v5339, %v5435
      %v5484 = vadd.f32 %v5340, %v5435
      %v5485 = vmax.f32 %v5437, 0.0
      %v5486 = vmax.f32 %v5438, 0.0
      %v5487 = vmax.f32 %v5439, 0.0
      %v5488 = vmax.f32 %v5440, 0.0
      %v5489 = vmax.f32 %v5441, 0.0
      %v5490 = vmax.f32 %v5442, 0.0
      %v5491 = vmax.f32 %v5443, 0.0
      %v5492 = vmax.f32 %v5444, 0.0
      %v5493 = vmax.f32 %v5445, 0.0
      %v5494 = vmax.f32 %v5446, 0.0
      %v5495 = vmax.f32 %v5447, 0.0
      %v5496 = vmax.f32 %v5448, 0.0
      %v5497 = vmax.f32 %v5449, 0.0
      %v5498 = vmax.f32 %v5450, 0.0
      %v5499 = vmax.f32 %v5451, 0.0
      %v5500 = vmax.f32 %v5452, 0.0
      %v5501 = vmax.f32 %v5453, 0.0
      %v5502 = vmax.f32 %v5454, 0.0
      %v5503 = vmax.f32 %v5455, 0.0
      %v5504 = vmax.f32 %v5456, 0.0
      %v5505 = vmax.f32 %v5457, 0.0
      %v5506 = vmax.f32 %v5458, 0.0
      %v5507 = vmax.f32 %v5459, 0.0
      %v5508 = vmax.f32 %v5460, 0.0
      %v5509 = vmax.f32 %v5461, 0.0
      %v5510 = vmax.f32 %v5462, 0.0
      %v5511 = vmax.f32 %v5463, 0.0
      %v5512 = vmax.f32 %v5464, 0.0
      %v5513 = vmax.f32 %v5465, 0.0
      %v5514 = vmax.f32 %v5466, 0.0
      %v5515 = vmax.f32 %v5467, 0.0
      %v5516 = vmax.f32 %v5468, 0.0
      %v5517 = vmax.f32 %v5469, 0.0
      %v5518 = vmax.f32 %v5470, 0.0
      %v5519 = vmax.f32 %v5471, 0.0
      %v5520 = vmax.f32 %v5472, 0.0
      %v5521 = vmax.f32 %v5473, 0.0
      %v5522 = vmax.f32 %v5474, 0.0
      %v5523 = vmax.f32 %v5475, 0.0
      %v5524 = vmax.f32 %v5476, 0.0
      %v5525 = vmax.f32 %v5477, 0.0
      %v5526 = vmax.f32 %v5478, 0.0
      %v5527 = vmax.f32 %v5479, 0.0
      %v5528 = vmax.f32 %v5480, 0.0
      %v5529 = vmax.f32 %v5481, 0.0
      %v5530 = vmax.f32 %v5482, 0.0
      %v5531 = vmax.f32 %v5483, 0.0
      %v5532 = vmax.f32 %v5484, 0.0
      %v5533 = vmax.f32 %v5485, %v5497
      %v5534 = vmax.f32 %v5486, %v5498
      %v5535 = vmax.f32 %v5487, %v5499
      %v5536 = vmax.f32 %v5488, %v5500
      %v5537 = vmax.f32 %v5489, %v5501
      %v5538 = vmax.f32 %v5490, %v5502
      %v5539 = vmax.f32 %v5491, %v5503
      %v5540 = vmax.f32 %v5492, %v5504
      %v5541 = vmax.f32 %v5493, %v5505
      %v5542 = vmax.f32 %v5494, %v5506
      %v5543 = vmax.f32 %v5495, %v5507
      %v5544 = vmax.f32 %v5496, %v5508
      %v5545 = vmax.f32 %v5509, %v5521
      %v5546 = vmax.f32 %v5510, %v5522
      %v5547 = vmax.f32 %v5511, %v5523
      %v5548 = vmax.f32 %v5512, %v5524
      %v5549 = vmax.f32 %v5513, %v5525
      %v5550 = vmax.f32 %v5514, %v5526
      %v5551 = vmax.f32 %v5515, %v5527
      %v5552 = vmax.f32 %v5516, %v5528
      %v5553 = vmax.f32 %v5517, %v5529
      %v5554 = vmax.f32 %v5518, %v5530
      %v5555 = vmax.f32 %v5519, %v5531
      %v5556 = vmax.f32 %v5520, %v5532
      %v5557 = vmax.f32 %v5533, %v5545
      %v5558 = vmax.f32 %v5534, %v5546
      %v5559 = vmax.f32 %v5535, %v5547
      %v5560 = vmax.f32 %v5536, %v5548
      %v5561 = vmax.f32 %v5537, %v5549
      %v5562 = vmax.f32 %v5538, %v5550
      %v5563 = vmax.f32 %v5539, %v5551
      %v5564 = vmax.f32 %v5540, %v5552
      %v5565 = vmax.f32 %v5541, %v5553
      %v5566 = vmax.f32 %v5542, %v5554
      %v5567 = vmax.f32 %v5543, %v5555
      %v5568 = vmax.f32 %v5544, %v5556
      %5569 = vst.msk [vmem:[%s251] sm:$0xff] %vm352, %v5557
      %5570 = vst.msk [vmem:[%s251 + $0x10] sm:$0xff] %vm352, %v5560
      %5571 = vst.msk [vmem:[%s251 + $0x20] sm:$0xff] %vm352, %v5563
      %5572 = vst.msk [vmem:[%s251 + $0x30] sm:$0xff] %vm352, %v5566
      %5577 = vrot.lane.b32.xlu0 %v5557, 125
      %v5578 = vpop.permute.xlu0 %5577
      %5579 = vrot.lane.b32.xlu0 %v5560, 125
      %v5580 = vpop.permute.xlu0 %5579
      %5581 = vrot.lane.b32.xlu0 %v5563, 125
      %v5582 = vpop.permute.xlu0 %5581
      %5583 = vrot.lane.b32.xlu0 %v5566, 125
      %v5584 = vpop.permute.xlu0 %5583
      %vm5589 = vcmask 261248
      %5590 = vst.msk [vmem:[%s251] sm:$0xff] %vm5589, %v5578
      %5591 = vst.msk [vmem:[%s251 + $0x10] sm:$0xff] %vm5589, %v5580
      %5592 = vst.msk [vmem:[%s251 + $0x20] sm:$0xff] %vm5589, %v5582
      %5593 = vst.msk [vmem:[%s251 + $0x30] sm:$0xff] %vm5589, %v5584
      %5594 = vrot.lane.b32.xlu0 %v5557, 122
      %v5595 = vpop.permute.xlu0 %5594
      %5596 = vrot.lane.b32.xlu0 %v5560, 122
      %v5597 = vpop.permute.xlu0 %5596
      %5598 = vrot.lane.b32.xlu0 %v5563, 122
      %v5599 = vpop.permute.xlu0 %5598
      %5600 = vrot.lane.b32.xlu0 %v5566, 122
      %v5601 = vpop.permute.xlu0 %5600
      %vm5606 = vcmask 392448
      %5607 = vst.msk [vmem:[%s251] sm:$0xff] %vm5606, %v5595
      %5608 = vst.msk [vmem:[%s251 + $0x10] sm:$0xff] %vm5606, %v5597
      %5609 = vst.msk [vmem:[%s251 + $0x20] sm:$0xff] %vm5606, %v5599
      %5610 = vst.msk [vmem:[%s251 + $0x30] sm:$0xff] %vm5606, %v5601
      %5611 = vrot.lane.b32.xlu0 %v5557, 119
      %v5612 = vpop.permute.xlu0 %5611
      %5613 = vrot.lane.b32.xlu0 %v5560, 119
      %v5614 = vpop.permute.xlu0 %5613
      %5615 = vrot.lane.b32.xlu0 %v5563, 119
      %v5616 = vpop.permute.xlu0 %5615
      %5617 = vrot.lane.b32.xlu0 %v5566, 119
      %v5618 = vpop.permute.xlu0 %5617
      %vm5623 = vcmask 523648
      %5624 = vst.msk [vmem:[%s251] sm:$0xff] %vm5623, %v5612
      %5625 = vst.msk [vmem:[%s251 + $0x10] sm:$0xff] %vm5623, %v5614
      %5626 = vst.msk [vmem:[%s251 + $0x20] sm:$0xff] %vm5623, %v5616
      %5627 = vst.msk [vmem:[%s251 + $0x30] sm:$0xff] %vm5623, %v5618
      %5628 = vrot.lane.b32.xlu0 %v5557, 116
      %v5629 = vpop.permute.xlu0 %5628
      %5630 = vrot.lane.b32.xlu0 %v5560, 116
      %v5631 = vpop.permute.xlu0 %5630
      %5632 = vrot.lane.b32.xlu0 %v5563, 116
      %v5633 = vpop.permute.xlu0 %5632
      %5634 = vrot.lane.b32.xlu0 %v5566, 116
      %v5635 = vpop.permute.xlu0 %5634
      %vm5640 = vcmask 654848
      %5641 = vst.msk [vmem:[%s251] sm:$0xff] %vm5640, %v5629
      %5642 = vst.msk [vmem:[%s251 + $0x10] sm:$0xff] %vm5640, %v5631
      %5643 = vst.msk [vmem:[%s251 + $0x20] sm:$0xff] %vm5640, %v5633
      %5644 = vst.msk [vmem:[%s251 + $0x30] sm:$0xff] %vm5640, %v5635
      %5645 = vrot.lane.b32.xlu0 %v5557, 113
      %v5646 = vpop.permute.xlu0 %5645
      %5647 = vrot.lane.b32.xlu0 %v5560, 113
      %v5648 = vpop.permute.xlu0 %5647
      %5649 = vrot.lane.b32.xlu0 %v5563, 113
      %v5650 = vpop.permute.xlu0 %5649
      %5651 = vrot.lane.b32.xlu0 %v5566, 113
      %v5652 = vpop.permute.xlu0 %5651
      %vm5657 = vcmask 786048
      %5658 = vst.msk [vmem:[%s251] sm:$0xff] %vm5657, %v5646
      %5659 = vst.msk [vmem:[%s251 + $0x10] sm:$0xff] %vm5657, %v5648
      %5660 = vst.msk [vmem:[%s251 + $0x20] sm:$0xff] %vm5657, %v5650
      %5661 = vst.msk [vmem:[%s251 + $0x30] sm:$0xff] %vm5657, %v5652
      %5666 = vrot.lane.b32.xlu0 %v5557, 110
      %v5667 = vpop.permute.xlu0 %5666
      %5668 = vrot.lane.b32.xlu0 %v5558, 110
      %v5669 = vpop.permute.xlu0 %5668
      %5670 = vrot.lane.b32.xlu0 %v5560, 110
      %v5671 = vpop.permute.xlu0 %5670
      %5672 = vrot.lane.b32.xlu0 %v5561, 110
      %v5673 = vpop.permute.xlu0 %5672
      %5674 = vrot.lane.b32.xlu0 %v5563, 110
      %v5675 = vpop.permute.xlu0 %5674
      %5676 = vrot.lane.b32.xlu0 %v5564, 110
      %v5677 = vpop.permute.xlu0 %5676
      %5678 = vrot.lane.b32.xlu0 %v5566, 110
      %v5679 = vpop.permute.xlu0 %5678
      %5680 = vrot.lane.b32.xlu0 %v5567, 110
      %v5681 = vpop.permute.xlu0 %5680
      %vm5682 = vcmask 900096
      %v5683 = vsel %vm5682, %v5667, %v5669
      %v5684 = vsel %vm5682, %v5671, %v5673
      %v5685 = vsel %vm5682, %v5675, %v5677
      %v5686 = vsel %vm5682, %v5679, %v5681
      %vm5691 = vcmask 917248
      %5692 = vst.msk [vmem:[%s251] sm:$0xff] %vm5691, %v5683
      %5693 = vst.msk [vmem:[%s251 + $0x10] sm:$0xff] %vm5691, %v5684
      %5694 = vst.msk [vmem:[%s251 + $0x20] sm:$0xff] %vm5691, %v5685
      %5695 = vst.msk [vmem:[%s251 + $0x30] sm:$0xff] %vm5691, %v5686
      %5696 = vrot.lane.b32.xlu0 %v5558, 107
      %v5697 = vpop.permute.xlu0 %5696
      %5698 = vrot.lane.b32.xlu0 %v5561, 107
      %v5699 = vpop.permute.xlu0 %5698
      %5700 = vrot.lane.b32.xlu0 %v5564, 107
      %v5701 = vpop.permute.xlu0 %5700
      %5702 = vrot.lane.b32.xlu0 %v5567, 107
      %v5703 = vpop.permute.xlu0 %5702
      %vm5708 = vcmask 1048448
      %5709 = vst.msk [vmem:[%s251] sm:$0xff] %vm5708, %v5697
      %5710 = vst.msk [vmem:[%s251 + $0x10] sm:$0xff] %vm5708, %v5699
      %5711 = vst.msk [vmem:[%s251 + $0x20] sm:$0xff] %vm5708, %v5701
      %5712 = vst.msk [vmem:[%s251 + $0x30] sm:$0xff] %vm5708, %v5703
      %5713 = vrot.lane.b32.xlu0 %v5558, 104
      %v5714 = vpop.permute.xlu0 %5713
      %5715 = vrot.lane.b32.xlu0 %v5561, 104
      %v5716 = vpop.permute.xlu0 %5715
      %5717 = vrot.lane.b32.xlu0 %v5564, 104
      %v5718 = vpop.permute.xlu0 %5717
      %5719 = vrot.lane.b32.xlu0 %v5567, 104
      %v5720 = vpop.permute.xlu0 %5719
      %5725 = vst.msk [vmem:[%s251 + $0x8] sm:$0xff] %vm352, %v5714
      %5726 = vst.msk [vmem:[%s251 + $0x18] sm:$0xff] %vm352, %v5716
      %5727 = vst.msk [vmem:[%s251 + $0x28] sm:$0xff] %vm352, %v5718
      %5728 = vst.msk [vmem:[%s251 + $0x38] sm:$0xff] %vm352, %v5720
      %5729 = vrot.lane.b32.xlu0 %v5558, 101
      %v5730 = vpop.permute.xlu0 %5729
      %5731 = vrot.lane.b32.xlu0 %v5561, 101
      %v5732 = vpop.permute.xlu0 %5731
      %5733 = vrot.lane.b32.xlu0 %v5564, 101
      %v5734 = vpop.permute.xlu0 %5733
      %5735 = vrot.lane.b32.xlu0 %v5567, 101
      %v5736 = vpop.permute.xlu0 %5735
      %5741 = vst.msk [vmem:[%s251 + $0x8] sm:$0xff] %vm5589, %v5730
      %5742 = vst.msk [vmem:[%s251 + $0x18] sm:$0xff] %vm5589, %v5732
      %5743 = vst.msk [vmem:[%s251 + $0x28] sm:$0xff] %vm5589, %v5734
      %5744 = vst.msk [vmem:[%s251 + $0x38] sm:$0xff] %vm5589, %v5736
      %5745 = vrot.lane.b32.xlu0 %v5558, 98
      %v5746 = vpop.permute.xlu0 %5745
      %5747 = vrot.lane.b32.xlu0 %v5561, 98
      %v5748 = vpop.permute.xlu0 %5747
      %5749 = vrot.lane.b32.xlu0 %v5564, 98
      %v5750 = vpop.permute.xlu0 %5749
      %5751 = vrot.lane.b32.xlu0 %v5567, 98
      %v5752 = vpop.permute.xlu0 %5751
      %5757 = vst.msk [vmem:[%s251 + $0x8] sm:$0xff] %vm5606, %v5746
      %5758 = vst.msk [vmem:[%s251 + $0x18] sm:$0xff] %vm5606, %v5748
      %5759 = vst.msk [vmem:[%s251 + $0x28] sm:$0xff] %vm5606, %v5750
      %5760 = vst.msk [vmem:[%s251 + $0x38] sm:$0xff] %vm5606, %v5752
      %5761 = vrot.lane.b32.xlu0 %v5558, 95
      %v5762 = vpop.permute.xlu0 %5761
      %5763 = vrot.lane.b32.xlu0 %v5561, 95
      %v5764 = vpop.permute.xlu0 %5763
      %5765 = vrot.lane.b32.xlu0 %v5564, 95
      %v5766 = vpop.permute.xlu0 %5765
      %5767 = vrot.lane.b32.xlu0 %v5567, 95
      %v5768 = vpop.permute.xlu0 %5767
      %5773 = vst.msk [vmem:[%s251 + $0x8] sm:$0xff] %vm5623, %v5762
      %5774 = vst.msk [vmem:[%s251 + $0x18] sm:$0xff] %vm5623, %v5764
      %5775 = vst.msk [vmem:[%s251 + $0x28] sm:$0xff] %vm5623, %v5766
      %5776 = vst.msk [vmem:[%s251 + $0x38] sm:$0xff] %vm5623, %v5768
      %5777 = vrot.lane.b32.xlu0 %v5558, 92
      %v5778 = vpop.permute.xlu0 %5777
      %5779 = vrot.lane.b32.xlu0 %v5561, 92
      %v5780 = vpop.permute.xlu0 %5779
      %5781 = vrot.lane.b32.xlu0 %v5564, 92
      %v5782 = vpop.permute.xlu0 %5781
      %5783 = vrot.lane.b32.xlu0 %v5567, 92
      %v5784 = vpop.permute.xlu0 %5783
      %5789 = vst.msk [vmem:[%s251 + $0x8] sm:$0xff] %vm5640, %v5778
      %5790 = vst.msk [vmem:[%s251 + $0x18] sm:$0xff] %vm5640, %v5780
      %5791 = vst.msk [vmem:[%s251 + $0x28] sm:$0xff] %vm5640, %v5782
      %5792 = vst.msk [vmem:[%s251 + $0x38] sm:$0xff] %vm5640, %v5784
      %5797 = vrot.lane.b32.xlu0 %v5558, 89
      %v5798 = vpop.permute.xlu0 %5797
      %5799 = vrot.lane.b32.xlu0 %v5559, 89
      %v5800 = vpop.permute.xlu0 %5799
      %5801 = vrot.lane.b32.xlu0 %v5561, 89
      %v5802 = vpop.permute.xlu0 %5801
      %5803 = vrot.lane.b32.xlu0 %v5562, 89
      %v5804 = vpop.permute.xlu0 %5803
      %5805 = vrot.lane.b32.xlu0 %v5564, 89
      %v5806 = vpop.permute.xlu0 %5805
      %5807 = vrot.lane.b32.xlu0 %v5565, 89
      %v5808 = vpop.permute.xlu0 %5807
      %5809 = vrot.lane.b32.xlu0 %v5567, 89
      %v5810 = vpop.permute.xlu0 %5809
      %5811 = vrot.lane.b32.xlu0 %v5568, 89
      %v5812 = vpop.permute.xlu0 %5811
      %vm5813 = vcmask 728064
      %v5814 = vsel %vm5813, %v5798, %v5800
      %v5815 = vsel %vm5813, %v5802, %v5804
      %v5816 = vsel %vm5813, %v5806, %v5808
      %v5817 = vsel %vm5813, %v5810, %v5812
      %5822 = vst.msk [vmem:[%s251 + $0x8] sm:$0xff] %vm5657, %v5814
      %5823 = vst.msk [vmem:[%s251 + $0x18] sm:$0xff] %vm5657, %v5815
      %5824 = vst.msk [vmem:[%s251 + $0x28] sm:$0xff] %vm5657, %v5816
      %5825 = vst.msk [vmem:[%s251 + $0x38] sm:$0xff] %vm5657, %v5817
      %5826 = vrot.lane.b32.xlu0 %v5559, 86
      %v5827 = vpop.permute.xlu0 %5826
      %5828 = vrot.lane.b32.xlu0 %v5562, 86
      %v5829 = vpop.permute.xlu0 %5828
      %5830 = vrot.lane.b32.xlu0 %v5565, 86
      %v5831 = vpop.permute.xlu0 %5830
      %5832 = vrot.lane.b32.xlu0 %v5568, 86
      %v5833 = vpop.permute.xlu0 %5832
      %5838 = vst.msk [vmem:[%s251 + $0x8] sm:$0xff] %vm5691, %v5827
      %5839 = vst.msk [vmem:[%s251 + $0x18] sm:$0xff] %vm5691, %v5829
      %5840 = vst.msk [vmem:[%s251 + $0x28] sm:$0xff] %vm5691, %v5831
      %5841 = vst.msk [vmem:[%s251 + $0x38] sm:$0xff] %vm5691, %v5833
      %5842 = vrot.lane.b32.xlu0 %v5559, 83
      %v5843 = vpop.permute.xlu0 %5842
      %5844 = vrot.lane.b32.xlu0 %v5562, 83
      %v5845 = vpop.permute.xlu0 %5844
      %5846 = vrot.lane.b32.xlu0 %v5565, 83
      %v5847 = vpop.permute.xlu0 %5846
      %5848 = vrot.lane.b32.xlu0 %v5568, 83
      %v5849 = vpop.permute.xlu0 %5848
      %5854 = vst.msk [vmem:[%s251 + $0x8] sm:$0xff] %vm5708, %v5843
      %5855 = vst.msk [vmem:[%s251 + $0x18] sm:$0xff] %vm5708, %v5845
      %5856 = vst.msk [vmem:[%s251 + $0x28] sm:$0xff] %vm5708, %v5847
      %5857 = vst.msk [vmem:[%s251 + $0x38] sm:$0xff] %vm5708, %v5849
      %p5858 = scmp.lt.s32.totalorder %s17, 7
      %s5859 = scalar_select %p5858, %s17, 7
      %s5860 = smul.addr %s5859, 8
      %s5861 = smul.addr %s5860, 8
      %s5862 = scalar_lea.vmem %s6, %s5861
      // Predicated region
      $region45: #{thai_char_cnn_forward.2} parent=43 // pred_check
        %p5863 = pneg %p166
      $region46: #{thai_char_cnn_forward.2} parent=43 // pred_check_branch
        %5865 = sbr.rel (%p5863) target = $region48
      $region47: #{thai_char_cnn_forward.2} parent=43 // pred_region
        _
      $region48: #{thai_char_cnn_forward.2} parent=43 // pred_fallthru
        _
    $region44: #{thai_char_cnn_forward.2} parent=5 // pred_fallthru
      _
    %p5866 = scmp.le.s32.totalorder 2, %s12
    // Predicated region
    $region49: #{thai_char_cnn_forward.2} parent=5 // pred_check
      %p5867 = pneg %p5866
    $region50: #{thai_char_cnn_forward.2} parent=5 // pred_check_branch
      %5869 = sbr.rel (%p5867) target = $region52
    $region51: #{thai_char_cnn_forward.2} parent=5 // pred_region
      %s5870 = ssub.s32 %s12, 2
      // Predicated region
      $region53: #{thai_char_cnn_forward.2} parent=51 // pred_check
        %p5871 = pneg %p172
      $region54: #{thai_char_cnn_forward.2} parent=51 // pred_check_branch
        %5873 = sbr.rel (%p5871) target = $region56
      $region55: #{thai_char_cnn_forward.2} parent=51 // pred_region
        %p5874 = scmp.lt.s32.totalorder %s18, 7
        %s5875 = scalar_select %p5874, %s18, 7
        %s5876 = smul.addr %s5875, 8
        %s5877 = smul.addr %s5876, 8
        %s5878 = scalar_lea.vmem %s6, %s5877
      $region56: #{thai_char_cnn_forward.2} parent=51 // pred_fallthru
        _
    $region52: #{thai_char_cnn_forward.2} parent=5 // pred_fallthru
      _
  $region6: #{thai_char_cnn_forward.2} parent=0 // loop_footer
    %s16 = sadd.s32 1, %s12
  $region7: #{thai_char_cnn_forward.2} parent=0 // loop_footer_branch
    %11 = sbr.rel target = $region3
  $region8: #{thai_char_cnn_forward.2} parent=0 // loop_exit
    _

</llo_original>
